<compile_context>
chip_gen: v6e
topology: v6e:2x2x1
jax: 0.10.0
libtpu: 0.0.40
codegen_flags: <defaults>
</compile_context>

<pallas_src>
import jax
import jax.numpy as jnp
from jax.experimental import pallas as pl
from jax.experimental.pallas import tpu as pltpu

COMPUTE_DTYPE = jnp.float32   # set to jnp.bfloat16 on v6e/v7x to halve HBM traffic
LANE = 128                    # lane width / channel padding target
TR1 = 392                     # conv1 row tile (multiple of 8; divides Np*196 when Np%8==0)
TB = 8                        # batch tile for the fused conv2+MLP kernel (multiple of 8)
VMEM_LIMIT = 32 * 1024 * 1024


def _round_up(x, m):
    return (x + m - 1) // m * m


def _nbytes(a):
    return a.size * a.dtype.itemsize


def _pad2(a, rows, cols):
    return jnp.pad(a, ((0, rows - a.shape[0]), (0, cols - a.shape[1])))


# ---------------------------------------------------------------------------
# Kernels
# ---------------------------------------------------------------------------
def conv1_pool_kernel(p_ref, w_ref, b_ref, o_ref):
    """Conv1 + 2x2 max-pool + bias + ReLU.

    p_ref: (4, TR, 128)  im2col patches, axis 0 = pool-window offset
    w_ref: (128, 128)    padded (75 -> 128 contraction, 6 -> 128 channels)
    b_ref: (1, 128)      padded bias (f32)
    o_ref: (TR, 128)     pooled activations, lane-dense
    """
    P, TR, KK = p_ref.shape
    C = w_ref.shape[1]
    # One tall MXU matmul for all 4 pool offsets (leading-dim reshape is free).
    x = p_ref[...].reshape(P * TR, KK)
    y = jnp.dot(x, w_ref[...], preferred_element_type=jnp.float32)
    y = jnp.max(y.reshape(P, TR, C), axis=0)          # 2x2 max-pool (VPU)
    # bias + ReLU after the max (valid: bias is shared and ReLU is monotone)
    o_ref[...] = jnp.maximum(y + b_ref[...], 0.0).astype(o_ref.dtype)


def conv2_mlp_kernel(p_ref, w2_ref, b2_ref, w1_ref, b1_ref,
                     wf2_ref, bf2_ref, wf3_ref, bf3_ref, o_ref):
    """conv2 + bias + ReLU + pool -> fc1 + ReLU -> fc2 + ReLU -> fc3 (fused).

    p_ref : (4, 25, TB, 256)  conv2 im2col patches (pool-offset, spatial, batch, feat)
    w2_ref: (256, 128)        conv2 weight (150 -> 256, 16 -> 128 padded)
    w1_ref: (25, 128, 128)    fc1 weight, pre-permuted to (spatial, channel, out)
    others: (1,128)/(128,128) padded biases / fc weights
    o_ref : (TB, 128)         logits (first 10 lanes valid)
    """
    P, S, TBk, KK = p_ref.shape
    C = w2_ref.shape[1]
    dt = w2_ref.dtype

    # conv2: a single (P*S*TB, KK) x (KK, C) MXU matmul covering all pool offsets.
    x = p_ref[...].reshape(P * S * TBk, KK)
    y = jnp.dot(x, w2_ref[...], preferred_element_type=jnp.float32)
    y = y.reshape(P, S, TBk, C)
    h = jnp.maximum(jnp.max(y, axis=0) + b2_ref[...], 0.0)      # (S, TB, C), f32

    # fc1: contract over (spatial, channel). Weights were permuted host-side so
    # the kernel never needs the PyTorch (C,H,W) flatten transpose.
    acc = jnp.zeros((TBk, C), jnp.float32)
    for s in range(S):                                          # static, unrolled
        acc = acc + jnp.dot(h[s].astype(dt), w1_ref[s],
                            preferred_element_type=jnp.float32)
    h1 = jnp.maximum(acc + b1_ref[...], 0.0)

    h2 = jnp.maximum(
        jnp.dot(h1.astype(dt), wf2_ref[...],
                preferred_element_type=jnp.float32) + bf2_ref[...], 0.0)
    o = jnp.dot(h2.astype(dt), wf3_ref[...],
                preferred_element_type=jnp.float32) + bf3_ref[...]
    o_ref[...] = o.astype(o_ref.dtype)


# ---------------------------------------------------------------------------
# Forward pass (host glue + the two pallas_calls)
# ---------------------------------------------------------------------------
def lenet_forward(x_nchw, params):
    N = x_nchw.shape[0]
    Np = _round_up(N, TB)

    x = jnp.transpose(x_nchw, (0, 2, 3, 1))                      # NCHW -> NHWC
    x = jnp.pad(x, ((0, Np - N), (0, 0), (0, 0), (0, 0)))

    # ----------------- conv1 + pool (Kernel A, gridded over rows) -----------
    K, Cin, C1 = 5, 3, 6
    OH = OW = 28
    PH = PW = 14
    R1 = Np * PH * PW

    slabs = [x[:, kh:kh + OH, kw:kw + OW, :] for kh in range(K) for kw in range(K)]
    patches = jnp.stack(slabs, axis=3).reshape(Np, OH, OW, K * K * Cin)
    p1 = jnp.stack([patches[:, dy::2, dx::2, :]
                    for dy in range(2) for dx in range(2)], axis=0)
    p1 = p1.reshape(4, R1, K * K * Cin)                          # rows = (n, ph, pw)
    p1 = jnp.pad(p1, ((0, 0), (0, 0), (0, LANE - K * K * Cin))).astype(COMPUTE_DTYPE)

    w1p = jnp.transpose(params["conv1_w"], (2, 3, 1, 0)).reshape(K * K * Cin, C1)
    w1p = _pad2(w1p, LANE, LANE).astype(COMPUTE_DTYPE)
    b1p = jnp.pad(params["conv1_b"], (0, LANE - C1)).reshape(1, LANE).astype(jnp.float32)

    assert R1 % TR1 == 0 and TR1 % 8 == 0
    elt = jnp.dtype(COMPUTE_DTYPE).itemsize
    h1 = pl.pallas_call(
        conv1_pool_kernel,
        out_shape=jax.ShapeDtypeStruct((R1, LANE), COMPUTE_DTYPE),
        grid=(R1 // TR1,),
        in_specs=[
            pl.BlockSpec((4, TR1, LANE), lambda i: (0, i, 0)),   # row-tiled patches
            pl.BlockSpec((LANE, LANE), lambda i: (0, 0)),        # weights resident
            pl.BlockSpec((1, LANE), lambda i: (0, 0)),
        ],
        out_specs=pl.BlockSpec((TR1, LANE), lambda i: (i, 0)),
        compiler_params=pltpu.CompilerParams(
            dimension_semantics=("parallel",),
            vmem_limit_bytes=VMEM_LIMIT),
        cost_estimate=pl.CostEstimate(
            flops=2 * 4 * R1 * LANE * LANE, transcendentals=0,
            bytes_accessed=_nbytes(p1) + _nbytes(w1p) + _nbytes(b1p) + R1 * LANE * elt),
    )(p1, w1p, b1p)

    # ----------------- conv2 im2col (host glue) ------------------------------
    h1 = h1[:, :C1].reshape(Np, PH, PW, C1)                      # drop padded channels
    K2, C2, O2, P2 = 5, 16, 10, 5
    KK2 = 256                                                    # 150 -> 256 padded

    slabs2 = [h1[:, kh:kh + O2, kw:kw + O2, :] for kh in range(K2) for kw in range(K2)]
    patches2 = jnp.stack(slabs2, axis=3).reshape(Np, O2, O2, K2 * K2 * C1)
    p2 = jnp.stack([patches2[:, dy::2, dx::2, :]
                    for dy in range(2) for dx in range(2)], axis=0)   # (4,Np,5,5,150)
    p2 = p2.transpose(0, 2, 3, 1, 4).reshape(4, P2 * P2, Np, K2 * K2 * C1)
    p2 = jnp.pad(p2, ((0, 0), (0, 0), (0, 0),
                      (0, KK2 - K2 * K2 * C1))).astype(COMPUTE_DTYPE)

    w2p = jnp.transpose(params["conv2_w"], (2, 3, 1, 0)).reshape(K2 * K2 * C1, C2)
    w2p = _pad2(w2p, KK2, LANE).astype(COMPUTE_DTYPE)
    b2p = jnp.pad(params["conv2_b"], (0, LANE - C2)).reshape(1, LANE).astype(jnp.float32)

    # fc1 weight permuted so it consumes the kernel's (spatial, channel) layout;
    # this reproduces nn.Flatten's (C, H, W) ordering without an in-kernel transpose.
    F1, F2, F3 = 120, 84, 10
    w_fc1 = params["fc1_w"].reshape(F1, C2, P2, P2)
    w_fc1 = w_fc1.transpose(2, 3, 1, 0).reshape(P2 * P2, C2, F1)
    w_fc1 = jnp.pad(w_fc1, ((0, 0), (0, LANE - C2), (0, LANE - F1))).astype(COMPUTE_DTYPE)
    b_fc1 = jnp.pad(params["fc1_b"], (0, LANE - F1)).reshape(1, LANE).astype(jnp.float32)
    w_fc2 = _pad2(params["fc2_w"].T, LANE, LANE).astype(COMPUTE_DTYPE)
    b_fc2 = jnp.pad(params["fc2_b"], (0, LANE - F2)).reshape(1, LANE).astype(jnp.float32)
    w_fc3 = _pad2(params["fc3_w"].T, LANE, LANE).astype(COMPUTE_DTYPE)
    b_fc3 = jnp.pad(params["fc3_b"], (0, LANE - F3)).reshape(1, LANE).astype(jnp.float32)

    flops_b = 2 * Np * (4 * 25 * KK2 * LANE + 25 * LANE * LANE + 2 * LANE * LANE)
    bytes_b = sum(_nbytes(a) for a in
                  (p2, w2p, b2p, w_fc1, b_fc1, w_fc2, b_fc2, w_fc3, b_fc3)) + Np * LANE * 4

    out_p = pl.pallas_call(
        conv2_mlp_kernel,
        out_shape=jax.ShapeDtypeStruct((Np, LANE), jnp.float32),
        grid=(Np // TB,),
        in_specs=[
            pl.BlockSpec((4, P2 * P2, TB, KK2), lambda b: (0, 0, b, 0)),  # batch-tiled
            pl.BlockSpec((KK2, LANE), lambda b: (0, 0)),
            pl.BlockSpec((1, LANE), lambda b: (0, 0)),
            pl.BlockSpec((P2 * P2, LANE, LANE), lambda b: (0, 0, 0)),
            pl.BlockSpec((1, LANE), lambda b: (0, 0)),
            pl.BlockSpec((LANE, LANE), lambda b: (0, 0)),
            pl.BlockSpec((1, LANE), lambda b: (0, 0)),
            pl.BlockSpec((LANE, LANE), lambda b: (0, 0)),
            pl.BlockSpec((1, LANE), lambda b: (0, 0)),
        ],
        out_specs=pl.BlockSpec((TB, LANE), lambda b: (b, 0)),
        compiler_params=pltpu.CompilerParams(
            dimension_semantics=("parallel",),
            vmem_limit_bytes=VMEM_LIMIT),
        cost_estimate=pl.CostEstimate(flops=flops_b, transcendentals=0,
                                      bytes_accessed=bytes_b),
    )(p2, w2p, b2p, w_fc1, b_fc1, w_fc2, b_fc2, w_fc3, b_fc3)

    return out_p[:N, :F3]


# ---------------------------------------------------------------------------
# Pure-JAX reference (mirrors the PyTorch module) + params + driver
# ---------------------------------------------------------------------------
def lenet_reference(x, p):
    dn = ("NCHW", "OIHW", "NCHW")
    y = jax.lax.conv_general_dilated(x, p["conv1_w"], (1, 1), "VALID",
                                     dimension_numbers=dn)
    y = jax.nn.relu(y + p["conv1_b"][None, :, None, None])
    y = y.reshape(y.shape[0], 6, 14, 2, 14, 2).max(axis=(3, 5))
    y = jax.lax.conv_general_dilated(y, p["conv2_w"], (1, 1), "VALID",
                                     dimension_numbers=dn)
    y = jax.nn.relu(y + p["conv2_b"][None, :, None, None])
    y = y.reshape(y.shape[0], 16, 5, 2, 5, 2).max(axis=(3, 5))
    y = y.reshape(y.shape[0], -1)
    y = jax.nn.relu(y @ p["fc1_w"].T + p["fc1_b"])
    y = jax.nn.relu(y @ p["fc2_w"].T + p["fc2_b"])
    return y @ p["fc3_w"].T + p["fc3_b"]


def init_params(key):
    ks = jax.random.split(key, 10)
    s = 0.05
    return {
        "conv1_w": s * jax.random.normal(ks[0], (6, 3, 5, 5), jnp.float32),
        "conv1_b": s * jax.random.normal(ks[1], (6,), jnp.float32),
        "conv2_w": s * jax.random.normal(ks[2], (16, 6, 5, 5), jnp.float32),
        "conv2_b": s * jax.random.normal(ks[3], (16,), jnp.float32),
        "fc1_w": s * jax.random.normal(ks[4], (120, 16 * 5 * 5), jnp.float32),
        "fc1_b": s * jax.random.normal(ks[5], (120,), jnp.float32),
        "fc2_w": s * jax.random.normal(ks[6], (84, 120), jnp.float32),
        "fc2_b": s * jax.random.normal(ks[7], (84,), jnp.float32),
        "fc3_w": s * jax.random.normal(ks[8], (10, 84), jnp.float32),
        "fc3_b": s * jax.random.normal(ks[9], (10,), jnp.float32),
    }


if __name__ == "__main__":
    key = jax.random.PRNGKey(0)
    pkey, xkey = jax.random.split(key)
    params = init_params(pkey)
    # LeNet's fc1 hard-codes 16*5*5 = 400 features -> 3x32x32 inputs.
    x = jax.random.normal(xkey, (2, 3, 32, 32), jnp.float32)

    out = jax.jit(lenet_forward)(x, params)
    jax.block_until_ready(out)
    assert out.shape == (2, 10) and out.dtype == jnp.float32

    ref = lenet_reference(x, params)
    assert jnp.allclose(out, ref, atol=3e-2, rtol=3e-2), \
        float(jnp.max(jnp.abs(out - ref)))
    print("KERNEL_OK")
</pallas_src>

<mosaic_0001>
module attributes {stable_mosaic.version = 11 : i64} {
  func.func @conv1_pool_kernel(%arg0: i32, %arg1: memref<4x392x128xf32, #tpu.memory_space<vmem>>, %arg2: memref<128x128xf32, #tpu.memory_space<vmem>>, %arg3: memref<1x128xf32, #tpu.memory_space<vmem>>, %arg4: memref<392x128xf32, #tpu.memory_space<vmem>>) attributes {dimension_semantics = [#tpu.dimension_semantics<parallel>], iteration_bounds = array<i64: 4>, scalar_prefetch = 0 : i64, scratch_operands = 0 : i64, tpu.core_type = #tpu.core_type<tc>, window_params = [{transform_indices = @transform_0, window_bounds = array<i64: 4, 392, 128>}, {pipeline_mode = #tpu.pipeline_mode<synchronous>, transform_indices = @transform_1, window_bounds = array<i64: 128, 128>}, {pipeline_mode = #tpu.pipeline_mode<synchronous>, transform_indices = @transform_2, window_bounds = array<i64: 1, 128>}, {transform_indices = @transform_3, window_bounds = array<i64: 392, 128>}]} {
    %c0 = arith.constant 0 : index
    %c0_0 = arith.constant 0 : index
    %c0_1 = arith.constant 0 : index
    %0 = vector.load %arg1[%c0, %c0_0, %c0_1] : memref<4x392x128xf32, #tpu.memory_space<vmem>>, vector<4x392x128xf32>
    %1 = vector.shape_cast %0 : vector<4x392x128xf32> to vector<1568x128xf32>
    %c0_2 = arith.constant 0 : index
    %c0_3 = arith.constant 0 : index
    %2 = vector.load %arg2[%c0_2, %c0_3] : memref<128x128xf32, #tpu.memory_space<vmem>>, vector<128x128xf32>
    %cst = arith.constant dense<0.000000e+00> : vector<1568x128xf32>
    %3 = tpu.matmul %1, %2, %cst {dimension_numbers = #tpu.dot_dimension_numbers<[1], [0], [0], [1], [0, 0, 1, 1], [], []>} : vector<1568x128xf32>, vector<128x128xf32>, vector<1568x128xf32> -> vector<1568x128xf32>
    %4 = vector.shape_cast %3 : vector<1568x128xf32> to vector<4x392x128xf32>
    %cst_4 = arith.constant dense<0xFF800000> : vector<392x128xf32>
    %5 = vector.multi_reduction <maximumf>, %4, %cst_4 [0] : vector<4x392x128xf32> to vector<392x128xf32>
    %c0_5 = arith.constant 0 : index
    %c0_6 = arith.constant 0 : index
    %6 = vector.load %arg3[%c0_5, %c0_6] : memref<1x128xf32, #tpu.memory_space<vmem>>, vector<1x128xf32>
    %7 = vector.broadcast %6 : vector<1x128xf32> to vector<392x128xf32>
    %8 = arith.addf %5, %7 : vector<392x128xf32>
    %cst_7 = arith.constant 0.000000e+00 : f32
    %9 = vector.broadcast %cst_7 : f32 to vector<392x128xf32>
    %10 = arith.maximumf %8, %9 : vector<392x128xf32>
    %c0_8 = arith.constant 0 : index
    %c0_9 = arith.constant 0 : index
    %11 = vector.load %arg4[%c0_8, %c0_9] : memref<392x128xf32, #tpu.memory_space<vmem>>, vector<392x128xf32>
    tpu.vector_store %arg4[%c0_8, %c0_9], %10 {strides = array<i32>} : memref<392x128xf32, #tpu.memory_space<vmem>>, vector<392x128xf32>,
    return
  }
  func.func @transform_0(%arg0: i32) -> (i32, i32, i32) {
    %c0_i32 = arith.constant 0 : i32
    %c0_i32_0 = arith.constant 0 : i32
    %c0_i32_1 = arith.constant 0 : i32
    return %c0_i32, %arg0, %c0_i32_0 : i32, i32, i32
  }
  func.func @transform_1(%arg0: i32) -> (i32, i32) {
    %c0_i32 = arith.constant 0 : i32
    %c0_i32_0 = arith.constant 0 : i32
    %c0_i32_1 = arith.constant 0 : i32
    return %c0_i32, %c0_i32_0 : i32, i32
  }
  func.func @transform_2(%arg0: i32) -> (i32, i32) {
    %c0_i32 = arith.constant 0 : i32
    %c0_i32_0 = arith.constant 0 : i32
    %c0_i32_1 = arith.constant 0 : i32
    return %c0_i32, %c0_i32_0 : i32, i32
  }
  func.func @transform_3(%arg0: i32) -> (i32, i32) {
    %c0_i32 = arith.constant 0 : i32
    %c0_i32_0 = arith.constant 0 : i32
    return %arg0, %c0_i32 : i32, i32
  }
}

module attributes {stable_mosaic.version = 11 : i64} {
  func.func @conv2_mlp_kernel(%arg0: i32, %arg1: memref<4x25x8x256xf32, #tpu.memory_space<vmem>>, %arg2: memref<256x128xf32, #tpu.memory_space<vmem>>, %arg3: memref<1x128xf32, #tpu.memory_space<vmem>>, %arg4: memref<25x128x128xf32, #tpu.memory_space<vmem>>, %arg5: memref<1x128xf32, #tpu.memory_space<vmem>>, %arg6: memref<128x128xf32, #tpu.memory_space<vmem>>, %arg7: memref<1x128xf32, #tpu.memory_space<vmem>>, %arg8: memref<128x128xf32, #tpu.memory_space<vmem>>, %arg9: memref<1x128xf32, #tpu.memory_space<vmem>>, %arg10: memref<8x128xf32, #tpu.memory_space<vmem>>) attributes {dimension_semantics = [#tpu.dimension_semantics<parallel>], iteration_bounds = array<i64: 1>, scalar_prefetch = 0 : i64, scratch_operands = 0 : i64, tpu.core_type = #tpu.core_type<tc>, window_params = [{transform_indices = @transform_0, window_bounds = array<i64: 4, 25, 8, 256>}, {pipeline_mode = #tpu.pipeline_mode<synchronous>, transform_indices = @transform_1, window_bounds = array<i64: 256, 128>}, {pipeline_mode = #tpu.pipeline_mode<synchronous>, transform_indices = @transform_2, window_bounds = array<i64: 1, 128>}, {pipeline_mode = #tpu.pipeline_mode<synchronous>, transform_indices = @transform_3, window_bounds = array<i64: 25, 128, 128>}, {pipeline_mode = #tpu.pipeline_mode<synchronous>, transform_indices = @transform_4, window_bounds = array<i64: 1, 128>}, {pipeline_mode = #tpu.pipeline_mode<synchronous>, transform_indices = @transform_5, window_bounds = array<i64: 128, 128>}, {pipeline_mode = #tpu.pipeline_mode<synchronous>, transform_indices = @transform_6, window_bounds = array<i64: 1, 128>}, {pipeline_mode = #tpu.pipeline_mode<synchronous>, transform_indices = @transform_7, window_bounds = array<i64: 128, 128>}, {pipeline_mode = #tpu.pipeline_mode<synchronous>, transform_indices = @transform_8, window_bounds = array<i64: 1, 128>}, {transform_indices = @transform_9, window_bounds = array<i64: 8, 128>}]} {
    %c0 = arith.constant 0 : index
    %c0_0 = arith.constant 0 : index
    %c0_1 = arith.constant 0 : index
    %c0_2 = arith.constant 0 : index
    %0 = vector.load %arg1[%c0, %c0_0, %c0_1, %c0_2] : memref<4x25x8x256xf32, #tpu.memory_space<vmem>>, vector<4x25x8x256xf32>
    %1 = vector.shape_cast %0 : vector<4x25x8x256xf32> to vector<800x256xf32>
    %c0_3 = arith.constant 0 : index
    %c0_4 = arith.constant 0 : index
    %2 = vector.load %arg2[%c0_3, %c0_4] : memref<256x128xf32, #tpu.memory_space<vmem>>, vector<256x128xf32>
    %cst = arith.constant dense<0.000000e+00> : vector<800x128xf32>
    %3 = tpu.matmul %1, %2, %cst {dimension_numbers = #tpu.dot_dimension_numbers<[1], [0], [0], [1], [0, 0, 1, 1], [], []>} : vector<800x256xf32>, vector<256x128xf32>, vector<800x128xf32> -> vector<800x128xf32>
    %4 = vector.shape_cast %3 : vector<800x128xf32> to vector<4x25x8x128xf32>
    %cst_5 = arith.constant dense<0xFF800000> : vector<25x8x128xf32>
    %5 = vector.multi_reduction <maximumf>, %4, %cst_5 [0] : vector<4x25x8x128xf32> to vector<25x8x128xf32>
    %c0_6 = arith.constant 0 : index
    %c0_7 = arith.constant 0 : index
    %6 = vector.load %arg3[%c0_6, %c0_7] : memref<1x128xf32, #tpu.memory_space<vmem>>, vector<1x128xf32>
    %7 = vector.shape_cast %6 : vector<1x128xf32> to vector<1x1x128xf32>
    %8 = vector.broadcast %7 : vector<1x1x128xf32> to vector<25x8x128xf32>
    %9 = arith.addf %5, %8 : vector<25x8x128xf32>
    %cst_8 = arith.constant 0.000000e+00 : f32
    %10 = vector.broadcast %cst_8 : f32 to vector<25x8x128xf32>
    %11 = arith.maximumf %9, %10 : vector<25x8x128xf32>
    %cst_9 = arith.constant 0.000000e+00 : f32
    %12 = vector.broadcast %cst_9 : f32 to vector<8x128xf32>
    %13 = vector.extract_strided_slice %11 {offsets = [0, 0, 0], sizes = [1, 8, 128], strides = [1, 1, 1]} : vector<25x8x128xf32> to vector<1x8x128xf32>
    %14 = vector.shape_cast %13 : vector<1x8x128xf32> to vector<8x128xf32>
    %c0_10 = arith.constant 0 : index
    %c0_11 = arith.constant 0 : index
    %c0_12 = arith.constant 0 : index
    %15 = vector.load %arg4[%c0_10, %c0_11, %c0_12] : memref<25x128x128xf32, #tpu.memory_space<vmem>>, vector<1x128x128xf32>
    %16 = vector.shape_cast %15 : vector<1x128x128xf32> to vector<128x128xf32>
    %cst_13 = arith.constant dense<0.000000e+00> : vector<8x128xf32>
    %17 = tpu.matmul %14, %16, %cst_13 {dimension_numbers = #tpu.dot_dimension_numbers<[1], [0], [0], [1], [0, 0, 1, 1], [], []>} : vector<8x128xf32>, vector<128x128xf32>, vector<8x128xf32> -> vector<8x128xf32>
    %18 = arith.addf %12, %17 : vector<8x128xf32>
    %19 = vector.extract_strided_slice %11 {offsets = [1, 0, 0], sizes = [1, 8, 128], strides = [1, 1, 1]} : vector<25x8x128xf32> to vector<1x8x128xf32>
    %20 = vector.shape_cast %19 : vector<1x8x128xf32> to vector<8x128xf32>
    %c1 = arith.constant 1 : index
    %c0_14 = arith.constant 0 : index
    %c0_15 = arith.constant 0 : index
    %21 = vector.load %arg4[%c1, %c0_14, %c0_15] : memref<25x128x128xf32, #tpu.memory_space<vmem>>, vector<1x128x128xf32>
    %22 = vector.shape_cast %21 : vector<1x128x128xf32> to vector<128x128xf32>
    %cst_16 = arith.constant dense<0.000000e+00> : vector<8x128xf32>
    %23 = tpu.matmul %20, %22, %cst_16 {dimension_numbers = #tpu.dot_dimension_numbers<[1], [0], [0], [1], [0, 0, 1, 1], [], []>} : vector<8x128xf32>, vector<128x128xf32>, vector<8x128xf32> -> vector<8x128xf32>
    %24 = arith.addf %18, %23 : vector<8x128xf32>
    %25 = vector.extract_strided_slice %11 {offsets = [2, 0, 0], sizes = [1, 8, 128], strides = [1, 1, 1]} : vector<25x8x128xf32> to vector<1x8x128xf32>
    %26 = vector.shape_cast %25 : vector<1x8x128xf32> to vector<8x128xf32>
    %c2 = arith.constant 2 : index
    %c0_17 = arith.constant 0 : index
    %c0_18 = arith.constant 0 : index
    %27 = vector.load %arg4[%c2, %c0_17, %c0_18] : memref<25x128x128xf32, #tpu.memory_space<vmem>>, vector<1x128x128xf32>
    %28 = vector.shape_cast %27 : vector<1x128x128xf32> to vector<128x128xf32>
    %cst_19 = arith.constant dense<0.000000e+00> : vector<8x128xf32>
    %29 = tpu.matmul %26, %28, %cst_19 {dimension_numbers = #tpu.dot_dimension_numbers<[1], [0], [0], [1], [0, 0, 1, 1], [], []>} : vector<8x128xf32>, vector<128x128xf32>, vector<8x128xf32> -> vector<8x128xf32>
    %30 = arith.addf %24, %29 : vector<8x128xf32>
    %31 = vector.extract_strided_slice %11 {offsets = [3, 0, 0], sizes = [1, 8, 128], strides = [1, 1, 1]} : vector<25x8x128xf32> to vector<1x8x128xf32>
    %32 = vector.shape_cast %31 : vector<1x8x128xf32> to vector<8x128xf32>
    %c3 = arith.constant 3 : index
    %c0_20 = arith.constant 0 : index
    %c0_21 = arith.constant 0 : index
    %33 = vector.load %arg4[%c3, %c0_20, %c0_21] : memref<25x128x128xf32, #tpu.memory_space<vmem>>, vector<1x128x128xf32>
    %34 = vector.shape_cast %33 : vector<1x128x128xf32> to vector<128x128xf32>
    %cst_22 = arith.constant dense<0.000000e+00> : vector<8x128xf32>
    %35 = tpu.matmul %32, %34, %cst_22 {dimension_numbers = #tpu.dot_dimension_numbers<[1], [0], [0], [1], [0, 0, 1, 1], [], []>} : vector<8x128xf32>, vector<128x128xf32>, vector<8x128xf32> -> vector<8x128xf32>
    %36 = arith.addf %30, %35 : vector<8x128xf32>
    %37 = vector.extract_strided_slice %11 {offsets = [4, 0, 0], sizes = [1, 8, 128], strides = [1, 1, 1]} : vector<25x8x128xf32> to vector<1x8x128xf32>
    %38 = vector.shape_cast %37 : vector<1x8x128xf32> to vector<8x128xf32>
    %c4 = arith.constant 4 : index
    %c0_23 = arith.constant 0 : index
    %c0_24 = arith.constant 0 : index
    %39 = vector.load %arg4[%c4, %c0_23, %c0_24] : memref<25x128x128xf32, #tpu.memory_space<vmem>>, vector<1x128x128xf32>
    %40 = vector.shape_cast %39 : vector<1x128x128xf32> to vector<128x128xf32>
    %cst_25 = arith.constant dense<0.000000e+00> : vector<8x128xf32>
    %41 = tpu.matmul %38, %40, %cst_25 {dimension_numbers = #tpu.dot_dimension_numbers<[1], [0], [0], [1], [0, 0, 1, 1], [], []>} : vector<8x128xf32>, vector<128x128xf32>, vector<8x128xf32> -> vector<8x128xf32>
    %42 = arith.addf %36, %41 : vector<8x128xf32>
    %43 = vector.extract_strided_slice %11 {offsets = [5, 0, 0], sizes = [1, 8, 128], strides = [1, 1, 1]} : vector<25x8x128xf32> to vector<1x8x128xf32>
    %44 = vector.shape_cast %43 : vector<1x8x128xf32> to vector<8x128xf32>
    %c5 = arith.constant 5 : index
    %c0_26 = arith.constant 0 : index
    %c0_27 = arith.constant 0 : index
    %45 = vector.load %arg4[%c5, %c0_26, %c0_27] : memref<25x128x128xf32, #tpu.memory_space<vmem>>, vector<1x128x128xf32>
    %46 = vector.shape_cast %45 : vector<1x128x128xf32> to vector<128x128xf32>
    %cst_28 = arith.constant dense<0.000000e+00> : vector<8x128xf32>
    %47 = tpu.matmul %44, %46, %cst_28 {dimension_numbers = #tpu.dot_dimension_numbers<[1], [0], [0], [1], [0, 0, 1, 1], [], []>} : vector<8x128xf32>, vector<128x128xf32>, vector<8x128xf32> -> vector<8x128xf32>
    %48 = arith.addf %42, %47 : vector<8x128xf32>
    %49 = vector.extract_strided_slice %11 {offsets = [6, 0, 0], sizes = [1, 8, 128], strides = [1, 1, 1]} : vector<25x8x128xf32> to vector<1x8x128xf32>
    %50 = vector.shape_cast %49 : vector<1x8x128xf32> to vector<8x128xf32>
    %c6 = arith.constant 6 : index
    %c0_29 = arith.constant 0 : index
    %c0_30 = arith.constant 0 : index
    %51 = vector.load %arg4[%c6, %c0_29, %c0_30] : memref<25x128x128xf32, #tpu.memory_space<vmem>>, vector<1x128x128xf32>
    %52 = vector.shape_cast %51 : vector<1x128x128xf32> to vector<128x128xf32>
    %cst_31 = arith.constant dense<0.000000e+00> : vector<8x128xf32>
    %53 = tpu.matmul %50, %52, %cst_31 {dimension_numbers = #tpu.dot_dimension_numbers<[1], [0], [0], [1], [0, 0, 1, 1], [], []>} : vector<8x128xf32>, vector<128x128xf32>, vector<8x128xf32> -> vector<8x128xf32>
    %54 = arith.addf %48, %53 : vector<8x128xf32>
    %55 = vector.extract_strided_slice %11 {offsets = [7, 0, 0], sizes = [1, 8, 128], strides = [1, 1, 1]} : vector<25x8x128xf32> to vector<1x8x128xf32>
    %56 = vector.shape_cast %55 : vector<1x8x128xf32> to vector<8x128xf32>
    %c7 = arith.constant 7 : index
    %c0_32 = arith.constant 0 : index
    %c0_33 = arith.constant 0 : index
    %57 = vector.load %arg4[%c7, %c0_32, %c0_33] : memref<25x128x128xf32, #tpu.memory_space<vmem>>, vector<1x128x128xf32>
    %58 = vector.shape_cast %57 : vector<1x128x128xf32> to vector<128x128xf32>
    %cst_34 = arith.constant dense<0.000000e+00> : vector<8x128xf32>
    %59 = tpu.matmul %56, %58, %cst_34 {dimension_numbers = #tpu.dot_dimension_numbers<[1], [0], [0], [1], [0, 0, 1, 1], [], []>} : vector<8x128xf32>, vector<128x128xf32>, vector<8x128xf32> -> vector<8x128xf32>
    %60 = arith.addf %54, %59 : vector<8x128xf32>
    %61 = vector.extract_strided_slice %11 {offsets = [8, 0, 0], sizes = [1, 8, 128], strides = [1, 1, 1]} : vector<25x8x128xf32> to vector<1x8x128xf32>
    %62 = vector.shape_cast %61 : vector<1x8x128xf32> to vector<8x128xf32>
    %c8 = arith.constant 8 : index
    %c0_35 = arith.constant 0 : index
    %c0_36 = arith.constant 0 : index
    %63 = vector.load %arg4[%c8, %c0_35, %c0_36] : memref<25x128x128xf32, #tpu.memory_space<vmem>>, vector<1x128x128xf32>
    %64 = vector.shape_cast %63 : vector<1x128x128xf32> to vector<128x128xf32>
    %cst_37 = arith.constant dense<0.000000e+00> : vector<8x128xf32>
    %65 = tpu.matmul %62, %64, %cst_37 {dimension_numbers = #tpu.dot_dimension_numbers<[1], [0], [0], [1], [0, 0, 1, 1], [], []>} : vector<8x128xf32>, vector<128x128xf32>, vector<8x128xf32> -> vector<8x128xf32>
    %66 = arith.addf %60, %65 : vector<8x128xf32>
    %67 = vector.extract_strided_slice %11 {offsets = [9, 0, 0], sizes = [1, 8, 128], strides = [1, 1, 1]} : vector<25x8x128xf32> to vector<1x8x128xf32>
    %68 = vector.shape_cast %67 : vector<1x8x128xf32> to vector<8x128xf32>
    %c9 = arith.constant 9 : index
    %c0_38 = arith.constant 0 : index
    %c0_39 = arith.constant 0 : index
    %69 = vector.load %arg4[%c9, %c0_38, %c0_39] : memref<25x128x128xf32, #tpu.memory_space<vmem>>, vector<1x128x128xf32>
    %70 = vector.shape_cast %69 : vector<1x128x128xf32> to vector<128x128xf32>
    %cst_40 = arith.constant dense<0.000000e+00> : vector<8x128xf32>
    %71 = tpu.matmul %68, %70, %cst_40 {dimension_numbers = #tpu.dot_dimension_numbers<[1], [0], [0], [1], [0, 0, 1, 1], [], []>} : vector<8x128xf32>, vector<128x128xf32>, vector<8x128xf32> -> vector<8x128xf32>
    %72 = arith.addf %66, %71 : vector<8x128xf32>
    %73 = vector.extract_strided_slice %11 {offsets = [10, 0, 0], sizes = [1, 8, 128], strides = [1, 1, 1]} : vector<25x8x128xf32> to vector<1x8x128xf32>
    %74 = vector.shape_cast %73 : vector<1x8x128xf32> to vector<8x128xf32>
    %c10 = arith.constant 10 : index
    %c0_41 = arith.constant 0 : index
    %c0_42 = arith.constant 0 : index
    %75 = vector.load %arg4[%c10, %c0_41, %c0_42] : memref<25x128x128xf32, #tpu.memory_space<vmem>>, vector<1x128x128xf32>
    %76 = vector.shape_cast %75 : vector<1x128x128xf32> to vector<128x128xf32>
    %cst_43 = arith.constant dense<0.000000e+00> : vector<8x128xf32>
    %77 = tpu.matmul %74, %76, %cst_43 {dimension_numbers = #tpu.dot_dimension_numbers<[1], [0], [0], [1], [0, 0, 1, 1], [], []>} : vector<8x128xf32>, vector<128x128xf32>, vector<8x128xf32> -> vector<8x128xf32>
    %78 = arith.addf %72, %77 : vector<8x128xf32>
    %79 = vector.extract_strided_slice %11 {offsets = [11, 0, 0], sizes = [1, 8, 128], strides = [1, 1, 1]} : vector<25x8x128xf32> to vector<1x8x128xf32>
    %80 = vector.shape_cast %79 : vector<1x8x128xf32> to vector<8x128xf32>
    %c11 = arith.constant 11 : index
    %c0_44 = arith.constant 0 : index
    %c0_45 = arith.constant 0 : index
    %81 = vector.load %arg4[%c11, %c0_44, %c0_45] : memref<25x128x128xf32, #tpu.memory_space<vmem>>, vector<1x128x128xf32>
    %82 = vector.shape_cast %81 : vector<1x128x128xf32> to vector<128x128xf32>
    %cst_46 = arith.constant dense<0.000000e+00> : vector<8x128xf32>
    %83 = tpu.matmul %80, %82, %cst_46 {dimension_numbers = #tpu.dot_dimension_numbers<[1], [0], [0], [1], [0, 0, 1, 1], [], []>} : vector<8x128xf32>, vector<128x128xf32>, vector<8x128xf32> -> vector<8x128xf32>
    %84 = arith.addf %78, %83 : vector<8x128xf32>
    %85 = vector.extract_strided_slice %11 {offsets = [12, 0, 0], sizes = [1, 8, 128], strides = [1, 1, 1]} : vector<25x8x128xf32> to vector<1x8x128xf32>
    %86 = vector.shape_cast %85 : vector<1x8x128xf32> to vector<8x128xf32>
    %c12 = arith.constant 12 : index
    %c0_47 = arith.constant 0 : index
    %c0_48 = arith.constant 0 : index
    %87 = vector.load %arg4[%c12, %c0_47, %c0_48] : memref<25x128x128xf32, #tpu.memory_space<vmem>>, vector<1x128x128xf32>
    %88 = vector.shape_cast %87 : vector<1x128x128xf32> to vector<128x128xf32>
    %cst_49 = arith.constant dense<0.000000e+00> : vector<8x128xf32>
    %89 = tpu.matmul %86, %88, %cst_49 {dimension_numbers = #tpu.dot_dimension_numbers<[1], [0], [0], [1], [0, 0, 1, 1], [], []>} : vector<8x128xf32>, vector<128x128xf32>, vector<8x128xf32> -> vector<8x128xf32>
    %90 = arith.addf %84, %89 : vector<8x128xf32>
    %91 = vector.extract_strided_slice %11 {offsets = [13, 0, 0], sizes = [1, 8, 128], strides = [1, 1, 1]} : vector<25x8x128xf32> to vector<1x8x128xf32>
    %92 = vector.shape_cast %91 : vector<1x8x128xf32> to vector<8x128xf32>
    %c13 = arith.constant 13 : index
    %c0_50 = arith.constant 0 : index
    %c0_51 = arith.constant 0 : index
    %93 = vector.load %arg4[%c13, %c0_50, %c0_51] : memref<25x128x128xf32, #tpu.memory_space<vmem>>, vector<1x128x128xf32>
    %94 = vector.shape_cast %93 : vector<1x128x128xf32> to vector<128x128xf32>
    %cst_52 = arith.constant dense<0.000000e+00> : vector<8x128xf32>
    %95 = tpu.matmul %92, %94, %cst_52 {dimension_numbers = #tpu.dot_dimension_numbers<[1], [0], [0], [1], [0, 0, 1, 1], [], []>} : vector<8x128xf32>, vector<128x128xf32>, vector<8x128xf32> -> vector<8x128xf32>
    %96 = arith.addf %90, %95 : vector<8x128xf32>
    %97 = vector.extract_strided_slice %11 {offsets = [14, 0, 0], sizes = [1, 8, 128], strides = [1, 1, 1]} : vector<25x8x128xf32> to vector<1x8x128xf32>
    %98 = vector.shape_cast %97 : vector<1x8x128xf32> to vector<8x128xf32>
    %c14 = arith.constant 14 : index
    %c0_53 = arith.constant 0 : index
    %c0_54 = arith.constant 0 : index
    %99 = vector.load %arg4[%c14, %c0_53, %c0_54] : memref<25x128x128xf32, #tpu.memory_space<vmem>>, vector<1x128x128xf32>
    %100 = vector.shape_cast %99 : vector<1x128x128xf32> to vector<128x128xf32>
    %cst_55 = arith.constant dense<0.000000e+00> : vector<8x128xf32>
    %101 = tpu.matmul %98, %100, %cst_55 {dimension_numbers = #tpu.dot_dimension_numbers<[1], [0], [0], [1], [0, 0, 1, 1], [], []>} : vector<8x128xf32>, vector<128x128xf32>, vector<8x128xf32> -> vector<8x128xf32>
    %102 = arith.addf %96, %101 : vector<8x128xf32>
    %103 = vector.extract_strided_slice %11 {offsets = [15, 0, 0], sizes = [1, 8, 128], strides = [1, 1, 1]} : vector<25x8x128xf32> to vector<1x8x128xf32>
    %104 = vector.shape_cast %103 : vector<1x8x128xf32> to vector<8x128xf32>
    %c15 = arith.constant 15 : index
    %c0_56 = arith.constant 0 : index
    %c0_57 = arith.constant 0 : index
    %105 = vector.load %arg4[%c15, %c0_56, %c0_57] : memref<25x128x128xf32, #tpu.memory_space<vmem>>, vector<1x128x128xf32>
    %106 = vector.shape_cast %105 : vector<1x128x128xf32> to vector<128x128xf32>
    %cst_58 = arith.constant dense<0.000000e+00> : vector<8x128xf32>
    %107 = tpu.matmul %104, %106, %cst_58 {dimension_numbers = #tpu.dot_dimension_numbers<[1], [0], [0], [1], [0, 0, 1, 1], [], []>} : vector<8x128xf32>, vector<128x128xf32>, vector<8x128xf32> -> vector<8x128xf32>
    %108 = arith.addf %102, %107 : vector<8x128xf32>
    %109 = vector.extract_strided_slice %11 {offsets = [16, 0, 0], sizes = [1, 8, 128], strides = [1, 1, 1]} : vector<25x8x128xf32> to vector<1x8x128xf32>
    %110 = vector.shape_cast %109 : vector<1x8x128xf32> to vector<8x128xf32>
    %c16 = arith.constant 16 : index
    %c0_59 = arith.constant 0 : index
    %c0_60 = arith.constant 0 : index
    %111 = vector.load %arg4[%c16, %c0_59, %c0_60] : memref<25x128x128xf32, #tpu.memory_space<vmem>>, vector<1x128x128xf32>
    %112 = vector.shape_cast %111 : vector<1x128x128xf32> to vector<128x128xf32>
    %cst_61 = arith.constant dense<0.000000e+00> : vector<8x128xf32>
    %113 = tpu.matmul %110, %112, %cst_61 {dimension_numbers = #tpu.dot_dimension_numbers<[1], [0], [0], [1], [0, 0, 1, 1], [], []>} : vector<8x128xf32>, vector<128x128xf32>, vector<8x128xf32> -> vector<8x128xf32>
    %114 = arith.addf %108, %113 : vector<8x128xf32>
    %115 = vector.extract_strided_slice %11 {offsets = [17, 0, 0], sizes = [1, 8, 128], strides = [1, 1, 1]} : vector<25x8x128xf32> to vector<1x8x128xf32>
    %116 = vector.shape_cast %115 : vector<1x8x128xf32> to vector<8x128xf32>
    %c17 = arith.constant 17 : index
    %c0_62 = arith.constant 0 : index
    %c0_63 = arith.constant 0 : index
    %117 = vector.load %arg4[%c17, %c0_62, %c0_63] : memref<25x128x128xf32, #tpu.memory_space<vmem>>, vector<1x128x128xf32>
    %118 = vector.shape_cast %117 : vector<1x128x128xf32> to vector<128x128xf32>
    %cst_64 = arith.constant dense<0.000000e+00> : vector<8x128xf32>
    %119 = tpu.matmul %116, %118, %cst_64 {dimension_numbers = #tpu.dot_dimension_numbers<[1], [0], [0], [1], [0, 0, 1, 1], [], []>} : vector<8x128xf32>, vector<128x128xf32>, vector<8x128xf32> -> vector<8x128xf32>
    %120 = arith.addf %114, %119 : vector<8x128xf32>
    %121 = vector.extract_strided_slice %11 {offsets = [18, 0, 0], sizes = [1, 8, 128], strides = [1, 1, 1]} : vector<25x8x128xf32> to vector<1x8x128xf32>
    %122 = vector.shape_cast %121 : vector<1x8x128xf32> to vector<8x128xf32>
    %c18 = arith.constant 18 : index
    %c0_65 = arith.constant 0 : index
    %c0_66 = arith.constant 0 : index
    %123 = vector.load %arg4[%c18, %c0_65, %c0_66] : memref<25x128x128xf32, #tpu.memory_space<vmem>>, vector<1x128x128xf32>
    %124 = vector.shape_cast %123 : vector<1x128x128xf32> to vector<128x128xf32>
    %cst_67 = arith.constant dense<0.000000e+00> : vector<8x128xf32>
    %125 = tpu.matmul %122, %124, %cst_67 {dimension_numbers = #tpu.dot_dimension_numbers<[1], [0], [0], [1], [0, 0, 1, 1], [], []>} : vector<8x128xf32>, vector<128x128xf32>, vector<8x128xf32> -> vector<8x128xf32>
    %126 = arith.addf %120, %125 : vector<8x128xf32>
    %127 = vector.extract_strided_slice %11 {offsets = [19, 0, 0], sizes = [1, 8, 128], strides = [1, 1, 1]} : vector<25x8x128xf32> to vector<1x8x128xf32>
    %128 = vector.shape_cast %127 : vector<1x8x128xf32> to vector<8x128xf32>
    %c19 = arith.constant 19 : index
    %c0_68 = arith.constant 0 : index
    %c0_69 = arith.constant 0 : index
    %129 = vector.load %arg4[%c19, %c0_68, %c0_69] : memref<25x128x128xf32, #tpu.memory_space<vmem>>, vector<1x128x128xf32>
    %130 = vector.shape_cast %129 : vector<1x128x128xf32> to vector<128x128xf32>
    %cst_70 = arith.constant dense<0.000000e+00> : vector<8x128xf32>
    %131 = tpu.matmul %128, %130, %cst_70 {dimension_numbers = #tpu.dot_dimension_numbers<[1], [0], [0], [1], [0, 0, 1, 1], [], []>} : vector<8x128xf32>, vector<128x128xf32>, vector<8x128xf32> -> vector<8x128xf32>
    %132 = arith.addf %126, %131 : vector<8x128xf32>
    %133 = vector.extract_strided_slice %11 {offsets = [20, 0, 0], sizes = [1, 8, 128], strides = [1, 1, 1]} : vector<25x8x128xf32> to vector<1x8x128xf32>
    %134 = vector.shape_cast %133 : vector<1x8x128xf32> to vector<8x128xf32>
    %c20 = arith.constant 20 : index
    %c0_71 = arith.constant 0 : index
    %c0_72 = arith.constant 0 : index
    %135 = vector.load %arg4[%c20, %c0_71, %c0_72] : memref<25x128x128xf32, #tpu.memory_space<vmem>>, vector<1x128x128xf32>
    %136 = vector.shape_cast %135 : vector<1x128x128xf32> to vector<128x128xf32>
    %cst_73 = arith.constant dense<0.000000e+00> : vector<8x128xf32>
    %137 = tpu.matmul %134, %136, %cst_73 {dimension_numbers = #tpu.dot_dimension_numbers<[1], [0], [0], [1], [0, 0, 1, 1], [], []>} : vector<8x128xf32>, vector<128x128xf32>, vector<8x128xf32> -> vector<8x128xf32>
    %138 = arith.addf %132, %137 : vector<8x128xf32>
    %139 = vector.extract_strided_slice %11 {offsets = [21, 0, 0], sizes = [1, 8, 128], strides = [1, 1, 1]} : vector<25x8x128xf32> to vector<1x8x128xf32>
    %140 = vector.shape_cast %139 : vector<1x8x128xf32> to vector<8x128xf32>
    %c21 = arith.constant 21 : index
    %c0_74 = arith.constant 0 : index
    %c0_75 = arith.constant 0 : index
    %141 = vector.load %arg4[%c21, %c0_74, %c0_75] : memref<25x128x128xf32, #tpu.memory_space<vmem>>, vector<1x128x128xf32>
    %142 = vector.shape_cast %141 : vector<1x128x128xf32> to vector<128x128xf32>
    %cst_76 = arith.constant dense<0.000000e+00> : vector<8x128xf32>
    %143 = tpu.matmul %140, %142, %cst_76 {dimension_numbers = #tpu.dot_dimension_numbers<[1], [0], [0], [1], [0, 0, 1, 1], [], []>} : vector<8x128xf32>, vector<128x128xf32>, vector<8x128xf32> -> vector<8x128xf32>
    %144 = arith.addf %138, %143 : vector<8x128xf32>
    %145 = vector.extract_strided_slice %11 {offsets = [22, 0, 0], sizes = [1, 8, 128], strides = [1, 1, 1]} : vector<25x8x128xf32> to vector<1x8x128xf32>
    %146 = vector.shape_cast %145 : vector<1x8x128xf32> to vector<8x128xf32>
    %c22 = arith.constant 22 : index
    %c0_77 = arith.constant 0 : index
    %c0_78 = arith.constant 0 : index
    %147 = vector.load %arg4[%c22, %c0_77, %c0_78] : memref<25x128x128xf32, #tpu.memory_space<vmem>>, vector<1x128x128xf32>
    %148 = vector.shape_cast %147 : vector<1x128x128xf32> to vector<128x128xf32>
    %cst_79 = arith.constant dense<0.000000e+00> : vector<8x128xf32>
    %149 = tpu.matmul %146, %148, %cst_79 {dimension_numbers = #tpu.dot_dimension_numbers<[1], [0], [0], [1], [0, 0, 1, 1], [], []>} : vector<8x128xf32>, vector<128x128xf32>, vector<8x128xf32> -> vector<8x128xf32>
    %150 = arith.addf %144, %149 : vector<8x128xf32>
    %151 = vector.extract_strided_slice %11 {offsets = [23, 0, 0], sizes = [1, 8, 128], strides = [1, 1, 1]} : vector<25x8x128xf32> to vector<1x8x128xf32>
    %152 = vector.shape_cast %151 : vector<1x8x128xf32> to vector<8x128xf32>
    %c23 = arith.constant 23 : index
    %c0_80 = arith.constant 0 : index
    %c0_81 = arith.constant 0 : index
    %153 = vector.load %arg4[%c23, %c0_80, %c0_81] : memref<25x128x128xf32, #tpu.memory_space<vmem>>, vector<1x128x128xf32>
    %154 = vector.shape_cast %153 : vector<1x128x128xf32> to vector<128x128xf32>
    %cst_82 = arith.constant dense<0.000000e+00> : vector<8x128xf32>
    %155 = tpu.matmul %152, %154, %cst_82 {dimension_numbers = #tpu.dot_dimension_numbers<[1], [0], [0], [1], [0, 0, 1, 1], [], []>} : vector<8x128xf32>, vector<128x128xf32>, vector<8x128xf32> -> vector<8x128xf32>
    %156 = arith.addf %150, %155 : vector<8x128xf32>
    %157 = vector.extract_strided_slice %11 {offsets = [24, 0, 0], sizes = [1, 8, 128], strides = [1, 1, 1]} : vector<25x8x128xf32> to vector<1x8x128xf32>
    %158 = vector.shape_cast %157 : vector<1x8x128xf32> to vector<8x128xf32>
    %c24 = arith.constant 24 : index
    %c0_83 = arith.constant 0 : index
    %c0_84 = arith.constant 0 : index
    %159 = vector.load %arg4[%c24, %c0_83, %c0_84] : memref<25x128x128xf32, #tpu.memory_space<vmem>>, vector<1x128x128xf32>
    %160 = vector.shape_cast %159 : vector<1x128x128xf32> to vector<128x128xf32>
    %cst_85 = arith.constant dense<0.000000e+00> : vector<8x128xf32>
    %161 = tpu.matmul %158, %160, %cst_85 {dimension_numbers = #tpu.dot_dimension_numbers<[1], [0], [0], [1], [0, 0, 1, 1], [], []>} : vector<8x128xf32>, vector<128x128xf32>, vector<8x128xf32> -> vector<8x128xf32>
    %162 = arith.addf %156, %161 : vector<8x128xf32>
    %c0_86 = arith.constant 0 : index
    %c0_87 = arith.constant 0 : index
    %163 = vector.load %arg5[%c0_86, %c0_87] : memref<1x128xf32, #tpu.memory_space<vmem>>, vector<1x128xf32>
    %164 = vector.broadcast %163 : vector<1x128xf32> to vector<8x128xf32>
    %165 = arith.addf %162, %164 : vector<8x128xf32>
    %cst_88 = arith.constant 0.000000e+00 : f32
    %166 = vector.broadcast %cst_88 : f32 to vector<8x128xf32>
    %167 = arith.maximumf %165, %166 : vector<8x128xf32>
    %c0_89 = arith.constant 0 : index
    %c0_90 = arith.constant 0 : index
    %168 = vector.load %arg6[%c0_89, %c0_90] : memref<128x128xf32, #tpu.memory_space<vmem>>, vector<128x128xf32>
    %cst_91 = arith.constant dense<0.000000e+00> : vector<8x128xf32>
    %169 = tpu.matmul %167, %168, %cst_91 {dimension_numbers = #tpu.dot_dimension_numbers<[1], [0], [0], [1], [0, 0, 1, 1], [], []>} : vector<8x128xf32>, vector<128x128xf32>, vector<8x128xf32> -> vector<8x128xf32>
    %c0_92 = arith.constant 0 : index
    %c0_93 = arith.constant 0 : index
    %170 = vector.load %arg7[%c0_92, %c0_93] : memref<1x128xf32, #tpu.memory_space<vmem>>, vector<1x128xf32>
    %171 = vector.broadcast %170 : vector<1x128xf32> to vector<8x128xf32>
    %172 = arith.addf %169, %171 : vector<8x128xf32>
    %cst_94 = arith.constant 0.000000e+00 : f32
    %173 = vector.broadcast %cst_94 : f32 to vector<8x128xf32>
    %174 = arith.maximumf %172, %173 : vector<8x128xf32>
    %c0_95 = arith.constant 0 : index
    %c0_96 = arith.constant 0 : index
    %175 = vector.load %arg8[%c0_95, %c0_96] : memref<128x128xf32, #tpu.memory_space<vmem>>, vector<128x128xf32>
    %cst_97 = arith.constant dense<0.000000e+00> : vector<8x128xf32>
    %176 = tpu.matmul %174, %175, %cst_97 {dimension_numbers = #tpu.dot_dimension_numbers<[1], [0], [0], [1], [0, 0, 1, 1], [], []>} : vector<8x128xf32>, vector<128x128xf32>, vector<8x128xf32> -> vector<8x128xf32>
    %c0_98 = arith.constant 0 : index
    %c0_99 = arith.constant 0 : index
    %177 = vector.load %arg9[%c0_98, %c0_99] : memref<1x128xf32, #tpu.memory_space<vmem>>, vector<1x128xf32>
    %178 = vector.broadcast %177 : vector<1x128xf32> to vector<8x128xf32>
    %179 = arith.addf %176, %178 : vector<8x128xf32>
    %c0_100 = arith.constant 0 : index
    %c0_101 = arith.constant 0 : index
    %180 = vector.load %arg10[%c0_100, %c0_101] : memref<8x128xf32, #tpu.memory_space<vmem>>, vector<8x128xf32>
    tpu.vector_store %arg10[%c0_100, %c0_101], %179 {strides = array<i32>} : memref<8x128xf32, #tpu.memory_space<vmem>>, vector<8x128xf32>,
    return
  }
  func.func @transform_0(%arg0: i32) -> (i32, i32, i32, i32) {
    %c0_i32 = arith.constant 0 : i32
    %c0_i32_0 = arith.constant 0 : i32
    %c0_i32_1 = arith.constant 0 : i32
    %c0_i32_2 = arith.constant 0 : i32
    return %c0_i32, %c0_i32_0, %arg0, %c0_i32_1 : i32, i32, i32, i32
  }
  func.func @transform_1(%arg0: i32) -> (i32, i32) {
    %c0_i32 = arith.constant 0 : i32
    %c0_i32_0 = arith.constant 0 : i32
    %c0_i32_1 = arith.constant 0 : i32
    return %c0_i32, %c0_i32_0 : i32, i32
  }
  func.func @transform_2(%arg0: i32) -> (i32, i32) {
    %c0_i32 = arith.constant 0 : i32
    %c0_i32_0 = arith.constant 0 : i32
    %c0_i32_1 = arith.constant 0 : i32
    return %c0_i32, %c0_i32_0 : i32, i32
  }
  func.func @transform_3(%arg0: i32) -> (i32, i32, i32) {
    %c0_i32 = arith.constant 0 : i32
    %c0_i32_0 = arith.constant 0 : i32
    %c0_i32_1 = arith.constant 0 : i32
    %c0_i32_2 = arith.constant 0 : i32
    return %c0_i32, %c0_i32_0, %c0_i32_1 : i32, i32, i32
  }
  func.func @transform_4(%arg0: i32) -> (i32, i32) {
    %c0_i32 = arith.constant 0 : i32
    %c0_i32_0 = arith.constant 0 : i32
    %c0_i32_1 = arith.constant 0 : i32
    return %c0_i32, %c0_i32_0 : i32, i32
  }
  func.func @transform_5(%arg0: i32) -> (i32, i32) {
    %c0_i32 = arith.constant 0 : i32
    %c0_i32_0 = arith.constant 0 : i32
    %c0_i32_1 = arith.constant 0 : i32
    return %c0_i32, %c0_i32_0 : i32, i32
  }
  func.func @transform_6(%arg0: i32) -> (i32, i32) {
    %c0_i32 = arith.constant 0 : i32
    %c0_i32_0 = arith.constant 0 : i32
    %c0_i32_1 = arith.constant 0 : i32
    return %c0_i32, %c0_i32_0 : i32, i32
  }
  func.func @transform_7(%arg0: i32) -> (i32, i32) {
    %c0_i32 = arith.constant 0 : i32
    %c0_i32_0 = arith.constant 0 : i32
    %c0_i32_1 = arith.constant 0 : i32
    return %c0_i32, %c0_i32_0 : i32, i32
  }
  func.func @transform_8(%arg0: i32) -> (i32, i32) {
    %c0_i32 = arith.constant 0 : i32
    %c0_i32_0 = arith.constant 0 : i32
    %c0_i32_1 = arith.constant 0 : i32
    return %c0_i32, %c0_i32_0 : i32, i32
  }
  func.func @transform_9(%arg0: i32) -> (i32, i32) {
    %c0_i32 = arith.constant 0 : i32
    %c0_i32_0 = arith.constant 0 : i32
    return %arg0, %c0_i32 : i32, i32
  }
}

</mosaic_0001>

<llo_original>
// kernel: lenet_forward.2
$region0: #{lenet_forward.2}
  #allocation0 [shape = 'u32[]', space=smem, size = 0x4, offset = 0x4, fixed_abs, tag = 'smem constant byte address 0x4 - core index']
  #allocation1 [shape = 'u32[144,128]{1,0:T(1,128)}', space=vmem, size = 0x12000, scoped, tag = 'internal scratch']
  %s0 = inlined_call_operand.vmem [shape: f32[4,1568,128], index: 0, kind: input, shape index: {}]
  %s1 = inlined_call_operand.vmem [shape: f32[128,128], index: 1, kind: input, shape index: {}]
  %s2 = inlined_call_operand.vmem [shape: f32[1,128], index: 2, kind: input, shape index: {}]
  %s3 = inlined_call_operand.vmem [shape: f32[1568,128], index: 3, kind: output, shape index: {}]
  %s4 = sld [smem:[#allocation0]]
  $region83: #{lenet_forward.2} parent=0
    _
  %s6 = ssub.s32 1, %s4
  %s7 = scalar_select 0, %s6, %s4
  $region1: #{lenet_forward.2} parent=0
    #allocation2 [shape = 'u8[1605632]{0}', space=vmem, size = 0x188000, scoped, tag = 'input window, operand 0']
    loop: start=0, step=1, limit=6
    $region2: #{lenet_forward.2} parent=1 // loop_pre_header
      _
    $region3: #{lenet_forward.2} parent=1 // loop_header
      %s9 = sphi 0, %s13
      %p10 = scmp.ge.s32.totalorder %s9, 6
      %s19 = sphi 0, %s21
      %s22 = sphi 0, %s19
      %s23 = sphi 0, %s22
      %s39 = sphi 0, %s23
      %s43 = sphi 0, %s43
      %s45 = sphi 0, %s43
      %s46 = sphi 0, %s45
      %s60 = sphi 0, %s46
      %s64 = sphi 0, %s64
      %s66 = sphi 0, %s64
      %s67 = sphi 0, %s66
      %s81 = sphi 0, %s67
      %s87 = sphi 0, %s89
      %s90 = sphi 0, %s87
      %s91 = sphi 0, %s90
      %s107 = sphi 0, %s91
    $region4: #{lenet_forward.2} parent=1 // loop_header_branch
      %12 = sbr.rel (%p10) target = $region8
    $region5: #{lenet_forward.2} parent=1 // loop_body
      %s14 = ssub.s32 %s9, 1
      %s15 = ssub.s32 %s9, 2
      %s16 = sadd.s32 %s9, 1
      %s17 = ssub.s32 %s9, %s16
      %p18 = scmp.eq.s32.totalorder %s17, 0
      %s20 = sadd.s32 %s19, 1
      %s21 = scalar_select %p18, %s19, %s20
      %p24 = pneg %p18
      %p25 = scmp.eq.s32.totalorder %s9, 3
      %p26 = por %p24, %p25
      %p27 = scmp.ne.s32.totalorder %s19, %s22
      %p28 = scmp.eq.s32.totalorder %s9, 0
      %p29 = por %p27, %p28
      %p30 = scmp.ne.s32.totalorder %s19, %s22
      %p31 = scmp.eq.s32.totalorder %s14, 3
      %p32 = por %p30, %p31
      %p33 = scmp.ne.s32.totalorder %s22, %s23
      %p34 = scmp.eq.s32.totalorder %s14, 0
      %p35 = por %p33, %p34
      %p36 = scmp.ne.s32.totalorder %s22, %s23
      %p37 = scmp.eq.s32.totalorder %s15, 3
      %p38 = por %p36, %p37
      %p40 = scmp.ne.s32.totalorder %s23, %s39
      %p41 = scmp.eq.s32.totalorder %s15, 0
      %p42 = por %p40, %p41
      %s44 = sadd.s32 %s43, 1
      %p47 = scmp.eq.s32.totalorder %s9, 3
      %p48 = scmp.ne.s32.totalorder %s43, %s45
      %p49 = scmp.eq.s32.totalorder %s9, 0
      %p50 = por %p48, %p49
      %p51 = scmp.ne.s32.totalorder %s43, %s45
      %p52 = scmp.eq.s32.totalorder %s14, 3
      %p53 = por %p51, %p52
      %p54 = scmp.ne.s32.totalorder %s45, %s46
      %p55 = scmp.eq.s32.totalorder %s14, 0
      %p56 = por %p54, %p55
      %p57 = scmp.ne.s32.totalorder %s45, %s46
      %p58 = scmp.eq.s32.totalorder %s15, 3
      %p59 = por %p57, %p58
      %p61 = scmp.ne.s32.totalorder %s46, %s60
      %p62 = scmp.eq.s32.totalorder %s15, 0
      %p63 = por %p61, %p62
      %s65 = sadd.s32 %s64, 1
      %p68 = scmp.eq.s32.totalorder %s9, 3
      %p69 = scmp.ne.s32.totalorder %s64, %s66
      %p70 = scmp.eq.s32.totalorder %s9, 0
      %p71 = por %p69, %p70
      %p72 = scmp.ne.s32.totalorder %s64, %s66
      %p73 = scmp.eq.s32.totalorder %s14, 3
      %p74 = por %p72, %p73
      %p75 = scmp.ne.s32.totalorder %s66, %s67
      %p76 = scmp.eq.s32.totalorder %s14, 0
      %p77 = por %p75, %p76
      %p78 = scmp.ne.s32.totalorder %s66, %s67
      %p79 = scmp.eq.s32.totalorder %s15, 3
      %p80 = por %p78, %p79
      %p82 = scmp.ne.s32.totalorder %s67, %s81
      %p83 = scmp.eq.s32.totalorder %s15, 0
      %p84 = por %p82, %p83
      %s85 = ssub.s32 %s9, %s16
      %p86 = scmp.eq.s32.totalorder %s85, 0
      %s88 = sadd.s32 %s87, 1
      %s89 = scalar_select %p86, %s87, %s88
      %p92 = pneg %p86
      %p93 = scmp.eq.s32.totalorder %s9, 3
      %p94 = por %p92, %p93
      %p95 = scmp.ne.s32.totalorder %s87, %s90
      %p96 = scmp.eq.s32.totalorder %s9, 0
      %p97 = por %p95, %p96
      %p98 = scmp.ne.s32.totalorder %s87, %s90
      %p99 = scmp.eq.s32.totalorder %s14, 3
      %p100 = por %p98, %p99
      %p101 = scmp.ne.s32.totalorder %s90, %s91
      %p102 = scmp.eq.s32.totalorder %s14, 0
      %p103 = por %p101, %p102
      %p104 = scmp.ne.s32.totalorder %s90, %s91
      %p105 = scmp.eq.s32.totalorder %s15, 3
      %p106 = por %p104, %p105
      %p108 = scmp.ne.s32.totalorder %s91, %s107
      %p109 = scmp.eq.s32.totalorder %s15, 0
      %p110 = por %p108, %p109
      %p111 = scmp.le.s32.totalorder 1, %s9
      %p112 = scmp.lt.s32.totalorder %s9, 5
      %p113 = pnand %p111, %p112
      %p114 = pneg %p113
      // Predicated region
      $region9: #{lenet_forward.2} parent=5 // pred_check
        _
      $region10: #{lenet_forward.2} parent=5 // pred_check_branch
        %116 = sbr.rel (%p113) target = $region12
      $region11: #{lenet_forward.2} parent=5 // pred_region
        %s117 = ssub.s32 %s9, 1
        // Predicated region
        $region13: #{lenet_forward.2} parent=11 // pred_check
          %p118 = pneg %p56
        $region14: #{lenet_forward.2} parent=11 // pred_check_branch
          %120 = sbr.rel (%p118) target = $region16
        $region15: #{lenet_forward.2} parent=11 // pred_region
          _
        $region16: #{lenet_forward.2} parent=11 // pred_fallthru
          _
        // Predicated region
        $region17: #{lenet_forward.2} parent=11 // pred_check
          %p121 = pneg %p77
        $region18: #{lenet_forward.2} parent=11 // pred_check_branch
          %123 = sbr.rel (%p121) target = $region20
        $region19: #{lenet_forward.2} parent=11 // pred_region
          _
        $region20: #{lenet_forward.2} parent=11 // pred_fallthru
          _
      $region12: #{lenet_forward.2} parent=5 // pred_fallthru
        _
      %p124 = scmp.lt.s32.totalorder %s9, 4
      // Predicated region
      $region21: #{lenet_forward.2} parent=5 // pred_check
        %p125 = pneg %p124
      $region22: #{lenet_forward.2} parent=5 // pred_check_branch
        %127 = sbr.rel (%p125) target = $region24
      $region23: #{lenet_forward.2} parent=5 // pred_region
        // Predicated region
        $region25: #{lenet_forward.2} parent=23 // pred_check
          %p128 = pneg %p29
        $region26: #{lenet_forward.2} parent=23 // pred_check_branch
          %130 = sbr.rel (%p128) target = $region28
        $region27: #{lenet_forward.2} parent=23 // pred_region
          %s131 = sand.u32 %s19, 1
          %s132 = sand.u32 %s19, 1
          %s133 = smul.addr %s132, 1568
          %s134 = scalar_lea.vmem [#allocation2], %s133
          %s135 = smul.u32 49, %s9
          %s136 = smul.addr %s135, 8
          %s137 = scalar_lea.vmem %s0, %s136
          // Predicated region
          $region29: #{lenet_forward.2} parent=27 // pred_check
            _
          $region30: #{lenet_forward.2} parent=27 // pred_check_branch
            %139 = sbr.rel (0) target = $region32
          $region31: #{lenet_forward.2} parent=27 // pred_region
            // Predicated region
            $region33: #{lenet_forward.2} parent=31 // pred_check
              _
            $region34: #{lenet_forward.2} parent=31 // pred_check_branch
              %141 = sbr.rel (0) target = $region36
            $region35: #{lenet_forward.2} parent=31 // pred_region
              // Predicated region
              $region48: #{lenet_forward.2} parent=35 // pred_check
                _
              $region49: #{lenet_forward.2} parent=35 // pred_check_branch
                %547 = sbr.rel (0) target = $region51
              $region50: #{lenet_forward.2} parent=35 // pred_region
                loop: start=0, step=1, limit=1
                $region52: #{lenet_forward.2} parent=50 // loop_pre_header
                  _
                $region53: #{lenet_forward.2} parent=50 // loop_header
                  %s549 = sphi 0, %s553
                  %p550 = scmp.ge.s32.totalorder %s549, 1
                  %s554 = sphi %s137, %s137
                  %s555 = sphi %s134, %s134
                $region54: #{lenet_forward.2} parent=50 // loop_header_branch
                  %552 = sbr.rel (%p550) target = $region58
                $region55: #{lenet_forward.2} parent=50 // loop_body
                  %v556 = vld [vmem:[%s554] sm:$0xff]
                  %557 = vst [vmem:[%s555] sm:$0xff] %v556
                  %v558 = vld [vmem:[%s554 + $0x8] sm:$0xff]
                  %559 = vst [vmem:[%s555 + $0x8] sm:$0xff] %v558
                  %v560 = vld [vmem:[%s554 + $0x10] sm:$0xff]
                  %561 = vst [vmem:[%s555 + $0x10] sm:$0xff] %v560
                  %v562 = vld [vmem:[%s554 + $0x18] sm:$0xff]
                  %563 = vst [vmem:[%s555 + $0x18] sm:$0xff] %v562
                  %v564 = vld [vmem:[%s554 + $0x20] sm:$0xff]
                  %565 = vst [vmem:[%s555 + $0x20] sm:$0xff] %v564
                  %v566 = vld [vmem:[%s554 + $0x28] sm:$0xff]
                  %567 = vst [vmem:[%s555 + $0x28] sm:$0xff] %v566
                  %v568 = vld [vmem:[%s554 + $0x30] sm:$0xff]
                  %569 = vst [vmem:[%s555 + $0x30] sm:$0xff] %v568
                  %v570 = vld [vmem:[%s554 + $0x38] sm:$0xff]
                  %571 = vst [vmem:[%s555 + $0x38] sm:$0xff] %v570
                  %v572 = vld [vmem:[%s554 + $0x40] sm:$0xff]
                  %573 = vst [vmem:[%s555 + $0x40] sm:$0xff] %v572
                  %v574 = vld [vmem:[%s554 + $0x48] sm:$0xff]
                  %575 = vst [vmem:[%s555 + $0x48] sm:$0xff] %v574
                  %v576 = vld [vmem:[%s554 + $0x50] sm:$0xff]
                  %577 = vst [vmem:[%s555 + $0x50] sm:$0xff] %v576
                  %v578 = vld [vmem:[%s554 + $0x58] sm:$0xff]
                  %579 = vst [vmem:[%s555 + $0x58] sm:$0xff] %v578
                  %v580 = vld [vmem:[%s554 + $0x60] sm:$0xff]
                  %581 = vst [vmem:[%s555 + $0x60] sm:$0xff] %v580
                  %v582 = vld [vmem:[%s554 + $0x68] sm:$0xff]
                  %583 = vst [vmem:[%s555 + $0x68] sm:$0xff] %v582
                  %v584 = vld [vmem:[%s554 + $0x70] sm:$0xff]
                  %585 = vst [vmem:[%s555 + $0x70] sm:$0xff] %v584
                  %v586 = vld [vmem:[%s554 + $0x78] sm:$0xff]
                  %587 = vst [vmem:[%s555 + $0x78] sm:$0xff] %v586
                  %v588 = vld [vmem:[%s554 + $0x80] sm:$0xff]
                  %589 = vst [vmem:[%s555 + $0x80] sm:$0xff] %v588
                  %v590 = vld [vmem:[%s554 + $0x88] sm:$0xff]
                  %591 = vst [vmem:[%s555 + $0x88] sm:$0xff] %v590
                  %v592 = vld [vmem:[%s554 + $0x90] sm:$0xff]
                  %593 = vst [vmem:[%s555 + $0x90] sm:$0xff] %v592
                  %v594 = vld [vmem:[%s554 + $0x98] sm:$0xff]
                  %595 = vst [vmem:[%s555 + $0x98] sm:$0xff] %v594
                  %v596 = vld [vmem:[%s554 + $0xa0] sm:$0xff]
                  %597 = vst [vmem:[%s555 + $0xa0] sm:$0xff] %v596
                  %v598 = vld [vmem:[%s554 + $0xa8] sm:$0xff]
                  %599 = vst [vmem:[%s555 + $0xa8] sm:$0xff] %v598
                  %v600 = vld [vmem:[%s554 + $0xb0] sm:$0xff]
                  %601 = vst [vmem:[%s555 + $0xb0] sm:$0xff] %v600
                  %v602 = vld [vmem:[%s554 + $0xb8] sm:$0xff]
                  %603 = vst [vmem:[%s555 + $0xb8] sm:$0xff] %v602
                  %v604 = vld [vmem:[%s554 + $0xc0] sm:$0xff]
                  %605 = vst [vmem:[%s555 + $0xc0] sm:$0xff] %v604
                  %v606 = vld [vmem:[%s554 + $0xc8] sm:$0xff]
                  %607 = vst [vmem:[%s555 + $0xc8] sm:$0xff] %v606
                  %v608 = vld [vmem:[%s554 + $0xd0] sm:$0xff]
                  %609 = vst [vmem:[%s555 + $0xd0] sm:$0xff] %v608
                  %v610 = vld [vmem:[%s554 + $0xd8] sm:$0xff]
                  %611 = vst [vmem:[%s555 + $0xd8] sm:$0xff] %v610
                  %v612 = vld [vmem:[%s554 + $0xe0] sm:$0xff]
                  %613 = vst [vmem:[%s555 + $0xe0] sm:$0xff] %v612
                  %v614 = vld [vmem:[%s554 + $0xe8] sm:$0xff]
                  %615 = vst [vmem:[%s555 + $0xe8] sm:$0xff] %v614
                  %v616 = vld [vmem:[%s554 + $0xf0] sm:$0xff]
                  %617 = vst [vmem:[%s555 + $0xf0] sm:$0xff] %v616
                  %v618 = vld [vmem:[%s554 + $0xf8] sm:$0xff]
                  %619 = vst [vmem:[%s555 + $0xf8] sm:$0xff] %v618
                  %v620 = vld [vmem:[%s554 + $0x100] sm:$0xff]
                  %621 = vst [vmem:[%s555 + $0x100] sm:$0xff] %v620
                  %v622 = vld [vmem:[%s554 + $0x108] sm:$0xff]
                  %623 = vst [vmem:[%s555 + $0x108] sm:$0xff] %v622
                  %v624 = vld [vmem:[%s554 + $0x110] sm:$0xff]
                  %625 = vst [vmem:[%s555 + $0x110] sm:$0xff] %v624
                  %v626 = vld [vmem:[%s554 + $0x118] sm:$0xff]
                  %627 = vst [vmem:[%s555 + $0x118] sm:$0xff] %v626
                  %v628 = vld [vmem:[%s554 + $0x120] sm:$0xff]
                  %629 = vst [vmem:[%s555 + $0x120] sm:$0xff] %v628
                  %v630 = vld [vmem:[%s554 + $0x128] sm:$0xff]
                  %631 = vst [vmem:[%s555 + $0x128] sm:$0xff] %v630
                  %v632 = vld [vmem:[%s554 + $0x130] sm:$0xff]
                  %633 = vst [vmem:[%s555 + $0x130] sm:$0xff] %v632
                  %v634 = vld [vmem:[%s554 + $0x138] sm:$0xff]
                  %635 = vst [vmem:[%s555 + $0x138] sm:$0xff] %v634
                  %v636 = vld [vmem:[%s554 + $0x140] sm:$0xff]
                  %637 = vst [vmem:[%s555 + $0x140] sm:$0xff] %v636
                  %v638 = vld [vmem:[%s554 + $0x148] sm:$0xff]
                  %639 = vst [vmem:[%s555 + $0x148] sm:$0xff] %v638
                  %v640 = vld [vmem:[%s554 + $0x150] sm:$0xff]
                  %641 = vst [vmem:[%s555 + $0x150] sm:$0xff] %v640
                  %v642 = vld [vmem:[%s554 + $0x158] sm:$0xff]
                  %643 = vst [vmem:[%s555 + $0x158] sm:$0xff] %v642
                  %v644 = vld [vmem:[%s554 + $0x160] sm:$0xff]
                  %645 = vst [vmem:[%s555 + $0x160] sm:$0xff] %v644
                  %v646 = vld [vmem:[%s554 + $0x168] sm:$0xff]
                  %647 = vst [vmem:[%s555 + $0x168] sm:$0xff] %v646
                  %v648 = vld [vmem:[%s554 + $0x170] sm:$0xff]
                  %649 = vst [vmem:[%s555 + $0x170] sm:$0xff] %v648
                  %v650 = vld [vmem:[%s554 + $0x178] sm:$0xff]
                  %651 = vst [vmem:[%s555 + $0x178] sm:$0xff] %v650
                  %v652 = vld [vmem:[%s554 + $0x180] sm:$0xff]
                  %653 = vst [vmem:[%s555 + $0x180] sm:$0xff] %v652
                  %v654 = vld [vmem:[%s554 + $0x620] sm:$0xff]
                  %655 = vst [vmem:[%s555 + $0x188] sm:$0xff] %v654
                  %v656 = vld [vmem:[%s554 + $0x628] sm:$0xff]
                  %657 = vst [vmem:[%s555 + $0x190] sm:$0xff] %v656
                  %v658 = vld [vmem:[%s554 + $0x630] sm:$0xff]
                  %659 = vst [vmem:[%s555 + $0x198] sm:$0xff] %v658
                  %v660 = vld [vmem:[%s554 + $0x638] sm:$0xff]
                  %661 = vst [vmem:[%s555 + $0x1a0] sm:$0xff] %v660
                  %v662 = vld [vmem:[%s554 + $0x640] sm:$0xff]
                  %663 = vst [vmem:[%s555 + $0x1a8] sm:$0xff] %v662
                  %v664 = vld [vmem:[%s554 + $0x648] sm:$0xff]
                  %665 = vst [vmem:[%s555 + $0x1b0] sm:$0xff] %v664
                  %v666 = vld [vmem:[%s554 + $0x650] sm:$0xff]
                  %667 = vst [vmem:[%s555 + $0x1b8] sm:$0xff] %v666
                  %v668 = vld [vmem:[%s554 + $0x658] sm:$0xff]
                  %669 = vst [vmem:[%s555 + $0x1c0] sm:$0xff] %v668
                  %v670 = vld [vmem:[%s554 + $0x660] sm:$0xff]
                  %671 = vst [vmem:[%s555 + $0x1c8] sm:$0xff] %v670
                  %v672 = vld [vmem:[%s554 + $0x668] sm:$0xff]
                  %673 = vst [vmem:[%s555 + $0x1d0] sm:$0xff] %v672
                  %v674 = vld [vmem:[%s554 + $0x670] sm:$0xff]
                  %675 = vst [vmem:[%s555 + $0x1d8] sm:$0xff] %v674
                  %v676 = vld [vmem:[%s554 + $0x678] sm:$0xff]
                  %677 = vst [vmem:[%s555 + $0x1e0] sm:$0xff] %v676
                  %v678 = vld [vmem:[%s554 + $0x680] sm:$0xff]
                  %679 = vst [vmem:[%s555 + $0x1e8] sm:$0xff] %v678
                  %v680 = vld [vmem:[%s554 + $0x688] sm:$0xff]
                  %681 = vst [vmem:[%s555 + $0x1f0] sm:$0xff] %v680
                  %v682 = vld [vmem:[%s554 + $0x690] sm:$0xff]
                  %683 = vst [vmem:[%s555 + $0x1f8] sm:$0xff] %v682
                  %v684 = vld [vmem:[%s554 + $0x698] sm:$0xff]
                  %685 = vst [vmem:[%s555 + $0x200] sm:$0xff] %v684
                  %v686 = vld [vmem:[%s554 + $0x6a0] sm:$0xff]
                  %687 = vst [vmem:[%s555 + $0x208] sm:$0xff] %v686
                  %v688 = vld [vmem:[%s554 + $0x6a8] sm:$0xff]
                  %689 = vst [vmem:[%s555 + $0x210] sm:$0xff] %v688
                  %v690 = vld [vmem:[%s554 + $0x6b0] sm:$0xff]
                  %691 = vst [vmem:[%s555 + $0x218] sm:$0xff] %v690
                  %v692 = vld [vmem:[%s554 + $0x6b8] sm:$0xff]
                  %693 = vst [vmem:[%s555 + $0x220] sm:$0xff] %v692
                  %v694 = vld [vmem:[%s554 + $0x6c0] sm:$0xff]
                  %695 = vst [vmem:[%s555 + $0x228] sm:$0xff] %v694
                  %v696 = vld [vmem:[%s554 + $0x6c8] sm:$0xff]
                  %697 = vst [vmem:[%s555 + $0x230] sm:$0xff] %v696
                  %v698 = vld [vmem:[%s554 + $0x6d0] sm:$0xff]
                  %699 = vst [vmem:[%s555 + $0x238] sm:$0xff] %v698
                  %v700 = vld [vmem:[%s554 + $0x6d8] sm:$0xff]
                  %701 = vst [vmem:[%s555 + $0x240] sm:$0xff] %v700
                  %v702 = vld [vmem:[%s554 + $0x6e0] sm:$0xff]
                  %703 = vst [vmem:[%s555 + $0x248] sm:$0xff] %v702
                  %v704 = vld [vmem:[%s554 + $0x6e8] sm:$0xff]
                  %705 = vst [vmem:[%s555 + $0x250] sm:$0xff] %v704
                  %v706 = vld [vmem:[%s554 + $0x6f0] sm:$0xff]
                  %707 = vst [vmem:[%s555 + $0x258] sm:$0xff] %v706
                  %v708 = vld [vmem:[%s554 + $0x6f8] sm:$0xff]
                  %709 = vst [vmem:[%s555 + $0x260] sm:$0xff] %v708
                  %v710 = vld [vmem:[%s554 + $0x700] sm:$0xff]
                  %711 = vst [vmem:[%s555 + $0x268] sm:$0xff] %v710
                  %v712 = vld [vmem:[%s554 + $0x708] sm:$0xff]
                  %713 = vst [vmem:[%s555 + $0x270] sm:$0xff] %v712
                  %v714 = vld [vmem:[%s554 + $0x710] sm:$0xff]
                  %715 = vst [vmem:[%s555 + $0x278] sm:$0xff] %v714
                  %v716 = vld [vmem:[%s554 + $0x718] sm:$0xff]
                  %717 = vst [vmem:[%s555 + $0x280] sm:$0xff] %v716
                  %v718 = vld [vmem:[%s554 + $0x720] sm:$0xff]
                  %719 = vst [vmem:[%s555 + $0x288] sm:$0xff] %v718
                  %v720 = vld [vmem:[%s554 + $0x728] sm:$0xff]
                  %721 = vst [vmem:[%s555 + $0x290] sm:$0xff] %v720
                  %v722 = vld [vmem:[%s554 + $0x730] sm:$0xff]
                  %723 = vst [vmem:[%s555 + $0x298] sm:$0xff] %v722
                  %v724 = vld [vmem:[%s554 + $0x738] sm:$0xff]
                  %725 = vst [vmem:[%s555 + $0x2a0] sm:$0xff] %v724
                  %v726 = vld [vmem:[%s554 + $0x740] sm:$0xff]
                  %727 = vst [vmem:[%s555 + $0x2a8] sm:$0xff] %v726
                  %v728 = vld [vmem:[%s554 + $0x748] sm:$0xff]
                  %729 = vst [vmem:[%s555 + $0x2b0] sm:$0xff] %v728
                  %v730 = vld [vmem:[%s554 + $0x750] sm:$0xff]
                  %731 = vst [vmem:[%s555 + $0x2b8] sm:$0xff] %v730
                  %v732 = vld [vmem:[%s554 + $0x758] sm:$0xff]
                  %733 = vst [vmem:[%s555 + $0x2c0] sm:$0xff] %v732
                  %v734 = vld [vmem:[%s554 + $0x760] sm:$0xff]
                  %735 = vst [vmem:[%s555 + $0x2c8] sm:$0xff] %v734
                  %v736 = vld [vmem:[%s554 + $0x768] sm:$0xff]
                  %737 = vst [vmem:[%s555 + $0x2d0] sm:$0xff] %v736
                  %v738 = vld [vmem:[%s554 + $0x770] sm:$0xff]
                  %739 = vst [vmem:[%s555 + $0x2d8] sm:$0xff] %v738
                  %v740 = vld [vmem:[%s554 + $0x778] sm:$0xff]
                  %741 = vst [vmem:[%s555 + $0x2e0] sm:$0xff] %v740
                  %v742 = vld [vmem:[%s554 + $0x780] sm:$0xff]
                  %743 = vst [vmem:[%s555 + $0x2e8] sm:$0xff] %v742
                  %v744 = vld [vmem:[%s554 + $0x788] sm:$0xff]
                  %745 = vst [vmem:[%s555 + $0x2f0] sm:$0xff] %v744
                  %v746 = vld [vmem:[%s554 + $0x790] sm:$0xff]
                  %747 = vst [vmem:[%s555 + $0x2f8] sm:$0xff] %v746
                  %v748 = vld [vmem:[%s554 + $0x798] sm:$0xff]
                  %749 = vst [vmem:[%s555 + $0x300] sm:$0xff] %v748
                  %v750 = vld [vmem:[%s554 + $0x7a0] sm:$0xff]
                  %751 = vst [vmem:[%s555 + $0x308] sm:$0xff] %v750
                  %v752 = vld [vmem:[%s554 + $0xc40] sm:$0xff]
                  %753 = vst [vmem:[%s555 + $0x310] sm:$0xff] %v752
                  %v754 = vld [vmem:[%s554 + $0xc48] sm:$0xff]
                  %755 = vst [vmem:[%s555 + $0x318] sm:$0xff] %v754
                  %v756 = vld [vmem:[%s554 + $0xc50] sm:$0xff]
                  %757 = vst [vmem:[%s555 + $0x320] sm:$0xff] %v756
                  %v758 = vld [vmem:[%s554 + $0xc58] sm:$0xff]
                  %759 = vst [vmem:[%s555 + $0x328] sm:$0xff] %v758
                  %v760 = vld [vmem:[%s554 + $0xc60] sm:$0xff]
                  %761 = vst [vmem:[%s555 + $0x330] sm:$0xff] %v760
                  %v762 = vld [vmem:[%s554 + $0xc68] sm:$0xff]
                  %763 = vst [vmem:[%s555 + $0x338] sm:$0xff] %v762
                  %v764 = vld [vmem:[%s554 + $0xc70] sm:$0xff]
                  %765 = vst [vmem:[%s555 + $0x340] sm:$0xff] %v764
                  %v766 = vld [vmem:[%s554 + $0xc78] sm:$0xff]
                  %767 = vst [vmem:[%s555 + $0x348] sm:$0xff] %v766
                  %v768 = vld [vmem:[%s554 + $0xc80] sm:$0xff]
                  %769 = vst [vmem:[%s555 + $0x350] sm:$0xff] %v768
                  %v770 = vld [vmem:[%s554 + $0xc88] sm:$0xff]
                  %771 = vst [vmem:[%s555 + $0x358] sm:$0xff] %v770
                  %v772 = vld [vmem:[%s554 + $0xc90] sm:$0xff]
                  %773 = vst [vmem:[%s555 + $0x360] sm:$0xff] %v772
                  %v774 = vld [vmem:[%s554 + $0xc98] sm:$0xff]
                  %775 = vst [vmem:[%s555 + $0x368] sm:$0xff] %v774
                  %v776 = vld [vmem:[%s554 + $0xca0] sm:$0xff]
                  %777 = vst [vmem:[%s555 + $0x370] sm:$0xff] %v776
                  %v778 = vld [vmem:[%s554 + $0xca8] sm:$0xff]
                  %779 = vst [vmem:[%s555 + $0x378] sm:$0xff] %v778
                  %v780 = vld [vmem:[%s554 + $0xcb0] sm:$0xff]
                  %781 = vst [vmem:[%s555 + $0x380] sm:$0xff] %v780
                  %v782 = vld [vmem:[%s554 + $0xcb8] sm:$0xff]
                  %783 = vst [vmem:[%s555 + $0x388] sm:$0xff] %v782
                  %v784 = vld [vmem:[%s554 + $0xcc0] sm:$0xff]
                  %785 = vst [vmem:[%s555 + $0x390] sm:$0xff] %v784
                  %v786 = vld [vmem:[%s554 + $0xcc8] sm:$0xff]
                  %787 = vst [vmem:[%s555 + $0x398] sm:$0xff] %v786
                  %v788 = vld [vmem:[%s554 + $0xcd0] sm:$0xff]
                  %789 = vst [vmem:[%s555 + $0x3a0] sm:$0xff] %v788
                  %v790 = vld [vmem:[%s554 + $0xcd8] sm:$0xff]
                  %791 = vst [vmem:[%s555 + $0x3a8] sm:$0xff] %v790
                  %v792 = vld [vmem:[%s554 + $0xce0] sm:$0xff]
                  %793 = vst [vmem:[%s555 + $0x3b0] sm:$0xff] %v792
                  %v794 = vld [vmem:[%s554 + $0xce8] sm:$0xff]
                  %795 = vst [vmem:[%s555 + $0x3b8] sm:$0xff] %v794
                  %v796 = vld [vmem:[%s554 + $0xcf0] sm:$0xff]
                  %797 = vst [vmem:[%s555 + $0x3c0] sm:$0xff] %v796
                  %v798 = vld [vmem:[%s554 + $0xcf8] sm:$0xff]
                  %799 = vst [vmem:[%s555 + $0x3c8] sm:$0xff] %v798
                  %v800 = vld [vmem:[%s554 + $0xd00] sm:$0xff]
                  %801 = vst [vmem:[%s555 + $0x3d0] sm:$0xff] %v800
                  %v802 = vld [vmem:[%s554 + $0xd08] sm:$0xff]
                  %803 = vst [vmem:[%s555 + $0x3d8] sm:$0xff] %v802
                  %v804 = vld [vmem:[%s554 + $0xd10] sm:$0xff]
                  %805 = vst [vmem:[%s555 + $0x3e0] sm:$0xff] %v804
                  %v806 = vld [vmem:[%s554 + $0xd18] sm:$0xff]
                  %807 = vst [vmem:[%s555 + $0x3e8] sm:$0xff] %v806
                  %v808 = vld [vmem:[%s554 + $0xd20] sm:$0xff]
                  %809 = vst [vmem:[%s555 + $0x3f0] sm:$0xff] %v808
                  %v810 = vld [vmem:[%s554 + $0xd28] sm:$0xff]
                  %811 = vst [vmem:[%s555 + $0x3f8] sm:$0xff] %v810
                  %v812 = vld [vmem:[%s554 + $0xd30] sm:$0xff]
                  %813 = vst [vmem:[%s555 + $0x400] sm:$0xff] %v812
                  %v814 = vld [vmem:[%s554 + $0xd38] sm:$0xff]
                  %815 = vst [vmem:[%s555 + $0x408] sm:$0xff] %v814
                  %v816 = vld [vmem:[%s554 + $0xd40] sm:$0xff]
                  %817 = vst [vmem:[%s555 + $0x410] sm:$0xff] %v816
                  %v818 = vld [vmem:[%s554 + $0xd48] sm:$0xff]
                  %819 = vst [vmem:[%s555 + $0x418] sm:$0xff] %v818
                  %v820 = vld [vmem:[%s554 + $0xd50] sm:$0xff]
                  %821 = vst [vmem:[%s555 + $0x420] sm:$0xff] %v820
                  %v822 = vld [vmem:[%s554 + $0xd58] sm:$0xff]
                  %823 = vst [vmem:[%s555 + $0x428] sm:$0xff] %v822
                  %v824 = vld [vmem:[%s554 + $0xd60] sm:$0xff]
                  %825 = vst [vmem:[%s555 + $0x430] sm:$0xff] %v824
                  %v826 = vld [vmem:[%s554 + $0xd68] sm:$0xff]
                  %827 = vst [vmem:[%s555 + $0x438] sm:$0xff] %v826
                  %v828 = vld [vmem:[%s554 + $0xd70] sm:$0xff]
                  %829 = vst [vmem:[%s555 + $0x440] sm:$0xff] %v828
                  %v830 = vld [vmem:[%s554 + $0xd78] sm:$0xff]
                  %831 = vst [vmem:[%s555 + $0x448] sm:$0xff] %v830
                  %v832 = vld [vmem:[%s554 + $0xd80] sm:$0xff]
                  %833 = vst [vmem:[%s555 + $0x450] sm:$0xff] %v832
                  %v834 = vld [vmem:[%s554 + $0xd88] sm:$0xff]
                  %835 = vst [vmem:[%s555 + $0x458] sm:$0xff] %v834
                  %v836 = vld [vmem:[%s554 + $0xd90] sm:$0xff]
                  %837 = vst [vmem:[%s555 + $0x460] sm:$0xff] %v836
                  %v838 = vld [vmem:[%s554 + $0xd98] sm:$0xff]
                  %839 = vst [vmem:[%s555 + $0x468] sm:$0xff] %v838
                  %v840 = vld [vmem:[%s554 + $0xda0] sm:$0xff]
                  %841 = vst [vmem:[%s555 + $0x470] sm:$0xff] %v840
                  %v842 = vld [vmem:[%s554 + $0xda8] sm:$0xff]
                  %843 = vst [vmem:[%s555 + $0x478] sm:$0xff] %v842
                  %v844 = vld [vmem:[%s554 + $0xdb0] sm:$0xff]
                  %845 = vst [vmem:[%s555 + $0x480] sm:$0xff] %v844
                  %v846 = vld [vmem:[%s554 + $0xdb8] sm:$0xff]
                  %847 = vst [vmem:[%s555 + $0x488] sm:$0xff] %v846
                  %v848 = vld [vmem:[%s554 + $0xdc0] sm:$0xff]
                  %849 = vst [vmem:[%s555 + $0x490] sm:$0xff] %v848
                  %v850 = vld [vmem:[%s554 + $0x1260] sm:$0xff]
                  %851 = vst [vmem:[%s555 + $0x498] sm:$0xff] %v850
                  %v852 = vld [vmem:[%s554 + $0x1268] sm:$0xff]
                  %853 = vst [vmem:[%s555 + $0x4a0] sm:$0xff] %v852
                  %v854 = vld [vmem:[%s554 + $0x1270] sm:$0xff]
                  %855 = vst [vmem:[%s555 + $0x4a8] sm:$0xff] %v854
                  %v856 = vld [vmem:[%s554 + $0x1278] sm:$0xff]
                  %857 = vst [vmem:[%s555 + $0x4b0] sm:$0xff] %v856
                  %v858 = vld [vmem:[%s554 + $0x1280] sm:$0xff]
                  %859 = vst [vmem:[%s555 + $0x4b8] sm:$0xff] %v858
                  %v860 = vld [vmem:[%s554 + $0x1288] sm:$0xff]
                  %861 = vst [vmem:[%s555 + $0x4c0] sm:$0xff] %v860
                  %v862 = vld [vmem:[%s554 + $0x1290] sm:$0xff]
                  %863 = vst [vmem:[%s555 + $0x4c8] sm:$0xff] %v862
                  %v864 = vld [vmem:[%s554 + $0x1298] sm:$0xff]
                  %865 = vst [vmem:[%s555 + $0x4d0] sm:$0xff] %v864
                  %v866 = vld [vmem:[%s554 + $0x12a0] sm:$0xff]
                  %867 = vst [vmem:[%s555 + $0x4d8] sm:$0xff] %v866
                  %v868 = vld [vmem:[%s554 + $0x12a8] sm:$0xff]
                  %869 = vst [vmem:[%s555 + $0x4e0] sm:$0xff] %v868
                  %v870 = vld [vmem:[%s554 + $0x12b0] sm:$0xff]
                  %871 = vst [vmem:[%s555 + $0x4e8] sm:$0xff] %v870
                  %v872 = vld [vmem:[%s554 + $0x12b8] sm:$0xff]
                  %873 = vst [vmem:[%s555 + $0x4f0] sm:$0xff] %v872
                  %v874 = vld [vmem:[%s554 + $0x12c0] sm:$0xff]
                  %875 = vst [vmem:[%s555 + $0x4f8] sm:$0xff] %v874
                  %v876 = vld [vmem:[%s554 + $0x12c8] sm:$0xff]
                  %877 = vst [vmem:[%s555 + $0x500] sm:$0xff] %v876
                  %v878 = vld [vmem:[%s554 + $0x12d0] sm:$0xff]
                  %879 = vst [vmem:[%s555 + $0x508] sm:$0xff] %v878
                  %v880 = vld [vmem:[%s554 + $0x12d8] sm:$0xff]
                  %881 = vst [vmem:[%s555 + $0x510] sm:$0xff] %v880
                  %v882 = vld [vmem:[%s554 + $0x12e0] sm:$0xff]
                  %883 = vst [vmem:[%s555 + $0x518] sm:$0xff] %v882
                  %v884 = vld [vmem:[%s554 + $0x12e8] sm:$0xff]
                  %885 = vst [vmem:[%s555 + $0x520] sm:$0xff] %v884
                  %v886 = vld [vmem:[%s554 + $0x12f0] sm:$0xff]
                  %887 = vst [vmem:[%s555 + $0x528] sm:$0xff] %v886
                  %v888 = vld [vmem:[%s554 + $0x12f8] sm:$0xff]
                  %889 = vst [vmem:[%s555 + $0x530] sm:$0xff] %v888
                  %v890 = vld [vmem:[%s554 + $0x1300] sm:$0xff]
                  %891 = vst [vmem:[%s555 + $0x538] sm:$0xff] %v890
                  %v892 = vld [vmem:[%s554 + $0x1308] sm:$0xff]
                  %893 = vst [vmem:[%s555 + $0x540] sm:$0xff] %v892
                  %v894 = vld [vmem:[%s554 + $0x1310] sm:$0xff]
                  %895 = vst [vmem:[%s555 + $0x548] sm:$0xff] %v894
                  %v896 = vld [vmem:[%s554 + $0x1318] sm:$0xff]
                  %897 = vst [vmem:[%s555 + $0x550] sm:$0xff] %v896
                  %v898 = vld [vmem:[%s554 + $0x1320] sm:$0xff]
                  %899 = vst [vmem:[%s555 + $0x558] sm:$0xff] %v898
                  %v900 = vld [vmem:[%s554 + $0x1328] sm:$0xff]
                  %901 = vst [vmem:[%s555 + $0x560] sm:$0xff] %v900
                  %v902 = vld [vmem:[%s554 + $0x1330] sm:$0xff]
                  %903 = vst [vmem:[%s555 + $0x568] sm:$0xff] %v902
                  %v904 = vld [vmem:[%s554 + $0x1338] sm:$0xff]
                  %905 = vst [vmem:[%s555 + $0x570] sm:$0xff] %v904
                  %v906 = vld [vmem:[%s554 + $0x1340] sm:$0xff]
                  %907 = vst [vmem:[%s555 + $0x578] sm:$0xff] %v906
                  %v908 = vld [vmem:[%s554 + $0x1348] sm:$0xff]
                  %909 = vst [vmem:[%s555 + $0x580] sm:$0xff] %v908
                  %v910 = vld [vmem:[%s554 + $0x1350] sm:$0xff]
                  %911 = vst [vmem:[%s555 + $0x588] sm:$0xff] %v910
                  %v912 = vld [vmem:[%s554 + $0x1358] sm:$0xff]
                  %913 = vst [vmem:[%s555 + $0x590] sm:$0xff] %v912
                  %v914 = vld [vmem:[%s554 + $0x1360] sm:$0xff]
                  %915 = vst [vmem:[%s555 + $0x598] sm:$0xff] %v914
                  %v916 = vld [vmem:[%s554 + $0x1368] sm:$0xff]
                  %917 = vst [vmem:[%s555 + $0x5a0] sm:$0xff] %v916
                  %v918 = vld [vmem:[%s554 + $0x1370] sm:$0xff]
                  %919 = vst [vmem:[%s555 + $0x5a8] sm:$0xff] %v918
                  %v920 = vld [vmem:[%s554 + $0x1378] sm:$0xff]
                  %921 = vst [vmem:[%s555 + $0x5b0] sm:$0xff] %v920
                  %v922 = vld [vmem:[%s554 + $0x1380] sm:$0xff]
                  %923 = vst [vmem:[%s555 + $0x5b8] sm:$0xff] %v922
                  %v924 = vld [vmem:[%s554 + $0x1388] sm:$0xff]
                  %925 = vst [vmem:[%s555 + $0x5c0] sm:$0xff] %v924
                  %v926 = vld [vmem:[%s554 + $0x1390] sm:$0xff]
                  %927 = vst [vmem:[%s555 + $0x5c8] sm:$0xff] %v926
                  %v928 = vld [vmem:[%s554 + $0x1398] sm:$0xff]
                  %929 = vst [vmem:[%s555 + $0x5d0] sm:$0xff] %v928
                  %v930 = vld [vmem:[%s554 + $0x13a0] sm:$0xff]
                  %931 = vst [vmem:[%s555 + $0x5d8] sm:$0xff] %v930
                  %v932 = vld [vmem:[%s554 + $0x13a8] sm:$0xff]
                  %933 = vst [vmem:[%s555 + $0x5e0] sm:$0xff] %v932
                  %v934 = vld [vmem:[%s554 + $0x13b0] sm:$0xff]
                  %935 = vst [vmem:[%s555 + $0x5e8] sm:$0xff] %v934
                  %v936 = vld [vmem:[%s554 + $0x13b8] sm:$0xff]
                  %937 = vst [vmem:[%s555 + $0x5f0] sm:$0xff] %v936
                  %v938 = vld [vmem:[%s554 + $0x13c0] sm:$0xff]
                  %939 = vst [vmem:[%s555 + $0x5f8] sm:$0xff] %v938
                  %v940 = vld [vmem:[%s554 + $0x13c8] sm:$0xff]
                  %941 = vst [vmem:[%s555 + $0x600] sm:$0xff] %v940
                  %v942 = vld [vmem:[%s554 + $0x13d0] sm:$0xff]
                  %943 = vst [vmem:[%s555 + $0x608] sm:$0xff] %v942
                  %v944 = vld [vmem:[%s554 + $0x13d8] sm:$0xff]
                  %945 = vst [vmem:[%s555 + $0x610] sm:$0xff] %v944
                  %v946 = vld [vmem:[%s554 + $0x13e0] sm:$0xff]
                  %947 = vst [vmem:[%s555 + $0x618] sm:$0xff] %v946
                $region56: #{lenet_forward.2} parent=50 // loop_footer
                  %s553 = sadd.s32 1, %s549
                $region57: #{lenet_forward.2} parent=50 // loop_footer_branch
                  %548 = sbr.rel target = $region53
                $region58: #{lenet_forward.2} parent=50 // loop_exit
                  _
              $region51: #{lenet_forward.2} parent=35 // pred_fallthru
                _
              // Predicated region
              $region59: #{lenet_forward.2} parent=35 // pred_check
                _
              $region60: #{lenet_forward.2} parent=35 // pred_check_branch
                %949 = sbr.rel target = $region62
              $region61: #{lenet_forward.2} parent=35 // pred_region
                _
              $region62: #{lenet_forward.2} parent=35 // pred_fallthru
                _
            $region36: #{lenet_forward.2} parent=31 // pred_fallthru
              _
            // Predicated region
            $region37: #{lenet_forward.2} parent=31 // pred_check
              _
            $region38: #{lenet_forward.2} parent=31 // pred_check_branch
              %143 = sbr.rel target = $region40
            $region39: #{lenet_forward.2} parent=31 // pred_region
              %s145 = ssub.s32 256, 1
              loop: start=0, step=1, limit=1
              $region41: #{lenet_forward.2} parent=39 // loop_pre_header
                _
              $region42: #{lenet_forward.2} parent=39 // loop_header
                %s147 = sphi 0, %s151
                %p148 = scmp.ge.s32.totalorder %s147, 1
                %s152 = sphi %s137, %s137
                %s153 = sphi %s134, %s134
              $region43: #{lenet_forward.2} parent=39 // loop_header_branch
                %150 = sbr.rel (%p148) target = $region47
              $region44: #{lenet_forward.2} parent=39 // loop_body
                %v154 = vld [vmem:[%s152] sm:%s145]
                %155 = vst [vmem:[%s153] sm:%s145] %v154
                %v156 = vld [vmem:[%s152 + $0x8] sm:%s145]
                %157 = vst [vmem:[%s153 + $0x8] sm:%s145] %v156
                %v158 = vld [vmem:[%s152 + $0x10] sm:%s145]
                %159 = vst [vmem:[%s153 + $0x10] sm:%s145] %v158
                %v160 = vld [vmem:[%s152 + $0x18] sm:%s145]
                %161 = vst [vmem:[%s153 + $0x18] sm:%s145] %v160
                %v162 = vld [vmem:[%s152 + $0x20] sm:%s145]
                %163 = vst [vmem:[%s153 + $0x20] sm:%s145] %v162
                %v164 = vld [vmem:[%s152 + $0x28] sm:%s145]
                %165 = vst [vmem:[%s153 + $0x28] sm:%s145] %v164
                %v166 = vld [vmem:[%s152 + $0x30] sm:%s145]
                %167 = vst [vmem:[%s153 + $0x30] sm:%s145] %v166
                %v168 = vld [vmem:[%s152 + $0x38] sm:%s145]
                %169 = vst [vmem:[%s153 + $0x38] sm:%s145] %v168
                %v170 = vld [vmem:[%s152 + $0x40] sm:%s145]
                %171 = vst [vmem:[%s153 + $0x40] sm:%s145] %v170
                %v172 = vld [vmem:[%s152 + $0x48] sm:%s145]
                %173 = vst [vmem:[%s153 + $0x48] sm:%s145] %v172
                %v174 = vld [vmem:[%s152 + $0x50] sm:%s145]
                %175 = vst [vmem:[%s153 + $0x50] sm:%s145] %v174
                %v176 = vld [vmem:[%s152 + $0x58] sm:%s145]
                %177 = vst [vmem:[%s153 + $0x58] sm:%s145] %v176
                %v178 = vld [vmem:[%s152 + $0x60] sm:%s145]
                %179 = vst [vmem:[%s153 + $0x60] sm:%s145] %v178
                %v180 = vld [vmem:[%s152 + $0x68] sm:%s145]
                %181 = vst [vmem:[%s153 + $0x68] sm:%s145] %v180
                %v182 = vld [vmem:[%s152 + $0x70] sm:%s145]
                %183 = vst [vmem:[%s153 + $0x70] sm:%s145] %v182
                %v184 = vld [vmem:[%s152 + $0x78] sm:%s145]
                %185 = vst [vmem:[%s153 + $0x78] sm:%s145] %v184
                %v186 = vld [vmem:[%s152 + $0x80] sm:%s145]
                %187 = vst [vmem:[%s153 + $0x80] sm:%s145] %v186
                %v188 = vld [vmem:[%s152 + $0x88] sm:%s145]
                %189 = vst [vmem:[%s153 + $0x88] sm:%s145] %v188
                %v190 = vld [vmem:[%s152 + $0x90] sm:%s145]
                %191 = vst [vmem:[%s153 + $0x90] sm:%s145] %v190
                %v192 = vld [vmem:[%s152 + $0x98] sm:%s145]
                %193 = vst [vmem:[%s153 + $0x98] sm:%s145] %v192
                %v194 = vld [vmem:[%s152 + $0xa0] sm:%s145]
                %195 = vst [vmem:[%s153 + $0xa0] sm:%s145] %v194
                %v196 = vld [vmem:[%s152 + $0xa8] sm:%s145]
                %197 = vst [vmem:[%s153 + $0xa8] sm:%s145] %v196
                %v198 = vld [vmem:[%s152 + $0xb0] sm:%s145]
                %199 = vst [vmem:[%s153 + $0xb0] sm:%s145] %v198
                %v200 = vld [vmem:[%s152 + $0xb8] sm:%s145]
                %201 = vst [vmem:[%s153 + $0xb8] sm:%s145] %v200
                %v202 = vld [vmem:[%s152 + $0xc0] sm:%s145]
                %203 = vst [vmem:[%s153 + $0xc0] sm:%s145] %v202
                %v204 = vld [vmem:[%s152 + $0xc8] sm:%s145]
                %205 = vst [vmem:[%s153 + $0xc8] sm:%s145] %v204
                %v206 = vld [vmem:[%s152 + $0xd0] sm:%s145]
                %207 = vst [vmem:[%s153 + $0xd0] sm:%s145] %v206
                %v208 = vld [vmem:[%s152 + $0xd8] sm:%s145]
                %209 = vst [vmem:[%s153 + $0xd8] sm:%s145] %v208
                %v210 = vld [vmem:[%s152 + $0xe0] sm:%s145]
                %211 = vst [vmem:[%s153 + $0xe0] sm:%s145] %v210
                %v212 = vld [vmem:[%s152 + $0xe8] sm:%s145]
                %213 = vst [vmem:[%s153 + $0xe8] sm:%s145] %v212
                %v214 = vld [vmem:[%s152 + $0xf0] sm:%s145]
                %215 = vst [vmem:[%s153 + $0xf0] sm:%s145] %v214
                %v216 = vld [vmem:[%s152 + $0xf8] sm:%s145]
                %217 = vst [vmem:[%s153 + $0xf8] sm:%s145] %v216
                %v218 = vld [vmem:[%s152 + $0x100] sm:%s145]
                %219 = vst [vmem:[%s153 + $0x100] sm:%s145] %v218
                %v220 = vld [vmem:[%s152 + $0x108] sm:%s145]
                %221 = vst [vmem:[%s153 + $0x108] sm:%s145] %v220
                %v222 = vld [vmem:[%s152 + $0x110] sm:%s145]
                %223 = vst [vmem:[%s153 + $0x110] sm:%s145] %v222
                %v224 = vld [vmem:[%s152 + $0x118] sm:%s145]
                %225 = vst [vmem:[%s153 + $0x118] sm:%s145] %v224
                %v226 = vld [vmem:[%s152 + $0x120] sm:%s145]
                %227 = vst [vmem:[%s153 + $0x120] sm:%s145] %v226
                %v228 = vld [vmem:[%s152 + $0x128] sm:%s145]
                %229 = vst [vmem:[%s153 + $0x128] sm:%s145] %v228
                %v230 = vld [vmem:[%s152 + $0x130] sm:%s145]
                %231 = vst [vmem:[%s153 + $0x130] sm:%s145] %v230
                %v232 = vld [vmem:[%s152 + $0x138] sm:%s145]
                %233 = vst [vmem:[%s153 + $0x138] sm:%s145] %v232
                %v234 = vld [vmem:[%s152 + $0x140] sm:%s145]
                %235 = vst [vmem:[%s153 + $0x140] sm:%s145] %v234
                %v236 = vld [vmem:[%s152 + $0x148] sm:%s145]
                %237 = vst [vmem:[%s153 + $0x148] sm:%s145] %v236
                %v238 = vld [vmem:[%s152 + $0x150] sm:%s145]
                %239 = vst [vmem:[%s153 + $0x150] sm:%s145] %v238
                %v240 = vld [vmem:[%s152 + $0x158] sm:%s145]
                %241 = vst [vmem:[%s153 + $0x158] sm:%s145] %v240
                %v242 = vld [vmem:[%s152 + $0x160] sm:%s145]
                %243 = vst [vmem:[%s153 + $0x160] sm:%s145] %v242
                %v244 = vld [vmem:[%s152 + $0x168] sm:%s145]
                %245 = vst [vmem:[%s153 + $0x168] sm:%s145] %v244
                %v246 = vld [vmem:[%s152 + $0x170] sm:%s145]
                %247 = vst [vmem:[%s153 + $0x170] sm:%s145] %v246
                %v248 = vld [vmem:[%s152 + $0x178] sm:%s145]
                %249 = vst [vmem:[%s153 + $0x178] sm:%s145] %v248
                %v250 = vld [vmem:[%s152 + $0x180] sm:%s145]
                %251 = vst [vmem:[%s153 + $0x180] sm:%s145] %v250
                %v252 = vld [vmem:[%s152 + $0x620] sm:%s145]
                %253 = vst [vmem:[%s153 + $0x188] sm:%s145] %v252
                %v254 = vld [vmem:[%s152 + $0x628] sm:%s145]
                %255 = vst [vmem:[%s153 + $0x190] sm:%s145] %v254
                %v256 = vld [vmem:[%s152 + $0x630] sm:%s145]
                %257 = vst [vmem:[%s153 + $0x198] sm:%s145] %v256
                %v258 = vld [vmem:[%s152 + $0x638] sm:%s145]
                %259 = vst [vmem:[%s153 + $0x1a0] sm:%s145] %v258
                %v260 = vld [vmem:[%s152 + $0x640] sm:%s145]
                %261 = vst [vmem:[%s153 + $0x1a8] sm:%s145] %v260
                %v262 = vld [vmem:[%s152 + $0x648] sm:%s145]
                %263 = vst [vmem:[%s153 + $0x1b0] sm:%s145] %v262
                %v264 = vld [vmem:[%s152 + $0x650] sm:%s145]
                %265 = vst [vmem:[%s153 + $0x1b8] sm:%s145] %v264
                %v266 = vld [vmem:[%s152 + $0x658] sm:%s145]
                %267 = vst [vmem:[%s153 + $0x1c0] sm:%s145] %v266
                %v268 = vld [vmem:[%s152 + $0x660] sm:%s145]
                %269 = vst [vmem:[%s153 + $0x1c8] sm:%s145] %v268
                %v270 = vld [vmem:[%s152 + $0x668] sm:%s145]
                %271 = vst [vmem:[%s153 + $0x1d0] sm:%s145] %v270
                %v272 = vld [vmem:[%s152 + $0x670] sm:%s145]
                %273 = vst [vmem:[%s153 + $0x1d8] sm:%s145] %v272
                %v274 = vld [vmem:[%s152 + $0x678] sm:%s145]
                %275 = vst [vmem:[%s153 + $0x1e0] sm:%s145] %v274
                %v276 = vld [vmem:[%s152 + $0x680] sm:%s145]
                %277 = vst [vmem:[%s153 + $0x1e8] sm:%s145] %v276
                %v278 = vld [vmem:[%s152 + $0x688] sm:%s145]
                %279 = vst [vmem:[%s153 + $0x1f0] sm:%s145] %v278
                %v280 = vld [vmem:[%s152 + $0x690] sm:%s145]
                %281 = vst [vmem:[%s153 + $0x1f8] sm:%s145] %v280
                %v282 = vld [vmem:[%s152 + $0x698] sm:%s145]
                %283 = vst [vmem:[%s153 + $0x200] sm:%s145] %v282
                %v284 = vld [vmem:[%s152 + $0x6a0] sm:%s145]
                %285 = vst [vmem:[%s153 + $0x208] sm:%s145] %v284
                %v286 = vld [vmem:[%s152 + $0x6a8] sm:%s145]
                %287 = vst [vmem:[%s153 + $0x210] sm:%s145] %v286
                %v288 = vld [vmem:[%s152 + $0x6b0] sm:%s145]
                %289 = vst [vmem:[%s153 + $0x218] sm:%s145] %v288
                %v290 = vld [vmem:[%s152 + $0x6b8] sm:%s145]
                %291 = vst [vmem:[%s153 + $0x220] sm:%s145] %v290
                %v292 = vld [vmem:[%s152 + $0x6c0] sm:%s145]
                %293 = vst [vmem:[%s153 + $0x228] sm:%s145] %v292
                %v294 = vld [vmem:[%s152 + $0x6c8] sm:%s145]
                %295 = vst [vmem:[%s153 + $0x230] sm:%s145] %v294
                %v296 = vld [vmem:[%s152 + $0x6d0] sm:%s145]
                %297 = vst [vmem:[%s153 + $0x238] sm:%s145] %v296
                %v298 = vld [vmem:[%s152 + $0x6d8] sm:%s145]
                %299 = vst [vmem:[%s153 + $0x240] sm:%s145] %v298
                %v300 = vld [vmem:[%s152 + $0x6e0] sm:%s145]
                %301 = vst [vmem:[%s153 + $0x248] sm:%s145] %v300
                %v302 = vld [vmem:[%s152 + $0x6e8] sm:%s145]
                %303 = vst [vmem:[%s153 + $0x250] sm:%s145] %v302
                %v304 = vld [vmem:[%s152 + $0x6f0] sm:%s145]
                %305 = vst [vmem:[%s153 + $0x258] sm:%s145] %v304
                %v306 = vld [vmem:[%s152 + $0x6f8] sm:%s145]
                %307 = vst [vmem:[%s153 + $0x260] sm:%s145] %v306
                %v308 = vld [vmem:[%s152 + $0x700] sm:%s145]
                %309 = vst [vmem:[%s153 + $0x268] sm:%s145] %v308
                %v310 = vld [vmem:[%s152 + $0x708] sm:%s145]
                %311 = vst [vmem:[%s153 + $0x270] sm:%s145] %v310
                %v312 = vld [vmem:[%s152 + $0x710] sm:%s145]
                %313 = vst [vmem:[%s153 + $0x278] sm:%s145] %v312
                %v314 = vld [vmem:[%s152 + $0x718] sm:%s145]
                %315 = vst [vmem:[%s153 + $0x280] sm:%s145] %v314
                %v316 = vld [vmem:[%s152 + $0x720] sm:%s145]
                %317 = vst [vmem:[%s153 + $0x288] sm:%s145] %v316
                %v318 = vld [vmem:[%s152 + $0x728] sm:%s145]
                %319 = vst [vmem:[%s153 + $0x290] sm:%s145] %v318
                %v320 = vld [vmem:[%s152 + $0x730] sm:%s145]
                %321 = vst [vmem:[%s153 + $0x298] sm:%s145] %v320
                %v322 = vld [vmem:[%s152 + $0x738] sm:%s145]
                %323 = vst [vmem:[%s153 + $0x2a0] sm:%s145] %v322
                %v324 = vld [vmem:[%s152 + $0x740] sm:%s145]
                %325 = vst [vmem:[%s153 + $0x2a8] sm:%s145] %v324
                %v326 = vld [vmem:[%s152 + $0x748] sm:%s145]
                %327 = vst [vmem:[%s153 + $0x2b0] sm:%s145] %v326
                %v328 = vld [vmem:[%s152 + $0x750] sm:%s145]
                %329 = vst [vmem:[%s153 + $0x2b8] sm:%s145] %v328
                %v330 = vld [vmem:[%s152 + $0x758] sm:%s145]
                %331 = vst [vmem:[%s153 + $0x2c0] sm:%s145] %v330
                %v332 = vld [vmem:[%s152 + $0x760] sm:%s145]
                %333 = vst [vmem:[%s153 + $0x2c8] sm:%s145] %v332
                %v334 = vld [vmem:[%s152 + $0x768] sm:%s145]
                %335 = vst [vmem:[%s153 + $0x2d0] sm:%s145] %v334
                %v336 = vld [vmem:[%s152 + $0x770] sm:%s145]
                %337 = vst [vmem:[%s153 + $0x2d8] sm:%s145] %v336
                %v338 = vld [vmem:[%s152 + $0x778] sm:%s145]
                %339 = vst [vmem:[%s153 + $0x2e0] sm:%s145] %v338
                %v340 = vld [vmem:[%s152 + $0x780] sm:%s145]
                %341 = vst [vmem:[%s153 + $0x2e8] sm:%s145] %v340
                %v342 = vld [vmem:[%s152 + $0x788] sm:%s145]
                %343 = vst [vmem:[%s153 + $0x2f0] sm:%s145] %v342
                %v344 = vld [vmem:[%s152 + $0x790] sm:%s145]
                %345 = vst [vmem:[%s153 + $0x2f8] sm:%s145] %v344
                %v346 = vld [vmem:[%s152 + $0x798] sm:%s145]
                %347 = vst [vmem:[%s153 + $0x300] sm:%s145] %v346
                %v348 = vld [vmem:[%s152 + $0x7a0] sm:%s145]
                %349 = vst [vmem:[%s153 + $0x308] sm:%s145] %v348
                %v350 = vld [vmem:[%s152 + $0xc40] sm:%s145]
                %351 = vst [vmem:[%s153 + $0x310] sm:%s145] %v350
                %v352 = vld [vmem:[%s152 + $0xc48] sm:%s145]
                %353 = vst [vmem:[%s153 + $0x318] sm:%s145] %v352
                %v354 = vld [vmem:[%s152 + $0xc50] sm:%s145]
                %355 = vst [vmem:[%s153 + $0x320] sm:%s145] %v354
                %v356 = vld [vmem:[%s152 + $0xc58] sm:%s145]
                %357 = vst [vmem:[%s153 + $0x328] sm:%s145] %v356
                %v358 = vld [vmem:[%s152 + $0xc60] sm:%s145]
                %359 = vst [vmem:[%s153 + $0x330] sm:%s145] %v358
                %v360 = vld [vmem:[%s152 + $0xc68] sm:%s145]
                %361 = vst [vmem:[%s153 + $0x338] sm:%s145] %v360
                %v362 = vld [vmem:[%s152 + $0xc70] sm:%s145]
                %363 = vst [vmem:[%s153 + $0x340] sm:%s145] %v362
                %v364 = vld [vmem:[%s152 + $0xc78] sm:%s145]
                %365 = vst [vmem:[%s153 + $0x348] sm:%s145] %v364
                %v366 = vld [vmem:[%s152 + $0xc80] sm:%s145]
                %367 = vst [vmem:[%s153 + $0x350] sm:%s145] %v366
                %v368 = vld [vmem:[%s152 + $0xc88] sm:%s145]
                %369 = vst [vmem:[%s153 + $0x358] sm:%s145] %v368
                %v370 = vld [vmem:[%s152 + $0xc90] sm:%s145]
                %371 = vst [vmem:[%s153 + $0x360] sm:%s145] %v370
                %v372 = vld [vmem:[%s152 + $0xc98] sm:%s145]
                %373 = vst [vmem:[%s153 + $0x368] sm:%s145] %v372
                %v374 = vld [vmem:[%s152 + $0xca0] sm:%s145]
                %375 = vst [vmem:[%s153 + $0x370] sm:%s145] %v374
                %v376 = vld [vmem:[%s152 + $0xca8] sm:%s145]
                %377 = vst [vmem:[%s153 + $0x378] sm:%s145] %v376
                %v378 = vld [vmem:[%s152 + $0xcb0] sm:%s145]
                %379 = vst [vmem:[%s153 + $0x380] sm:%s145] %v378
                %v380 = vld [vmem:[%s152 + $0xcb8] sm:%s145]
                %381 = vst [vmem:[%s153 + $0x388] sm:%s145] %v380
                %v382 = vld [vmem:[%s152 + $0xcc0] sm:%s145]
                %383 = vst [vmem:[%s153 + $0x390] sm:%s145] %v382
                %v384 = vld [vmem:[%s152 + $0xcc8] sm:%s145]
                %385 = vst [vmem:[%s153 + $0x398] sm:%s145] %v384
                %v386 = vld [vmem:[%s152 + $0xcd0] sm:%s145]
                %387 = vst [vmem:[%s153 + $0x3a0] sm:%s145] %v386
                %v388 = vld [vmem:[%s152 + $0xcd8] sm:%s145]
                %389 = vst [vmem:[%s153 + $0x3a8] sm:%s145] %v388
                %v390 = vld [vmem:[%s152 + $0xce0] sm:%s145]
                %391 = vst [vmem:[%s153 + $0x3b0] sm:%s145] %v390
                %v392 = vld [vmem:[%s152 + $0xce8] sm:%s145]
                %393 = vst [vmem:[%s153 + $0x3b8] sm:%s145] %v392
                %v394 = vld [vmem:[%s152 + $0xcf0] sm:%s145]
                %395 = vst [vmem:[%s153 + $0x3c0] sm:%s145] %v394
                %v396 = vld [vmem:[%s152 + $0xcf8] sm:%s145]
                %397 = vst [vmem:[%s153 + $0x3c8] sm:%s145] %v396
                %v398 = vld [vmem:[%s152 + $0xd00] sm:%s145]
                %399 = vst [vmem:[%s153 + $0x3d0] sm:%s145] %v398
                %v400 = vld [vmem:[%s152 + $0xd08] sm:%s145]
                %401 = vst [vmem:[%s153 + $0x3d8] sm:%s145] %v400
                %v402 = vld [vmem:[%s152 + $0xd10] sm:%s145]
                %403 = vst [vmem:[%s153 + $0x3e0] sm:%s145] %v402
                %v404 = vld [vmem:[%s152 + $0xd18] sm:%s145]
                %405 = vst [vmem:[%s153 + $0x3e8] sm:%s145] %v404
                %v406 = vld [vmem:[%s152 + $0xd20] sm:%s145]
                %407 = vst [vmem:[%s153 + $0x3f0] sm:%s145] %v406
                %v408 = vld [vmem:[%s152 + $0xd28] sm:%s145]
                %409 = vst [vmem:[%s153 + $0x3f8] sm:%s145] %v408
                %v410 = vld [vmem:[%s152 + $0xd30] sm:%s145]
                %411 = vst [vmem:[%s153 + $0x400] sm:%s145] %v410
                %v412 = vld [vmem:[%s152 + $0xd38] sm:%s145]
                %413 = vst [vmem:[%s153 + $0x408] sm:%s145] %v412
                %v414 = vld [vmem:[%s152 + $0xd40] sm:%s145]
                %415 = vst [vmem:[%s153 + $0x410] sm:%s145] %v414
                %v416 = vld [vmem:[%s152 + $0xd48] sm:%s145]
                %417 = vst [vmem:[%s153 + $0x418] sm:%s145] %v416
                %v418 = vld [vmem:[%s152 + $0xd50] sm:%s145]
                %419 = vst [vmem:[%s153 + $0x420] sm:%s145] %v418
                %v420 = vld [vmem:[%s152 + $0xd58] sm:%s145]
                %421 = vst [vmem:[%s153 + $0x428] sm:%s145] %v420
                %v422 = vld [vmem:[%s152 + $0xd60] sm:%s145]
                %423 = vst [vmem:[%s153 + $0x430] sm:%s145] %v422
                %v424 = vld [vmem:[%s152 + $0xd68] sm:%s145]
                %425 = vst [vmem:[%s153 + $0x438] sm:%s145] %v424
                %v426 = vld [vmem:[%s152 + $0xd70] sm:%s145]
                %427 = vst [vmem:[%s153 + $0x440] sm:%s145] %v426
                %v428 = vld [vmem:[%s152 + $0xd78] sm:%s145]
                %429 = vst [vmem:[%s153 + $0x448] sm:%s145] %v428
                %v430 = vld [vmem:[%s152 + $0xd80] sm:%s145]
                %431 = vst [vmem:[%s153 + $0x450] sm:%s145] %v430
                %v432 = vld [vmem:[%s152 + $0xd88] sm:%s145]
                %433 = vst [vmem:[%s153 + $0x458] sm:%s145] %v432
                %v434 = vld [vmem:[%s152 + $0xd90] sm:%s145]
                %435 = vst [vmem:[%s153 + $0x460] sm:%s145] %v434
                %v436 = vld [vmem:[%s152 + $0xd98] sm:%s145]
                %437 = vst [vmem:[%s153 + $0x468] sm:%s145] %v436
                %v438 = vld [vmem:[%s152 + $0xda0] sm:%s145]
                %439 = vst [vmem:[%s153 + $0x470] sm:%s145] %v438
                %v440 = vld [vmem:[%s152 + $0xda8] sm:%s145]
                %441 = vst [vmem:[%s153 + $0x478] sm:%s145] %v440
                %v442 = vld [vmem:[%s152 + $0xdb0] sm:%s145]
                %443 = vst [vmem:[%s153 + $0x480] sm:%s145] %v442
                %v444 = vld [vmem:[%s152 + $0xdb8] sm:%s145]
                %445 = vst [vmem:[%s153 + $0x488] sm:%s145] %v444
                %v446 = vld [vmem:[%s152 + $0xdc0] sm:%s145]
                %447 = vst [vmem:[%s153 + $0x490] sm:%s145] %v446
                %v448 = vld [vmem:[%s152 + $0x1260] sm:%s145]
                %449 = vst [vmem:[%s153 + $0x498] sm:%s145] %v448
                %v450 = vld [vmem:[%s152 + $0x1268] sm:%s145]
                %451 = vst [vmem:[%s153 + $0x4a0] sm:%s145] %v450
                %v452 = vld [vmem:[%s152 + $0x1270] sm:%s145]
                %453 = vst [vmem:[%s153 + $0x4a8] sm:%s145] %v452
                %v454 = vld [vmem:[%s152 + $0x1278] sm:%s145]
                %455 = vst [vmem:[%s153 + $0x4b0] sm:%s145] %v454
                %v456 = vld [vmem:[%s152 + $0x1280] sm:%s145]
                %457 = vst [vmem:[%s153 + $0x4b8] sm:%s145] %v456
                %v458 = vld [vmem:[%s152 + $0x1288] sm:%s145]
                %459 = vst [vmem:[%s153 + $0x4c0] sm:%s145] %v458
                %v460 = vld [vmem:[%s152 + $0x1290] sm:%s145]
                %461 = vst [vmem:[%s153 + $0x4c8] sm:%s145] %v460
                %v462 = vld [vmem:[%s152 + $0x1298] sm:%s145]
                %463 = vst [vmem:[%s153 + $0x4d0] sm:%s145] %v462
                %v464 = vld [vmem:[%s152 + $0x12a0] sm:%s145]
                %465 = vst [vmem:[%s153 + $0x4d8] sm:%s145] %v464
                %v466 = vld [vmem:[%s152 + $0x12a8] sm:%s145]
                %467 = vst [vmem:[%s153 + $0x4e0] sm:%s145] %v466
                %v468 = vld [vmem:[%s152 + $0x12b0] sm:%s145]
                %469 = vst [vmem:[%s153 + $0x4e8] sm:%s145] %v468
                %v470 = vld [vmem:[%s152 + $0x12b8] sm:%s145]
                %471 = vst [vmem:[%s153 + $0x4f0] sm:%s145] %v470
                %v472 = vld [vmem:[%s152 + $0x12c0] sm:%s145]
                %473 = vst [vmem:[%s153 + $0x4f8] sm:%s145] %v472
                %v474 = vld [vmem:[%s152 + $0x12c8] sm:%s145]
                %475 = vst [vmem:[%s153 + $0x500] sm:%s145] %v474
                %v476 = vld [vmem:[%s152 + $0x12d0] sm:%s145]
                %477 = vst [vmem:[%s153 + $0x508] sm:%s145] %v476
                %v478 = vld [vmem:[%s152 + $0x12d8] sm:%s145]
                %479 = vst [vmem:[%s153 + $0x510] sm:%s145] %v478
                %v480 = vld [vmem:[%s152 + $0x12e0] sm:%s145]
                %481 = vst [vmem:[%s153 + $0x518] sm:%s145] %v480
                %v482 = vld [vmem:[%s152 + $0x12e8] sm:%s145]
                %483 = vst [vmem:[%s153 + $0x520] sm:%s145] %v482
                %v484 = vld [vmem:[%s152 + $0x12f0] sm:%s145]
                %485 = vst [vmem:[%s153 + $0x528] sm:%s145] %v484
                %v486 = vld [vmem:[%s152 + $0x12f8] sm:%s145]
                %487 = vst [vmem:[%s153 + $0x530] sm:%s145] %v486
                %v488 = vld [vmem:[%s152 + $0x1300] sm:%s145]
                %489 = vst [vmem:[%s153 + $0x538] sm:%s145] %v488
                %v490 = vld [vmem:[%s152 + $0x1308] sm:%s145]
                %491 = vst [vmem:[%s153 + $0x540] sm:%s145] %v490
                %v492 = vld [vmem:[%s152 + $0x1310] sm:%s145]
                %493 = vst [vmem:[%s153 + $0x548] sm:%s145] %v492
                %v494 = vld [vmem:[%s152 + $0x1318] sm:%s145]
                %495 = vst [vmem:[%s153 + $0x550] sm:%s145] %v494
                %v496 = vld [vmem:[%s152 + $0x1320] sm:%s145]
                %497 = vst [vmem:[%s153 + $0x558] sm:%s145] %v496
                %v498 = vld [vmem:[%s152 + $0x1328] sm:%s145]
                %499 = vst [vmem:[%s153 + $0x560] sm:%s145] %v498
                %v500 = vld [vmem:[%s152 + $0x1330] sm:%s145]
                %501 = vst [vmem:[%s153 + $0x568] sm:%s145] %v500
                %v502 = vld [vmem:[%s152 + $0x1338] sm:%s145]
                %503 = vst [vmem:[%s153 + $0x570] sm:%s145] %v502
                %v504 = vld [vmem:[%s152 + $0x1340] sm:%s145]
                %505 = vst [vmem:[%s153 + $0x578] sm:%s145] %v504
                %v506 = vld [vmem:[%s152 + $0x1348] sm:%s145]
                %507 = vst [vmem:[%s153 + $0x580] sm:%s145] %v506
                %v508 = vld [vmem:[%s152 + $0x1350] sm:%s145]
                %509 = vst [vmem:[%s153 + $0x588] sm:%s145] %v508
                %v510 = vld [vmem:[%s152 + $0x1358] sm:%s145]
                %511 = vst [vmem:[%s153 + $0x590] sm:%s145] %v510
                %v512 = vld [vmem:[%s152 + $0x1360] sm:%s145]
                %513 = vst [vmem:[%s153 + $0x598] sm:%s145] %v512
                %v514 = vld [vmem:[%s152 + $0x1368] sm:%s145]
                %515 = vst [vmem:[%s153 + $0x5a0] sm:%s145] %v514
                %v516 = vld [vmem:[%s152 + $0x1370] sm:%s145]
                %517 = vst [vmem:[%s153 + $0x5a8] sm:%s145] %v516
                %v518 = vld [vmem:[%s152 + $0x1378] sm:%s145]
                %519 = vst [vmem:[%s153 + $0x5b0] sm:%s145] %v518
                %v520 = vld [vmem:[%s152 + $0x1380] sm:%s145]
                %521 = vst [vmem:[%s153 + $0x5b8] sm:%s145] %v520
                %v522 = vld [vmem:[%s152 + $0x1388] sm:%s145]
                %523 = vst [vmem:[%s153 + $0x5c0] sm:%s145] %v522
                %v524 = vld [vmem:[%s152 + $0x1390] sm:%s145]
                %525 = vst [vmem:[%s153 + $0x5c8] sm:%s145] %v524
                %v526 = vld [vmem:[%s152 + $0x1398] sm:%s145]
                %527 = vst [vmem:[%s153 + $0x5d0] sm:%s145] %v526
                %v528 = vld [vmem:[%s152 + $0x13a0] sm:%s145]
                %529 = vst [vmem:[%s153 + $0x5d8] sm:%s145] %v528
                %v530 = vld [vmem:[%s152 + $0x13a8] sm:%s145]
                %531 = vst [vmem:[%s153 + $0x5e0] sm:%s145] %v530
                %v532 = vld [vmem:[%s152 + $0x13b0] sm:%s145]
                %533 = vst [vmem:[%s153 + $0x5e8] sm:%s145] %v532
                %v534 = vld [vmem:[%s152 + $0x13b8] sm:%s145]
                %535 = vst [vmem:[%s153 + $0x5f0] sm:%s145] %v534
                %v536 = vld [vmem:[%s152 + $0x13c0] sm:%s145]
                %537 = vst [vmem:[%s153 + $0x5f8] sm:%s145] %v536
                %v538 = vld [vmem:[%s152 + $0x13c8] sm:%s145]
                %539 = vst [vmem:[%s153 + $0x600] sm:%s145] %v538
                %v540 = vld [vmem:[%s152 + $0x13d0] sm:%s145]
                %541 = vst [vmem:[%s153 + $0x608] sm:%s145] %v540
                %v542 = vld [vmem:[%s152 + $0x13d8] sm:%s145]
                %543 = vst [vmem:[%s153 + $0x610] sm:%s145] %v542
                %v544 = vld [vmem:[%s152 + $0x13e0] sm:%s145]
                %545 = vst [vmem:[%s153 + $0x618] sm:%s145] %v544
              $region45: #{lenet_forward.2} parent=39 // loop_footer
                %s151 = sadd.s32 1, %s147
              $region46: #{lenet_forward.2} parent=39 // loop_footer_branch
                %146 = sbr.rel target = $region42
              $region47: #{lenet_forward.2} parent=39 // loop_exit
                _
            $region40: #{lenet_forward.2} parent=31 // pred_fallthru
              _
          $region32: #{lenet_forward.2} parent=27 // pred_fallthru
            _
          %950 = vnop
        $region28: #{lenet_forward.2} parent=23 // pred_fallthru
          _
      $region24: #{lenet_forward.2} parent=5 // pred_fallthru
        _
      %p951 = scmp.le.s32.totalorder 1, %s9
      %p952 = scmp.lt.s32.totalorder %s9, 5
      %p953 = pnand %p951, %p952
      %p954 = pneg %p953
      // Predicated region
      $region63: #{lenet_forward.2} parent=5 // pred_check
        _
      $region64: #{lenet_forward.2} parent=5 // pred_check_branch
        %956 = sbr.rel (%p953) target = $region66
      $region65: #{lenet_forward.2} parent=5 // pred_region
        %s957 = ssub.s32 %s9, 1
        %s958 = sand.u32 %s22, 1
        %s959 = sand.u32 %s22, 1
        %s960 = smul.addr %s959, 1568
        %s961 = scalar_lea.vmem [#allocation2], %s960
        // Predicated region
        $region67: #{lenet_forward.2} parent=65 // pred_check
          %p962 = pneg %p35
        $region68: #{lenet_forward.2} parent=65 // pred_check_branch
          %964 = sbr.rel (%p962) target = $region70
        $region69: #{lenet_forward.2} parent=65 // pred_region
          _
        $region70: #{lenet_forward.2} parent=65 // pred_fallthru
          _
        %s965 = sand.u32 %s22, 1
        %s966 = sand.u32 %s22, 1
        %s967 = smul.addr %s966, 1568
        %s968 = scalar_lea.vmem [#allocation2], %s967
        %p969 = pneg %p35
        %p970 = pneg %p32
        %p971 = pneg %p56
        %p972 = pneg %p53
        %p973 = pneg %p77
        %p974 = pneg %p74
        %p975 = pneg %p103
        %p976 = pneg %p100
        %s977 = smul.u32 49, %s14
        %p978 = scmp.lt.s32.totalorder %s977, 195
        %s979 = scalar_select %p978, %s977, 195
        %s980 = smul.addr %s979, 8
        %s981 = scalar_lea.vmem %s3, %s980
        %s982 = smul.u32 49, %s14
        %s983 = smul.u32 49, %s14
        %p984 = scmp.lt.s32.totalorder %s983, 195
        %s985 = scalar_select %p984, %s983, 195
        %s986 = smul.addr %s985, 8
        %s987 = scalar_lea.vmem %s3, %s986
        %s988 = smul.u32 49, %s14
        %v989 = vld [vmem:[%s961] sm:$0xff]
        %v990 = vld [vmem:[%s961 + $0x8] sm:$0xff]
        %v991 = vld [vmem:[%s961 + $0x10] sm:$0xff]
        %v992 = vld [vmem:[%s961 + $0x18] sm:$0xff]
        %v993 = vld [vmem:[%s961 + $0x20] sm:$0xff]
        %v994 = vld [vmem:[%s961 + $0x28] sm:$0xff]
        %v995 = vld [vmem:[%s961 + $0x30] sm:$0xff]
        %v996 = vld [vmem:[%s961 + $0x38] sm:$0xff]
        %v997 = vld [vmem:[%s961 + $0x40] sm:$0xff]
        %v998 = vld [vmem:[%s961 + $0x48] sm:$0xff]
        %v999 = vld [vmem:[%s961 + $0x50] sm:$0xff]
        %v1000 = vld [vmem:[%s961 + $0x58] sm:$0xff]
        %v1001 = vld [vmem:[%s961 + $0x60] sm:$0xff]
        %v1002 = vld [vmem:[%s961 + $0x68] sm:$0xff]
        %v1003 = vld [vmem:[%s961 + $0x70] sm:$0xff]
        %v1004 = vld [vmem:[%s961 + $0x78] sm:$0xff]
        %v1005 = vld [vmem:[%s961 + $0x80] sm:$0xff]
        %v1006 = vld [vmem:[%s961 + $0x88] sm:$0xff]
        %v1007 = vld [vmem:[%s961 + $0x90] sm:$0xff]
        %v1008 = vld [vmem:[%s961 + $0x98] sm:$0xff]
        %v1009 = vld [vmem:[%s961 + $0xa0] sm:$0xff]
        %v1010 = vld [vmem:[%s961 + $0xa8] sm:$0xff]
        %v1011 = vld [vmem:[%s961 + $0xb0] sm:$0xff]
        %v1012 = vld [vmem:[%s961 + $0xb8] sm:$0xff]
        %v1013 = vld [vmem:[%s961 + $0xc0] sm:$0xff]
        %v1014 = vld [vmem:[%s961 + $0xc8] sm:$0xff]
        %v1015 = vld [vmem:[%s961 + $0xd0] sm:$0xff]
        %v1016 = vld [vmem:[%s961 + $0xd8] sm:$0xff]
        %v1017 = vld [vmem:[%s961 + $0xe0] sm:$0xff]
        %v1018 = vld [vmem:[%s961 + $0xe8] sm:$0xff]
        %v1019 = vld [vmem:[%s961 + $0xf0] sm:$0xff]
        %v1020 = vld [vmem:[%s961 + $0xf8] sm:$0xff]
        %v1021 = vld [vmem:[%s961 + $0x100] sm:$0xff]
        %v1022 = vld [vmem:[%s961 + $0x108] sm:$0xff]
        %v1023 = vld [vmem:[%s961 + $0x110] sm:$0xff]
        %v1024 = vld [vmem:[%s961 + $0x118] sm:$0xff]
        %v1025 = vld [vmem:[%s961 + $0x120] sm:$0xff]
        %v1026 = vld [vmem:[%s961 + $0x128] sm:$0xff]
        %v1027 = vld [vmem:[%s961 + $0x130] sm:$0xff]
        %v1028 = vld [vmem:[%s961 + $0x138] sm:$0xff]
        %v1029 = vld [vmem:[%s961 + $0x140] sm:$0xff]
        %v1030 = vld [vmem:[%s961 + $0x148] sm:$0xff]
        %v1031 = vld [vmem:[%s961 + $0x150] sm:$0xff]
        %v1032 = vld [vmem:[%s961 + $0x158] sm:$0xff]
        %v1033 = vld [vmem:[%s961 + $0x160] sm:$0xff]
        %v1034 = vld [vmem:[%s961 + $0x168] sm:$0xff]
        %v1035 = vld [vmem:[%s961 + $0x170] sm:$0xff]
        %v1036 = vld [vmem:[%s961 + $0x178] sm:$0xff]
        %v1037 = vld [vmem:[%s961 + $0x180] sm:$0xff]
        %v1038 = vld [vmem:[%s961 + $0x188] sm:$0xff]
        %v1039 = vld [vmem:[%s961 + $0x190] sm:$0xff]
        %v1040 = vld [vmem:[%s961 + $0x198] sm:$0xff]
        %v1041 = vld [vmem:[%s961 + $0x1a0] sm:$0xff]
        %v1042 = vld [vmem:[%s961 + $0x1a8] sm:$0xff]
        %v1043 = vld [vmem:[%s961 + $0x1b0] sm:$0xff]
        %v1044 = vld [vmem:[%s961 + $0x1b8] sm:$0xff]
        %v1045 = vld [vmem:[%s961 + $0x1c0] sm:$0xff]
        %v1046 = vld [vmem:[%s961 + $0x1c8] sm:$0xff]
        %v1047 = vld [vmem:[%s961 + $0x1d0] sm:$0xff]
        %v1048 = vld [vmem:[%s961 + $0x1d8] sm:$0xff]
        %v1049 = vld [vmem:[%s961 + $0x1e0] sm:$0xff]
        %v1050 = vld [vmem:[%s961 + $0x1e8] sm:$0xff]
        %v1051 = vld [vmem:[%s961 + $0x1f0] sm:$0xff]
        %v1052 = vld [vmem:[%s961 + $0x1f8] sm:$0xff]
        %v1053 = vld [vmem:[%s961 + $0x200] sm:$0xff]
        %v1054 = vld [vmem:[%s961 + $0x208] sm:$0xff]
        %v1055 = vld [vmem:[%s961 + $0x210] sm:$0xff]
        %v1056 = vld [vmem:[%s961 + $0x218] sm:$0xff]
        %v1057 = vld [vmem:[%s961 + $0x220] sm:$0xff]
        %v1058 = vld [vmem:[%s961 + $0x228] sm:$0xff]
        %v1059 = vld [vmem:[%s961 + $0x230] sm:$0xff]
        %v1060 = vld [vmem:[%s961 + $0x238] sm:$0xff]
        %v1061 = vld [vmem:[%s961 + $0x240] sm:$0xff]
        %v1062 = vld [vmem:[%s961 + $0x248] sm:$0xff]
        %v1063 = vld [vmem:[%s961 + $0x250] sm:$0xff]
        %v1064 = vld [vmem:[%s961 + $0x258] sm:$0xff]
        %v1065 = vld [vmem:[%s961 + $0x260] sm:$0xff]
        %v1066 = vld [vmem:[%s961 + $0x268] sm:$0xff]
        %v1067 = vld [vmem:[%s961 + $0x270] sm:$0xff]
        %v1068 = vld [vmem:[%s961 + $0x278] sm:$0xff]
        %v1069 = vld [vmem:[%s961 + $0x280] sm:$0xff]
        %v1070 = vld [vmem:[%s961 + $0x288] sm:$0xff]
        %v1071 = vld [vmem:[%s961 + $0x290] sm:$0xff]
        %v1072 = vld [vmem:[%s961 + $0x298] sm:$0xff]
        %v1073 = vld [vmem:[%s961 + $0x2a0] sm:$0xff]
        %v1074 = vld [vmem:[%s961 + $0x2a8] sm:$0xff]
        %v1075 = vld [vmem:[%s961 + $0x2b0] sm:$0xff]
        %v1076 = vld [vmem:[%s961 + $0x2b8] sm:$0xff]
        %v1077 = vld [vmem:[%s961 + $0x2c0] sm:$0xff]
        %v1078 = vld [vmem:[%s961 + $0x2c8] sm:$0xff]
        %v1079 = vld [vmem:[%s961 + $0x2d0] sm:$0xff]
        %v1080 = vld [vmem:[%s961 + $0x2d8] sm:$0xff]
        %v1081 = vld [vmem:[%s961 + $0x2e0] sm:$0xff]
        %v1082 = vld [vmem:[%s961 + $0x2e8] sm:$0xff]
        %v1083 = vld [vmem:[%s961 + $0x2f0] sm:$0xff]
        %v1084 = vld [vmem:[%s961 + $0x2f8] sm:$0xff]
        %v1085 = vld [vmem:[%s961 + $0x300] sm:$0xff]
        %v1086 = vld [vmem:[%s961 + $0x308] sm:$0xff]
        %v1087 = vld [vmem:[%s961 + $0x310] sm:$0xff]
        %v1088 = vld [vmem:[%s961 + $0x318] sm:$0xff]
        %v1089 = vld [vmem:[%s961 + $0x320] sm:$0xff]
        %v1090 = vld [vmem:[%s961 + $0x328] sm:$0xff]
        %v1091 = vld [vmem:[%s961 + $0x330] sm:$0xff]
        %v1092 = vld [vmem:[%s961 + $0x338] sm:$0xff]
        %v1093 = vld [vmem:[%s961 + $0x340] sm:$0xff]
        %v1094 = vld [vmem:[%s961 + $0x348] sm:$0xff]
        %v1095 = vld [vmem:[%s961 + $0x350] sm:$0xff]
        %v1096 = vld [vmem:[%s961 + $0x358] sm:$0xff]
        %v1097 = vld [vmem:[%s961 + $0x360] sm:$0xff]
        %v1098 = vld [vmem:[%s961 + $0x368] sm:$0xff]
        %v1099 = vld [vmem:[%s961 + $0x370] sm:$0xff]
        %v1100 = vld [vmem:[%s961 + $0x378] sm:$0xff]
        %v1101 = vld [vmem:[%s961 + $0x380] sm:$0xff]
        %v1102 = vld [vmem:[%s961 + $0x388] sm:$0xff]
        %v1103 = vld [vmem:[%s961 + $0x390] sm:$0xff]
        %v1104 = vld [vmem:[%s961 + $0x398] sm:$0xff]
        %v1105 = vld [vmem:[%s961 + $0x3a0] sm:$0xff]
        %v1106 = vld [vmem:[%s961 + $0x3a8] sm:$0xff]
        %v1107 = vld [vmem:[%s961 + $0x3b0] sm:$0xff]
        %v1108 = vld [vmem:[%s961 + $0x3b8] sm:$0xff]
        %v1109 = vld [vmem:[%s961 + $0x3c0] sm:$0xff]
        %v1110 = vld [vmem:[%s961 + $0x3c8] sm:$0xff]
        %v1111 = vld [vmem:[%s961 + $0x3d0] sm:$0xff]
        %v1112 = vld [vmem:[%s961 + $0x3d8] sm:$0xff]
        %v1113 = vld [vmem:[%s961 + $0x3e0] sm:$0xff]
        %v1114 = vld [vmem:[%s961 + $0x3e8] sm:$0xff]
        %v1115 = vld [vmem:[%s961 + $0x3f0] sm:$0xff]
        %v1116 = vld [vmem:[%s961 + $0x3f8] sm:$0xff]
        %v1117 = vld [vmem:[%s961 + $0x400] sm:$0xff]
        %v1118 = vld [vmem:[%s961 + $0x408] sm:$0xff]
        %v1119 = vld [vmem:[%s961 + $0x410] sm:$0xff]
        %v1120 = vld [vmem:[%s961 + $0x418] sm:$0xff]
        %v1121 = vld [vmem:[%s961 + $0x420] sm:$0xff]
        %v1122 = vld [vmem:[%s961 + $0x428] sm:$0xff]
        %v1123 = vld [vmem:[%s961 + $0x430] sm:$0xff]
        %v1124 = vld [vmem:[%s961 + $0x438] sm:$0xff]
        %v1125 = vld [vmem:[%s961 + $0x440] sm:$0xff]
        %v1126 = vld [vmem:[%s961 + $0x448] sm:$0xff]
        %v1127 = vld [vmem:[%s961 + $0x450] sm:$0xff]
        %v1128 = vld [vmem:[%s961 + $0x458] sm:$0xff]
        %v1129 = vld [vmem:[%s961 + $0x460] sm:$0xff]
        %v1130 = vld [vmem:[%s961 + $0x468] sm:$0xff]
        %v1131 = vld [vmem:[%s961 + $0x470] sm:$0xff]
        %v1132 = vld [vmem:[%s961 + $0x478] sm:$0xff]
        %v1133 = vld [vmem:[%s961 + $0x480] sm:$0xff]
        %v1134 = vld [vmem:[%s961 + $0x488] sm:$0xff]
        %v1135 = vld [vmem:[%s961 + $0x490] sm:$0xff]
        %v1136 = vld [vmem:[%s961 + $0x498] sm:$0xff]
        %v1137 = vld [vmem:[%s961 + $0x4a0] sm:$0xff]
        %v1138 = vld [vmem:[%s961 + $0x4a8] sm:$0xff]
        %v1139 = vld [vmem:[%s961 + $0x4b0] sm:$0xff]
        %v1140 = vld [vmem:[%s961 + $0x4b8] sm:$0xff]
        %v1141 = vld [vmem:[%s961 + $0x4c0] sm:$0xff]
        %v1142 = vld [vmem:[%s961 + $0x4c8] sm:$0xff]
        %v1143 = vld [vmem:[%s961 + $0x4d0] sm:$0xff]
        %v1144 = vld [vmem:[%s961 + $0x4d8] sm:$0xff]
        %v1145 = vld [vmem:[%s961 + $0x4e0] sm:$0xff]
        %v1146 = vld [vmem:[%s961 + $0x4e8] sm:$0xff]
        %v1147 = vld [vmem:[%s961 + $0x4f0] sm:$0xff]
        %v1148 = vld [vmem:[%s961 + $0x4f8] sm:$0xff]
        %v1149 = vld [vmem:[%s961 + $0x500] sm:$0xff]
        %v1150 = vld [vmem:[%s961 + $0x508] sm:$0xff]
        %v1151 = vld [vmem:[%s961 + $0x510] sm:$0xff]
        %v1152 = vld [vmem:[%s961 + $0x518] sm:$0xff]
        %v1153 = vld [vmem:[%s961 + $0x520] sm:$0xff]
        %v1154 = vld [vmem:[%s961 + $0x528] sm:$0xff]
        %v1155 = vld [vmem:[%s961 + $0x530] sm:$0xff]
        %v1156 = vld [vmem:[%s961 + $0x538] sm:$0xff]
        %v1157 = vld [vmem:[%s961 + $0x540] sm:$0xff]
        %v1158 = vld [vmem:[%s961 + $0x548] sm:$0xff]
        %v1159 = vld [vmem:[%s961 + $0x550] sm:$0xff]
        %v1160 = vld [vmem:[%s961 + $0x558] sm:$0xff]
        %v1161 = vld [vmem:[%s961 + $0x560] sm:$0xff]
        %v1162 = vld [vmem:[%s961 + $0x568] sm:$0xff]
        %v1163 = vld [vmem:[%s961 + $0x570] sm:$0xff]
        %v1164 = vld [vmem:[%s961 + $0x578] sm:$0xff]
        %v1165 = vld [vmem:[%s961 + $0x580] sm:$0xff]
        %v1166 = vld [vmem:[%s961 + $0x588] sm:$0xff]
        %v1167 = vld [vmem:[%s961 + $0x590] sm:$0xff]
        %v1168 = vld [vmem:[%s961 + $0x598] sm:$0xff]
        %v1169 = vld [vmem:[%s961 + $0x5a0] sm:$0xff]
        %v1170 = vld [vmem:[%s961 + $0x5a8] sm:$0xff]
        %v1171 = vld [vmem:[%s961 + $0x5b0] sm:$0xff]
        %v1172 = vld [vmem:[%s961 + $0x5b8] sm:$0xff]
        %v1173 = vld [vmem:[%s961 + $0x5c0] sm:$0xff]
        %v1174 = vld [vmem:[%s961 + $0x5c8] sm:$0xff]
        %v1175 = vld [vmem:[%s961 + $0x5d0] sm:$0xff]
        %v1176 = vld [vmem:[%s961 + $0x5d8] sm:$0xff]
        %v1177 = vld [vmem:[%s961 + $0x5e0] sm:$0xff]
        %v1178 = vld [vmem:[%s961 + $0x5e8] sm:$0xff]
        %v1179 = vld [vmem:[%s961 + $0x5f0] sm:$0xff]
        %v1180 = vld [vmem:[%s961 + $0x5f8] sm:$0xff]
        %v1181 = vld [vmem:[%s961 + $0x600] sm:$0xff]
        %v1182 = vld [vmem:[%s961 + $0x608] sm:$0xff]
        %v1183 = vld [vmem:[%s961 + $0x610] sm:$0xff]
        %v1184 = vld [vmem:[%s961 + $0x618] sm:$0xff]
        %v1185 = vld [vmem:[%s1] sm:$0xff]
        %v1186 = vld [vmem:[%s1 + $0x8] sm:$0xff]
        %v1187 = vld [vmem:[%s1 + $0x10] sm:$0xff]
        %v1188 = vld [vmem:[%s1 + $0x18] sm:$0xff]
        %v1189 = vld [vmem:[%s1 + $0x20] sm:$0xff]
        %v1190 = vld [vmem:[%s1 + $0x28] sm:$0xff]
        %v1191 = vld [vmem:[%s1 + $0x30] sm:$0xff]
        %v1192 = vld [vmem:[%s1 + $0x38] sm:$0xff]
        %v1193 = vld [vmem:[%s1 + $0x40] sm:$0xff]
        %v1194 = vld [vmem:[%s1 + $0x48] sm:$0xff]
        %v1195 = vld [vmem:[%s1 + $0x50] sm:$0xff]
        %v1196 = vld [vmem:[%s1 + $0x58] sm:$0xff]
        %v1197 = vld [vmem:[%s1 + $0x60] sm:$0xff]
        %v1198 = vld [vmem:[%s1 + $0x68] sm:$0xff]
        %v1199 = vld [vmem:[%s1 + $0x70] sm:$0xff]
        %v1200 = vld [vmem:[%s1 + $0x78] sm:$0xff]
        %1201 = vmatprep.subr.mxu0 0.0
        %1202 = vmatpush1.msra.mxu0 %v1200
        %1203 = vmatprep.subr.mxu0 0.0
        %1204 = vmatpush1.msra.mxu0 %v1199
        %1205 = vmatprep.subr.mxu0 0.0
        %1206 = vmatpush1.msra.mxu0 %v1198
        %1207 = vmatprep.subr.mxu0 0.0
        %1208 = vmatpush1.msra.mxu0 %v1197
        %1209 = vmatprep.subr.mxu0 0.0
        %1210 = vmatpush1.msra.mxu0 %v1196
        %1211 = vmatprep.subr.mxu0 0.0
        %1212 = vmatpush1.msra.mxu0 %v1195
        %1213 = vmatprep.subr.mxu0 0.0
        %1214 = vmatpush1.msra.mxu0 %v1194
        %1215 = vmatprep.subr.mxu0 0.0
        %1216 = vmatpush1.msra.mxu0 %v1193
        %1217 = vmatprep.subr.mxu0 0.0
        %1218 = vmatpush1.msra.mxu0 %v1192
        %1219 = vmatprep.subr.mxu0 0.0
        %1220 = vmatpush1.msra.mxu0 %v1191
        %1221 = vmatprep.subr.mxu0 0.0
        %1222 = vmatpush1.msra.mxu0 %v1190
        %1223 = vmatprep.subr.mxu0 0.0
        %1224 = vmatpush1.msra.mxu0 %v1189
        %1225 = vmatprep.subr.mxu0 0.0
        %1226 = vmatpush1.msra.mxu0 %v1188
        %1227 = vmatprep.subr.mxu0 0.0
        %1228 = vmatpush1.msra.mxu0 %v1187
        %1229 = vmatprep.subr.mxu0 0.0
        %1230 = vmatpush1.msra.mxu0 %v1186
        %1231 = vmatprep.subr.mxu0 0.0
        %1232 = vmatpush1.msra.mxu0 %v1185
        %1233 = vmatprep.subr.mxu0 0.0
        %1234 = vmatpush2.msra.mxu0 0.0
        %1235 = vmatprep.subr.mxu0 0.0
        %1236 = vmatpush2.msra.mxu0 0.0
        %1237 = vmatprep.subr.mxu0 0.0
        %1238 = vmatpush2.msra.mxu0 0.0
        %1239 = vmatprep.subr.mxu0 0.0
        %1240 = vmatpush2.msra.mxu0 0.0
        %1241 = vmatprep.subr.mxu0 0.0
        %1242 = vmatpush2.msra.mxu0 0.0
        %1243 = vmatprep.subr.mxu0 0.0
        %1244 = vmatpush2.msra.mxu0 0.0
        %1245 = vmatprep.subr.mxu0 0.0
        %1246 = vmatpush2.msra.mxu0 0.0
        %1247 = vmatprep.subr.mxu0 0.0
        %1248 = vmatpush2.msra.mxu0 0.0
        %1249 = vmatprep.subr.mxu0 0.0
        %1250 = vmatpush2.msra.mxu0 0.0
        %1251 = vmatprep.subr.mxu0 0.0
        %1252 = vmatpush2.msra.mxu0 0.0
        %1253 = vmatprep.subr.mxu0 0.0
        %1254 = vmatpush2.msra.mxu0 0.0
        %1255 = vmatprep.subr.mxu0 0.0
        %1256 = vmatpush2.msra.mxu0 0.0
        %1257 = vmatprep.subr.mxu0 0.0
        %1258 = vmatpush2.msra.mxu0 0.0
        %1259 = vmatprep.subr.mxu0 0.0
        %1260 = vmatpush2.msra.mxu0 0.0
        %1261 = vmatprep.subr.mxu0 0.0
        %1262 = vmatpush2.msra.mxu0 0.0
        %1263 = vmatprep.subr.mxu0 0.0
        %1264 = vmatpush2.msra.mxu0 0.0
        %1265 = vmatprep.mubr.f32.mxu0 0.0
        %1266 = vmatmul.mubr.f32.gmra.mxu0 %v989
        %v1267 = vpop.f32.mrf.mxu0
        %v1268 = vadd.f32 0.0, %v1267
        %v1269 = vpop.f32.mrf.mxu0
        %1270 = vmatprep.mubr.f32.mxu0 0.0
        %1271 = vmatmul.mubr.f32.gmra.mxu0 %v990
        %v1272 = vpop.f32.mrf.mxu0
        %v1273 = vadd.f32 0.0, %v1272
        %v1274 = vpop.f32.mrf.mxu0
        %1275 = vmatprep.mubr.f32.mxu0 0.0
        %1276 = vmatmul.mubr.f32.gmra.mxu0 %v991
        %v1277 = vpop.f32.mrf.mxu0
        %v1278 = vadd.f32 0.0, %v1277
        %v1279 = vpop.f32.mrf.mxu0
        %1280 = vmatprep.mubr.f32.mxu0 0.0
        %1281 = vmatmul.mubr.f32.gmra.mxu0 %v992
        %v1282 = vpop.f32.mrf.mxu0
        %v1283 = vadd.f32 0.0, %v1282
        %v1284 = vpop.f32.mrf.mxu0
        %1285 = vmatprep.mubr.f32.mxu0 0.0
        %1286 = vmatmul.mubr.f32.gmra.mxu0 %v993
        %v1287 = vpop.f32.mrf.mxu0
        %v1288 = vadd.f32 0.0, %v1287
        %v1289 = vpop.f32.mrf.mxu0
        %1290 = vmatprep.mubr.f32.mxu0 0.0
        %1291 = vmatmul.mubr.f32.gmra.mxu0 %v994
        %v1292 = vpop.f32.mrf.mxu0
        %v1293 = vadd.f32 0.0, %v1292
        %v1294 = vpop.f32.mrf.mxu0
        %1295 = vmatprep.mubr.f32.mxu0 0.0
        %1296 = vmatmul.mubr.f32.gmra.mxu0 %v995
        %v1297 = vpop.f32.mrf.mxu0
        %v1298 = vadd.f32 0.0, %v1297
        %v1299 = vpop.f32.mrf.mxu0
        %1300 = vmatprep.mubr.f32.mxu0 0.0
        %1301 = vmatmul.mubr.f32.gmra.mxu0 %v996
        %v1302 = vpop.f32.mrf.mxu0
        %v1303 = vadd.f32 0.0, %v1302
        %v1304 = vpop.f32.mrf.mxu0
        %1305 = vmatprep.mubr.f32.mxu0 0.0
        %1306 = vmatmul.mubr.f32.gmra.mxu0 %v997
        %v1307 = vpop.f32.mrf.mxu0
        %v1308 = vadd.f32 0.0, %v1307
        %v1309 = vpop.f32.mrf.mxu0
        %1310 = vmatprep.mubr.f32.mxu0 0.0
        %1311 = vmatmul.mubr.f32.gmra.mxu0 %v998
        %v1312 = vpop.f32.mrf.mxu0
        %v1313 = vadd.f32 0.0, %v1312
        %v1314 = vpop.f32.mrf.mxu0
        %1315 = vmatprep.mubr.f32.mxu0 0.0
        %1316 = vmatmul.mubr.f32.gmra.mxu0 %v999
        %v1317 = vpop.f32.mrf.mxu0
        %v1318 = vadd.f32 0.0, %v1317
        %v1319 = vpop.f32.mrf.mxu0
        %1320 = vmatprep.mubr.f32.mxu0 0.0
        %1321 = vmatmul.mubr.f32.gmra.mxu0 %v1000
        %v1322 = vpop.f32.mrf.mxu0
        %v1323 = vadd.f32 0.0, %v1322
        %v1324 = vpop.f32.mrf.mxu0
        %1325 = vmatprep.mubr.f32.mxu0 0.0
        %1326 = vmatmul.mubr.f32.gmra.mxu0 %v1001
        %v1327 = vpop.f32.mrf.mxu0
        %v1328 = vadd.f32 0.0, %v1327
        %v1329 = vpop.f32.mrf.mxu0
        %1330 = vmatprep.mubr.f32.mxu0 0.0
        %1331 = vmatmul.mubr.f32.gmra.mxu0 %v1002
        %v1332 = vpop.f32.mrf.mxu0
        %v1333 = vadd.f32 0.0, %v1332
        %v1334 = vpop.f32.mrf.mxu0
        %1335 = vmatprep.mubr.f32.mxu0 0.0
        %1336 = vmatmul.mubr.f32.gmra.mxu0 %v1003
        %v1337 = vpop.f32.mrf.mxu0
        %v1338 = vadd.f32 0.0, %v1337
        %v1339 = vpop.f32.mrf.mxu0
        %1340 = vmatprep.mubr.f32.mxu0 0.0
        %1341 = vmatmul.mubr.f32.gmra.mxu0 %v1004
        %v1342 = vpop.f32.mrf.mxu0
        %v1343 = vadd.f32 0.0, %v1342
        %v1344 = vpop.f32.mrf.mxu0
        %1345 = vmatprep.mubr.f32.mxu0 0.0
        %1346 = vmatmul.mubr.f32.gmra.mxu0 %v1005
        %v1347 = vpop.f32.mrf.mxu0
        %v1348 = vadd.f32 0.0, %v1347
        %v1349 = vpop.f32.mrf.mxu0
        %1350 = vmatprep.mubr.f32.mxu0 0.0
        %1351 = vmatmul.mubr.f32.gmra.mxu0 %v1006
        %v1352 = vpop.f32.mrf.mxu0
        %v1353 = vadd.f32 0.0, %v1352
        %v1354 = vpop.f32.mrf.mxu0
        %1355 = vmatprep.mubr.f32.mxu0 0.0
        %1356 = vmatmul.mubr.f32.gmra.mxu0 %v1007
        %v1357 = vpop.f32.mrf.mxu0
        %v1358 = vadd.f32 0.0, %v1357
        %v1359 = vpop.f32.mrf.mxu0
        %1360 = vmatprep.mubr.f32.mxu0 0.0
        %1361 = vmatmul.mubr.f32.gmra.mxu0 %v1008
        %v1362 = vpop.f32.mrf.mxu0
        %v1363 = vadd.f32 0.0, %v1362
        %v1364 = vpop.f32.mrf.mxu0
        %1365 = vmatprep.mubr.f32.mxu0 0.0
        %1366 = vmatmul.mubr.f32.gmra.mxu0 %v1009
        %v1367 = vpop.f32.mrf.mxu0
        %v1368 = vadd.f32 0.0, %v1367
        %v1369 = vpop.f32.mrf.mxu0
        %1370 = vmatprep.mubr.f32.mxu0 0.0
        %1371 = vmatmul.mubr.f32.gmra.mxu0 %v1010
        %v1372 = vpop.f32.mrf.mxu0
        %v1373 = vadd.f32 0.0, %v1372
        %v1374 = vpop.f32.mrf.mxu0
        %1375 = vmatprep.mubr.f32.mxu0 0.0
        %1376 = vmatmul.mubr.f32.gmra.mxu0 %v1011
        %v1377 = vpop.f32.mrf.mxu0
        %v1378 = vadd.f32 0.0, %v1377
        %v1379 = vpop.f32.mrf.mxu0
        %1380 = vmatprep.mubr.f32.mxu0 0.0
        %1381 = vmatmul.mubr.f32.gmra.mxu0 %v1012
        %v1382 = vpop.f32.mrf.mxu0
        %v1383 = vadd.f32 0.0, %v1382
        %v1384 = vpop.f32.mrf.mxu0
        %1385 = vmatprep.mubr.f32.mxu0 0.0
        %1386 = vmatmul.mubr.f32.gmra.mxu0 %v1013
        %v1387 = vpop.f32.mrf.mxu0
        %v1388 = vadd.f32 0.0, %v1387
        %v1389 = vpop.f32.mrf.mxu0
        %1390 = vmatprep.mubr.f32.mxu0 0.0
        %1391 = vmatmul.mubr.f32.gmra.mxu0 %v1014
        %v1392 = vpop.f32.mrf.mxu0
        %v1393 = vadd.f32 0.0, %v1392
        %v1394 = vpop.f32.mrf.mxu0
        %1395 = vmatprep.mubr.f32.mxu0 0.0
        %1396 = vmatmul.mubr.f32.gmra.mxu0 %v1015
        %v1397 = vpop.f32.mrf.mxu0
        %v1398 = vadd.f32 0.0, %v1397
        %v1399 = vpop.f32.mrf.mxu0
        %1400 = vmatprep.mubr.f32.mxu0 0.0
        %1401 = vmatmul.mubr.f32.gmra.mxu0 %v1016
        %v1402 = vpop.f32.mrf.mxu0
        %v1403 = vadd.f32 0.0, %v1402
        %v1404 = vpop.f32.mrf.mxu0
        %1405 = vmatprep.mubr.f32.mxu0 0.0
        %1406 = vmatmul.mubr.f32.gmra.mxu0 %v1017
        %v1407 = vpop.f32.mrf.mxu0
        %v1408 = vadd.f32 0.0, %v1407
        %v1409 = vpop.f32.mrf.mxu0
        %1410 = vmatprep.mubr.f32.mxu0 0.0
        %1411 = vmatmul.mubr.f32.gmra.mxu0 %v1018
        %v1412 = vpop.f32.mrf.mxu0
        %v1413 = vadd.f32 0.0, %v1412
        %v1414 = vpop.f32.mrf.mxu0
        %1415 = vmatprep.mubr.f32.mxu0 0.0
        %1416 = vmatmul.mubr.f32.gmra.mxu0 %v1019
        %v1417 = vpop.f32.mrf.mxu0
        %v1418 = vadd.f32 0.0, %v1417
        %v1419 = vpop.f32.mrf.mxu0
        %1420 = vmatprep.mubr.f32.mxu0 0.0
        %1421 = vmatmul.mubr.f32.gmra.mxu0 %v1020
        %v1422 = vpop.f32.mrf.mxu0
        %v1423 = vadd.f32 0.0, %v1422
        %v1424 = vpop.f32.mrf.mxu0
        %1425 = vmatprep.mubr.f32.mxu0 0.0
        %1426 = vmatmul.mubr.f32.gmra.mxu0 %v1021
        %v1427 = vpop.f32.mrf.mxu0
        %v1428 = vadd.f32 0.0, %v1427
        %v1429 = vpop.f32.mrf.mxu0
        %1430 = vmatprep.mubr.f32.mxu0 0.0
        %1431 = vmatmul.mubr.f32.gmra.mxu0 %v1022
        %v1432 = vpop.f32.mrf.mxu0
        %v1433 = vadd.f32 0.0, %v1432
        %v1434 = vpop.f32.mrf.mxu0
        %1435 = vmatprep.mubr.f32.mxu0 0.0
        %1436 = vmatmul.mubr.f32.gmra.mxu0 %v1023
        %v1437 = vpop.f32.mrf.mxu0
        %v1438 = vadd.f32 0.0, %v1437
        %v1439 = vpop.f32.mrf.mxu0
        %1440 = vmatprep.mubr.f32.mxu0 0.0
        %1441 = vmatmul.mubr.f32.gmra.mxu0 %v1024
        %v1442 = vpop.f32.mrf.mxu0
        %v1443 = vadd.f32 0.0, %v1442
        %v1444 = vpop.f32.mrf.mxu0
        %1445 = vmatprep.mubr.f32.mxu0 0.0
        %1446 = vmatmul.mubr.f32.gmra.mxu0 %v1025
        %v1447 = vpop.f32.mrf.mxu0
        %v1448 = vadd.f32 0.0, %v1447
        %v1449 = vpop.f32.mrf.mxu0
        %1450 = vmatprep.mubr.f32.mxu0 0.0
        %1451 = vmatmul.mubr.f32.gmra.mxu0 %v1026
        %v1452 = vpop.f32.mrf.mxu0
        %v1453 = vadd.f32 0.0, %v1452
        %v1454 = vpop.f32.mrf.mxu0
        %1455 = vmatprep.mubr.f32.mxu0 0.0
        %1456 = vmatmul.mubr.f32.gmra.mxu0 %v1027
        %v1457 = vpop.f32.mrf.mxu0
        %v1458 = vadd.f32 0.0, %v1457
        %v1459 = vpop.f32.mrf.mxu0
        %1460 = vmatprep.mubr.f32.mxu0 0.0
        %1461 = vmatmul.mubr.f32.gmra.mxu0 %v1028
        %v1462 = vpop.f32.mrf.mxu0
        %v1463 = vadd.f32 0.0, %v1462
        %v1464 = vpop.f32.mrf.mxu0
        %1465 = vmatprep.mubr.f32.mxu0 0.0
        %1466 = vmatmul.mubr.f32.gmra.mxu0 %v1029
        %v1467 = vpop.f32.mrf.mxu0
        %v1468 = vadd.f32 0.0, %v1467
        %v1469 = vpop.f32.mrf.mxu0
        %1470 = vmatprep.mubr.f32.mxu0 0.0
        %1471 = vmatmul.mubr.f32.gmra.mxu0 %v1030
        %v1472 = vpop.f32.mrf.mxu0
        %v1473 = vadd.f32 0.0, %v1472
        %v1474 = vpop.f32.mrf.mxu0
        %1475 = vmatprep.mubr.f32.mxu0 0.0
        %1476 = vmatmul.mubr.f32.gmra.mxu0 %v1031
        %v1477 = vpop.f32.mrf.mxu0
        %v1478 = vadd.f32 0.0, %v1477
        %v1479 = vpop.f32.mrf.mxu0
        %1480 = vmatprep.mubr.f32.mxu0 0.0
        %1481 = vmatmul.mubr.f32.gmra.mxu0 %v1032
        %v1482 = vpop.f32.mrf.mxu0
        %v1483 = vadd.f32 0.0, %v1482
        %v1484 = vpop.f32.mrf.mxu0
        %1485 = vmatprep.mubr.f32.mxu0 0.0
        %1486 = vmatmul.mubr.f32.gmra.mxu0 %v1033
        %v1487 = vpop.f32.mrf.mxu0
        %v1488 = vadd.f32 0.0, %v1487
        %v1489 = vpop.f32.mrf.mxu0
        %1490 = vmatprep.mubr.f32.mxu0 0.0
        %1491 = vmatmul.mubr.f32.gmra.mxu0 %v1034
        %v1492 = vpop.f32.mrf.mxu0
        %v1493 = vadd.f32 0.0, %v1492
        %v1494 = vpop.f32.mrf.mxu0
        %1495 = vmatprep.mubr.f32.mxu0 0.0
        %1496 = vmatmul.mubr.f32.gmra.mxu0 %v1035
        %v1497 = vpop.f32.mrf.mxu0
        %v1498 = vadd.f32 0.0, %v1497
        %v1499 = vpop.f32.mrf.mxu0
        %1500 = vmatprep.mubr.f32.mxu0 0.0
        %1501 = vmatmul.mubr.f32.gmra.mxu0 %v1036
        %v1502 = vpop.f32.mrf.mxu0
        %v1503 = vadd.f32 0.0, %v1502
        %v1504 = vpop.f32.mrf.mxu0
        %1505 = vmatprep.mubr.f32.mxu0 0.0
        %1506 = vmatmul.mubr.f32.gmra.mxu0 %v1037
        %v1507 = vpop.f32.mrf.mxu0
        %v1508 = vadd.f32 0.0, %v1507
        %v1509 = vpop.f32.mrf.mxu0
        %1510 = vmatprep.mubr.f32.mxu0 0.0
        %1511 = vmatmul.mubr.f32.gmra.mxu0 %v1038
        %v1512 = vpop.f32.mrf.mxu0
        %v1513 = vadd.f32 0.0, %v1512
        %v1514 = vpop.f32.mrf.mxu0
        %1515 = vmatprep.mubr.f32.mxu0 0.0
        %1516 = vmatmul.mubr.f32.gmra.mxu0 %v1039
        %v1517 = vpop.f32.mrf.mxu0
        %v1518 = vadd.f32 0.0, %v1517
        %v1519 = vpop.f32.mrf.mxu0
        %1520 = vmatprep.mubr.f32.mxu0 0.0
        %1521 = vmatmul.mubr.f32.gmra.mxu0 %v1040
        %v1522 = vpop.f32.mrf.mxu0
        %v1523 = vadd.f32 0.0, %v1522
        %v1524 = vpop.f32.mrf.mxu0
        %1525 = vmatprep.mubr.f32.mxu0 0.0
        %1526 = vmatmul.mubr.f32.gmra.mxu0 %v1041
        %v1527 = vpop.f32.mrf.mxu0
        %v1528 = vadd.f32 0.0, %v1527
        %v1529 = vpop.f32.mrf.mxu0
        %1530 = vmatprep.mubr.f32.mxu0 0.0
        %1531 = vmatmul.mubr.f32.gmra.mxu0 %v1042
        %v1532 = vpop.f32.mrf.mxu0
        %v1533 = vadd.f32 0.0, %v1532
        %v1534 = vpop.f32.mrf.mxu0
        %1535 = vmatprep.mubr.f32.mxu0 0.0
        %1536 = vmatmul.mubr.f32.gmra.mxu0 %v1043
        %v1537 = vpop.f32.mrf.mxu0
        %v1538 = vadd.f32 0.0, %v1537
        %v1539 = vpop.f32.mrf.mxu0
        %1540 = vmatprep.mubr.f32.mxu0 0.0
        %1541 = vmatmul.mubr.f32.gmra.mxu0 %v1044
        %v1542 = vpop.f32.mrf.mxu0
        %v1543 = vadd.f32 0.0, %v1542
        %v1544 = vpop.f32.mrf.mxu0
        %1545 = vmatprep.mubr.f32.mxu0 0.0
        %1546 = vmatmul.mubr.f32.gmra.mxu0 %v1045
        %v1547 = vpop.f32.mrf.mxu0
        %v1548 = vadd.f32 0.0, %v1547
        %v1549 = vpop.f32.mrf.mxu0
        %1550 = vmatprep.mubr.f32.mxu0 0.0
        %1551 = vmatmul.mubr.f32.gmra.mxu0 %v1046
        %v1552 = vpop.f32.mrf.mxu0
        %v1553 = vadd.f32 0.0, %v1552
        %v1554 = vpop.f32.mrf.mxu0
        %1555 = vmatprep.mubr.f32.mxu0 0.0
        %1556 = vmatmul.mubr.f32.gmra.mxu0 %v1047
        %v1557 = vpop.f32.mrf.mxu0
        %v1558 = vadd.f32 0.0, %v1557
        %v1559 = vpop.f32.mrf.mxu0
        %1560 = vmatprep.mubr.f32.mxu0 0.0
        %1561 = vmatmul.mubr.f32.gmra.mxu0 %v1048
        %v1562 = vpop.f32.mrf.mxu0
        %v1563 = vadd.f32 0.0, %v1562
        %v1564 = vpop.f32.mrf.mxu0
        %1565 = vmatprep.mubr.f32.mxu0 0.0
        %1566 = vmatmul.mubr.f32.gmra.mxu0 %v1049
        %v1567 = vpop.f32.mrf.mxu0
        %v1568 = vadd.f32 0.0, %v1567
        %v1569 = vpop.f32.mrf.mxu0
        %1570 = vmatprep.mubr.f32.mxu0 0.0
        %1571 = vmatmul.mubr.f32.gmra.mxu0 %v1050
        %v1572 = vpop.f32.mrf.mxu0
        %v1573 = vadd.f32 0.0, %v1572
        %v1574 = vpop.f32.mrf.mxu0
        %1575 = vmatprep.mubr.f32.mxu0 0.0
        %1576 = vmatmul.mubr.f32.gmra.mxu0 %v1051
        %v1577 = vpop.f32.mrf.mxu0
        %v1578 = vadd.f32 0.0, %v1577
        %v1579 = vpop.f32.mrf.mxu0
        %1580 = vmatprep.mubr.f32.mxu0 0.0
        %1581 = vmatmul.mubr.f32.gmra.mxu0 %v1052
        %v1582 = vpop.f32.mrf.mxu0
        %v1583 = vadd.f32 0.0, %v1582
        %v1584 = vpop.f32.mrf.mxu0
        %1585 = vmatprep.mubr.f32.mxu0 0.0
        %1586 = vmatmul.mubr.f32.gmra.mxu0 %v1053
        %v1587 = vpop.f32.mrf.mxu0
        %v1588 = vadd.f32 0.0, %v1587
        %v1589 = vpop.f32.mrf.mxu0
        %1590 = vmatprep.mubr.f32.mxu0 0.0
        %1591 = vmatmul.mubr.f32.gmra.mxu0 %v1054
        %v1592 = vpop.f32.mrf.mxu0
        %v1593 = vadd.f32 0.0, %v1592
        %v1594 = vpop.f32.mrf.mxu0
        %1595 = vmatprep.mubr.f32.mxu0 0.0
        %1596 = vmatmul.mubr.f32.gmra.mxu0 %v1055
        %v1597 = vpop.f32.mrf.mxu0
        %v1598 = vadd.f32 0.0, %v1597
        %v1599 = vpop.f32.mrf.mxu0
        %1600 = vmatprep.mubr.f32.mxu0 0.0
        %1601 = vmatmul.mubr.f32.gmra.mxu0 %v1056
        %v1602 = vpop.f32.mrf.mxu0
        %v1603 = vadd.f32 0.0, %v1602
        %v1604 = vpop.f32.mrf.mxu0
        %1605 = vmatprep.mubr.f32.mxu0 0.0
        %1606 = vmatmul.mubr.f32.gmra.mxu0 %v1057
        %v1607 = vpop.f32.mrf.mxu0
        %v1608 = vadd.f32 0.0, %v1607
        %v1609 = vpop.f32.mrf.mxu0
        %1610 = vmatprep.mubr.f32.mxu0 0.0
        %1611 = vmatmul.mubr.f32.gmra.mxu0 %v1058
        %v1612 = vpop.f32.mrf.mxu0
        %v1613 = vadd.f32 0.0, %v1612
        %v1614 = vpop.f32.mrf.mxu0
        %1615 = vmatprep.mubr.f32.mxu0 0.0
        %1616 = vmatmul.mubr.f32.gmra.mxu0 %v1059
        %v1617 = vpop.f32.mrf.mxu0
        %v1618 = vadd.f32 0.0, %v1617
        %v1619 = vpop.f32.mrf.mxu0
        %1620 = vmatprep.mubr.f32.mxu0 0.0
        %1621 = vmatmul.mubr.f32.gmra.mxu0 %v1060
        %v1622 = vpop.f32.mrf.mxu0
        %v1623 = vadd.f32 0.0, %v1622
        %v1624 = vpop.f32.mrf.mxu0
        %1625 = vmatprep.mubr.f32.mxu0 0.0
        %1626 = vmatmul.mubr.f32.gmra.mxu0 %v1061
        %v1627 = vpop.f32.mrf.mxu0
        %v1628 = vadd.f32 0.0, %v1627
        %v1629 = vpop.f32.mrf.mxu0
        %1630 = vmatprep.mubr.f32.mxu0 0.0
        %1631 = vmatmul.mubr.f32.gmra.mxu0 %v1062
        %v1632 = vpop.f32.mrf.mxu0
        %v1633 = vadd.f32 0.0, %v1632
        %v1634 = vpop.f32.mrf.mxu0
        %1635 = vmatprep.mubr.f32.mxu0 0.0
        %1636 = vmatmul.mubr.f32.gmra.mxu0 %v1063
        %v1637 = vpop.f32.mrf.mxu0
        %v1638 = vadd.f32 0.0, %v1637
        %v1639 = vpop.f32.mrf.mxu0
        %1640 = vmatprep.mubr.f32.mxu0 0.0
        %1641 = vmatmul.mubr.f32.gmra.mxu0 %v1064
        %v1642 = vpop.f32.mrf.mxu0
        %v1643 = vadd.f32 0.0, %v1642
        %v1644 = vpop.f32.mrf.mxu0
        %1645 = vmatprep.mubr.f32.mxu0 0.0
        %1646 = vmatmul.mubr.f32.gmra.mxu0 %v1065
        %v1647 = vpop.f32.mrf.mxu0
        %v1648 = vadd.f32 0.0, %v1647
        %v1649 = vpop.f32.mrf.mxu0
        %1650 = vmatprep.mubr.f32.mxu0 0.0
        %1651 = vmatmul.mubr.f32.gmra.mxu0 %v1066
        %v1652 = vpop.f32.mrf.mxu0
        %v1653 = vadd.f32 0.0, %v1652
        %v1654 = vpop.f32.mrf.mxu0
        %1655 = vmatprep.mubr.f32.mxu0 0.0
        %1656 = vmatmul.mubr.f32.gmra.mxu0 %v1067
        %v1657 = vpop.f32.mrf.mxu0
        %v1658 = vadd.f32 0.0, %v1657
        %v1659 = vpop.f32.mrf.mxu0
        %1660 = vmatprep.mubr.f32.mxu0 0.0
        %1661 = vmatmul.mubr.f32.gmra.mxu0 %v1068
        %v1662 = vpop.f32.mrf.mxu0
        %v1663 = vadd.f32 0.0, %v1662
        %v1664 = vpop.f32.mrf.mxu0
        %1665 = vmatprep.mubr.f32.mxu0 0.0
        %1666 = vmatmul.mubr.f32.gmra.mxu0 %v1069
        %v1667 = vpop.f32.mrf.mxu0
        %v1668 = vadd.f32 0.0, %v1667
        %v1669 = vpop.f32.mrf.mxu0
        %1670 = vmatprep.mubr.f32.mxu0 0.0
        %1671 = vmatmul.mubr.f32.gmra.mxu0 %v1070
        %v1672 = vpop.f32.mrf.mxu0
        %v1673 = vadd.f32 0.0, %v1672
        %v1674 = vpop.f32.mrf.mxu0
        %1675 = vmatprep.mubr.f32.mxu0 0.0
        %1676 = vmatmul.mubr.f32.gmra.mxu0 %v1071
        %v1677 = vpop.f32.mrf.mxu0
        %v1678 = vadd.f32 0.0, %v1677
        %v1679 = vpop.f32.mrf.mxu0
        %1680 = vmatprep.mubr.f32.mxu0 0.0
        %1681 = vmatmul.mubr.f32.gmra.mxu0 %v1072
        %v1682 = vpop.f32.mrf.mxu0
        %v1683 = vadd.f32 0.0, %v1682
        %v1684 = vpop.f32.mrf.mxu0
        %1685 = vmatprep.mubr.f32.mxu0 0.0
        %1686 = vmatmul.mubr.f32.gmra.mxu0 %v1073
        %v1687 = vpop.f32.mrf.mxu0
        %v1688 = vadd.f32 0.0, %v1687
        %v1689 = vpop.f32.mrf.mxu0
        %1690 = vmatprep.mubr.f32.mxu0 0.0
        %1691 = vmatmul.mubr.f32.gmra.mxu0 %v1074
        %v1692 = vpop.f32.mrf.mxu0
        %v1693 = vadd.f32 0.0, %v1692
        %v1694 = vpop.f32.mrf.mxu0
        %1695 = vmatprep.mubr.f32.mxu0 0.0
        %1696 = vmatmul.mubr.f32.gmra.mxu0 %v1075
        %v1697 = vpop.f32.mrf.mxu0
        %v1698 = vadd.f32 0.0, %v1697
        %v1699 = vpop.f32.mrf.mxu0
        %1700 = vmatprep.mubr.f32.mxu0 0.0
        %1701 = vmatmul.mubr.f32.gmra.mxu0 %v1076
        %v1702 = vpop.f32.mrf.mxu0
        %v1703 = vadd.f32 0.0, %v1702
        %v1704 = vpop.f32.mrf.mxu0
        %1705 = vmatprep.mubr.f32.mxu0 0.0
        %1706 = vmatmul.mubr.f32.gmra.mxu0 %v1077
        %v1707 = vpop.f32.mrf.mxu0
        %v1708 = vadd.f32 0.0, %v1707
        %v1709 = vpop.f32.mrf.mxu0
        %1710 = vmatprep.mubr.f32.mxu0 0.0
        %1711 = vmatmul.mubr.f32.gmra.mxu0 %v1078
        %v1712 = vpop.f32.mrf.mxu0
        %v1713 = vadd.f32 0.0, %v1712
        %v1714 = vpop.f32.mrf.mxu0
        %1715 = vmatprep.mubr.f32.mxu0 0.0
        %1716 = vmatmul.mubr.f32.gmra.mxu0 %v1079
        %v1717 = vpop.f32.mrf.mxu0
        %v1718 = vadd.f32 0.0, %v1717
        %v1719 = vpop.f32.mrf.mxu0
        %1720 = vmatprep.mubr.f32.mxu0 0.0
        %1721 = vmatmul.mubr.f32.gmra.mxu0 %v1080
        %v1722 = vpop.f32.mrf.mxu0
        %v1723 = vadd.f32 0.0, %v1722
        %v1724 = vpop.f32.mrf.mxu0
        %1725 = vmatprep.mubr.f32.mxu0 0.0
        %1726 = vmatmul.mubr.f32.gmra.mxu0 %v1081
        %v1727 = vpop.f32.mrf.mxu0
        %v1728 = vadd.f32 0.0, %v1727
        %v1729 = vpop.f32.mrf.mxu0
        %1730 = vmatprep.mubr.f32.mxu0 0.0
        %1731 = vmatmul.mubr.f32.gmra.mxu0 %v1082
        %v1732 = vpop.f32.mrf.mxu0
        %v1733 = vadd.f32 0.0, %v1732
        %v1734 = vpop.f32.mrf.mxu0
        %1735 = vmatprep.mubr.f32.mxu0 0.0
        %1736 = vmatmul.mubr.f32.gmra.mxu0 %v1083
        %v1737 = vpop.f32.mrf.mxu0
        %v1738 = vadd.f32 0.0, %v1737
        %v1739 = vpop.f32.mrf.mxu0
        %1740 = vmatprep.mubr.f32.mxu0 0.0
        %1741 = vmatmul.mubr.f32.gmra.mxu0 %v1084
        %v1742 = vpop.f32.mrf.mxu0
        %v1743 = vadd.f32 0.0, %v1742
        %v1744 = vpop.f32.mrf.mxu0
        %1745 = vmatprep.mubr.f32.mxu0 0.0
        %1746 = vmatmul.mubr.f32.gmra.mxu0 %v1085
        %v1747 = vpop.f32.mrf.mxu0
        %v1748 = vadd.f32 0.0, %v1747
        %v1749 = vpop.f32.mrf.mxu0
        %1750 = vmatprep.mubr.f32.mxu0 0.0
        %1751 = vmatmul.mubr.f32.gmra.mxu0 %v1086
        %v1752 = vpop.f32.mrf.mxu0
        %v1753 = vadd.f32 0.0, %v1752
        %v1754 = vpop.f32.mrf.mxu0
        %1755 = vmatprep.mubr.f32.mxu0 0.0
        %1756 = vmatmul.mubr.f32.gmra.mxu0 %v1087
        %v1757 = vpop.f32.mrf.mxu0
        %v1758 = vadd.f32 0.0, %v1757
        %v1759 = vpop.f32.mrf.mxu0
        %1760 = vmatprep.mubr.f32.mxu0 0.0
        %1761 = vmatmul.mubr.f32.gmra.mxu0 %v1088
        %v1762 = vpop.f32.mrf.mxu0
        %v1763 = vadd.f32 0.0, %v1762
        %v1764 = vpop.f32.mrf.mxu0
        %1765 = vmatprep.mubr.f32.mxu0 0.0
        %1766 = vmatmul.mubr.f32.gmra.mxu0 %v1089
        %v1767 = vpop.f32.mrf.mxu0
        %v1768 = vadd.f32 0.0, %v1767
        %v1769 = vpop.f32.mrf.mxu0
        %1770 = vmatprep.mubr.f32.mxu0 0.0
        %1771 = vmatmul.mubr.f32.gmra.mxu0 %v1090
        %v1772 = vpop.f32.mrf.mxu0
        %v1773 = vadd.f32 0.0, %v1772
        %v1774 = vpop.f32.mrf.mxu0
        %1775 = vmatprep.mubr.f32.mxu0 0.0
        %1776 = vmatmul.mubr.f32.gmra.mxu0 %v1091
        %v1777 = vpop.f32.mrf.mxu0
        %v1778 = vadd.f32 0.0, %v1777
        %v1779 = vpop.f32.mrf.mxu0
        %1780 = vmatprep.mubr.f32.mxu0 0.0
        %1781 = vmatmul.mubr.f32.gmra.mxu0 %v1092
        %v1782 = vpop.f32.mrf.mxu0
        %v1783 = vadd.f32 0.0, %v1782
        %v1784 = vpop.f32.mrf.mxu0
        %1785 = vmatprep.mubr.f32.mxu0 0.0
        %1786 = vmatmul.mubr.f32.gmra.mxu0 %v1093
        %v1787 = vpop.f32.mrf.mxu0
        %v1788 = vadd.f32 0.0, %v1787
        %v1789 = vpop.f32.mrf.mxu0
        %1790 = vmatprep.mubr.f32.mxu0 0.0
        %1791 = vmatmul.mubr.f32.gmra.mxu0 %v1094
        %v1792 = vpop.f32.mrf.mxu0
        %v1793 = vadd.f32 0.0, %v1792
        %v1794 = vpop.f32.mrf.mxu0
        %1795 = vmatprep.mubr.f32.mxu0 0.0
        %1796 = vmatmul.mubr.f32.gmra.mxu0 %v1095
        %v1797 = vpop.f32.mrf.mxu0
        %v1798 = vadd.f32 0.0, %v1797
        %v1799 = vpop.f32.mrf.mxu0
        %1800 = vmatprep.mubr.f32.mxu0 0.0
        %1801 = vmatmul.mubr.f32.gmra.mxu0 %v1096
        %v1802 = vpop.f32.mrf.mxu0
        %v1803 = vadd.f32 0.0, %v1802
        %v1804 = vpop.f32.mrf.mxu0
        %1805 = vmatprep.mubr.f32.mxu0 0.0
        %1806 = vmatmul.mubr.f32.gmra.mxu0 %v1097
        %v1807 = vpop.f32.mrf.mxu0
        %v1808 = vadd.f32 0.0, %v1807
        %v1809 = vpop.f32.mrf.mxu0
        %1810 = vmatprep.mubr.f32.mxu0 0.0
        %1811 = vmatmul.mubr.f32.gmra.mxu0 %v1098
        %v1812 = vpop.f32.mrf.mxu0
        %v1813 = vadd.f32 0.0, %v1812
        %v1814 = vpop.f32.mrf.mxu0
        %1815 = vmatprep.mubr.f32.mxu0 0.0
        %1816 = vmatmul.mubr.f32.gmra.mxu0 %v1099
        %v1817 = vpop.f32.mrf.mxu0
        %v1818 = vadd.f32 0.0, %v1817
        %v1819 = vpop.f32.mrf.mxu0
        %1820 = vmatprep.mubr.f32.mxu0 0.0
        %1821 = vmatmul.mubr.f32.gmra.mxu0 %v1100
        %v1822 = vpop.f32.mrf.mxu0
        %v1823 = vadd.f32 0.0, %v1822
        %v1824 = vpop.f32.mrf.mxu0
        %1825 = vmatprep.mubr.f32.mxu0 0.0
        %1826 = vmatmul.mubr.f32.gmra.mxu0 %v1101
        %v1827 = vpop.f32.mrf.mxu0
        %v1828 = vadd.f32 0.0, %v1827
        %v1829 = vpop.f32.mrf.mxu0
        %1830 = vmatprep.mubr.f32.mxu0 0.0
        %1831 = vmatmul.mubr.f32.gmra.mxu0 %v1102
        %v1832 = vpop.f32.mrf.mxu0
        %v1833 = vadd.f32 0.0, %v1832
        %v1834 = vpop.f32.mrf.mxu0
        %1835 = vmatprep.mubr.f32.mxu0 0.0
        %1836 = vmatmul.mubr.f32.gmra.mxu0 %v1103
        %v1837 = vpop.f32.mrf.mxu0
        %v1838 = vadd.f32 0.0, %v1837
        %v1839 = vpop.f32.mrf.mxu0
        %1840 = vmatprep.mubr.f32.mxu0 0.0
        %1841 = vmatmul.mubr.f32.gmra.mxu0 %v1104
        %v1842 = vpop.f32.mrf.mxu0
        %v1843 = vadd.f32 0.0, %v1842
        %v1844 = vpop.f32.mrf.mxu0
        %1845 = vmatprep.mubr.f32.mxu0 0.0
        %1846 = vmatmul.mubr.f32.gmra.mxu0 %v1105
        %v1847 = vpop.f32.mrf.mxu0
        %v1848 = vadd.f32 0.0, %v1847
        %v1849 = vpop.f32.mrf.mxu0
        %1850 = vmatprep.mubr.f32.mxu0 0.0
        %1851 = vmatmul.mubr.f32.gmra.mxu0 %v1106
        %v1852 = vpop.f32.mrf.mxu0
        %v1853 = vadd.f32 0.0, %v1852
        %v1854 = vpop.f32.mrf.mxu0
        %1855 = vmatprep.mubr.f32.mxu0 0.0
        %1856 = vmatmul.mubr.f32.gmra.mxu0 %v1107
        %v1857 = vpop.f32.mrf.mxu0
        %v1858 = vadd.f32 0.0, %v1857
        %v1859 = vpop.f32.mrf.mxu0
        %1860 = vmatprep.mubr.f32.mxu0 0.0
        %1861 = vmatmul.mubr.f32.gmra.mxu0 %v1108
        %v1862 = vpop.f32.mrf.mxu0
        %v1863 = vadd.f32 0.0, %v1862
        %v1864 = vpop.f32.mrf.mxu0
        %1865 = vmatprep.mubr.f32.mxu0 0.0
        %1866 = vmatmul.mubr.f32.gmra.mxu0 %v1109
        %v1867 = vpop.f32.mrf.mxu0
        %v1868 = vadd.f32 0.0, %v1867
        %v1869 = vpop.f32.mrf.mxu0
        %1870 = vmatprep.mubr.f32.mxu0 0.0
        %1871 = vmatmul.mubr.f32.gmra.mxu0 %v1110
        %v1872 = vpop.f32.mrf.mxu0
        %v1873 = vadd.f32 0.0, %v1872
        %v1874 = vpop.f32.mrf.mxu0
        %1875 = vmatprep.mubr.f32.mxu0 0.0
        %1876 = vmatmul.mubr.f32.gmra.mxu0 %v1111
        %v1877 = vpop.f32.mrf.mxu0
        %v1878 = vadd.f32 0.0, %v1877
        %v1879 = vpop.f32.mrf.mxu0
        %1880 = vmatprep.mubr.f32.mxu0 0.0
        %1881 = vmatmul.mubr.f32.gmra.mxu0 %v1112
        %v1882 = vpop.f32.mrf.mxu0
        %v1883 = vadd.f32 0.0, %v1882
        %v1884 = vpop.f32.mrf.mxu0
        %1885 = vmatprep.mubr.f32.mxu0 0.0
        %1886 = vmatmul.mubr.f32.gmra.mxu0 %v1113
        %v1887 = vpop.f32.mrf.mxu0
        %v1888 = vadd.f32 0.0, %v1887
        %v1889 = vpop.f32.mrf.mxu0
        %1890 = vmatprep.mubr.f32.mxu0 0.0
        %1891 = vmatmul.mubr.f32.gmra.mxu0 %v1114
        %v1892 = vpop.f32.mrf.mxu0
        %v1893 = vadd.f32 0.0, %v1892
        %v1894 = vpop.f32.mrf.mxu0
        %1895 = vmatprep.mubr.f32.mxu0 0.0
        %1896 = vmatmul.mubr.f32.gmra.mxu0 %v1115
        %v1897 = vpop.f32.mrf.mxu0
        %v1898 = vadd.f32 0.0, %v1897
        %v1899 = vpop.f32.mrf.mxu0
        %1900 = vmatprep.mubr.f32.mxu0 0.0
        %1901 = vmatmul.mubr.f32.gmra.mxu0 %v1116
        %v1902 = vpop.f32.mrf.mxu0
        %v1903 = vadd.f32 0.0, %v1902
        %v1904 = vpop.f32.mrf.mxu0
        %1905 = vmatprep.mubr.f32.mxu0 0.0
        %1906 = vmatmul.mubr.f32.gmra.mxu0 %v1117
        %v1907 = vpop.f32.mrf.mxu0
        %v1908 = vadd.f32 0.0, %v1907
        %v1909 = vpop.f32.mrf.mxu0
        %1910 = vmatprep.mubr.f32.mxu0 0.0
        %1911 = vmatmul.mubr.f32.gmra.mxu0 %v1118
        %v1912 = vpop.f32.mrf.mxu0
        %v1913 = vadd.f32 0.0, %v1912
        %v1914 = vpop.f32.mrf.mxu0
        %1915 = vmatprep.mubr.f32.mxu0 0.0
        %1916 = vmatmul.mubr.f32.gmra.mxu0 %v1119
        %v1917 = vpop.f32.mrf.mxu0
        %v1918 = vadd.f32 0.0, %v1917
        %v1919 = vpop.f32.mrf.mxu0
        %1920 = vmatprep.mubr.f32.mxu0 0.0
        %1921 = vmatmul.mubr.f32.gmra.mxu0 %v1120
        %v1922 = vpop.f32.mrf.mxu0
        %v1923 = vadd.f32 0.0, %v1922
        %v1924 = vpop.f32.mrf.mxu0
        %1925 = vmatprep.mubr.f32.mxu0 0.0
        %1926 = vmatmul.mubr.f32.gmra.mxu0 %v1121
        %v1927 = vpop.f32.mrf.mxu0
        %v1928 = vadd.f32 0.0, %v1927
        %v1929 = vpop.f32.mrf.mxu0
        %1930 = vmatprep.mubr.f32.mxu0 0.0
        %1931 = vmatmul.mubr.f32.gmra.mxu0 %v1122
        %v1932 = vpop.f32.mrf.mxu0
        %v1933 = vadd.f32 0.0, %v1932
        %v1934 = vpop.f32.mrf.mxu0
        %1935 = vmatprep.mubr.f32.mxu0 0.0
        %1936 = vmatmul.mubr.f32.gmra.mxu0 %v1123
        %v1937 = vpop.f32.mrf.mxu0
        %v1938 = vadd.f32 0.0, %v1937
        %v1939 = vpop.f32.mrf.mxu0
        %1940 = vmatprep.mubr.f32.mxu0 0.0
        %1941 = vmatmul.mubr.f32.gmra.mxu0 %v1124
        %v1942 = vpop.f32.mrf.mxu0
        %v1943 = vadd.f32 0.0, %v1942
        %v1944 = vpop.f32.mrf.mxu0
        %1945 = vmatprep.mubr.f32.mxu0 0.0
        %1946 = vmatmul.mubr.f32.gmra.mxu0 %v1125
        %v1947 = vpop.f32.mrf.mxu0
        %v1948 = vadd.f32 0.0, %v1947
        %v1949 = vpop.f32.mrf.mxu0
        %1950 = vmatprep.mubr.f32.mxu0 0.0
        %1951 = vmatmul.mubr.f32.gmra.mxu0 %v1126
        %v1952 = vpop.f32.mrf.mxu0
        %v1953 = vadd.f32 0.0, %v1952
        %v1954 = vpop.f32.mrf.mxu0
        %1955 = vmatprep.mubr.f32.mxu0 0.0
        %1956 = vmatmul.mubr.f32.gmra.mxu0 %v1127
        %v1957 = vpop.f32.mrf.mxu0
        %v1958 = vadd.f32 0.0, %v1957
        %v1959 = vpop.f32.mrf.mxu0
        %1960 = vmatprep.mubr.f32.mxu0 0.0
        %1961 = vmatmul.mubr.f32.gmra.mxu0 %v1128
        %v1962 = vpop.f32.mrf.mxu0
        %v1963 = vadd.f32 0.0, %v1962
        %v1964 = vpop.f32.mrf.mxu0
        %1965 = vmatprep.mubr.f32.mxu0 0.0
        %1966 = vmatmul.mubr.f32.gmra.mxu0 %v1129
        %v1967 = vpop.f32.mrf.mxu0
        %v1968 = vadd.f32 0.0, %v1967
        %v1969 = vpop.f32.mrf.mxu0
        %1970 = vmatprep.mubr.f32.mxu0 0.0
        %1971 = vmatmul.mubr.f32.gmra.mxu0 %v1130
        %v1972 = vpop.f32.mrf.mxu0
        %v1973 = vadd.f32 0.0, %v1972
        %v1974 = vpop.f32.mrf.mxu0
        %1975 = vmatprep.mubr.f32.mxu0 0.0
        %1976 = vmatmul.mubr.f32.gmra.mxu0 %v1131
        %v1977 = vpop.f32.mrf.mxu0
        %v1978 = vadd.f32 0.0, %v1977
        %v1979 = vpop.f32.mrf.mxu0
        %1980 = vmatprep.mubr.f32.mxu0 0.0
        %1981 = vmatmul.mubr.f32.gmra.mxu0 %v1132
        %v1982 = vpop.f32.mrf.mxu0
        %v1983 = vadd.f32 0.0, %v1982
        %v1984 = vpop.f32.mrf.mxu0
        %1985 = vmatprep.mubr.f32.mxu0 0.0
        %1986 = vmatmul.mubr.f32.gmra.mxu0 %v1133
        %v1987 = vpop.f32.mrf.mxu0
        %v1988 = vadd.f32 0.0, %v1987
        %v1989 = vpop.f32.mrf.mxu0
        %1990 = vmatprep.mubr.f32.mxu0 0.0
        %1991 = vmatmul.mubr.f32.gmra.mxu0 %v1134
        %v1992 = vpop.f32.mrf.mxu0
        %v1993 = vadd.f32 0.0, %v1992
        %v1994 = vpop.f32.mrf.mxu0
        %1995 = vmatprep.mubr.f32.mxu0 0.0
        %1996 = vmatmul.mubr.f32.gmra.mxu0 %v1135
        %v1997 = vpop.f32.mrf.mxu0
        %v1998 = vadd.f32 0.0, %v1997
        %v1999 = vpop.f32.mrf.mxu0
        %2000 = vmatprep.mubr.f32.mxu0 0.0
        %2001 = vmatmul.mubr.f32.gmra.mxu0 %v1136
        %v2002 = vpop.f32.mrf.mxu0
        %v2003 = vadd.f32 0.0, %v2002
        %v2004 = vpop.f32.mrf.mxu0
        %2005 = vmatprep.mubr.f32.mxu0 0.0
        %2006 = vmatmul.mubr.f32.gmra.mxu0 %v1137
        %v2007 = vpop.f32.mrf.mxu0
        %v2008 = vadd.f32 0.0, %v2007
        %v2009 = vpop.f32.mrf.mxu0
        %2010 = vmatprep.mubr.f32.mxu0 0.0
        %2011 = vmatmul.mubr.f32.gmra.mxu0 %v1138
        %v2012 = vpop.f32.mrf.mxu0
        %v2013 = vadd.f32 0.0, %v2012
        %v2014 = vpop.f32.mrf.mxu0
        %2015 = vmatprep.mubr.f32.mxu0 0.0
        %2016 = vmatmul.mubr.f32.gmra.mxu0 %v1139
        %v2017 = vpop.f32.mrf.mxu0
        %v2018 = vadd.f32 0.0, %v2017
        %v2019 = vpop.f32.mrf.mxu0
        %2020 = vmatprep.mubr.f32.mxu0 0.0
        %2021 = vmatmul.mubr.f32.gmra.mxu0 %v1140
        %v2022 = vpop.f32.mrf.mxu0
        %v2023 = vadd.f32 0.0, %v2022
        %v2024 = vpop.f32.mrf.mxu0
        %2025 = vmatprep.mubr.f32.mxu0 0.0
        %2026 = vmatmul.mubr.f32.gmra.mxu0 %v1141
        %v2027 = vpop.f32.mrf.mxu0
        %v2028 = vadd.f32 0.0, %v2027
        %v2029 = vpop.f32.mrf.mxu0
        %2030 = vmatprep.mubr.f32.mxu0 0.0
        %2031 = vmatmul.mubr.f32.gmra.mxu0 %v1142
        %v2032 = vpop.f32.mrf.mxu0
        %v2033 = vadd.f32 0.0, %v2032
        %v2034 = vpop.f32.mrf.mxu0
        %2035 = vmatprep.mubr.f32.mxu0 0.0
        %2036 = vmatmul.mubr.f32.gmra.mxu0 %v1143
        %v2037 = vpop.f32.mrf.mxu0
        %v2038 = vadd.f32 0.0, %v2037
        %v2039 = vpop.f32.mrf.mxu0
        %2040 = vmatprep.mubr.f32.mxu0 0.0
        %2041 = vmatmul.mubr.f32.gmra.mxu0 %v1144
        %v2042 = vpop.f32.mrf.mxu0
        %v2043 = vadd.f32 0.0, %v2042
        %v2044 = vpop.f32.mrf.mxu0
        %2045 = vmatprep.mubr.f32.mxu0 0.0
        %2046 = vmatmul.mubr.f32.gmra.mxu0 %v1145
        %v2047 = vpop.f32.mrf.mxu0
        %v2048 = vadd.f32 0.0, %v2047
        %v2049 = vpop.f32.mrf.mxu0
        %2050 = vmatprep.mubr.f32.mxu0 0.0
        %2051 = vmatmul.mubr.f32.gmra.mxu0 %v1146
        %v2052 = vpop.f32.mrf.mxu0
        %v2053 = vadd.f32 0.0, %v2052
        %v2054 = vpop.f32.mrf.mxu0
        %2055 = vmatprep.mubr.f32.mxu0 0.0
        %2056 = vmatmul.mubr.f32.gmra.mxu0 %v1147
        %v2057 = vpop.f32.mrf.mxu0
        %v2058 = vadd.f32 0.0, %v2057
        %v2059 = vpop.f32.mrf.mxu0
        %2060 = vmatprep.mubr.f32.mxu0 0.0
        %2061 = vmatmul.mubr.f32.gmra.mxu0 %v1148
        %v2062 = vpop.f32.mrf.mxu0
        %v2063 = vadd.f32 0.0, %v2062
        %v2064 = vpop.f32.mrf.mxu0
        %2065 = vmatprep.mubr.f32.mxu0 0.0
        %2066 = vmatmul.mubr.f32.gmra.mxu0 %v1149
        %v2067 = vpop.f32.mrf.mxu0
        %v2068 = vadd.f32 0.0, %v2067
        %v2069 = vpop.f32.mrf.mxu0
        %2070 = vmatprep.mubr.f32.mxu0 0.0
        %2071 = vmatmul.mubr.f32.gmra.mxu0 %v1150
        %v2072 = vpop.f32.mrf.mxu0
        %v2073 = vadd.f32 0.0, %v2072
        %v2074 = vpop.f32.mrf.mxu0
        %2075 = vmatprep.mubr.f32.mxu0 0.0
        %2076 = vmatmul.mubr.f32.gmra.mxu0 %v1151
        %v2077 = vpop.f32.mrf.mxu0
        %v2078 = vadd.f32 0.0, %v2077
        %v2079 = vpop.f32.mrf.mxu0
        %2080 = vmatprep.mubr.f32.mxu0 0.0
        %2081 = vmatmul.mubr.f32.gmra.mxu0 %v1152
        %v2082 = vpop.f32.mrf.mxu0
        %v2083 = vadd.f32 0.0, %v2082
        %v2084 = vpop.f32.mrf.mxu0
        %2085 = vmatprep.mubr.f32.mxu0 0.0
        %2086 = vmatmul.mubr.f32.gmra.mxu0 %v1153
        %v2087 = vpop.f32.mrf.mxu0
        %v2088 = vadd.f32 0.0, %v2087
        %v2089 = vpop.f32.mrf.mxu0
        %2090 = vmatprep.mubr.f32.mxu0 0.0
        %2091 = vmatmul.mubr.f32.gmra.mxu0 %v1154
        %v2092 = vpop.f32.mrf.mxu0
        %v2093 = vadd.f32 0.0, %v2092
        %v2094 = vpop.f32.mrf.mxu0
        %2095 = vmatprep.mubr.f32.mxu0 0.0
        %2096 = vmatmul.mubr.f32.gmra.mxu0 %v1155
        %v2097 = vpop.f32.mrf.mxu0
        %v2098 = vadd.f32 0.0, %v2097
        %v2099 = vpop.f32.mrf.mxu0
        %2100 = vmatprep.mubr.f32.mxu0 0.0
        %2101 = vmatmul.mubr.f32.gmra.mxu0 %v1156
        %v2102 = vpop.f32.mrf.mxu0
        %v2103 = vadd.f32 0.0, %v2102
        %v2104 = vpop.f32.mrf.mxu0
        %2105 = vmatprep.mubr.f32.mxu0 0.0
        %2106 = vmatmul.mubr.f32.gmra.mxu0 %v1157
        %v2107 = vpop.f32.mrf.mxu0
        %v2108 = vadd.f32 0.0, %v2107
        %v2109 = vpop.f32.mrf.mxu0
        %2110 = vmatprep.mubr.f32.mxu0 0.0
        %2111 = vmatmul.mubr.f32.gmra.mxu0 %v1158
        %v2112 = vpop.f32.mrf.mxu0
        %v2113 = vadd.f32 0.0, %v2112
        %v2114 = vpop.f32.mrf.mxu0
        %2115 = vmatprep.mubr.f32.mxu0 0.0
        %2116 = vmatmul.mubr.f32.gmra.mxu0 %v1159
        %v2117 = vpop.f32.mrf.mxu0
        %v2118 = vadd.f32 0.0, %v2117
        %v2119 = vpop.f32.mrf.mxu0
        %2120 = vmatprep.mubr.f32.mxu0 0.0
        %2121 = vmatmul.mubr.f32.gmra.mxu0 %v1160
        %v2122 = vpop.f32.mrf.mxu0
        %v2123 = vadd.f32 0.0, %v2122
        %v2124 = vpop.f32.mrf.mxu0
        %2125 = vmatprep.mubr.f32.mxu0 0.0
        %2126 = vmatmul.mubr.f32.gmra.mxu0 %v1161
        %v2127 = vpop.f32.mrf.mxu0
        %v2128 = vadd.f32 0.0, %v2127
        %v2129 = vpop.f32.mrf.mxu0
        %2130 = vmatprep.mubr.f32.mxu0 0.0
        %2131 = vmatmul.mubr.f32.gmra.mxu0 %v1162
        %v2132 = vpop.f32.mrf.mxu0
        %v2133 = vadd.f32 0.0, %v2132
        %v2134 = vpop.f32.mrf.mxu0
        %2135 = vmatprep.mubr.f32.mxu0 0.0
        %2136 = vmatmul.mubr.f32.gmra.mxu0 %v1163
        %v2137 = vpop.f32.mrf.mxu0
        %v2138 = vadd.f32 0.0, %v2137
        %v2139 = vpop.f32.mrf.mxu0
        %2140 = vmatprep.mubr.f32.mxu0 0.0
        %2141 = vmatmul.mubr.f32.gmra.mxu0 %v1164
        %v2142 = vpop.f32.mrf.mxu0
        %v2143 = vadd.f32 0.0, %v2142
        %v2144 = vpop.f32.mrf.mxu0
        %2145 = vmatprep.mubr.f32.mxu0 0.0
        %2146 = vmatmul.mubr.f32.gmra.mxu0 %v1165
        %v2147 = vpop.f32.mrf.mxu0
        %v2148 = vadd.f32 0.0, %v2147
        %v2149 = vpop.f32.mrf.mxu0
        %2150 = vmatprep.mubr.f32.mxu0 0.0
        %2151 = vmatmul.mubr.f32.gmra.mxu0 %v1166
        %v2152 = vpop.f32.mrf.mxu0
        %v2153 = vadd.f32 0.0, %v2152
        %v2154 = vpop.f32.mrf.mxu0
        %2155 = vmatprep.mubr.f32.mxu0 0.0
        %2156 = vmatmul.mubr.f32.gmra.mxu0 %v1167
        %v2157 = vpop.f32.mrf.mxu0
        %v2158 = vadd.f32 0.0, %v2157
        %v2159 = vpop.f32.mrf.mxu0
        %2160 = vmatprep.mubr.f32.mxu0 0.0
        %2161 = vmatmul.mubr.f32.gmra.mxu0 %v1168
        %v2162 = vpop.f32.mrf.mxu0
        %v2163 = vadd.f32 0.0, %v2162
        %v2164 = vpop.f32.mrf.mxu0
        %2165 = vmatprep.mubr.f32.mxu0 0.0
        %2166 = vmatmul.mubr.f32.gmra.mxu0 %v1169
        %v2167 = vpop.f32.mrf.mxu0
        %v2168 = vadd.f32 0.0, %v2167
        %v2169 = vpop.f32.mrf.mxu0
        %2170 = vmatprep.mubr.f32.mxu0 0.0
        %2171 = vmatmul.mubr.f32.gmra.mxu0 %v1170
        %v2172 = vpop.f32.mrf.mxu0
        %v2173 = vadd.f32 0.0, %v2172
        %v2174 = vpop.f32.mrf.mxu0
        %2175 = vmatprep.mubr.f32.mxu0 0.0
        %2176 = vmatmul.mubr.f32.gmra.mxu0 %v1171
        %v2177 = vpop.f32.mrf.mxu0
        %v2178 = vadd.f32 0.0, %v2177
        %v2179 = vpop.f32.mrf.mxu0
        %2180 = vmatprep.mubr.f32.mxu0 0.0
        %2181 = vmatmul.mubr.f32.gmra.mxu0 %v1172
        %v2182 = vpop.f32.mrf.mxu0
        %v2183 = vadd.f32 0.0, %v2182
        %v2184 = vpop.f32.mrf.mxu0
        %2185 = vmatprep.mubr.f32.mxu0 0.0
        %2186 = vmatmul.mubr.f32.gmra.mxu0 %v1173
        %v2187 = vpop.f32.mrf.mxu0
        %v2188 = vadd.f32 0.0, %v2187
        %v2189 = vpop.f32.mrf.mxu0
        %2190 = vmatprep.mubr.f32.mxu0 0.0
        %2191 = vmatmul.mubr.f32.gmra.mxu0 %v1174
        %v2192 = vpop.f32.mrf.mxu0
        %v2193 = vadd.f32 0.0, %v2192
        %v2194 = vpop.f32.mrf.mxu0
        %2195 = vmatprep.mubr.f32.mxu0 0.0
        %2196 = vmatmul.mubr.f32.gmra.mxu0 %v1175
        %v2197 = vpop.f32.mrf.mxu0
        %v2198 = vadd.f32 0.0, %v2197
        %v2199 = vpop.f32.mrf.mxu0
        %2200 = vmatprep.mubr.f32.mxu0 0.0
        %2201 = vmatmul.mubr.f32.gmra.mxu0 %v1176
        %v2202 = vpop.f32.mrf.mxu0
        %v2203 = vadd.f32 0.0, %v2202
        %v2204 = vpop.f32.mrf.mxu0
        %2205 = vmatprep.mubr.f32.mxu0 0.0
        %2206 = vmatmul.mubr.f32.gmra.mxu0 %v1177
        %v2207 = vpop.f32.mrf.mxu0
        %v2208 = vadd.f32 0.0, %v2207
        %v2209 = vpop.f32.mrf.mxu0
        %2210 = vmatprep.mubr.f32.mxu0 0.0
        %2211 = vmatmul.mubr.f32.gmra.mxu0 %v1178
        %v2212 = vpop.f32.mrf.mxu0
        %v2213 = vadd.f32 0.0, %v2212
        %v2214 = vpop.f32.mrf.mxu0
        %2215 = vmatprep.mubr.f32.mxu0 0.0
        %2216 = vmatmul.mubr.f32.gmra.mxu0 %v1179
        %v2217 = vpop.f32.mrf.mxu0
        %v2218 = vadd.f32 0.0, %v2217
        %v2219 = vpop.f32.mrf.mxu0
        %2220 = vmatprep.mubr.f32.mxu0 0.0
        %2221 = vmatmul.mubr.f32.gmra.mxu0 %v1180
        %v2222 = vpop.f32.mrf.mxu0
        %v2223 = vadd.f32 0.0, %v2222
        %v2224 = vpop.f32.mrf.mxu0
        %2225 = vmatprep.mubr.f32.mxu0 0.0
        %2226 = vmatmul.mubr.f32.gmra.mxu0 %v1181
        %v2227 = vpop.f32.mrf.mxu0
        %v2228 = vadd.f32 0.0, %v2227
        %v2229 = vpop.f32.mrf.mxu0
        %2230 = vmatprep.mubr.f32.mxu0 0.0
        %2231 = vmatmul.mubr.f32.gmra.mxu0 %v1182
        %v2232 = vpop.f32.mrf.mxu0
        %v2233 = vadd.f32 0.0, %v2232
        %v2234 = vpop.f32.mrf.mxu0
        %2235 = vmatprep.mubr.f32.mxu0 0.0
        %2236 = vmatmul.mubr.f32.gmra.mxu0 %v1183
        %v2237 = vpop.f32.mrf.mxu0
        %v2238 = vadd.f32 0.0, %v2237
        %v2239 = vpop.f32.mrf.mxu0
        %2240 = vmatprep.mubr.f32.mxu0 0.0
        %2241 = vmatmul.mubr.f32.gmra.mxu0 %v1184
        %v2242 = vpop.f32.mrf.mxu0
        %v2243 = vadd.f32 0.0, %v2242
        %v2244 = vpop.f32.mrf.mxu0
        %2245 = vdwg.mxu0
        %v2246 = vmax.f32 %v1268, %v1513
        %v2247 = vmax.f32 %v2246, %v1758
        %v2248 = vmax.f32 %v2247, %v2003
        %v2249 = vmax.f32 %v1273, %v1518
        %v2250 = vmax.f32 %v2249, %v1763
        %v2251 = vmax.f32 %v2250, %v2008
        %v2252 = vmax.f32 %v1278, %v1523
        %v2253 = vmax.f32 %v2252, %v1768
        %v2254 = vmax.f32 %v2253, %v2013
        %v2255 = vmax.f32 %v1283, %v1528
        %v2256 = vmax.f32 %v2255, %v1773
        %v2257 = vmax.f32 %v2256, %v2018
        %v2258 = vmax.f32 %v1288, %v1533
        %v2259 = vmax.f32 %v2258, %v1778
        %v2260 = vmax.f32 %v2259, %v2023
        %v2261 = vmax.f32 %v1293, %v1538
        %v2262 = vmax.f32 %v2261, %v1783
        %v2263 = vmax.f32 %v2262, %v2028
        %v2264 = vmax.f32 %v1298, %v1543
        %v2265 = vmax.f32 %v2264, %v1788
        %v2266 = vmax.f32 %v2265, %v2033
        %v2267 = vmax.f32 %v1303, %v1548
        %v2268 = vmax.f32 %v2267, %v1793
        %v2269 = vmax.f32 %v2268, %v2038
        %v2270 = vmax.f32 %v1308, %v1553
        %v2271 = vmax.f32 %v2270, %v1798
        %v2272 = vmax.f32 %v2271, %v2043
        %v2273 = vmax.f32 %v1313, %v1558
        %v2274 = vmax.f32 %v2273, %v1803
        %v2275 = vmax.f32 %v2274, %v2048
        %v2276 = vmax.f32 %v1318, %v1563
        %v2277 = vmax.f32 %v2276, %v1808
        %v2278 = vmax.f32 %v2277, %v2053
        %v2279 = vmax.f32 %v1323, %v1568
        %v2280 = vmax.f32 %v2279, %v1813
        %v2281 = vmax.f32 %v2280, %v2058
        %v2282 = vmax.f32 %v1328, %v1573
        %v2283 = vmax.f32 %v2282, %v1818
        %v2284 = vmax.f32 %v2283, %v2063
        %v2285 = vmax.f32 %v1333, %v1578
        %v2286 = vmax.f32 %v2285, %v1823
        %v2287 = vmax.f32 %v2286, %v2068
        %v2288 = vmax.f32 %v1338, %v1583
        %v2289 = vmax.f32 %v2288, %v1828
        %v2290 = vmax.f32 %v2289, %v2073
        %v2291 = vmax.f32 %v1343, %v1588
        %v2292 = vmax.f32 %v2291, %v1833
        %v2293 = vmax.f32 %v2292, %v2078
        %v2294 = vmax.f32 %v1348, %v1593
        %v2295 = vmax.f32 %v2294, %v1838
        %v2296 = vmax.f32 %v2295, %v2083
        %v2297 = vmax.f32 %v1353, %v1598
        %v2298 = vmax.f32 %v2297, %v1843
        %v2299 = vmax.f32 %v2298, %v2088
        %v2300 = vmax.f32 %v1358, %v1603
        %v2301 = vmax.f32 %v2300, %v1848
        %v2302 = vmax.f32 %v2301, %v2093
        %v2303 = vmax.f32 %v1363, %v1608
        %v2304 = vmax.f32 %v2303, %v1853
        %v2305 = vmax.f32 %v2304, %v2098
        %v2306 = vmax.f32 %v1368, %v1613
        %v2307 = vmax.f32 %v2306, %v1858
        %v2308 = vmax.f32 %v2307, %v2103
        %v2309 = vmax.f32 %v1373, %v1618
        %v2310 = vmax.f32 %v2309, %v1863
        %v2311 = vmax.f32 %v2310, %v2108
        %v2312 = vmax.f32 %v1378, %v1623
        %v2313 = vmax.f32 %v2312, %v1868
        %v2314 = vmax.f32 %v2313, %v2113
        %v2315 = vmax.f32 %v1383, %v1628
        %v2316 = vmax.f32 %v2315, %v1873
        %v2317 = vmax.f32 %v2316, %v2118
        %v2318 = vmax.f32 %v1388, %v1633
        %v2319 = vmax.f32 %v2318, %v1878
        %v2320 = vmax.f32 %v2319, %v2123
        %v2321 = vmax.f32 %v1393, %v1638
        %v2322 = vmax.f32 %v2321, %v1883
        %v2323 = vmax.f32 %v2322, %v2128
        %v2324 = vmax.f32 %v1398, %v1643
        %v2325 = vmax.f32 %v2324, %v1888
        %v2326 = vmax.f32 %v2325, %v2133
        %v2327 = vmax.f32 %v1403, %v1648
        %v2328 = vmax.f32 %v2327, %v1893
        %v2329 = vmax.f32 %v2328, %v2138
        %v2330 = vmax.f32 %v1408, %v1653
        %v2331 = vmax.f32 %v2330, %v1898
        %v2332 = vmax.f32 %v2331, %v2143
        %v2333 = vmax.f32 %v1413, %v1658
        %v2334 = vmax.f32 %v2333, %v1903
        %v2335 = vmax.f32 %v2334, %v2148
        %v2336 = vmax.f32 %v1418, %v1663
        %v2337 = vmax.f32 %v2336, %v1908
        %v2338 = vmax.f32 %v2337, %v2153
        %v2339 = vmax.f32 %v1423, %v1668
        %v2340 = vmax.f32 %v2339, %v1913
        %v2341 = vmax.f32 %v2340, %v2158
        %v2342 = vmax.f32 %v1428, %v1673
        %v2343 = vmax.f32 %v2342, %v1918
        %v2344 = vmax.f32 %v2343, %v2163
        %v2345 = vmax.f32 %v1433, %v1678
        %v2346 = vmax.f32 %v2345, %v1923
        %v2347 = vmax.f32 %v2346, %v2168
        %v2348 = vmax.f32 %v1438, %v1683
        %v2349 = vmax.f32 %v2348, %v1928
        %v2350 = vmax.f32 %v2349, %v2173
        %v2351 = vmax.f32 %v1443, %v1688
        %v2352 = vmax.f32 %v2351, %v1933
        %v2353 = vmax.f32 %v2352, %v2178
        %v2354 = vmax.f32 %v1448, %v1693
        %v2355 = vmax.f32 %v2354, %v1938
        %v2356 = vmax.f32 %v2355, %v2183
        %v2357 = vmax.f32 %v1453, %v1698
        %v2358 = vmax.f32 %v2357, %v1943
        %v2359 = vmax.f32 %v2358, %v2188
        %v2360 = vmax.f32 %v1458, %v1703
        %v2361 = vmax.f32 %v2360, %v1948
        %v2362 = vmax.f32 %v2361, %v2193
        %v2363 = vmax.f32 %v1463, %v1708
        %v2364 = vmax.f32 %v2363, %v1953
        %v2365 = vmax.f32 %v2364, %v2198
        %v2366 = vmax.f32 %v1468, %v1713
        %v2367 = vmax.f32 %v2366, %v1958
        %v2368 = vmax.f32 %v2367, %v2203
        %v2369 = vmax.f32 %v1473, %v1718
        %v2370 = vmax.f32 %v2369, %v1963
        %v2371 = vmax.f32 %v2370, %v2208
        %v2372 = vmax.f32 %v1478, %v1723
        %v2373 = vmax.f32 %v2372, %v1968
        %v2374 = vmax.f32 %v2373, %v2213
        %v2375 = vmax.f32 %v1483, %v1728
        %v2376 = vmax.f32 %v2375, %v1973
        %v2377 = vmax.f32 %v2376, %v2218
        %v2378 = vmax.f32 %v1488, %v1733
        %v2379 = vmax.f32 %v2378, %v1978
        %v2380 = vmax.f32 %v2379, %v2223
        %v2381 = vmax.f32 %v1493, %v1738
        %v2382 = vmax.f32 %v2381, %v1983
        %v2383 = vmax.f32 %v2382, %v2228
        %v2384 = vmax.f32 %v1498, %v1743
        %v2385 = vmax.f32 %v2384, %v1988
        %v2386 = vmax.f32 %v2385, %v2233
        %v2387 = vmax.f32 %v1503, %v1748
        %v2388 = vmax.f32 %v2387, %v1993
        %v2389 = vmax.f32 %v2388, %v2238
        %v2390 = vmax.f32 %v1508, %v1753
        %v2391 = vmax.f32 %v2390, %v1998
        %v2392 = vmax.f32 %v2391, %v2243
        %v2393 = vld [vmem:[%s2] sm:$0x1]
        %v2395 = vlaneseq
        %v2396 = vshrl.u32 %v2395, 7
        %v2397 = vsub.s32 0, %v2396
        %v2398 = vrot.slane %v2393, %v2397
        %v2400 = vadd.f32 %v2248, %v2398
        %v2401 = vadd.f32 %v2251, %v2398
        %v2402 = vadd.f32 %v2254, %v2398
        %v2403 = vadd.f32 %v2257, %v2398
        %v2404 = vadd.f32 %v2260, %v2398
        %v2405 = vadd.f32 %v2263, %v2398
        %v2406 = vadd.f32 %v2266, %v2398
        %v2407 = vadd.f32 %v2269, %v2398
        %v2408 = vadd.f32 %v2272, %v2398
        %v2409 = vadd.f32 %v2275, %v2398
        %v2410 = vadd.f32 %v2278, %v2398
        %v2411 = vadd.f32 %v2281, %v2398
        %v2412 = vadd.f32 %v2284, %v2398
        %v2413 = vadd.f32 %v2287, %v2398
        %v2414 = vadd.f32 %v2290, %v2398
        %v2415 = vadd.f32 %v2293, %v2398
        %v2416 = vadd.f32 %v2296, %v2398
        %v2417 = vadd.f32 %v2299, %v2398
        %v2418 = vadd.f32 %v2302, %v2398
        %v2419 = vadd.f32 %v2305, %v2398
        %v2420 = vadd.f32 %v2308, %v2398
        %v2421 = vadd.f32 %v2311, %v2398
        %v2422 = vadd.f32 %v2314, %v2398
        %v2423 = vadd.f32 %v2317, %v2398
        %v2424 = vadd.f32 %v2320, %v2398
        %v2425 = vadd.f32 %v2323, %v2398
        %v2426 = vadd.f32 %v2326, %v2398
        %v2427 = vadd.f32 %v2329, %v2398
        %v2428 = vadd.f32 %v2332, %v2398
        %v2429 = vadd.f32 %v2335, %v2398
        %v2430 = vadd.f32 %v2338, %v2398
        %v2431 = vadd.f32 %v2341, %v2398
        %v2432 = vadd.f32 %v2344, %v2398
        %v2433 = vadd.f32 %v2347, %v2398
        %v2434 = vadd.f32 %v2350, %v2398
        %v2435 = vadd.f32 %v2353, %v2398
        %v2436 = vadd.f32 %v2356, %v2398
        %v2437 = vadd.f32 %v2359, %v2398
        %v2438 = vadd.f32 %v2362, %v2398
        %v2439 = vadd.f32 %v2365, %v2398
        %v2440 = vadd.f32 %v2368, %v2398
        %v2441 = vadd.f32 %v2371, %v2398
        %v2442 = vadd.f32 %v2374, %v2398
        %v2443 = vadd.f32 %v2377, %v2398
        %v2444 = vadd.f32 %v2380, %v2398
        %v2445 = vadd.f32 %v2383, %v2398
        %v2446 = vadd.f32 %v2386, %v2398
        %v2447 = vadd.f32 %v2389, %v2398
        %v2448 = vadd.f32 %v2392, %v2398
        %v2449 = vmax.f32 %v2400, 0.0
        %v2450 = vmax.f32 %v2401, 0.0
        %v2451 = vmax.f32 %v2402, 0.0
        %v2452 = vmax.f32 %v2403, 0.0
        %v2453 = vmax.f32 %v2404, 0.0
        %v2454 = vmax.f32 %v2405, 0.0
        %v2455 = vmax.f32 %v2406, 0.0
        %v2456 = vmax.f32 %v2407, 0.0
        %v2457 = vmax.f32 %v2408, 0.0
        %v2458 = vmax.f32 %v2409, 0.0
        %v2459 = vmax.f32 %v2410, 0.0
        %v2460 = vmax.f32 %v2411, 0.0
        %v2461 = vmax.f32 %v2412, 0.0
        %v2462 = vmax.f32 %v2413, 0.0
        %v2463 = vmax.f32 %v2414, 0.0
        %v2464 = vmax.f32 %v2415, 0.0
        %v2465 = vmax.f32 %v2416, 0.0
        %v2466 = vmax.f32 %v2417, 0.0
        %v2467 = vmax.f32 %v2418, 0.0
        %v2468 = vmax.f32 %v2419, 0.0
        %v2469 = vmax.f32 %v2420, 0.0
        %v2470 = vmax.f32 %v2421, 0.0
        %v2471 = vmax.f32 %v2422, 0.0
        %v2472 = vmax.f32 %v2423, 0.0
        %v2473 = vmax.f32 %v2424, 0.0
        %v2474 = vmax.f32 %v2425, 0.0
        %v2475 = vmax.f32 %v2426, 0.0
        %v2476 = vmax.f32 %v2427, 0.0
        %v2477 = vmax.f32 %v2428, 0.0
        %v2478 = vmax.f32 %v2429, 0.0
        %v2479 = vmax.f32 %v2430, 0.0
        %v2480 = vmax.f32 %v2431, 0.0
        %v2481 = vmax.f32 %v2432, 0.0
        %v2482 = vmax.f32 %v2433, 0.0
        %v2483 = vmax.f32 %v2434, 0.0
        %v2484 = vmax.f32 %v2435, 0.0
        %v2485 = vmax.f32 %v2436, 0.0
        %v2486 = vmax.f32 %v2437, 0.0
        %v2487 = vmax.f32 %v2438, 0.0
        %v2488 = vmax.f32 %v2439, 0.0
        %v2489 = vmax.f32 %v2440, 0.0
        %v2490 = vmax.f32 %v2441, 0.0
        %v2491 = vmax.f32 %v2442, 0.0
        %v2492 = vmax.f32 %v2443, 0.0
        %v2493 = vmax.f32 %v2444, 0.0
        %v2494 = vmax.f32 %v2445, 0.0
        %v2495 = vmax.f32 %v2446, 0.0
        %v2496 = vmax.f32 %v2447, 0.0
        %v2497 = vmax.f32 %v2448, 0.0
        %2498 = vst [vmem:[%s987] sm:$0xff] %v2449
        %2499 = vst [vmem:[%s987 + $0x8] sm:$0xff] %v2450
        %2500 = vst [vmem:[%s987 + $0x10] sm:$0xff] %v2451
        %2501 = vst [vmem:[%s987 + $0x18] sm:$0xff] %v2452
        %2502 = vst [vmem:[%s987 + $0x20] sm:$0xff] %v2453
        %2503 = vst [vmem:[%s987 + $0x28] sm:$0xff] %v2454
        %2504 = vst [vmem:[%s987 + $0x30] sm:$0xff] %v2455
        %2505 = vst [vmem:[%s987 + $0x38] sm:$0xff] %v2456
        %2506 = vst [vmem:[%s987 + $0x40] sm:$0xff] %v2457
        %2507 = vst [vmem:[%s987 + $0x48] sm:$0xff] %v2458
        %2508 = vst [vmem:[%s987 + $0x50] sm:$0xff] %v2459
        %2509 = vst [vmem:[%s987 + $0x58] sm:$0xff] %v2460
        %2510 = vst [vmem:[%s987 + $0x60] sm:$0xff] %v2461
        %2511 = vst [vmem:[%s987 + $0x68] sm:$0xff] %v2462
        %2512 = vst [vmem:[%s987 + $0x70] sm:$0xff] %v2463
        %2513 = vst [vmem:[%s987 + $0x78] sm:$0xff] %v2464
        %2514 = vst [vmem:[%s987 + $0x80] sm:$0xff] %v2465
        %2515 = vst [vmem:[%s987 + $0x88] sm:$0xff] %v2466
        %2516 = vst [vmem:[%s987 + $0x90] sm:$0xff] %v2467
        %2517 = vst [vmem:[%s987 + $0x98] sm:$0xff] %v2468
        %2518 = vst [vmem:[%s987 + $0xa0] sm:$0xff] %v2469
        %2519 = vst [vmem:[%s987 + $0xa8] sm:$0xff] %v2470
        %2520 = vst [vmem:[%s987 + $0xb0] sm:$0xff] %v2471
        %2521 = vst [vmem:[%s987 + $0xb8] sm:$0xff] %v2472
        %2522 = vst [vmem:[%s987 + $0xc0] sm:$0xff] %v2473
        %2523 = vst [vmem:[%s987 + $0xc8] sm:$0xff] %v2474
        %2524 = vst [vmem:[%s987 + $0xd0] sm:$0xff] %v2475
        %2525 = vst [vmem:[%s987 + $0xd8] sm:$0xff] %v2476
        %2526 = vst [vmem:[%s987 + $0xe0] sm:$0xff] %v2477
        %2527 = vst [vmem:[%s987 + $0xe8] sm:$0xff] %v2478
        %2528 = vst [vmem:[%s987 + $0xf0] sm:$0xff] %v2479
        %2529 = vst [vmem:[%s987 + $0xf8] sm:$0xff] %v2480
        %2530 = vst [vmem:[%s987 + $0x100] sm:$0xff] %v2481
        %2531 = vst [vmem:[%s987 + $0x108] sm:$0xff] %v2482
        %2532 = vst [vmem:[%s987 + $0x110] sm:$0xff] %v2483
        %2533 = vst [vmem:[%s987 + $0x118] sm:$0xff] %v2484
        %2534 = vst [vmem:[%s987 + $0x120] sm:$0xff] %v2485
        %2535 = vst [vmem:[%s987 + $0x128] sm:$0xff] %v2486
        %2536 = vst [vmem:[%s987 + $0x130] sm:$0xff] %v2487
        %2537 = vst [vmem:[%s987 + $0x138] sm:$0xff] %v2488
        %2538 = vst [vmem:[%s987 + $0x140] sm:$0xff] %v2489
        %2539 = vst [vmem:[%s987 + $0x148] sm:$0xff] %v2490
        %2540 = vst [vmem:[%s987 + $0x150] sm:$0xff] %v2491
        %2541 = vst [vmem:[%s987 + $0x158] sm:$0xff] %v2492
        %2542 = vst [vmem:[%s987 + $0x160] sm:$0xff] %v2493
        %2543 = vst [vmem:[%s987 + $0x168] sm:$0xff] %v2494
        %2544 = vst [vmem:[%s987 + $0x170] sm:$0xff] %v2495
        %2545 = vst [vmem:[%s987 + $0x178] sm:$0xff] %v2496
        %2546 = vst [vmem:[%s987 + $0x180] sm:$0xff] %v2497
        %s2547 = smul.u32 49, %s14
        %p2548 = scmp.lt.s32.totalorder %s2547, 195
        %s2549 = scalar_select %p2548, %s2547, 195
        %s2550 = smul.addr %s2549, 8
        %s2551 = scalar_lea.vmem %s3, %s2550
        // Predicated region
        $region71: #{lenet_forward.2} parent=65 // pred_check
          %p2552 = pneg %p100
        $region72: #{lenet_forward.2} parent=65 // pred_check_branch
          %2554 = sbr.rel (%p2552) target = $region74
        $region73: #{lenet_forward.2} parent=65 // pred_region
          %s2555 = smul.u32 49, %s14
        $region74: #{lenet_forward.2} parent=65 // pred_fallthru
          _
      $region66: #{lenet_forward.2} parent=5 // pred_fallthru
        _
      %p2556 = scmp.le.s32.totalorder 2, %s9
      // Predicated region
      $region75: #{lenet_forward.2} parent=5 // pred_check
        %p2557 = pneg %p2556
      $region76: #{lenet_forward.2} parent=5 // pred_check_branch
        %2559 = sbr.rel (%p2557) target = $region78
      $region77: #{lenet_forward.2} parent=5 // pred_region
        %s2560 = ssub.s32 %s9, 2
        // Predicated region
        $region79: #{lenet_forward.2} parent=77 // pred_check
          %p2561 = pneg %p106
        $region80: #{lenet_forward.2} parent=77 // pred_check_branch
          %2563 = sbr.rel (%p2561) target = $region82
        $region81: #{lenet_forward.2} parent=77 // pred_region
          %s2564 = smul.u32 49, %s15
          %p2565 = scmp.lt.s32.totalorder %s2564, 195
          %s2566 = scalar_select %p2565, %s2564, 195
          %s2567 = smul.addr %s2566, 8
          %s2568 = scalar_lea.vmem %s3, %s2567
        $region82: #{lenet_forward.2} parent=77 // pred_fallthru
          _
      $region78: #{lenet_forward.2} parent=5 // pred_fallthru
        _
    $region6: #{lenet_forward.2} parent=1 // loop_footer
      %s13 = sadd.s32 1, %s9
    $region7: #{lenet_forward.2} parent=1 // loop_footer_branch
      %8 = sbr.rel target = $region3
    $region8: #{lenet_forward.2} parent=1 // loop_exit
      _

// kernel: lenet_forward.3
$region0: #{lenet_forward.3}
  #allocation0 [shape = 'u32[]', space=smem, size = 0x4, offset = 0x4, fixed_abs, tag = 'smem constant byte address 0x4 - core index']
  #allocation1 [shape = 'u32[144,128]{1,0:T(1,128)}', space=vmem, size = 0x12000, scoped, tag = 'internal scratch']
  %s0 = inlined_call_operand.vmem [shape: f32[4,25,8,256], index: 0, kind: input, shape index: {}]
  %s1 = inlined_call_operand.vmem [shape: f32[256,128], index: 1, kind: input, shape index: {}]
  %s2 = inlined_call_operand.vmem [shape: f32[1,128], index: 2, kind: input, shape index: {}]
  %s3 = inlined_call_operand.vmem [shape: f32[25,128,128], index: 3, kind: input, shape index: {}]
  %s4 = inlined_call_operand.vmem [shape: f32[1,128], index: 4, kind: input, shape index: {}]
  %s5 = inlined_call_operand.vmem [shape: f32[128,128], index: 5, kind: input, shape index: {}]
  %s6 = inlined_call_operand.vmem [shape: f32[1,128], index: 6, kind: input, shape index: {}]
  %s7 = inlined_call_operand.vmem [shape: f32[128,128], index: 7, kind: input, shape index: {}]
  %s8 = inlined_call_operand.vmem [shape: f32[1,128], index: 8, kind: input, shape index: {}]
  %s9 = inlined_call_operand.vmem [shape: f32[8,128], index: 9, kind: output, shape index: {}]
  %s10 = sld [smem:[#allocation0]]
  $region46: #{lenet_forward.3} parent=0
    _
  %s12 = ssub.s32 1, %s10
  %s13 = scalar_select 0, %s12, %s10
  // Predicated region
  $region2: #{lenet_forward.3} parent=0 // pred_check
    _
  $region3: #{lenet_forward.3} parent=0 // pred_check_branch
    %15 = sbr.rel (0) target = $region5
  $region4: #{lenet_forward.3} parent=0 // pred_region
    _
  $region5: #{lenet_forward.3} parent=0 // pred_fallthru
    _
  // Predicated region
  $region6: #{lenet_forward.3} parent=0 // pred_check
    _
  $region7: #{lenet_forward.3} parent=0 // pred_check_branch
    %17 = sbr.rel (0) target = $region9
  $region8: #{lenet_forward.3} parent=0 // pred_region
    _
  $region9: #{lenet_forward.3} parent=0 // pred_fallthru
    _
  // Predicated region
  $region10: #{lenet_forward.3} parent=0 // pred_check
    _
  $region11: #{lenet_forward.3} parent=0 // pred_check_branch
    %19 = sbr.rel (0) target = $region13
  $region12: #{lenet_forward.3} parent=0 // pred_region
    _
  $region13: #{lenet_forward.3} parent=0 // pred_fallthru
    _
  // Predicated region
  $region14: #{lenet_forward.3} parent=0 // pred_check
    _
  $region15: #{lenet_forward.3} parent=0 // pred_check_branch
    %21 = sbr.rel (0) target = $region17
  $region16: #{lenet_forward.3} parent=0 // pred_region
    _
  $region17: #{lenet_forward.3} parent=0 // pred_fallthru
    _
  // Predicated region
  $region18: #{lenet_forward.3} parent=0 // pred_check
    _
  $region19: #{lenet_forward.3} parent=0 // pred_check_branch
    %23 = sbr.rel (0) target = $region21
  $region20: #{lenet_forward.3} parent=0 // pred_region
    _
  $region21: #{lenet_forward.3} parent=0 // pred_fallthru
    _
  // Predicated region
  $region22: #{lenet_forward.3} parent=0 // pred_check
    _
  $region23: #{lenet_forward.3} parent=0 // pred_check_branch
    %25 = sbr.rel (0) target = $region25
  $region24: #{lenet_forward.3} parent=0 // pred_region
    _
  $region25: #{lenet_forward.3} parent=0 // pred_fallthru
    _
  // Predicated region
  $region26: #{lenet_forward.3} parent=0 // pred_check
    _
  $region27: #{lenet_forward.3} parent=0 // pred_check_branch
    %27 = sbr.rel (0) target = $region29
  $region28: #{lenet_forward.3} parent=0 // pred_region
    _
  $region29: #{lenet_forward.3} parent=0 // pred_fallthru
    _
  // Predicated region
  $region30: #{lenet_forward.3} parent=0 // pred_check
    _
  $region31: #{lenet_forward.3} parent=0 // pred_check_branch
    %29 = sbr.rel (0) target = $region33
  $region32: #{lenet_forward.3} parent=0 // pred_region
    _
  $region33: #{lenet_forward.3} parent=0 // pred_fallthru
    _
  // Predicated region
  $region34: #{lenet_forward.3} parent=0 // pred_check
    _
  $region35: #{lenet_forward.3} parent=0 // pred_check_branch
    %31 = sbr.rel (0) target = $region37
  $region36: #{lenet_forward.3} parent=0 // pred_region
    _
  $region37: #{lenet_forward.3} parent=0 // pred_fallthru
    _
  %v32 = vld [vmem:[%s0] sm:$0xff]
  %v33 = vld [vmem:[%s0 + $0x8] sm:$0xff]
  %v34 = vld [vmem:[%s0 + $0x10] sm:$0xff]
  %v35 = vld [vmem:[%s0 + $0x18] sm:$0xff]
  %v36 = vld [vmem:[%s0 + $0x20] sm:$0xff]
  %v37 = vld [vmem:[%s0 + $0x28] sm:$0xff]
  %v38 = vld [vmem:[%s0 + $0x30] sm:$0xff]
  %v39 = vld [vmem:[%s0 + $0x38] sm:$0xff]
  %v40 = vld [vmem:[%s0 + $0x40] sm:$0xff]
  %v41 = vld [vmem:[%s0 + $0x48] sm:$0xff]
  %v42 = vld [vmem:[%s0 + $0x50] sm:$0xff]
  %v43 = vld [vmem:[%s0 + $0x58] sm:$0xff]
  %v44 = vld [vmem:[%s0 + $0x60] sm:$0xff]
  %v45 = vld [vmem:[%s0 + $0x68] sm:$0xff]
  %v46 = vld [vmem:[%s0 + $0x70] sm:$0xff]
  %v47 = vld [vmem:[%s0 + $0x78] sm:$0xff]
  %v48 = vld [vmem:[%s0 + $0x80] sm:$0xff]
  %v49 = vld [vmem:[%s0 + $0x88] sm:$0xff]
  %v50 = vld [vmem:[%s0 + $0x90] sm:$0xff]
  %v51 = vld [vmem:[%s0 + $0x98] sm:$0xff]
  %v52 = vld [vmem:[%s0 + $0xa0] sm:$0xff]
  %v53 = vld [vmem:[%s0 + $0xa8] sm:$0xff]
  %v54 = vld [vmem:[%s0 + $0xb0] sm:$0xff]
  %v55 = vld [vmem:[%s0 + $0xb8] sm:$0xff]
  %v56 = vld [vmem:[%s0 + $0xc0] sm:$0xff]
  %v57 = vld [vmem:[%s0 + $0xc8] sm:$0xff]
  %v58 = vld [vmem:[%s0 + $0xd0] sm:$0xff]
  %v59 = vld [vmem:[%s0 + $0xd8] sm:$0xff]
  %v60 = vld [vmem:[%s0 + $0xe0] sm:$0xff]
  %v61 = vld [vmem:[%s0 + $0xe8] sm:$0xff]
  %v62 = vld [vmem:[%s0 + $0xf0] sm:$0xff]
  %v63 = vld [vmem:[%s0 + $0xf8] sm:$0xff]
  %v64 = vld [vmem:[%s0 + $0x100] sm:$0xff]
  %v65 = vld [vmem:[%s0 + $0x108] sm:$0xff]
  %v66 = vld [vmem:[%s0 + $0x110] sm:$0xff]
  %v67 = vld [vmem:[%s0 + $0x118] sm:$0xff]
  %v68 = vld [vmem:[%s0 + $0x120] sm:$0xff]
  %v69 = vld [vmem:[%s0 + $0x128] sm:$0xff]
  %v70 = vld [vmem:[%s0 + $0x130] sm:$0xff]
  %v71 = vld [vmem:[%s0 + $0x138] sm:$0xff]
  %v72 = vld [vmem:[%s0 + $0x140] sm:$0xff]
  %v73 = vld [vmem:[%s0 + $0x148] sm:$0xff]
  %v74 = vld [vmem:[%s0 + $0x150] sm:$0xff]
  %v75 = vld [vmem:[%s0 + $0x158] sm:$0xff]
  %v76 = vld [vmem:[%s0 + $0x160] sm:$0xff]
  %v77 = vld [vmem:[%s0 + $0x168] sm:$0xff]
  %v78 = vld [vmem:[%s0 + $0x170] sm:$0xff]
  %v79 = vld [vmem:[%s0 + $0x178] sm:$0xff]
  %v80 = vld [vmem:[%s0 + $0x180] sm:$0xff]
  %v81 = vld [vmem:[%s0 + $0x188] sm:$0xff]
  %v82 = vld [vmem:[%s0 + $0x190] sm:$0xff]
  %v83 = vld [vmem:[%s0 + $0x198] sm:$0xff]
  %v84 = vld [vmem:[%s0 + $0x1a0] sm:$0xff]
  %v85 = vld [vmem:[%s0 + $0x1a8] sm:$0xff]
  %v86 = vld [vmem:[%s0 + $0x1b0] sm:$0xff]
  %v87 = vld [vmem:[%s0 + $0x1b8] sm:$0xff]
  %v88 = vld [vmem:[%s0 + $0x1c0] sm:$0xff]
  %v89 = vld [vmem:[%s0 + $0x1c8] sm:$0xff]
  %v90 = vld [vmem:[%s0 + $0x1d0] sm:$0xff]
  %v91 = vld [vmem:[%s0 + $0x1d8] sm:$0xff]
  %v92 = vld [vmem:[%s0 + $0x1e0] sm:$0xff]
  %v93 = vld [vmem:[%s0 + $0x1e8] sm:$0xff]
  %v94 = vld [vmem:[%s0 + $0x1f0] sm:$0xff]
  %v95 = vld [vmem:[%s0 + $0x1f8] sm:$0xff]
  %v96 = vld [vmem:[%s0 + $0x200] sm:$0xff]
  %v97 = vld [vmem:[%s0 + $0x208] sm:$0xff]
  %v98 = vld [vmem:[%s0 + $0x210] sm:$0xff]
  %v99 = vld [vmem:[%s0 + $0x218] sm:$0xff]
  %v100 = vld [vmem:[%s0 + $0x220] sm:$0xff]
  %v101 = vld [vmem:[%s0 + $0x228] sm:$0xff]
  %v102 = vld [vmem:[%s0 + $0x230] sm:$0xff]
  %v103 = vld [vmem:[%s0 + $0x238] sm:$0xff]
  %v104 = vld [vmem:[%s0 + $0x240] sm:$0xff]
  %v105 = vld [vmem:[%s0 + $0x248] sm:$0xff]
  %v106 = vld [vmem:[%s0 + $0x250] sm:$0xff]
  %v107 = vld [vmem:[%s0 + $0x258] sm:$0xff]
  %v108 = vld [vmem:[%s0 + $0x260] sm:$0xff]
  %v109 = vld [vmem:[%s0 + $0x268] sm:$0xff]
  %v110 = vld [vmem:[%s0 + $0x270] sm:$0xff]
  %v111 = vld [vmem:[%s0 + $0x278] sm:$0xff]
  %v112 = vld [vmem:[%s0 + $0x280] sm:$0xff]
  %v113 = vld [vmem:[%s0 + $0x288] sm:$0xff]
  %v114 = vld [vmem:[%s0 + $0x290] sm:$0xff]
  %v115 = vld [vmem:[%s0 + $0x298] sm:$0xff]
  %v116 = vld [vmem:[%s0 + $0x2a0] sm:$0xff]
  %v117 = vld [vmem:[%s0 + $0x2a8] sm:$0xff]
  %v118 = vld [vmem:[%s0 + $0x2b0] sm:$0xff]
  %v119 = vld [vmem:[%s0 + $0x2b8] sm:$0xff]
  %v120 = vld [vmem:[%s0 + $0x2c0] sm:$0xff]
  %v121 = vld [vmem:[%s0 + $0x2c8] sm:$0xff]
  %v122 = vld [vmem:[%s0 + $0x2d0] sm:$0xff]
  %v123 = vld [vmem:[%s0 + $0x2d8] sm:$0xff]
  %v124 = vld [vmem:[%s0 + $0x2e0] sm:$0xff]
  %v125 = vld [vmem:[%s0 + $0x2e8] sm:$0xff]
  %v126 = vld [vmem:[%s0 + $0x2f0] sm:$0xff]
  %v127 = vld [vmem:[%s0 + $0x2f8] sm:$0xff]
  %v128 = vld [vmem:[%s0 + $0x300] sm:$0xff]
  %v129 = vld [vmem:[%s0 + $0x308] sm:$0xff]
  %v130 = vld [vmem:[%s0 + $0x310] sm:$0xff]
  %v131 = vld [vmem:[%s0 + $0x318] sm:$0xff]
  %v132 = vld [vmem:[%s0 + $0x320] sm:$0xff]
  %v133 = vld [vmem:[%s0 + $0x328] sm:$0xff]
  %v134 = vld [vmem:[%s0 + $0x330] sm:$0xff]
  %v135 = vld [vmem:[%s0 + $0x338] sm:$0xff]
  %v136 = vld [vmem:[%s0 + $0x340] sm:$0xff]
  %v137 = vld [vmem:[%s0 + $0x348] sm:$0xff]
  %v138 = vld [vmem:[%s0 + $0x350] sm:$0xff]
  %v139 = vld [vmem:[%s0 + $0x358] sm:$0xff]
  %v140 = vld [vmem:[%s0 + $0x360] sm:$0xff]
  %v141 = vld [vmem:[%s0 + $0x368] sm:$0xff]
  %v142 = vld [vmem:[%s0 + $0x370] sm:$0xff]
  %v143 = vld [vmem:[%s0 + $0x378] sm:$0xff]
  %v144 = vld [vmem:[%s0 + $0x380] sm:$0xff]
  %v145 = vld [vmem:[%s0 + $0x388] sm:$0xff]
  %v146 = vld [vmem:[%s0 + $0x390] sm:$0xff]
  %v147 = vld [vmem:[%s0 + $0x398] sm:$0xff]
  %v148 = vld [vmem:[%s0 + $0x3a0] sm:$0xff]
  %v149 = vld [vmem:[%s0 + $0x3a8] sm:$0xff]
  %v150 = vld [vmem:[%s0 + $0x3b0] sm:$0xff]
  %v151 = vld [vmem:[%s0 + $0x3b8] sm:$0xff]
  %v152 = vld [vmem:[%s0 + $0x3c0] sm:$0xff]
  %v153 = vld [vmem:[%s0 + $0x3c8] sm:$0xff]
  %v154 = vld [vmem:[%s0 + $0x3d0] sm:$0xff]
  %v155 = vld [vmem:[%s0 + $0x3d8] sm:$0xff]
  %v156 = vld [vmem:[%s0 + $0x3e0] sm:$0xff]
  %v157 = vld [vmem:[%s0 + $0x3e8] sm:$0xff]
  %v158 = vld [vmem:[%s0 + $0x3f0] sm:$0xff]
  %v159 = vld [vmem:[%s0 + $0x3f8] sm:$0xff]
  %v160 = vld [vmem:[%s0 + $0x400] sm:$0xff]
  %v161 = vld [vmem:[%s0 + $0x408] sm:$0xff]
  %v162 = vld [vmem:[%s0 + $0x410] sm:$0xff]
  %v163 = vld [vmem:[%s0 + $0x418] sm:$0xff]
  %v164 = vld [vmem:[%s0 + $0x420] sm:$0xff]
  %v165 = vld [vmem:[%s0 + $0x428] sm:$0xff]
  %v166 = vld [vmem:[%s0 + $0x430] sm:$0xff]
  %v167 = vld [vmem:[%s0 + $0x438] sm:$0xff]
  %v168 = vld [vmem:[%s0 + $0x440] sm:$0xff]
  %v169 = vld [vmem:[%s0 + $0x448] sm:$0xff]
  %v170 = vld [vmem:[%s0 + $0x450] sm:$0xff]
  %v171 = vld [vmem:[%s0 + $0x458] sm:$0xff]
  %v172 = vld [vmem:[%s0 + $0x460] sm:$0xff]
  %v173 = vld [vmem:[%s0 + $0x468] sm:$0xff]
  %v174 = vld [vmem:[%s0 + $0x470] sm:$0xff]
  %v175 = vld [vmem:[%s0 + $0x478] sm:$0xff]
  %v176 = vld [vmem:[%s0 + $0x480] sm:$0xff]
  %v177 = vld [vmem:[%s0 + $0x488] sm:$0xff]
  %v178 = vld [vmem:[%s0 + $0x490] sm:$0xff]
  %v179 = vld [vmem:[%s0 + $0x498] sm:$0xff]
  %v180 = vld [vmem:[%s0 + $0x4a0] sm:$0xff]
  %v181 = vld [vmem:[%s0 + $0x4a8] sm:$0xff]
  %v182 = vld [vmem:[%s0 + $0x4b0] sm:$0xff]
  %v183 = vld [vmem:[%s0 + $0x4b8] sm:$0xff]
  %v184 = vld [vmem:[%s0 + $0x4c0] sm:$0xff]
  %v185 = vld [vmem:[%s0 + $0x4c8] sm:$0xff]
  %v186 = vld [vmem:[%s0 + $0x4d0] sm:$0xff]
  %v187 = vld [vmem:[%s0 + $0x4d8] sm:$0xff]
  %v188 = vld [vmem:[%s0 + $0x4e0] sm:$0xff]
  %v189 = vld [vmem:[%s0 + $0x4e8] sm:$0xff]
  %v190 = vld [vmem:[%s0 + $0x4f0] sm:$0xff]
  %v191 = vld [vmem:[%s0 + $0x4f8] sm:$0xff]
  %v192 = vld [vmem:[%s0 + $0x500] sm:$0xff]
  %v193 = vld [vmem:[%s0 + $0x508] sm:$0xff]
  %v194 = vld [vmem:[%s0 + $0x510] sm:$0xff]
  %v195 = vld [vmem:[%s0 + $0x518] sm:$0xff]
  %v196 = vld [vmem:[%s0 + $0x520] sm:$0xff]
  %v197 = vld [vmem:[%s0 + $0x528] sm:$0xff]
  %v198 = vld [vmem:[%s0 + $0x530] sm:$0xff]
  %v199 = vld [vmem:[%s0 + $0x538] sm:$0xff]
  %v200 = vld [vmem:[%s0 + $0x540] sm:$0xff]
  %v201 = vld [vmem:[%s0 + $0x548] sm:$0xff]
  %v202 = vld [vmem:[%s0 + $0x550] sm:$0xff]
  %v203 = vld [vmem:[%s0 + $0x558] sm:$0xff]
  %v204 = vld [vmem:[%s0 + $0x560] sm:$0xff]
  %v205 = vld [vmem:[%s0 + $0x568] sm:$0xff]
  %v206 = vld [vmem:[%s0 + $0x570] sm:$0xff]
  %v207 = vld [vmem:[%s0 + $0x578] sm:$0xff]
  %v208 = vld [vmem:[%s0 + $0x580] sm:$0xff]
  %v209 = vld [vmem:[%s0 + $0x588] sm:$0xff]
  %v210 = vld [vmem:[%s0 + $0x590] sm:$0xff]
  %v211 = vld [vmem:[%s0 + $0x598] sm:$0xff]
  %v212 = vld [vmem:[%s0 + $0x5a0] sm:$0xff]
  %v213 = vld [vmem:[%s0 + $0x5a8] sm:$0xff]
  %v214 = vld [vmem:[%s0 + $0x5b0] sm:$0xff]
  %v215 = vld [vmem:[%s0 + $0x5b8] sm:$0xff]
  %v216 = vld [vmem:[%s0 + $0x5c0] sm:$0xff]
  %v217 = vld [vmem:[%s0 + $0x5c8] sm:$0xff]
  %v218 = vld [vmem:[%s0 + $0x5d0] sm:$0xff]
  %v219 = vld [vmem:[%s0 + $0x5d8] sm:$0xff]
  %v220 = vld [vmem:[%s0 + $0x5e0] sm:$0xff]
  %v221 = vld [vmem:[%s0 + $0x5e8] sm:$0xff]
  %v222 = vld [vmem:[%s0 + $0x5f0] sm:$0xff]
  %v223 = vld [vmem:[%s0 + $0x5f8] sm:$0xff]
  %v224 = vld [vmem:[%s0 + $0x600] sm:$0xff]
  %v225 = vld [vmem:[%s0 + $0x608] sm:$0xff]
  %v226 = vld [vmem:[%s0 + $0x610] sm:$0xff]
  %v227 = vld [vmem:[%s0 + $0x618] sm:$0xff]
  %v228 = vld [vmem:[%s0 + $0x620] sm:$0xff]
  %v229 = vld [vmem:[%s0 + $0x628] sm:$0xff]
  %v230 = vld [vmem:[%s0 + $0x630] sm:$0xff]
  %v231 = vld [vmem:[%s0 + $0x638] sm:$0xff]
  %v232 = vld [vmem:[%s1] sm:$0xff]
  %v233 = vld [vmem:[%s1 + $0x8] sm:$0xff]
  %v234 = vld [vmem:[%s1 + $0x10] sm:$0xff]
  %v235 = vld [vmem:[%s1 + $0x18] sm:$0xff]
  %v236 = vld [vmem:[%s1 + $0x20] sm:$0xff]
  %v237 = vld [vmem:[%s1 + $0x28] sm:$0xff]
  %v238 = vld [vmem:[%s1 + $0x30] sm:$0xff]
  %v239 = vld [vmem:[%s1 + $0x38] sm:$0xff]
  %v240 = vld [vmem:[%s1 + $0x40] sm:$0xff]
  %v241 = vld [vmem:[%s1 + $0x48] sm:$0xff]
  %v242 = vld [vmem:[%s1 + $0x50] sm:$0xff]
  %v243 = vld [vmem:[%s1 + $0x58] sm:$0xff]
  %v244 = vld [vmem:[%s1 + $0x60] sm:$0xff]
  %v245 = vld [vmem:[%s1 + $0x68] sm:$0xff]
  %v246 = vld [vmem:[%s1 + $0x70] sm:$0xff]
  %v247 = vld [vmem:[%s1 + $0x78] sm:$0xff]
  %v248 = vld [vmem:[%s1 + $0x80] sm:$0xff]
  %v249 = vld [vmem:[%s1 + $0x88] sm:$0xff]
  %v250 = vld [vmem:[%s1 + $0x90] sm:$0xff]
  %v251 = vld [vmem:[%s1 + $0x98] sm:$0xff]
  %v252 = vld [vmem:[%s1 + $0xa0] sm:$0xff]
  %v253 = vld [vmem:[%s1 + $0xa8] sm:$0xff]
  %v254 = vld [vmem:[%s1 + $0xb0] sm:$0xff]
  %v255 = vld [vmem:[%s1 + $0xb8] sm:$0xff]
  %v256 = vld [vmem:[%s1 + $0xc0] sm:$0xff]
  %v257 = vld [vmem:[%s1 + $0xc8] sm:$0xff]
  %v258 = vld [vmem:[%s1 + $0xd0] sm:$0xff]
  %v259 = vld [vmem:[%s1 + $0xd8] sm:$0xff]
  %v260 = vld [vmem:[%s1 + $0xe0] sm:$0xff]
  %v261 = vld [vmem:[%s1 + $0xe8] sm:$0xff]
  %v262 = vld [vmem:[%s1 + $0xf0] sm:$0xff]
  %v263 = vld [vmem:[%s1 + $0xf8] sm:$0xff]
  %264 = vmatprep.subr.mxu0 0.0
  %265 = vmatpush1.msra.mxu0 %v247
  %266 = vmatprep.subr.mxu0 0.0
  %267 = vmatpush1.msra.mxu0 %v246
  %268 = vmatprep.subr.mxu0 0.0
  %269 = vmatpush1.msra.mxu0 %v245
  %270 = vmatprep.subr.mxu0 0.0
  %271 = vmatpush1.msra.mxu0 %v244
  %272 = vmatprep.subr.mxu0 0.0
  %273 = vmatpush1.msra.mxu0 %v243
  %274 = vmatprep.subr.mxu0 0.0
  %275 = vmatpush1.msra.mxu0 %v242
  %276 = vmatprep.subr.mxu0 0.0
  %277 = vmatpush1.msra.mxu0 %v241
  %278 = vmatprep.subr.mxu0 0.0
  %279 = vmatpush1.msra.mxu0 %v240
  %280 = vmatprep.subr.mxu0 0.0
  %281 = vmatpush1.msra.mxu0 %v239
  %282 = vmatprep.subr.mxu0 0.0
  %283 = vmatpush1.msra.mxu0 %v238
  %284 = vmatprep.subr.mxu0 0.0
  %285 = vmatpush1.msra.mxu0 %v237
  %286 = vmatprep.subr.mxu0 0.0
  %287 = vmatpush1.msra.mxu0 %v236
  %288 = vmatprep.subr.mxu0 0.0
  %289 = vmatpush1.msra.mxu0 %v235
  %290 = vmatprep.subr.mxu0 0.0
  %291 = vmatpush1.msra.mxu0 %v234
  %292 = vmatprep.subr.mxu0 0.0
  %293 = vmatpush1.msra.mxu0 %v233
  %294 = vmatprep.subr.mxu0 0.0
  %295 = vmatpush1.msra.mxu0 %v232
  %296 = vmatprep.subr.mxu0 0.0
  %297 = vmatpush2.msra.mxu0 %v263
  %298 = vmatprep.subr.mxu0 0.0
  %299 = vmatpush2.msra.mxu0 %v262
  %300 = vmatprep.subr.mxu0 0.0
  %301 = vmatpush2.msra.mxu0 %v261
  %302 = vmatprep.subr.mxu0 0.0
  %303 = vmatpush2.msra.mxu0 %v260
  %304 = vmatprep.subr.mxu0 0.0
  %305 = vmatpush2.msra.mxu0 %v259
  %306 = vmatprep.subr.mxu0 0.0
  %307 = vmatpush2.msra.mxu0 %v258
  %308 = vmatprep.subr.mxu0 0.0
  %309 = vmatpush2.msra.mxu0 %v257
  %310 = vmatprep.subr.mxu0 0.0
  %311 = vmatpush2.msra.mxu0 %v256
  %312 = vmatprep.subr.mxu0 0.0
  %313 = vmatpush2.msra.mxu0 %v255
  %314 = vmatprep.subr.mxu0 0.0
  %315 = vmatpush2.msra.mxu0 %v254
  %316 = vmatprep.subr.mxu0 0.0
  %317 = vmatpush2.msra.mxu0 %v253
  %318 = vmatprep.subr.mxu0 0.0
  %319 = vmatpush2.msra.mxu0 %v252
  %320 = vmatprep.subr.mxu0 0.0
  %321 = vmatpush2.msra.mxu0 %v251
  %322 = vmatprep.subr.mxu0 0.0
  %323 = vmatpush2.msra.mxu0 %v250
  %324 = vmatprep.subr.mxu0 0.0
  %325 = vmatpush2.msra.mxu0 %v249
  %326 = vmatprep.subr.mxu0 0.0
  %327 = vmatpush2.msra.mxu0 %v248
  %328 = vmatprep.mubr.f32.mxu0 %v33
  %329 = vmatmul.mubr.f32.gmra.mxu0 %v32
  %v330 = vpop.f32.mrf.mxu0
  %v331 = vadd.f32 0.0, %v330
  %v332 = vpop.f32.mrf.mxu0
  %333 = vmatprep.mubr.f32.mxu0 %v35
  %334 = vmatmul.mubr.f32.gmra.mxu0 %v34
  %v335 = vpop.f32.mrf.mxu0
  %v336 = vadd.f32 0.0, %v335
  %v337 = vpop.f32.mrf.mxu0
  %338 = vmatprep.mubr.f32.mxu0 %v37
  %339 = vmatmul.mubr.f32.gmra.mxu0 %v36
  %v340 = vpop.f32.mrf.mxu0
  %v341 = vadd.f32 0.0, %v340
  %v342 = vpop.f32.mrf.mxu0
  %343 = vmatprep.mubr.f32.mxu0 %v39
  %344 = vmatmul.mubr.f32.gmra.mxu0 %v38
  %v345 = vpop.f32.mrf.mxu0
  %v346 = vadd.f32 0.0, %v345
  %v347 = vpop.f32.mrf.mxu0
  %348 = vmatprep.mubr.f32.mxu0 %v41
  %349 = vmatmul.mubr.f32.gmra.mxu0 %v40
  %v350 = vpop.f32.mrf.mxu0
  %v351 = vadd.f32 0.0, %v350
  %v352 = vpop.f32.mrf.mxu0
  %353 = vmatprep.mubr.f32.mxu0 %v43
  %354 = vmatmul.mubr.f32.gmra.mxu0 %v42
  %v355 = vpop.f32.mrf.mxu0
  %v356 = vadd.f32 0.0, %v355
  %v357 = vpop.f32.mrf.mxu0
  %358 = vmatprep.mubr.f32.mxu0 %v45
  %359 = vmatmul.mubr.f32.gmra.mxu0 %v44
  %v360 = vpop.f32.mrf.mxu0
  %v361 = vadd.f32 0.0, %v360
  %v362 = vpop.f32.mrf.mxu0
  %363 = vmatprep.mubr.f32.mxu0 %v47
  %364 = vmatmul.mubr.f32.gmra.mxu0 %v46
  %v365 = vpop.f32.mrf.mxu0
  %v366 = vadd.f32 0.0, %v365
  %v367 = vpop.f32.mrf.mxu0
  %368 = vmatprep.mubr.f32.mxu0 %v49
  %369 = vmatmul.mubr.f32.gmra.mxu0 %v48
  %v370 = vpop.f32.mrf.mxu0
  %v371 = vadd.f32 0.0, %v370
  %v372 = vpop.f32.mrf.mxu0
  %373 = vmatprep.mubr.f32.mxu0 %v51
  %374 = vmatmul.mubr.f32.gmra.mxu0 %v50
  %v375 = vpop.f32.mrf.mxu0
  %v376 = vadd.f32 0.0, %v375
  %v377 = vpop.f32.mrf.mxu0
  %378 = vmatprep.mubr.f32.mxu0 %v53
  %379 = vmatmul.mubr.f32.gmra.mxu0 %v52
  %v380 = vpop.f32.mrf.mxu0
  %v381 = vadd.f32 0.0, %v380
  %v382 = vpop.f32.mrf.mxu0
  %383 = vmatprep.mubr.f32.mxu0 %v55
  %384 = vmatmul.mubr.f32.gmra.mxu0 %v54
  %v385 = vpop.f32.mrf.mxu0
  %v386 = vadd.f32 0.0, %v385
  %v387 = vpop.f32.mrf.mxu0
  %388 = vmatprep.mubr.f32.mxu0 %v57
  %389 = vmatmul.mubr.f32.gmra.mxu0 %v56
  %v390 = vpop.f32.mrf.mxu0
  %v391 = vadd.f32 0.0, %v390
  %v392 = vpop.f32.mrf.mxu0
  %393 = vmatprep.mubr.f32.mxu0 %v59
  %394 = vmatmul.mubr.f32.gmra.mxu0 %v58
  %v395 = vpop.f32.mrf.mxu0
  %v396 = vadd.f32 0.0, %v395
  %v397 = vpop.f32.mrf.mxu0
  %398 = vmatprep.mubr.f32.mxu0 %v61
  %399 = vmatmul.mubr.f32.gmra.mxu0 %v60
  %v400 = vpop.f32.mrf.mxu0
  %v401 = vadd.f32 0.0, %v400
  %v402 = vpop.f32.mrf.mxu0
  %403 = vmatprep.mubr.f32.mxu0 %v63
  %404 = vmatmul.mubr.f32.gmra.mxu0 %v62
  %v405 = vpop.f32.mrf.mxu0
  %v406 = vadd.f32 0.0, %v405
  %v407 = vpop.f32.mrf.mxu0
  %408 = vmatprep.mubr.f32.mxu0 %v65
  %409 = vmatmul.mubr.f32.gmra.mxu0 %v64
  %v410 = vpop.f32.mrf.mxu0
  %v411 = vadd.f32 0.0, %v410
  %v412 = vpop.f32.mrf.mxu0
  %413 = vmatprep.mubr.f32.mxu0 %v67
  %414 = vmatmul.mubr.f32.gmra.mxu0 %v66
  %v415 = vpop.f32.mrf.mxu0
  %v416 = vadd.f32 0.0, %v415
  %v417 = vpop.f32.mrf.mxu0
  %418 = vmatprep.mubr.f32.mxu0 %v69
  %419 = vmatmul.mubr.f32.gmra.mxu0 %v68
  %v420 = vpop.f32.mrf.mxu0
  %v421 = vadd.f32 0.0, %v420
  %v422 = vpop.f32.mrf.mxu0
  %423 = vmatprep.mubr.f32.mxu0 %v71
  %424 = vmatmul.mubr.f32.gmra.mxu0 %v70
  %v425 = vpop.f32.mrf.mxu0
  %v426 = vadd.f32 0.0, %v425
  %v427 = vpop.f32.mrf.mxu0
  %428 = vmatprep.mubr.f32.mxu0 %v73
  %429 = vmatmul.mubr.f32.gmra.mxu0 %v72
  %v430 = vpop.f32.mrf.mxu0
  %v431 = vadd.f32 0.0, %v430
  %v432 = vpop.f32.mrf.mxu0
  %433 = vmatprep.mubr.f32.mxu0 %v75
  %434 = vmatmul.mubr.f32.gmra.mxu0 %v74
  %v435 = vpop.f32.mrf.mxu0
  %v436 = vadd.f32 0.0, %v435
  %v437 = vpop.f32.mrf.mxu0
  %438 = vmatprep.mubr.f32.mxu0 %v77
  %439 = vmatmul.mubr.f32.gmra.mxu0 %v76
  %v440 = vpop.f32.mrf.mxu0
  %v441 = vadd.f32 0.0, %v440
  %v442 = vpop.f32.mrf.mxu0
  %443 = vmatprep.mubr.f32.mxu0 %v79
  %444 = vmatmul.mubr.f32.gmra.mxu0 %v78
  %v445 = vpop.f32.mrf.mxu0
  %v446 = vadd.f32 0.0, %v445
  %v447 = vpop.f32.mrf.mxu0
  %448 = vmatprep.mubr.f32.mxu0 %v81
  %449 = vmatmul.mubr.f32.gmra.mxu0 %v80
  %v450 = vpop.f32.mrf.mxu0
  %v451 = vadd.f32 0.0, %v450
  %v452 = vpop.f32.mrf.mxu0
  %453 = vmatprep.mubr.f32.mxu0 %v83
  %454 = vmatmul.mubr.f32.gmra.mxu0 %v82
  %v455 = vpop.f32.mrf.mxu0
  %v456 = vadd.f32 0.0, %v455
  %v457 = vpop.f32.mrf.mxu0
  %458 = vmatprep.mubr.f32.mxu0 %v85
  %459 = vmatmul.mubr.f32.gmra.mxu0 %v84
  %v460 = vpop.f32.mrf.mxu0
  %v461 = vadd.f32 0.0, %v460
  %v462 = vpop.f32.mrf.mxu0
  %463 = vmatprep.mubr.f32.mxu0 %v87
  %464 = vmatmul.mubr.f32.gmra.mxu0 %v86
  %v465 = vpop.f32.mrf.mxu0
  %v466 = vadd.f32 0.0, %v465
  %v467 = vpop.f32.mrf.mxu0
  %468 = vmatprep.mubr.f32.mxu0 %v89
  %469 = vmatmul.mubr.f32.gmra.mxu0 %v88
  %v470 = vpop.f32.mrf.mxu0
  %v471 = vadd.f32 0.0, %v470
  %v472 = vpop.f32.mrf.mxu0
  %473 = vmatprep.mubr.f32.mxu0 %v91
  %474 = vmatmul.mubr.f32.gmra.mxu0 %v90
  %v475 = vpop.f32.mrf.mxu0
  %v476 = vadd.f32 0.0, %v475
  %v477 = vpop.f32.mrf.mxu0
  %478 = vmatprep.mubr.f32.mxu0 %v93
  %479 = vmatmul.mubr.f32.gmra.mxu0 %v92
  %v480 = vpop.f32.mrf.mxu0
  %v481 = vadd.f32 0.0, %v480
  %v482 = vpop.f32.mrf.mxu0
  %483 = vmatprep.mubr.f32.mxu0 %v95
  %484 = vmatmul.mubr.f32.gmra.mxu0 %v94
  %v485 = vpop.f32.mrf.mxu0
  %v486 = vadd.f32 0.0, %v485
  %v487 = vpop.f32.mrf.mxu0
  %488 = vmatprep.mubr.f32.mxu0 %v97
  %489 = vmatmul.mubr.f32.gmra.mxu0 %v96
  %v490 = vpop.f32.mrf.mxu0
  %v491 = vadd.f32 0.0, %v490
  %v492 = vpop.f32.mrf.mxu0
  %493 = vmatprep.mubr.f32.mxu0 %v99
  %494 = vmatmul.mubr.f32.gmra.mxu0 %v98
  %v495 = vpop.f32.mrf.mxu0
  %v496 = vadd.f32 0.0, %v495
  %v497 = vpop.f32.mrf.mxu0
  %498 = vmatprep.mubr.f32.mxu0 %v101
  %499 = vmatmul.mubr.f32.gmra.mxu0 %v100
  %v500 = vpop.f32.mrf.mxu0
  %v501 = vadd.f32 0.0, %v500
  %v502 = vpop.f32.mrf.mxu0
  %503 = vmatprep.mubr.f32.mxu0 %v103
  %504 = vmatmul.mubr.f32.gmra.mxu0 %v102
  %v505 = vpop.f32.mrf.mxu0
  %v506 = vadd.f32 0.0, %v505
  %v507 = vpop.f32.mrf.mxu0
  %508 = vmatprep.mubr.f32.mxu0 %v105
  %509 = vmatmul.mubr.f32.gmra.mxu0 %v104
  %v510 = vpop.f32.mrf.mxu0
  %v511 = vadd.f32 0.0, %v510
  %v512 = vpop.f32.mrf.mxu0
  %513 = vmatprep.mubr.f32.mxu0 %v107
  %514 = vmatmul.mubr.f32.gmra.mxu0 %v106
  %v515 = vpop.f32.mrf.mxu0
  %v516 = vadd.f32 0.0, %v515
  %v517 = vpop.f32.mrf.mxu0
  %518 = vmatprep.mubr.f32.mxu0 %v109
  %519 = vmatmul.mubr.f32.gmra.mxu0 %v108
  %v520 = vpop.f32.mrf.mxu0
  %v521 = vadd.f32 0.0, %v520
  %v522 = vpop.f32.mrf.mxu0
  %523 = vmatprep.mubr.f32.mxu0 %v111
  %524 = vmatmul.mubr.f32.gmra.mxu0 %v110
  %v525 = vpop.f32.mrf.mxu0
  %v526 = vadd.f32 0.0, %v525
  %v527 = vpop.f32.mrf.mxu0
  %528 = vmatprep.mubr.f32.mxu0 %v113
  %529 = vmatmul.mubr.f32.gmra.mxu0 %v112
  %v530 = vpop.f32.mrf.mxu0
  %v531 = vadd.f32 0.0, %v530
  %v532 = vpop.f32.mrf.mxu0
  %533 = vmatprep.mubr.f32.mxu0 %v115
  %534 = vmatmul.mubr.f32.gmra.mxu0 %v114
  %v535 = vpop.f32.mrf.mxu0
  %v536 = vadd.f32 0.0, %v535
  %v537 = vpop.f32.mrf.mxu0
  %538 = vmatprep.mubr.f32.mxu0 %v117
  %539 = vmatmul.mubr.f32.gmra.mxu0 %v116
  %v540 = vpop.f32.mrf.mxu0
  %v541 = vadd.f32 0.0, %v540
  %v542 = vpop.f32.mrf.mxu0
  %543 = vmatprep.mubr.f32.mxu0 %v119
  %544 = vmatmul.mubr.f32.gmra.mxu0 %v118
  %v545 = vpop.f32.mrf.mxu0
  %v546 = vadd.f32 0.0, %v545
  %v547 = vpop.f32.mrf.mxu0
  %548 = vmatprep.mubr.f32.mxu0 %v121
  %549 = vmatmul.mubr.f32.gmra.mxu0 %v120
  %v550 = vpop.f32.mrf.mxu0
  %v551 = vadd.f32 0.0, %v550
  %v552 = vpop.f32.mrf.mxu0
  %553 = vmatprep.mubr.f32.mxu0 %v123
  %554 = vmatmul.mubr.f32.gmra.mxu0 %v122
  %v555 = vpop.f32.mrf.mxu0
  %v556 = vadd.f32 0.0, %v555
  %v557 = vpop.f32.mrf.mxu0
  %558 = vmatprep.mubr.f32.mxu0 %v125
  %559 = vmatmul.mubr.f32.gmra.mxu0 %v124
  %v560 = vpop.f32.mrf.mxu0
  %v561 = vadd.f32 0.0, %v560
  %v562 = vpop.f32.mrf.mxu0
  %563 = vmatprep.mubr.f32.mxu0 %v127
  %564 = vmatmul.mubr.f32.gmra.mxu0 %v126
  %v565 = vpop.f32.mrf.mxu0
  %v566 = vadd.f32 0.0, %v565
  %v567 = vpop.f32.mrf.mxu0
  %568 = vmatprep.mubr.f32.mxu0 %v129
  %569 = vmatmul.mubr.f32.gmra.mxu0 %v128
  %v570 = vpop.f32.mrf.mxu0
  %v571 = vadd.f32 0.0, %v570
  %v572 = vpop.f32.mrf.mxu0
  %573 = vmatprep.mubr.f32.mxu0 %v131
  %574 = vmatmul.mubr.f32.gmra.mxu0 %v130
  %v575 = vpop.f32.mrf.mxu0
  %v576 = vadd.f32 0.0, %v575
  %v577 = vpop.f32.mrf.mxu0
  %578 = vmatprep.mubr.f32.mxu0 %v133
  %579 = vmatmul.mubr.f32.gmra.mxu0 %v132
  %v580 = vpop.f32.mrf.mxu0
  %v581 = vadd.f32 0.0, %v580
  %v582 = vpop.f32.mrf.mxu0
  %583 = vmatprep.mubr.f32.mxu0 %v135
  %584 = vmatmul.mubr.f32.gmra.mxu0 %v134
  %v585 = vpop.f32.mrf.mxu0
  %v586 = vadd.f32 0.0, %v585
  %v587 = vpop.f32.mrf.mxu0
  %588 = vmatprep.mubr.f32.mxu0 %v137
  %589 = vmatmul.mubr.f32.gmra.mxu0 %v136
  %v590 = vpop.f32.mrf.mxu0
  %v591 = vadd.f32 0.0, %v590
  %v592 = vpop.f32.mrf.mxu0
  %593 = vmatprep.mubr.f32.mxu0 %v139
  %594 = vmatmul.mubr.f32.gmra.mxu0 %v138
  %v595 = vpop.f32.mrf.mxu0
  %v596 = vadd.f32 0.0, %v595
  %v597 = vpop.f32.mrf.mxu0
  %598 = vmatprep.mubr.f32.mxu0 %v141
  %599 = vmatmul.mubr.f32.gmra.mxu0 %v140
  %v600 = vpop.f32.mrf.mxu0
  %v601 = vadd.f32 0.0, %v600
  %v602 = vpop.f32.mrf.mxu0
  %603 = vmatprep.mubr.f32.mxu0 %v143
  %604 = vmatmul.mubr.f32.gmra.mxu0 %v142
  %v605 = vpop.f32.mrf.mxu0
  %v606 = vadd.f32 0.0, %v605
  %v607 = vpop.f32.mrf.mxu0
  %608 = vmatprep.mubr.f32.mxu0 %v145
  %609 = vmatmul.mubr.f32.gmra.mxu0 %v144
  %v610 = vpop.f32.mrf.mxu0
  %v611 = vadd.f32 0.0, %v610
  %v612 = vpop.f32.mrf.mxu0
  %613 = vmatprep.mubr.f32.mxu0 %v147
  %614 = vmatmul.mubr.f32.gmra.mxu0 %v146
  %v615 = vpop.f32.mrf.mxu0
  %v616 = vadd.f32 0.0, %v615
  %v617 = vpop.f32.mrf.mxu0
  %618 = vmatprep.mubr.f32.mxu0 %v149
  %619 = vmatmul.mubr.f32.gmra.mxu0 %v148
  %v620 = vpop.f32.mrf.mxu0
  %v621 = vadd.f32 0.0, %v620
  %v622 = vpop.f32.mrf.mxu0
  %623 = vmatprep.mubr.f32.mxu0 %v151
  %624 = vmatmul.mubr.f32.gmra.mxu0 %v150
  %v625 = vpop.f32.mrf.mxu0
  %v626 = vadd.f32 0.0, %v625
  %v627 = vpop.f32.mrf.mxu0
  %628 = vmatprep.mubr.f32.mxu0 %v153
  %629 = vmatmul.mubr.f32.gmra.mxu0 %v152
  %v630 = vpop.f32.mrf.mxu0
  %v631 = vadd.f32 0.0, %v630
  %v632 = vpop.f32.mrf.mxu0
  %633 = vmatprep.mubr.f32.mxu0 %v155
  %634 = vmatmul.mubr.f32.gmra.mxu0 %v154
  %v635 = vpop.f32.mrf.mxu0
  %v636 = vadd.f32 0.0, %v635
  %v637 = vpop.f32.mrf.mxu0
  %638 = vmatprep.mubr.f32.mxu0 %v157
  %639 = vmatmul.mubr.f32.gmra.mxu0 %v156
  %v640 = vpop.f32.mrf.mxu0
  %v641 = vadd.f32 0.0, %v640
  %v642 = vpop.f32.mrf.mxu0
  %643 = vmatprep.mubr.f32.mxu0 %v159
  %644 = vmatmul.mubr.f32.gmra.mxu0 %v158
  %v645 = vpop.f32.mrf.mxu0
  %v646 = vadd.f32 0.0, %v645
  %v647 = vpop.f32.mrf.mxu0
  %648 = vmatprep.mubr.f32.mxu0 %v161
  %649 = vmatmul.mubr.f32.gmra.mxu0 %v160
  %v650 = vpop.f32.mrf.mxu0
  %v651 = vadd.f32 0.0, %v650
  %v652 = vpop.f32.mrf.mxu0
  %653 = vmatprep.mubr.f32.mxu0 %v163
  %654 = vmatmul.mubr.f32.gmra.mxu0 %v162
  %v655 = vpop.f32.mrf.mxu0
  %v656 = vadd.f32 0.0, %v655
  %v657 = vpop.f32.mrf.mxu0
  %658 = vmatprep.mubr.f32.mxu0 %v165
  %659 = vmatmul.mubr.f32.gmra.mxu0 %v164
  %v660 = vpop.f32.mrf.mxu0
  %v661 = vadd.f32 0.0, %v660
  %v662 = vpop.f32.mrf.mxu0
  %663 = vmatprep.mubr.f32.mxu0 %v167
  %664 = vmatmul.mubr.f32.gmra.mxu0 %v166
  %v665 = vpop.f32.mrf.mxu0
  %v666 = vadd.f32 0.0, %v665
  %v667 = vpop.f32.mrf.mxu0
  %668 = vmatprep.mubr.f32.mxu0 %v169
  %669 = vmatmul.mubr.f32.gmra.mxu0 %v168
  %v670 = vpop.f32.mrf.mxu0
  %v671 = vadd.f32 0.0, %v670
  %v672 = vpop.f32.mrf.mxu0
  %673 = vmatprep.mubr.f32.mxu0 %v171
  %674 = vmatmul.mubr.f32.gmra.mxu0 %v170
  %v675 = vpop.f32.mrf.mxu0
  %v676 = vadd.f32 0.0, %v675
  %v677 = vpop.f32.mrf.mxu0
  %678 = vmatprep.mubr.f32.mxu0 %v173
  %679 = vmatmul.mubr.f32.gmra.mxu0 %v172
  %v680 = vpop.f32.mrf.mxu0
  %v681 = vadd.f32 0.0, %v680
  %v682 = vpop.f32.mrf.mxu0
  %683 = vmatprep.mubr.f32.mxu0 %v175
  %684 = vmatmul.mubr.f32.gmra.mxu0 %v174
  %v685 = vpop.f32.mrf.mxu0
  %v686 = vadd.f32 0.0, %v685
  %v687 = vpop.f32.mrf.mxu0
  %688 = vmatprep.mubr.f32.mxu0 %v177
  %689 = vmatmul.mubr.f32.gmra.mxu0 %v176
  %v690 = vpop.f32.mrf.mxu0
  %v691 = vadd.f32 0.0, %v690
  %v692 = vpop.f32.mrf.mxu0
  %693 = vmatprep.mubr.f32.mxu0 %v179
  %694 = vmatmul.mubr.f32.gmra.mxu0 %v178
  %v695 = vpop.f32.mrf.mxu0
  %v696 = vadd.f32 0.0, %v695
  %v697 = vpop.f32.mrf.mxu0
  %698 = vmatprep.mubr.f32.mxu0 %v181
  %699 = vmatmul.mubr.f32.gmra.mxu0 %v180
  %v700 = vpop.f32.mrf.mxu0
  %v701 = vadd.f32 0.0, %v700
  %v702 = vpop.f32.mrf.mxu0
  %703 = vmatprep.mubr.f32.mxu0 %v183
  %704 = vmatmul.mubr.f32.gmra.mxu0 %v182
  %v705 = vpop.f32.mrf.mxu0
  %v706 = vadd.f32 0.0, %v705
  %v707 = vpop.f32.mrf.mxu0
  %708 = vmatprep.mubr.f32.mxu0 %v185
  %709 = vmatmul.mubr.f32.gmra.mxu0 %v184
  %v710 = vpop.f32.mrf.mxu0
  %v711 = vadd.f32 0.0, %v710
  %v712 = vpop.f32.mrf.mxu0
  %713 = vmatprep.mubr.f32.mxu0 %v187
  %714 = vmatmul.mubr.f32.gmra.mxu0 %v186
  %v715 = vpop.f32.mrf.mxu0
  %v716 = vadd.f32 0.0, %v715
  %v717 = vpop.f32.mrf.mxu0
  %718 = vmatprep.mubr.f32.mxu0 %v189
  %719 = vmatmul.mubr.f32.gmra.mxu0 %v188
  %v720 = vpop.f32.mrf.mxu0
  %v721 = vadd.f32 0.0, %v720
  %v722 = vpop.f32.mrf.mxu0
  %723 = vmatprep.mubr.f32.mxu0 %v191
  %724 = vmatmul.mubr.f32.gmra.mxu0 %v190
  %v725 = vpop.f32.mrf.mxu0
  %v726 = vadd.f32 0.0, %v725
  %v727 = vpop.f32.mrf.mxu0
  %728 = vmatprep.mubr.f32.mxu0 %v193
  %729 = vmatmul.mubr.f32.gmra.mxu0 %v192
  %v730 = vpop.f32.mrf.mxu0
  %v731 = vadd.f32 0.0, %v730
  %v732 = vpop.f32.mrf.mxu0
  %733 = vmatprep.mubr.f32.mxu0 %v195
  %734 = vmatmul.mubr.f32.gmra.mxu0 %v194
  %v735 = vpop.f32.mrf.mxu0
  %v736 = vadd.f32 0.0, %v735
  %v737 = vpop.f32.mrf.mxu0
  %738 = vmatprep.mubr.f32.mxu0 %v197
  %739 = vmatmul.mubr.f32.gmra.mxu0 %v196
  %v740 = vpop.f32.mrf.mxu0
  %v741 = vadd.f32 0.0, %v740
  %v742 = vpop.f32.mrf.mxu0
  %743 = vmatprep.mubr.f32.mxu0 %v199
  %744 = vmatmul.mubr.f32.gmra.mxu0 %v198
  %v745 = vpop.f32.mrf.mxu0
  %v746 = vadd.f32 0.0, %v745
  %v747 = vpop.f32.mrf.mxu0
  %748 = vmatprep.mubr.f32.mxu0 %v201
  %749 = vmatmul.mubr.f32.gmra.mxu0 %v200
  %v750 = vpop.f32.mrf.mxu0
  %v751 = vadd.f32 0.0, %v750
  %v752 = vpop.f32.mrf.mxu0
  %753 = vmatprep.mubr.f32.mxu0 %v203
  %754 = vmatmul.mubr.f32.gmra.mxu0 %v202
  %v755 = vpop.f32.mrf.mxu0
  %v756 = vadd.f32 0.0, %v755
  %v757 = vpop.f32.mrf.mxu0
  %758 = vmatprep.mubr.f32.mxu0 %v205
  %759 = vmatmul.mubr.f32.gmra.mxu0 %v204
  %v760 = vpop.f32.mrf.mxu0
  %v761 = vadd.f32 0.0, %v760
  %v762 = vpop.f32.mrf.mxu0
  %763 = vmatprep.mubr.f32.mxu0 %v207
  %764 = vmatmul.mubr.f32.gmra.mxu0 %v206
  %v765 = vpop.f32.mrf.mxu0
  %v766 = vadd.f32 0.0, %v765
  %v767 = vpop.f32.mrf.mxu0
  %768 = vmatprep.mubr.f32.mxu0 %v209
  %769 = vmatmul.mubr.f32.gmra.mxu0 %v208
  %v770 = vpop.f32.mrf.mxu0
  %v771 = vadd.f32 0.0, %v770
  %v772 = vpop.f32.mrf.mxu0
  %773 = vmatprep.mubr.f32.mxu0 %v211
  %774 = vmatmul.mubr.f32.gmra.mxu0 %v210
  %v775 = vpop.f32.mrf.mxu0
  %v776 = vadd.f32 0.0, %v775
  %v777 = vpop.f32.mrf.mxu0
  %778 = vmatprep.mubr.f32.mxu0 %v213
  %779 = vmatmul.mubr.f32.gmra.mxu0 %v212
  %v780 = vpop.f32.mrf.mxu0
  %v781 = vadd.f32 0.0, %v780
  %v782 = vpop.f32.mrf.mxu0
  %783 = vmatprep.mubr.f32.mxu0 %v215
  %784 = vmatmul.mubr.f32.gmra.mxu0 %v214
  %v785 = vpop.f32.mrf.mxu0
  %v786 = vadd.f32 0.0, %v785
  %v787 = vpop.f32.mrf.mxu0
  %788 = vmatprep.mubr.f32.mxu0 %v217
  %789 = vmatmul.mubr.f32.gmra.mxu0 %v216
  %v790 = vpop.f32.mrf.mxu0
  %v791 = vadd.f32 0.0, %v790
  %v792 = vpop.f32.mrf.mxu0
  %793 = vmatprep.mubr.f32.mxu0 %v219
  %794 = vmatmul.mubr.f32.gmra.mxu0 %v218
  %v795 = vpop.f32.mrf.mxu0
  %v796 = vadd.f32 0.0, %v795
  %v797 = vpop.f32.mrf.mxu0
  %798 = vmatprep.mubr.f32.mxu0 %v221
  %799 = vmatmul.mubr.f32.gmra.mxu0 %v220
  %v800 = vpop.f32.mrf.mxu0
  %v801 = vadd.f32 0.0, %v800
  %v802 = vpop.f32.mrf.mxu0
  %803 = vmatprep.mubr.f32.mxu0 %v223
  %804 = vmatmul.mubr.f32.gmra.mxu0 %v222
  %v805 = vpop.f32.mrf.mxu0
  %v806 = vadd.f32 0.0, %v805
  %v807 = vpop.f32.mrf.mxu0
  %808 = vmatprep.mubr.f32.mxu0 %v225
  %809 = vmatmul.mubr.f32.gmra.mxu0 %v224
  %v810 = vpop.f32.mrf.mxu0
  %v811 = vadd.f32 0.0, %v810
  %v812 = vpop.f32.mrf.mxu0
  %813 = vmatprep.mubr.f32.mxu0 %v227
  %814 = vmatmul.mubr.f32.gmra.mxu0 %v226
  %v815 = vpop.f32.mrf.mxu0
  %v816 = vadd.f32 0.0, %v815
  %v817 = vpop.f32.mrf.mxu0
  %818 = vmatprep.mubr.f32.mxu0 %v229
  %819 = vmatmul.mubr.f32.gmra.mxu0 %v228
  %v820 = vpop.f32.mrf.mxu0
  %v821 = vadd.f32 0.0, %v820
  %v822 = vpop.f32.mrf.mxu0
  %823 = vmatprep.mubr.f32.mxu0 %v231
  %824 = vmatmul.mubr.f32.gmra.mxu0 %v230
  %v825 = vpop.f32.mrf.mxu0
  %v826 = vadd.f32 0.0, %v825
  %v827 = vpop.f32.mrf.mxu0
  %828 = vdwg.mxu0
  %v829 = vmax.f32 %v331, %v456
  %v830 = vmax.f32 %v829, %v581
  %v831 = vmax.f32 %v830, %v706
  %v832 = vmax.f32 %v336, %v461
  %v833 = vmax.f32 %v832, %v586
  %v834 = vmax.f32 %v833, %v711
  %v835 = vmax.f32 %v341, %v466
  %v836 = vmax.f32 %v835, %v591
  %v837 = vmax.f32 %v836, %v716
  %v838 = vmax.f32 %v346, %v471
  %v839 = vmax.f32 %v838, %v596
  %v840 = vmax.f32 %v839, %v721
  %v841 = vmax.f32 %v351, %v476
  %v842 = vmax.f32 %v841, %v601
  %v843 = vmax.f32 %v842, %v726
  %v844 = vmax.f32 %v356, %v481
  %v845 = vmax.f32 %v844, %v606
  %v846 = vmax.f32 %v845, %v731
  %v847 = vmax.f32 %v361, %v486
  %v848 = vmax.f32 %v847, %v611
  %v849 = vmax.f32 %v848, %v736
  %v850 = vmax.f32 %v366, %v491
  %v851 = vmax.f32 %v850, %v616
  %v852 = vmax.f32 %v851, %v741
  %v853 = vmax.f32 %v371, %v496
  %v854 = vmax.f32 %v853, %v621
  %v855 = vmax.f32 %v854, %v746
  %v856 = vmax.f32 %v376, %v501
  %v857 = vmax.f32 %v856, %v626
  %v858 = vmax.f32 %v857, %v751
  %v859 = vmax.f32 %v381, %v506
  %v860 = vmax.f32 %v859, %v631
  %v861 = vmax.f32 %v860, %v756
  %v862 = vmax.f32 %v386, %v511
  %v863 = vmax.f32 %v862, %v636
  %v864 = vmax.f32 %v863, %v761
  %v865 = vmax.f32 %v391, %v516
  %v866 = vmax.f32 %v865, %v641
  %v867 = vmax.f32 %v866, %v766
  %v868 = vmax.f32 %v396, %v521
  %v869 = vmax.f32 %v868, %v646
  %v870 = vmax.f32 %v869, %v771
  %v871 = vmax.f32 %v401, %v526
  %v872 = vmax.f32 %v871, %v651
  %v873 = vmax.f32 %v872, %v776
  %v874 = vmax.f32 %v406, %v531
  %v875 = vmax.f32 %v874, %v656
  %v876 = vmax.f32 %v875, %v781
  %v877 = vmax.f32 %v411, %v536
  %v878 = vmax.f32 %v877, %v661
  %v879 = vmax.f32 %v878, %v786
  %v880 = vmax.f32 %v416, %v541
  %v881 = vmax.f32 %v880, %v666
  %v882 = vmax.f32 %v881, %v791
  %v883 = vmax.f32 %v421, %v546
  %v884 = vmax.f32 %v883, %v671
  %v885 = vmax.f32 %v884, %v796
  %v886 = vmax.f32 %v426, %v551
  %v887 = vmax.f32 %v886, %v676
  %v888 = vmax.f32 %v887, %v801
  %v889 = vmax.f32 %v431, %v556
  %v890 = vmax.f32 %v889, %v681
  %v891 = vmax.f32 %v890, %v806
  %v892 = vmax.f32 %v436, %v561
  %v893 = vmax.f32 %v892, %v686
  %v894 = vmax.f32 %v893, %v811
  %v895 = vmax.f32 %v441, %v566
  %v896 = vmax.f32 %v895, %v691
  %v897 = vmax.f32 %v896, %v816
  %v898 = vmax.f32 %v446, %v571
  %v899 = vmax.f32 %v898, %v696
  %v900 = vmax.f32 %v899, %v821
  %v901 = vmax.f32 %v451, %v576
  %v902 = vmax.f32 %v901, %v701
  %v903 = vmax.f32 %v902, %v826
  %v904 = vld [vmem:[%s2] sm:$0x1]
  %v906 = vlaneseq
  %v907 = vshrl.u32 %v906, 7
  %v908 = vsub.s32 0, %v907
  %v909 = vrot.slane %v904, %v908
  %v911 = vadd.f32 %v831, %v909
  %v912 = vadd.f32 %v834, %v909
  %v913 = vadd.f32 %v837, %v909
  %v914 = vadd.f32 %v840, %v909
  %v915 = vadd.f32 %v843, %v909
  %v916 = vadd.f32 %v846, %v909
  %v917 = vadd.f32 %v849, %v909
  %v918 = vadd.f32 %v852, %v909
  %v919 = vadd.f32 %v855, %v909
  %v920 = vadd.f32 %v858, %v909
  %v921 = vadd.f32 %v861, %v909
  %v922 = vadd.f32 %v864, %v909
  %v923 = vadd.f32 %v867, %v909
  %v924 = vadd.f32 %v870, %v909
  %v925 = vadd.f32 %v873, %v909
  %v926 = vadd.f32 %v876, %v909
  %v927 = vadd.f32 %v879, %v909
  %v928 = vadd.f32 %v882, %v909
  %v929 = vadd.f32 %v885, %v909
  %v930 = vadd.f32 %v888, %v909
  %v931 = vadd.f32 %v891, %v909
  %v932 = vadd.f32 %v894, %v909
  %v933 = vadd.f32 %v897, %v909
  %v934 = vadd.f32 %v900, %v909
  %v935 = vadd.f32 %v903, %v909
  %v936 = vmax.f32 %v911, 0.0
  %v937 = vmax.f32 %v912, 0.0
  %v938 = vmax.f32 %v913, 0.0
  %v939 = vmax.f32 %v914, 0.0
  %v940 = vmax.f32 %v915, 0.0
  %v941 = vmax.f32 %v916, 0.0
  %v942 = vmax.f32 %v917, 0.0
  %v943 = vmax.f32 %v918, 0.0
  %v944 = vmax.f32 %v919, 0.0
  %v945 = vmax.f32 %v920, 0.0
  %v946 = vmax.f32 %v921, 0.0
  %v947 = vmax.f32 %v922, 0.0
  %v948 = vmax.f32 %v923, 0.0
  %v949 = vmax.f32 %v924, 0.0
  %v950 = vmax.f32 %v925, 0.0
  %v951 = vmax.f32 %v926, 0.0
  %v952 = vmax.f32 %v927, 0.0
  %v953 = vmax.f32 %v928, 0.0
  %v954 = vmax.f32 %v929, 0.0
  %v955 = vmax.f32 %v930, 0.0
  %v956 = vmax.f32 %v931, 0.0
  %v957 = vmax.f32 %v932, 0.0
  %v958 = vmax.f32 %v933, 0.0
  %v959 = vmax.f32 %v934, 0.0
  %v960 = vmax.f32 %v935, 0.0
  %v961 = vld [vmem:[%s3] sm:$0xff]
  %v962 = vld [vmem:[%s3 + $0x8] sm:$0xff]
  %v963 = vld [vmem:[%s3 + $0x10] sm:$0xff]
  %v964 = vld [vmem:[%s3 + $0x18] sm:$0xff]
  %v965 = vld [vmem:[%s3 + $0x20] sm:$0xff]
  %v966 = vld [vmem:[%s3 + $0x28] sm:$0xff]
  %v967 = vld [vmem:[%s3 + $0x30] sm:$0xff]
  %v968 = vld [vmem:[%s3 + $0x38] sm:$0xff]
  %v969 = vld [vmem:[%s3 + $0x40] sm:$0xff]
  %v970 = vld [vmem:[%s3 + $0x48] sm:$0xff]
  %v971 = vld [vmem:[%s3 + $0x50] sm:$0xff]
  %v972 = vld [vmem:[%s3 + $0x58] sm:$0xff]
  %v973 = vld [vmem:[%s3 + $0x60] sm:$0xff]
  %v974 = vld [vmem:[%s3 + $0x68] sm:$0xff]
  %v975 = vld [vmem:[%s3 + $0x70] sm:$0xff]
  %v976 = vld [vmem:[%s3 + $0x78] sm:$0xff]
  %s977 = scalar_lea.vmem %s3, 128
  %v978 = vld [vmem:[%s977] sm:$0xff]
  %v979 = vld [vmem:[%s977 + $0x8] sm:$0xff]
  %v980 = vld [vmem:[%s977 + $0x10] sm:$0xff]
  %v981 = vld [vmem:[%s977 + $0x18] sm:$0xff]
  %v982 = vld [vmem:[%s977 + $0x20] sm:$0xff]
  %v983 = vld [vmem:[%s977 + $0x28] sm:$0xff]
  %v984 = vld [vmem:[%s977 + $0x30] sm:$0xff]
  %v985 = vld [vmem:[%s977 + $0x38] sm:$0xff]
  %v986 = vld [vmem:[%s977 + $0x40] sm:$0xff]
  %v987 = vld [vmem:[%s977 + $0x48] sm:$0xff]
  %v988 = vld [vmem:[%s977 + $0x50] sm:$0xff]
  %v989 = vld [vmem:[%s977 + $0x58] sm:$0xff]
  %v990 = vld [vmem:[%s977 + $0x60] sm:$0xff]
  %v991 = vld [vmem:[%s977 + $0x68] sm:$0xff]
  %v992 = vld [vmem:[%s977 + $0x70] sm:$0xff]
  %v993 = vld [vmem:[%s977 + $0x78] sm:$0xff]
  %994 = vmatprep.subr.mxu0 0.0
  %995 = vmatpush1.msra.mxu0 %v993
  %996 = vmatprep.subr.mxu0 0.0
  %997 = vmatpush1.msra.mxu0 %v992
  %998 = vmatprep.subr.mxu0 0.0
  %999 = vmatpush1.msra.mxu0 %v991
  %1000 = vmatprep.subr.mxu0 0.0
  %1001 = vmatpush1.msra.mxu0 %v990
  %1002 = vmatprep.subr.mxu0 0.0
  %1003 = vmatpush1.msra.mxu0 %v989
  %1004 = vmatprep.subr.mxu0 0.0
  %1005 = vmatpush1.msra.mxu0 %v988
  %1006 = vmatprep.subr.mxu0 0.0
  %1007 = vmatpush1.msra.mxu0 %v987
  %1008 = vmatprep.subr.mxu0 0.0
  %1009 = vmatpush1.msra.mxu0 %v986
  %1010 = vmatprep.subr.mxu0 0.0
  %1011 = vmatpush1.msra.mxu0 %v985
  %1012 = vmatprep.subr.mxu0 0.0
  %1013 = vmatpush1.msra.mxu0 %v984
  %1014 = vmatprep.subr.mxu0 0.0
  %1015 = vmatpush1.msra.mxu0 %v983
  %1016 = vmatprep.subr.mxu0 0.0
  %1017 = vmatpush1.msra.mxu0 %v982
  %1018 = vmatprep.subr.mxu0 0.0
  %1019 = vmatpush1.msra.mxu0 %v981
  %1020 = vmatprep.subr.mxu0 0.0
  %1021 = vmatpush1.msra.mxu0 %v980
  %1022 = vmatprep.subr.mxu0 0.0
  %1023 = vmatpush1.msra.mxu0 %v979
  %1024 = vmatprep.subr.mxu0 0.0
  %1025 = vmatpush1.msra.mxu0 %v978
  %1026 = vmatprep.subr.mxu0 0.0
  %1027 = vmatpush2.msra.mxu0 0.0
  %1028 = vmatprep.subr.mxu0 0.0
  %1029 = vmatpush2.msra.mxu0 0.0
  %1030 = vmatprep.subr.mxu0 0.0
  %1031 = vmatpush2.msra.mxu0 0.0
  %1032 = vmatprep.subr.mxu0 0.0
  %1033 = vmatpush2.msra.mxu0 0.0
  %1034 = vmatprep.subr.mxu0 0.0
  %1035 = vmatpush2.msra.mxu0 0.0
  %1036 = vmatprep.subr.mxu0 0.0
  %1037 = vmatpush2.msra.mxu0 0.0
  %1038 = vmatprep.subr.mxu0 0.0
  %1039 = vmatpush2.msra.mxu0 0.0
  %1040 = vmatprep.subr.mxu0 0.0
  %1041 = vmatpush2.msra.mxu0 0.0
  %1042 = vmatprep.subr.mxu0 0.0
  %1043 = vmatpush2.msra.mxu0 0.0
  %1044 = vmatprep.subr.mxu0 0.0
  %1045 = vmatpush2.msra.mxu0 0.0
  %1046 = vmatprep.subr.mxu0 0.0
  %1047 = vmatpush2.msra.mxu0 0.0
  %1048 = vmatprep.subr.mxu0 0.0
  %1049 = vmatpush2.msra.mxu0 0.0
  %1050 = vmatprep.subr.mxu0 0.0
  %1051 = vmatpush2.msra.mxu0 0.0
  %1052 = vmatprep.subr.mxu0 0.0
  %1053 = vmatpush2.msra.mxu0 0.0
  %1054 = vmatprep.subr.mxu0 0.0
  %1055 = vmatpush2.msra.mxu0 0.0
  %1056 = vmatprep.subr.mxu0 0.0
  %1057 = vmatpush2.msra.mxu0 0.0
  %1058 = vmatprep.mubr.f32.mxu0 0.0
  %1059 = vmatmul.mubr.f32.gmra.mxu0 %v937
  %v1060 = vpop.f32.mrf.mxu0
  %v1061 = vadd.f32 0.0, %v1060
  %v1062 = vpop.f32.mrf.mxu0
  %1063 = vdwg.mxu0
  %1064 = vmatprep.subr.mxu0 0.0
  %1065 = vmatpush1.msra.mxu0 %v976
  %1066 = vmatprep.subr.mxu0 0.0
  %1067 = vmatpush1.msra.mxu0 %v975
  %1068 = vmatprep.subr.mxu0 0.0
  %1069 = vmatpush1.msra.mxu0 %v974
  %1070 = vmatprep.subr.mxu0 0.0
  %1071 = vmatpush1.msra.mxu0 %v973
  %1072 = vmatprep.subr.mxu0 0.0
  %1073 = vmatpush1.msra.mxu0 %v972
  %1074 = vmatprep.subr.mxu0 0.0
  %1075 = vmatpush1.msra.mxu0 %v971
  %1076 = vmatprep.subr.mxu0 0.0
  %1077 = vmatpush1.msra.mxu0 %v970
  %1078 = vmatprep.subr.mxu0 0.0
  %1079 = vmatpush1.msra.mxu0 %v969
  %1080 = vmatprep.subr.mxu0 0.0
  %1081 = vmatpush1.msra.mxu0 %v968
  %1082 = vmatprep.subr.mxu0 0.0
  %1083 = vmatpush1.msra.mxu0 %v967
  %1084 = vmatprep.subr.mxu0 0.0
  %1085 = vmatpush1.msra.mxu0 %v966
  %1086 = vmatprep.subr.mxu0 0.0
  %1087 = vmatpush1.msra.mxu0 %v965
  %1088 = vmatprep.subr.mxu0 0.0
  %1089 = vmatpush1.msra.mxu0 %v964
  %1090 = vmatprep.subr.mxu0 0.0
  %1091 = vmatpush1.msra.mxu0 %v963
  %1092 = vmatprep.subr.mxu0 0.0
  %1093 = vmatpush1.msra.mxu0 %v962
  %1094 = vmatprep.subr.mxu0 0.0
  %1095 = vmatpush1.msra.mxu0 %v961
  %1096 = vmatprep.subr.mxu0 0.0
  %1097 = vmatpush2.msra.mxu0 0.0
  %1098 = vmatprep.subr.mxu0 0.0
  %1099 = vmatpush2.msra.mxu0 0.0
  %1100 = vmatprep.subr.mxu0 0.0
  %1101 = vmatpush2.msra.mxu0 0.0
  %1102 = vmatprep.subr.mxu0 0.0
  %1103 = vmatpush2.msra.mxu0 0.0
  %1104 = vmatprep.subr.mxu0 0.0
  %1105 = vmatpush2.msra.mxu0 0.0
  %1106 = vmatprep.subr.mxu0 0.0
  %1107 = vmatpush2.msra.mxu0 0.0
  %1108 = vmatprep.subr.mxu0 0.0
  %1109 = vmatpush2.msra.mxu0 0.0
  %1110 = vmatprep.subr.mxu0 0.0
  %1111 = vmatpush2.msra.mxu0 0.0
  %1112 = vmatprep.subr.mxu0 0.0
  %1113 = vmatpush2.msra.mxu0 0.0
  %1114 = vmatprep.subr.mxu0 0.0
  %1115 = vmatpush2.msra.mxu0 0.0
  %1116 = vmatprep.subr.mxu0 0.0
  %1117 = vmatpush2.msra.mxu0 0.0
  %1118 = vmatprep.subr.mxu0 0.0
  %1119 = vmatpush2.msra.mxu0 0.0
  %1120 = vmatprep.subr.mxu0 0.0
  %1121 = vmatpush2.msra.mxu0 0.0
  %1122 = vmatprep.subr.mxu0 0.0
  %1123 = vmatpush2.msra.mxu0 0.0
  %1124 = vmatprep.subr.mxu0 0.0
  %1125 = vmatpush2.msra.mxu0 0.0
  %1126 = vmatprep.subr.mxu0 0.0
  %1127 = vmatpush2.msra.mxu0 0.0
  %1128 = vmatprep.mubr.f32.mxu0 0.0
  %1129 = vmatmul.mubr.f32.gmra.mxu0 %v936
  %v1130 = vpop.f32.mrf.mxu0
  %v1131 = vadd.f32 %v1061, %v1130
  %v1132 = vpop.f32.mrf.mxu0
  %1133 = vdwg.mxu0
  %s1134 = scalar_lea.vmem %s3, 256
  %v1135 = vld [vmem:[%s1134] sm:$0xff]
  %v1136 = vld [vmem:[%s1134 + $0x8] sm:$0xff]
  %v1137 = vld [vmem:[%s1134 + $0x10] sm:$0xff]
  %v1138 = vld [vmem:[%s1134 + $0x18] sm:$0xff]
  %v1139 = vld [vmem:[%s1134 + $0x20] sm:$0xff]
  %v1140 = vld [vmem:[%s1134 + $0x28] sm:$0xff]
  %v1141 = vld [vmem:[%s1134 + $0x30] sm:$0xff]
  %v1142 = vld [vmem:[%s1134 + $0x38] sm:$0xff]
  %v1143 = vld [vmem:[%s1134 + $0x40] sm:$0xff]
  %v1144 = vld [vmem:[%s1134 + $0x48] sm:$0xff]
  %v1145 = vld [vmem:[%s1134 + $0x50] sm:$0xff]
  %v1146 = vld [vmem:[%s1134 + $0x58] sm:$0xff]
  %v1147 = vld [vmem:[%s1134 + $0x60] sm:$0xff]
  %v1148 = vld [vmem:[%s1134 + $0x68] sm:$0xff]
  %v1149 = vld [vmem:[%s1134 + $0x70] sm:$0xff]
  %v1150 = vld [vmem:[%s1134 + $0x78] sm:$0xff]
  %1151 = vmatprep.subr.mxu0 0.0
  %1152 = vmatpush1.msra.mxu0 %v1150
  %1153 = vmatprep.subr.mxu0 0.0
  %1154 = vmatpush1.msra.mxu0 %v1149
  %1155 = vmatprep.subr.mxu0 0.0
  %1156 = vmatpush1.msra.mxu0 %v1148
  %1157 = vmatprep.subr.mxu0 0.0
  %1158 = vmatpush1.msra.mxu0 %v1147
  %1159 = vmatprep.subr.mxu0 0.0
  %1160 = vmatpush1.msra.mxu0 %v1146
  %1161 = vmatprep.subr.mxu0 0.0
  %1162 = vmatpush1.msra.mxu0 %v1145
  %1163 = vmatprep.subr.mxu0 0.0
  %1164 = vmatpush1.msra.mxu0 %v1144
  %1165 = vmatprep.subr.mxu0 0.0
  %1166 = vmatpush1.msra.mxu0 %v1143
  %1167 = vmatprep.subr.mxu0 0.0
  %1168 = vmatpush1.msra.mxu0 %v1142
  %1169 = vmatprep.subr.mxu0 0.0
  %1170 = vmatpush1.msra.mxu0 %v1141
  %1171 = vmatprep.subr.mxu0 0.0
  %1172 = vmatpush1.msra.mxu0 %v1140
  %1173 = vmatprep.subr.mxu0 0.0
  %1174 = vmatpush1.msra.mxu0 %v1139
  %1175 = vmatprep.subr.mxu0 0.0
  %1176 = vmatpush1.msra.mxu0 %v1138
  %1177 = vmatprep.subr.mxu0 0.0
  %1178 = vmatpush1.msra.mxu0 %v1137
  %1179 = vmatprep.subr.mxu0 0.0
  %1180 = vmatpush1.msra.mxu0 %v1136
  %1181 = vmatprep.subr.mxu0 0.0
  %1182 = vmatpush1.msra.mxu0 %v1135
  %1183 = vmatprep.subr.mxu0 0.0
  %1184 = vmatpush2.msra.mxu0 0.0
  %1185 = vmatprep.subr.mxu0 0.0
  %1186 = vmatpush2.msra.mxu0 0.0
  %1187 = vmatprep.subr.mxu0 0.0
  %1188 = vmatpush2.msra.mxu0 0.0
  %1189 = vmatprep.subr.mxu0 0.0
  %1190 = vmatpush2.msra.mxu0 0.0
  %1191 = vmatprep.subr.mxu0 0.0
  %1192 = vmatpush2.msra.mxu0 0.0
  %1193 = vmatprep.subr.mxu0 0.0
  %1194 = vmatpush2.msra.mxu0 0.0
  %1195 = vmatprep.subr.mxu0 0.0
  %1196 = vmatpush2.msra.mxu0 0.0
  %1197 = vmatprep.subr.mxu0 0.0
  %1198 = vmatpush2.msra.mxu0 0.0
  %1199 = vmatprep.subr.mxu0 0.0
  %1200 = vmatpush2.msra.mxu0 0.0
  %1201 = vmatprep.subr.mxu0 0.0
  %1202 = vmatpush2.msra.mxu0 0.0
  %1203 = vmatprep.subr.mxu0 0.0
  %1204 = vmatpush2.msra.mxu0 0.0
  %1205 = vmatprep.subr.mxu0 0.0
  %1206 = vmatpush2.msra.mxu0 0.0
  %1207 = vmatprep.subr.mxu0 0.0
  %1208 = vmatpush2.msra.mxu0 0.0
  %1209 = vmatprep.subr.mxu0 0.0
  %1210 = vmatpush2.msra.mxu0 0.0
  %1211 = vmatprep.subr.mxu0 0.0
  %1212 = vmatpush2.msra.mxu0 0.0
  %1213 = vmatprep.subr.mxu0 0.0
  %1214 = vmatpush2.msra.mxu0 0.0
  %1215 = vmatprep.mubr.f32.mxu0 0.0
  %1216 = vmatmul.mubr.f32.gmra.mxu0 %v938
  %v1217 = vpop.f32.mrf.mxu0
  %v1218 = vadd.f32 0.0, %v1217
  %v1219 = vpop.f32.mrf.mxu0
  %1220 = vdwg.mxu0
  %v1221 = vadd.f32 %v1131, %v1218
  %s1222 = scalar_lea.vmem %s3, 384
  %v1223 = vld [vmem:[%s1222] sm:$0xff]
  %v1224 = vld [vmem:[%s1222 + $0x8] sm:$0xff]
  %v1225 = vld [vmem:[%s1222 + $0x10] sm:$0xff]
  %v1226 = vld [vmem:[%s1222 + $0x18] sm:$0xff]
  %v1227 = vld [vmem:[%s1222 + $0x20] sm:$0xff]
  %v1228 = vld [vmem:[%s1222 + $0x28] sm:$0xff]
  %v1229 = vld [vmem:[%s1222 + $0x30] sm:$0xff]
  %v1230 = vld [vmem:[%s1222 + $0x38] sm:$0xff]
  %v1231 = vld [vmem:[%s1222 + $0x40] sm:$0xff]
  %v1232 = vld [vmem:[%s1222 + $0x48] sm:$0xff]
  %v1233 = vld [vmem:[%s1222 + $0x50] sm:$0xff]
  %v1234 = vld [vmem:[%s1222 + $0x58] sm:$0xff]
  %v1235 = vld [vmem:[%s1222 + $0x60] sm:$0xff]
  %v1236 = vld [vmem:[%s1222 + $0x68] sm:$0xff]
  %v1237 = vld [vmem:[%s1222 + $0x70] sm:$0xff]
  %v1238 = vld [vmem:[%s1222 + $0x78] sm:$0xff]
  %1239 = vmatprep.subr.mxu0 0.0
  %1240 = vmatpush1.msra.mxu0 %v1238
  %1241 = vmatprep.subr.mxu0 0.0
  %1242 = vmatpush1.msra.mxu0 %v1237
  %1243 = vmatprep.subr.mxu0 0.0
  %1244 = vmatpush1.msra.mxu0 %v1236
  %1245 = vmatprep.subr.mxu0 0.0
  %1246 = vmatpush1.msra.mxu0 %v1235
  %1247 = vmatprep.subr.mxu0 0.0
  %1248 = vmatpush1.msra.mxu0 %v1234
  %1249 = vmatprep.subr.mxu0 0.0
  %1250 = vmatpush1.msra.mxu0 %v1233
  %1251 = vmatprep.subr.mxu0 0.0
  %1252 = vmatpush1.msra.mxu0 %v1232
  %1253 = vmatprep.subr.mxu0 0.0
  %1254 = vmatpush1.msra.mxu0 %v1231
  %1255 = vmatprep.subr.mxu0 0.0
  %1256 = vmatpush1.msra.mxu0 %v1230
  %1257 = vmatprep.subr.mxu0 0.0
  %1258 = vmatpush1.msra.mxu0 %v1229
  %1259 = vmatprep.subr.mxu0 0.0
  %1260 = vmatpush1.msra.mxu0 %v1228
  %1261 = vmatprep.subr.mxu0 0.0
  %1262 = vmatpush1.msra.mxu0 %v1227
  %1263 = vmatprep.subr.mxu0 0.0
  %1264 = vmatpush1.msra.mxu0 %v1226
  %1265 = vmatprep.subr.mxu0 0.0
  %1266 = vmatpush1.msra.mxu0 %v1225
  %1267 = vmatprep.subr.mxu0 0.0
  %1268 = vmatpush1.msra.mxu0 %v1224
  %1269 = vmatprep.subr.mxu0 0.0
  %1270 = vmatpush1.msra.mxu0 %v1223
  %1271 = vmatprep.subr.mxu0 0.0
  %1272 = vmatpush2.msra.mxu0 0.0
  %1273 = vmatprep.subr.mxu0 0.0
  %1274 = vmatpush2.msra.mxu0 0.0
  %1275 = vmatprep.subr.mxu0 0.0
  %1276 = vmatpush2.msra.mxu0 0.0
  %1277 = vmatprep.subr.mxu0 0.0
  %1278 = vmatpush2.msra.mxu0 0.0
  %1279 = vmatprep.subr.mxu0 0.0
  %1280 = vmatpush2.msra.mxu0 0.0
  %1281 = vmatprep.subr.mxu0 0.0
  %1282 = vmatpush2.msra.mxu0 0.0
  %1283 = vmatprep.subr.mxu0 0.0
  %1284 = vmatpush2.msra.mxu0 0.0
  %1285 = vmatprep.subr.mxu0 0.0
  %1286 = vmatpush2.msra.mxu0 0.0
  %1287 = vmatprep.subr.mxu0 0.0
  %1288 = vmatpush2.msra.mxu0 0.0
  %1289 = vmatprep.subr.mxu0 0.0
  %1290 = vmatpush2.msra.mxu0 0.0
  %1291 = vmatprep.subr.mxu0 0.0
  %1292 = vmatpush2.msra.mxu0 0.0
  %1293 = vmatprep.subr.mxu0 0.0
  %1294 = vmatpush2.msra.mxu0 0.0
  %1295 = vmatprep.subr.mxu0 0.0
  %1296 = vmatpush2.msra.mxu0 0.0
  %1297 = vmatprep.subr.mxu0 0.0
  %1298 = vmatpush2.msra.mxu0 0.0
  %1299 = vmatprep.subr.mxu0 0.0
  %1300 = vmatpush2.msra.mxu0 0.0
  %1301 = vmatprep.subr.mxu0 0.0
  %1302 = vmatpush2.msra.mxu0 0.0
  %1303 = vmatprep.mubr.f32.mxu0 0.0
  %1304 = vmatmul.mubr.f32.gmra.mxu0 %v939
  %v1305 = vpop.f32.mrf.mxu0
  %v1306 = vadd.f32 0.0, %v1305
  %v1307 = vpop.f32.mrf.mxu0
  %1308 = vdwg.mxu0
  %v1309 = vadd.f32 %v1221, %v1306
  %s1310 = scalar_lea.vmem %s3, 512
  %v1311 = vld [vmem:[%s1310] sm:$0xff]
  %v1312 = vld [vmem:[%s1310 + $0x8] sm:$0xff]
  %v1313 = vld [vmem:[%s1310 + $0x10] sm:$0xff]
  %v1314 = vld [vmem:[%s1310 + $0x18] sm:$0xff]
  %v1315 = vld [vmem:[%s1310 + $0x20] sm:$0xff]
  %v1316 = vld [vmem:[%s1310 + $0x28] sm:$0xff]
  %v1317 = vld [vmem:[%s1310 + $0x30] sm:$0xff]
  %v1318 = vld [vmem:[%s1310 + $0x38] sm:$0xff]
  %v1319 = vld [vmem:[%s1310 + $0x40] sm:$0xff]
  %v1320 = vld [vmem:[%s1310 + $0x48] sm:$0xff]
  %v1321 = vld [vmem:[%s1310 + $0x50] sm:$0xff]
  %v1322 = vld [vmem:[%s1310 + $0x58] sm:$0xff]
  %v1323 = vld [vmem:[%s1310 + $0x60] sm:$0xff]
  %v1324 = vld [vmem:[%s1310 + $0x68] sm:$0xff]
  %v1325 = vld [vmem:[%s1310 + $0x70] sm:$0xff]
  %v1326 = vld [vmem:[%s1310 + $0x78] sm:$0xff]
  %1327 = vmatprep.subr.mxu0 0.0
  %1328 = vmatpush1.msra.mxu0 %v1326
  %1329 = vmatprep.subr.mxu0 0.0
  %1330 = vmatpush1.msra.mxu0 %v1325
  %1331 = vmatprep.subr.mxu0 0.0
  %1332 = vmatpush1.msra.mxu0 %v1324
  %1333 = vmatprep.subr.mxu0 0.0
  %1334 = vmatpush1.msra.mxu0 %v1323
  %1335 = vmatprep.subr.mxu0 0.0
  %1336 = vmatpush1.msra.mxu0 %v1322
  %1337 = vmatprep.subr.mxu0 0.0
  %1338 = vmatpush1.msra.mxu0 %v1321
  %1339 = vmatprep.subr.mxu0 0.0
  %1340 = vmatpush1.msra.mxu0 %v1320
  %1341 = vmatprep.subr.mxu0 0.0
  %1342 = vmatpush1.msra.mxu0 %v1319
  %1343 = vmatprep.subr.mxu0 0.0
  %1344 = vmatpush1.msra.mxu0 %v1318
  %1345 = vmatprep.subr.mxu0 0.0
  %1346 = vmatpush1.msra.mxu0 %v1317
  %1347 = vmatprep.subr.mxu0 0.0
  %1348 = vmatpush1.msra.mxu0 %v1316
  %1349 = vmatprep.subr.mxu0 0.0
  %1350 = vmatpush1.msra.mxu0 %v1315
  %1351 = vmatprep.subr.mxu0 0.0
  %1352 = vmatpush1.msra.mxu0 %v1314
  %1353 = vmatprep.subr.mxu0 0.0
  %1354 = vmatpush1.msra.mxu0 %v1313
  %1355 = vmatprep.subr.mxu0 0.0
  %1356 = vmatpush1.msra.mxu0 %v1312
  %1357 = vmatprep.subr.mxu0 0.0
  %1358 = vmatpush1.msra.mxu0 %v1311
  %1359 = vmatprep.subr.mxu0 0.0
  %1360 = vmatpush2.msra.mxu0 0.0
  %1361 = vmatprep.subr.mxu0 0.0
  %1362 = vmatpush2.msra.mxu0 0.0
  %1363 = vmatprep.subr.mxu0 0.0
  %1364 = vmatpush2.msra.mxu0 0.0
  %1365 = vmatprep.subr.mxu0 0.0
  %1366 = vmatpush2.msra.mxu0 0.0
  %1367 = vmatprep.subr.mxu0 0.0
  %1368 = vmatpush2.msra.mxu0 0.0
  %1369 = vmatprep.subr.mxu0 0.0
  %1370 = vmatpush2.msra.mxu0 0.0
  %1371 = vmatprep.subr.mxu0 0.0
  %1372 = vmatpush2.msra.mxu0 0.0
  %1373 = vmatprep.subr.mxu0 0.0
  %1374 = vmatpush2.msra.mxu0 0.0
  %1375 = vmatprep.subr.mxu0 0.0
  %1376 = vmatpush2.msra.mxu0 0.0
  %1377 = vmatprep.subr.mxu0 0.0
  %1378 = vmatpush2.msra.mxu0 0.0
  %1379 = vmatprep.subr.mxu0 0.0
  %1380 = vmatpush2.msra.mxu0 0.0
  %1381 = vmatprep.subr.mxu0 0.0
  %1382 = vmatpush2.msra.mxu0 0.0
  %1383 = vmatprep.subr.mxu0 0.0
  %1384 = vmatpush2.msra.mxu0 0.0
  %1385 = vmatprep.subr.mxu0 0.0
  %1386 = vmatpush2.msra.mxu0 0.0
  %1387 = vmatprep.subr.mxu0 0.0
  %1388 = vmatpush2.msra.mxu0 0.0
  %1389 = vmatprep.subr.mxu0 0.0
  %1390 = vmatpush2.msra.mxu0 0.0
  %1391 = vmatprep.mubr.f32.mxu0 0.0
  %1392 = vmatmul.mubr.f32.gmra.mxu0 %v940
  %v1393 = vpop.f32.mrf.mxu0
  %v1394 = vadd.f32 0.0, %v1393
  %v1395 = vpop.f32.mrf.mxu0
  %1396 = vdwg.mxu0
  %v1397 = vadd.f32 %v1309, %v1394
  %s1398 = scalar_lea.vmem %s3, 640
  %v1399 = vld [vmem:[%s1398] sm:$0xff]
  %v1400 = vld [vmem:[%s1398 + $0x8] sm:$0xff]
  %v1401 = vld [vmem:[%s1398 + $0x10] sm:$0xff]
  %v1402 = vld [vmem:[%s1398 + $0x18] sm:$0xff]
  %v1403 = vld [vmem:[%s1398 + $0x20] sm:$0xff]
  %v1404 = vld [vmem:[%s1398 + $0x28] sm:$0xff]
  %v1405 = vld [vmem:[%s1398 + $0x30] sm:$0xff]
  %v1406 = vld [vmem:[%s1398 + $0x38] sm:$0xff]
  %v1407 = vld [vmem:[%s1398 + $0x40] sm:$0xff]
  %v1408 = vld [vmem:[%s1398 + $0x48] sm:$0xff]
  %v1409 = vld [vmem:[%s1398 + $0x50] sm:$0xff]
  %v1410 = vld [vmem:[%s1398 + $0x58] sm:$0xff]
  %v1411 = vld [vmem:[%s1398 + $0x60] sm:$0xff]
  %v1412 = vld [vmem:[%s1398 + $0x68] sm:$0xff]
  %v1413 = vld [vmem:[%s1398 + $0x70] sm:$0xff]
  %v1414 = vld [vmem:[%s1398 + $0x78] sm:$0xff]
  %1415 = vmatprep.subr.mxu0 0.0
  %1416 = vmatpush1.msra.mxu0 %v1414
  %1417 = vmatprep.subr.mxu0 0.0
  %1418 = vmatpush1.msra.mxu0 %v1413
  %1419 = vmatprep.subr.mxu0 0.0
  %1420 = vmatpush1.msra.mxu0 %v1412
  %1421 = vmatprep.subr.mxu0 0.0
  %1422 = vmatpush1.msra.mxu0 %v1411
  %1423 = vmatprep.subr.mxu0 0.0
  %1424 = vmatpush1.msra.mxu0 %v1410
  %1425 = vmatprep.subr.mxu0 0.0
  %1426 = vmatpush1.msra.mxu0 %v1409
  %1427 = vmatprep.subr.mxu0 0.0
  %1428 = vmatpush1.msra.mxu0 %v1408
  %1429 = vmatprep.subr.mxu0 0.0
  %1430 = vmatpush1.msra.mxu0 %v1407
  %1431 = vmatprep.subr.mxu0 0.0
  %1432 = vmatpush1.msra.mxu0 %v1406
  %1433 = vmatprep.subr.mxu0 0.0
  %1434 = vmatpush1.msra.mxu0 %v1405
  %1435 = vmatprep.subr.mxu0 0.0
  %1436 = vmatpush1.msra.mxu0 %v1404
  %1437 = vmatprep.subr.mxu0 0.0
  %1438 = vmatpush1.msra.mxu0 %v1403
  %1439 = vmatprep.subr.mxu0 0.0
  %1440 = vmatpush1.msra.mxu0 %v1402
  %1441 = vmatprep.subr.mxu0 0.0
  %1442 = vmatpush1.msra.mxu0 %v1401
  %1443 = vmatprep.subr.mxu0 0.0
  %1444 = vmatpush1.msra.mxu0 %v1400
  %1445 = vmatprep.subr.mxu0 0.0
  %1446 = vmatpush1.msra.mxu0 %v1399
  %1447 = vmatprep.subr.mxu0 0.0
  %1448 = vmatpush2.msra.mxu0 0.0
  %1449 = vmatprep.subr.mxu0 0.0
  %1450 = vmatpush2.msra.mxu0 0.0
  %1451 = vmatprep.subr.mxu0 0.0
  %1452 = vmatpush2.msra.mxu0 0.0
  %1453 = vmatprep.subr.mxu0 0.0
  %1454 = vmatpush2.msra.mxu0 0.0
  %1455 = vmatprep.subr.mxu0 0.0
  %1456 = vmatpush2.msra.mxu0 0.0
  %1457 = vmatprep.subr.mxu0 0.0
  %1458 = vmatpush2.msra.mxu0 0.0
  %1459 = vmatprep.subr.mxu0 0.0
  %1460 = vmatpush2.msra.mxu0 0.0
  %1461 = vmatprep.subr.mxu0 0.0
  %1462 = vmatpush2.msra.mxu0 0.0
  %1463 = vmatprep.subr.mxu0 0.0
  %1464 = vmatpush2.msra.mxu0 0.0
  %1465 = vmatprep.subr.mxu0 0.0
  %1466 = vmatpush2.msra.mxu0 0.0
  %1467 = vmatprep.subr.mxu0 0.0
  %1468 = vmatpush2.msra.mxu0 0.0
  %1469 = vmatprep.subr.mxu0 0.0
  %1470 = vmatpush2.msra.mxu0 0.0
  %1471 = vmatprep.subr.mxu0 0.0
  %1472 = vmatpush2.msra.mxu0 0.0
  %1473 = vmatprep.subr.mxu0 0.0
  %1474 = vmatpush2.msra.mxu0 0.0
  %1475 = vmatprep.subr.mxu0 0.0
  %1476 = vmatpush2.msra.mxu0 0.0
  %1477 = vmatprep.subr.mxu0 0.0
  %1478 = vmatpush2.msra.mxu0 0.0
  %1479 = vmatprep.mubr.f32.mxu0 0.0
  %1480 = vmatmul.mubr.f32.gmra.mxu0 %v941
  %v1481 = vpop.f32.mrf.mxu0
  %v1482 = vadd.f32 0.0, %v1481
  %v1483 = vpop.f32.mrf.mxu0
  %1484 = vdwg.mxu0
  %v1485 = vadd.f32 %v1397, %v1482
  %s1486 = scalar_lea.vmem %s3, 768
  %v1487 = vld [vmem:[%s1486] sm:$0xff]
  %v1488 = vld [vmem:[%s1486 + $0x8] sm:$0xff]
  %v1489 = vld [vmem:[%s1486 + $0x10] sm:$0xff]
  %v1490 = vld [vmem:[%s1486 + $0x18] sm:$0xff]
  %v1491 = vld [vmem:[%s1486 + $0x20] sm:$0xff]
  %v1492 = vld [vmem:[%s1486 + $0x28] sm:$0xff]
  %v1493 = vld [vmem:[%s1486 + $0x30] sm:$0xff]
  %v1494 = vld [vmem:[%s1486 + $0x38] sm:$0xff]
  %v1495 = vld [vmem:[%s1486 + $0x40] sm:$0xff]
  %v1496 = vld [vmem:[%s1486 + $0x48] sm:$0xff]
  %v1497 = vld [vmem:[%s1486 + $0x50] sm:$0xff]
  %v1498 = vld [vmem:[%s1486 + $0x58] sm:$0xff]
  %v1499 = vld [vmem:[%s1486 + $0x60] sm:$0xff]
  %v1500 = vld [vmem:[%s1486 + $0x68] sm:$0xff]
  %v1501 = vld [vmem:[%s1486 + $0x70] sm:$0xff]
  %v1502 = vld [vmem:[%s1486 + $0x78] sm:$0xff]
  %1503 = vmatprep.subr.mxu0 0.0
  %1504 = vmatpush1.msra.mxu0 %v1502
  %1505 = vmatprep.subr.mxu0 0.0
  %1506 = vmatpush1.msra.mxu0 %v1501
  %1507 = vmatprep.subr.mxu0 0.0
  %1508 = vmatpush1.msra.mxu0 %v1500
  %1509 = vmatprep.subr.mxu0 0.0
  %1510 = vmatpush1.msra.mxu0 %v1499
  %1511 = vmatprep.subr.mxu0 0.0
  %1512 = vmatpush1.msra.mxu0 %v1498
  %1513 = vmatprep.subr.mxu0 0.0
  %1514 = vmatpush1.msra.mxu0 %v1497
  %1515 = vmatprep.subr.mxu0 0.0
  %1516 = vmatpush1.msra.mxu0 %v1496
  %1517 = vmatprep.subr.mxu0 0.0
  %1518 = vmatpush1.msra.mxu0 %v1495
  %1519 = vmatprep.subr.mxu0 0.0
  %1520 = vmatpush1.msra.mxu0 %v1494
  %1521 = vmatprep.subr.mxu0 0.0
  %1522 = vmatpush1.msra.mxu0 %v1493
  %1523 = vmatprep.subr.mxu0 0.0
  %1524 = vmatpush1.msra.mxu0 %v1492
  %1525 = vmatprep.subr.mxu0 0.0
  %1526 = vmatpush1.msra.mxu0 %v1491
  %1527 = vmatprep.subr.mxu0 0.0
  %1528 = vmatpush1.msra.mxu0 %v1490
  %1529 = vmatprep.subr.mxu0 0.0
  %1530 = vmatpush1.msra.mxu0 %v1489
  %1531 = vmatprep.subr.mxu0 0.0
  %1532 = vmatpush1.msra.mxu0 %v1488
  %1533 = vmatprep.subr.mxu0 0.0
  %1534 = vmatpush1.msra.mxu0 %v1487
  %1535 = vmatprep.subr.mxu0 0.0
  %1536 = vmatpush2.msra.mxu0 0.0
  %1537 = vmatprep.subr.mxu0 0.0
  %1538 = vmatpush2.msra.mxu0 0.0
  %1539 = vmatprep.subr.mxu0 0.0
  %1540 = vmatpush2.msra.mxu0 0.0
  %1541 = vmatprep.subr.mxu0 0.0
  %1542 = vmatpush2.msra.mxu0 0.0
  %1543 = vmatprep.subr.mxu0 0.0
  %1544 = vmatpush2.msra.mxu0 0.0
  %1545 = vmatprep.subr.mxu0 0.0
  %1546 = vmatpush2.msra.mxu0 0.0
  %1547 = vmatprep.subr.mxu0 0.0
  %1548 = vmatpush2.msra.mxu0 0.0
  %1549 = vmatprep.subr.mxu0 0.0
  %1550 = vmatpush2.msra.mxu0 0.0
  %1551 = vmatprep.subr.mxu0 0.0
  %1552 = vmatpush2.msra.mxu0 0.0
  %1553 = vmatprep.subr.mxu0 0.0
  %1554 = vmatpush2.msra.mxu0 0.0
  %1555 = vmatprep.subr.mxu0 0.0
  %1556 = vmatpush2.msra.mxu0 0.0
  %1557 = vmatprep.subr.mxu0 0.0
  %1558 = vmatpush2.msra.mxu0 0.0
  %1559 = vmatprep.subr.mxu0 0.0
  %1560 = vmatpush2.msra.mxu0 0.0
  %1561 = vmatprep.subr.mxu0 0.0
  %1562 = vmatpush2.msra.mxu0 0.0
  %1563 = vmatprep.subr.mxu0 0.0
  %1564 = vmatpush2.msra.mxu0 0.0
  %1565 = vmatprep.subr.mxu0 0.0
  %1566 = vmatpush2.msra.mxu0 0.0
  %1567 = vmatprep.mubr.f32.mxu0 0.0
  %1568 = vmatmul.mubr.f32.gmra.mxu0 %v942
  %v1569 = vpop.f32.mrf.mxu0
  %v1570 = vadd.f32 0.0, %v1569
  %v1571 = vpop.f32.mrf.mxu0
  %1572 = vdwg.mxu0
  %v1573 = vadd.f32 %v1485, %v1570
  %s1574 = scalar_lea.vmem %s3, 896
  %v1575 = vld [vmem:[%s1574] sm:$0xff]
  %v1576 = vld [vmem:[%s1574 + $0x8] sm:$0xff]
  %v1577 = vld [vmem:[%s1574 + $0x10] sm:$0xff]
  %v1578 = vld [vmem:[%s1574 + $0x18] sm:$0xff]
  %v1579 = vld [vmem:[%s1574 + $0x20] sm:$0xff]
  %v1580 = vld [vmem:[%s1574 + $0x28] sm:$0xff]
  %v1581 = vld [vmem:[%s1574 + $0x30] sm:$0xff]
  %v1582 = vld [vmem:[%s1574 + $0x38] sm:$0xff]
  %v1583 = vld [vmem:[%s1574 + $0x40] sm:$0xff]
  %v1584 = vld [vmem:[%s1574 + $0x48] sm:$0xff]
  %v1585 = vld [vmem:[%s1574 + $0x50] sm:$0xff]
  %v1586 = vld [vmem:[%s1574 + $0x58] sm:$0xff]
  %v1587 = vld [vmem:[%s1574 + $0x60] sm:$0xff]
  %v1588 = vld [vmem:[%s1574 + $0x68] sm:$0xff]
  %v1589 = vld [vmem:[%s1574 + $0x70] sm:$0xff]
  %v1590 = vld [vmem:[%s1574 + $0x78] sm:$0xff]
  %1591 = vmatprep.subr.mxu0 0.0
  %1592 = vmatpush1.msra.mxu0 %v1590
  %1593 = vmatprep.subr.mxu0 0.0
  %1594 = vmatpush1.msra.mxu0 %v1589
  %1595 = vmatprep.subr.mxu0 0.0
  %1596 = vmatpush1.msra.mxu0 %v1588
  %1597 = vmatprep.subr.mxu0 0.0
  %1598 = vmatpush1.msra.mxu0 %v1587
  %1599 = vmatprep.subr.mxu0 0.0
  %1600 = vmatpush1.msra.mxu0 %v1586
  %1601 = vmatprep.subr.mxu0 0.0
  %1602 = vmatpush1.msra.mxu0 %v1585
  %1603 = vmatprep.subr.mxu0 0.0
  %1604 = vmatpush1.msra.mxu0 %v1584
  %1605 = vmatprep.subr.mxu0 0.0
  %1606 = vmatpush1.msra.mxu0 %v1583
  %1607 = vmatprep.subr.mxu0 0.0
  %1608 = vmatpush1.msra.mxu0 %v1582
  %1609 = vmatprep.subr.mxu0 0.0
  %1610 = vmatpush1.msra.mxu0 %v1581
  %1611 = vmatprep.subr.mxu0 0.0
  %1612 = vmatpush1.msra.mxu0 %v1580
  %1613 = vmatprep.subr.mxu0 0.0
  %1614 = vmatpush1.msra.mxu0 %v1579
  %1615 = vmatprep.subr.mxu0 0.0
  %1616 = vmatpush1.msra.mxu0 %v1578
  %1617 = vmatprep.subr.mxu0 0.0
  %1618 = vmatpush1.msra.mxu0 %v1577
  %1619 = vmatprep.subr.mxu0 0.0
  %1620 = vmatpush1.msra.mxu0 %v1576
  %1621 = vmatprep.subr.mxu0 0.0
  %1622 = vmatpush1.msra.mxu0 %v1575
  %1623 = vmatprep.subr.mxu0 0.0
  %1624 = vmatpush2.msra.mxu0 0.0
  %1625 = vmatprep.subr.mxu0 0.0
  %1626 = vmatpush2.msra.mxu0 0.0
  %1627 = vmatprep.subr.mxu0 0.0
  %1628 = vmatpush2.msra.mxu0 0.0
  %1629 = vmatprep.subr.mxu0 0.0
  %1630 = vmatpush2.msra.mxu0 0.0
  %1631 = vmatprep.subr.mxu0 0.0
  %1632 = vmatpush2.msra.mxu0 0.0
  %1633 = vmatprep.subr.mxu0 0.0
  %1634 = vmatpush2.msra.mxu0 0.0
  %1635 = vmatprep.subr.mxu0 0.0
  %1636 = vmatpush2.msra.mxu0 0.0
  %1637 = vmatprep.subr.mxu0 0.0
  %1638 = vmatpush2.msra.mxu0 0.0
  %1639 = vmatprep.subr.mxu0 0.0
  %1640 = vmatpush2.msra.mxu0 0.0
  %1641 = vmatprep.subr.mxu0 0.0
  %1642 = vmatpush2.msra.mxu0 0.0
  %1643 = vmatprep.subr.mxu0 0.0
  %1644 = vmatpush2.msra.mxu0 0.0
  %1645 = vmatprep.subr.mxu0 0.0
  %1646 = vmatpush2.msra.mxu0 0.0
  %1647 = vmatprep.subr.mxu0 0.0
  %1648 = vmatpush2.msra.mxu0 0.0
  %1649 = vmatprep.subr.mxu0 0.0
  %1650 = vmatpush2.msra.mxu0 0.0
  %1651 = vmatprep.subr.mxu0 0.0
  %1652 = vmatpush2.msra.mxu0 0.0
  %1653 = vmatprep.subr.mxu0 0.0
  %1654 = vmatpush2.msra.mxu0 0.0
  %1655 = vmatprep.mubr.f32.mxu0 0.0
  %1656 = vmatmul.mubr.f32.gmra.mxu0 %v943
  %v1657 = vpop.f32.mrf.mxu0
  %v1658 = vadd.f32 0.0, %v1657
  %v1659 = vpop.f32.mrf.mxu0
  %1660 = vdwg.mxu0
  %v1661 = vadd.f32 %v1573, %v1658
  %s1662 = scalar_lea.vmem %s3, 1024
  %v1663 = vld [vmem:[%s1662] sm:$0xff]
  %v1664 = vld [vmem:[%s1662 + $0x8] sm:$0xff]
  %v1665 = vld [vmem:[%s1662 + $0x10] sm:$0xff]
  %v1666 = vld [vmem:[%s1662 + $0x18] sm:$0xff]
  %v1667 = vld [vmem:[%s1662 + $0x20] sm:$0xff]
  %v1668 = vld [vmem:[%s1662 + $0x28] sm:$0xff]
  %v1669 = vld [vmem:[%s1662 + $0x30] sm:$0xff]
  %v1670 = vld [vmem:[%s1662 + $0x38] sm:$0xff]
  %v1671 = vld [vmem:[%s1662 + $0x40] sm:$0xff]
  %v1672 = vld [vmem:[%s1662 + $0x48] sm:$0xff]
  %v1673 = vld [vmem:[%s1662 + $0x50] sm:$0xff]
  %v1674 = vld [vmem:[%s1662 + $0x58] sm:$0xff]
  %v1675 = vld [vmem:[%s1662 + $0x60] sm:$0xff]
  %v1676 = vld [vmem:[%s1662 + $0x68] sm:$0xff]
  %v1677 = vld [vmem:[%s1662 + $0x70] sm:$0xff]
  %v1678 = vld [vmem:[%s1662 + $0x78] sm:$0xff]
  %1679 = vmatprep.subr.mxu0 0.0
  %1680 = vmatpush1.msra.mxu0 %v1678
  %1681 = vmatprep.subr.mxu0 0.0
  %1682 = vmatpush1.msra.mxu0 %v1677
  %1683 = vmatprep.subr.mxu0 0.0
  %1684 = vmatpush1.msra.mxu0 %v1676
  %1685 = vmatprep.subr.mxu0 0.0
  %1686 = vmatpush1.msra.mxu0 %v1675
  %1687 = vmatprep.subr.mxu0 0.0
  %1688 = vmatpush1.msra.mxu0 %v1674
  %1689 = vmatprep.subr.mxu0 0.0
  %1690 = vmatpush1.msra.mxu0 %v1673
  %1691 = vmatprep.subr.mxu0 0.0
  %1692 = vmatpush1.msra.mxu0 %v1672
  %1693 = vmatprep.subr.mxu0 0.0
  %1694 = vmatpush1.msra.mxu0 %v1671
  %1695 = vmatprep.subr.mxu0 0.0
  %1696 = vmatpush1.msra.mxu0 %v1670
  %1697 = vmatprep.subr.mxu0 0.0
  %1698 = vmatpush1.msra.mxu0 %v1669
  %1699 = vmatprep.subr.mxu0 0.0
  %1700 = vmatpush1.msra.mxu0 %v1668
  %1701 = vmatprep.subr.mxu0 0.0
  %1702 = vmatpush1.msra.mxu0 %v1667
  %1703 = vmatprep.subr.mxu0 0.0
  %1704 = vmatpush1.msra.mxu0 %v1666
  %1705 = vmatprep.subr.mxu0 0.0
  %1706 = vmatpush1.msra.mxu0 %v1665
  %1707 = vmatprep.subr.mxu0 0.0
  %1708 = vmatpush1.msra.mxu0 %v1664
  %1709 = vmatprep.subr.mxu0 0.0
  %1710 = vmatpush1.msra.mxu0 %v1663
  %1711 = vmatprep.subr.mxu0 0.0
  %1712 = vmatpush2.msra.mxu0 0.0
  %1713 = vmatprep.subr.mxu0 0.0
  %1714 = vmatpush2.msra.mxu0 0.0
  %1715 = vmatprep.subr.mxu0 0.0
  %1716 = vmatpush2.msra.mxu0 0.0
  %1717 = vmatprep.subr.mxu0 0.0
  %1718 = vmatpush2.msra.mxu0 0.0
  %1719 = vmatprep.subr.mxu0 0.0
  %1720 = vmatpush2.msra.mxu0 0.0
  %1721 = vmatprep.subr.mxu0 0.0
  %1722 = vmatpush2.msra.mxu0 0.0
  %1723 = vmatprep.subr.mxu0 0.0
  %1724 = vmatpush2.msra.mxu0 0.0
  %1725 = vmatprep.subr.mxu0 0.0
  %1726 = vmatpush2.msra.mxu0 0.0
  %1727 = vmatprep.subr.mxu0 0.0
  %1728 = vmatpush2.msra.mxu0 0.0
  %1729 = vmatprep.subr.mxu0 0.0
  %1730 = vmatpush2.msra.mxu0 0.0
  %1731 = vmatprep.subr.mxu0 0.0
  %1732 = vmatpush2.msra.mxu0 0.0
  %1733 = vmatprep.subr.mxu0 0.0
  %1734 = vmatpush2.msra.mxu0 0.0
  %1735 = vmatprep.subr.mxu0 0.0
  %1736 = vmatpush2.msra.mxu0 0.0
  %1737 = vmatprep.subr.mxu0 0.0
  %1738 = vmatpush2.msra.mxu0 0.0
  %1739 = vmatprep.subr.mxu0 0.0
  %1740 = vmatpush2.msra.mxu0 0.0
  %1741 = vmatprep.subr.mxu0 0.0
  %1742 = vmatpush2.msra.mxu0 0.0
  %1743 = vmatprep.mubr.f32.mxu0 0.0
  %1744 = vmatmul.mubr.f32.gmra.mxu0 %v944
  %v1745 = vpop.f32.mrf.mxu0
  %v1746 = vadd.f32 0.0, %v1745
  %v1747 = vpop.f32.mrf.mxu0
  %1748 = vdwg.mxu0
  %v1749 = vadd.f32 %v1661, %v1746
  %s1750 = scalar_lea.vmem %s3, 1152
  %v1751 = vld [vmem:[%s1750] sm:$0xff]
  %v1752 = vld [vmem:[%s1750 + $0x8] sm:$0xff]
  %v1753 = vld [vmem:[%s1750 + $0x10] sm:$0xff]
  %v1754 = vld [vmem:[%s1750 + $0x18] sm:$0xff]
  %v1755 = vld [vmem:[%s1750 + $0x20] sm:$0xff]
  %v1756 = vld [vmem:[%s1750 + $0x28] sm:$0xff]
  %v1757 = vld [vmem:[%s1750 + $0x30] sm:$0xff]
  %v1758 = vld [vmem:[%s1750 + $0x38] sm:$0xff]
  %v1759 = vld [vmem:[%s1750 + $0x40] sm:$0xff]
  %v1760 = vld [vmem:[%s1750 + $0x48] sm:$0xff]
  %v1761 = vld [vmem:[%s1750 + $0x50] sm:$0xff]
  %v1762 = vld [vmem:[%s1750 + $0x58] sm:$0xff]
  %v1763 = vld [vmem:[%s1750 + $0x60] sm:$0xff]
  %v1764 = vld [vmem:[%s1750 + $0x68] sm:$0xff]
  %v1765 = vld [vmem:[%s1750 + $0x70] sm:$0xff]
  %v1766 = vld [vmem:[%s1750 + $0x78] sm:$0xff]
  %1767 = vmatprep.subr.mxu0 0.0
  %1768 = vmatpush1.msra.mxu0 %v1766
  %1769 = vmatprep.subr.mxu0 0.0
  %1770 = vmatpush1.msra.mxu0 %v1765
  %1771 = vmatprep.subr.mxu0 0.0
  %1772 = vmatpush1.msra.mxu0 %v1764
  %1773 = vmatprep.subr.mxu0 0.0
  %1774 = vmatpush1.msra.mxu0 %v1763
  %1775 = vmatprep.subr.mxu0 0.0
  %1776 = vmatpush1.msra.mxu0 %v1762
  %1777 = vmatprep.subr.mxu0 0.0
  %1778 = vmatpush1.msra.mxu0 %v1761
  %1779 = vmatprep.subr.mxu0 0.0
  %1780 = vmatpush1.msra.mxu0 %v1760
  %1781 = vmatprep.subr.mxu0 0.0
  %1782 = vmatpush1.msra.mxu0 %v1759
  %1783 = vmatprep.subr.mxu0 0.0
  %1784 = vmatpush1.msra.mxu0 %v1758
  %1785 = vmatprep.subr.mxu0 0.0
  %1786 = vmatpush1.msra.mxu0 %v1757
  %1787 = vmatprep.subr.mxu0 0.0
  %1788 = vmatpush1.msra.mxu0 %v1756
  %1789 = vmatprep.subr.mxu0 0.0
  %1790 = vmatpush1.msra.mxu0 %v1755
  %1791 = vmatprep.subr.mxu0 0.0
  %1792 = vmatpush1.msra.mxu0 %v1754
  %1793 = vmatprep.subr.mxu0 0.0
  %1794 = vmatpush1.msra.mxu0 %v1753
  %1795 = vmatprep.subr.mxu0 0.0
  %1796 = vmatpush1.msra.mxu0 %v1752
  %1797 = vmatprep.subr.mxu0 0.0
  %1798 = vmatpush1.msra.mxu0 %v1751
  %1799 = vmatprep.subr.mxu0 0.0
  %1800 = vmatpush2.msra.mxu0 0.0
  %1801 = vmatprep.subr.mxu0 0.0
  %1802 = vmatpush2.msra.mxu0 0.0
  %1803 = vmatprep.subr.mxu0 0.0
  %1804 = vmatpush2.msra.mxu0 0.0
  %1805 = vmatprep.subr.mxu0 0.0
  %1806 = vmatpush2.msra.mxu0 0.0
  %1807 = vmatprep.subr.mxu0 0.0
  %1808 = vmatpush2.msra.mxu0 0.0
  %1809 = vmatprep.subr.mxu0 0.0
  %1810 = vmatpush2.msra.mxu0 0.0
  %1811 = vmatprep.subr.mxu0 0.0
  %1812 = vmatpush2.msra.mxu0 0.0
  %1813 = vmatprep.subr.mxu0 0.0
  %1814 = vmatpush2.msra.mxu0 0.0
  %1815 = vmatprep.subr.mxu0 0.0
  %1816 = vmatpush2.msra.mxu0 0.0
  %1817 = vmatprep.subr.mxu0 0.0
  %1818 = vmatpush2.msra.mxu0 0.0
  %1819 = vmatprep.subr.mxu0 0.0
  %1820 = vmatpush2.msra.mxu0 0.0
  %1821 = vmatprep.subr.mxu0 0.0
  %1822 = vmatpush2.msra.mxu0 0.0
  %1823 = vmatprep.subr.mxu0 0.0
  %1824 = vmatpush2.msra.mxu0 0.0
  %1825 = vmatprep.subr.mxu0 0.0
  %1826 = vmatpush2.msra.mxu0 0.0
  %1827 = vmatprep.subr.mxu0 0.0
  %1828 = vmatpush2.msra.mxu0 0.0
  %1829 = vmatprep.subr.mxu0 0.0
  %1830 = vmatpush2.msra.mxu0 0.0
  %1831 = vmatprep.mubr.f32.mxu0 0.0
  %1832 = vmatmul.mubr.f32.gmra.mxu0 %v945
  %v1833 = vpop.f32.mrf.mxu0
  %v1834 = vadd.f32 0.0, %v1833
  %v1835 = vpop.f32.mrf.mxu0
  %1836 = vdwg.mxu0
  %v1837 = vadd.f32 %v1749, %v1834
  %s1838 = scalar_lea.vmem %s3, 1280
  %v1839 = vld [vmem:[%s1838] sm:$0xff]
  %v1840 = vld [vmem:[%s1838 + $0x8] sm:$0xff]
  %v1841 = vld [vmem:[%s1838 + $0x10] sm:$0xff]
  %v1842 = vld [vmem:[%s1838 + $0x18] sm:$0xff]
  %v1843 = vld [vmem:[%s1838 + $0x20] sm:$0xff]
  %v1844 = vld [vmem:[%s1838 + $0x28] sm:$0xff]
  %v1845 = vld [vmem:[%s1838 + $0x30] sm:$0xff]
  %v1846 = vld [vmem:[%s1838 + $0x38] sm:$0xff]
  %v1847 = vld [vmem:[%s1838 + $0x40] sm:$0xff]
  %v1848 = vld [vmem:[%s1838 + $0x48] sm:$0xff]
  %v1849 = vld [vmem:[%s1838 + $0x50] sm:$0xff]
  %v1850 = vld [vmem:[%s1838 + $0x58] sm:$0xff]
  %v1851 = vld [vmem:[%s1838 + $0x60] sm:$0xff]
  %v1852 = vld [vmem:[%s1838 + $0x68] sm:$0xff]
  %v1853 = vld [vmem:[%s1838 + $0x70] sm:$0xff]
  %v1854 = vld [vmem:[%s1838 + $0x78] sm:$0xff]
  %1855 = vmatprep.subr.mxu0 0.0
  %1856 = vmatpush1.msra.mxu0 %v1854
  %1857 = vmatprep.subr.mxu0 0.0
  %1858 = vmatpush1.msra.mxu0 %v1853
  %1859 = vmatprep.subr.mxu0 0.0
  %1860 = vmatpush1.msra.mxu0 %v1852
  %1861 = vmatprep.subr.mxu0 0.0
  %1862 = vmatpush1.msra.mxu0 %v1851
  %1863 = vmatprep.subr.mxu0 0.0
  %1864 = vmatpush1.msra.mxu0 %v1850
  %1865 = vmatprep.subr.mxu0 0.0
  %1866 = vmatpush1.msra.mxu0 %v1849
  %1867 = vmatprep.subr.mxu0 0.0
  %1868 = vmatpush1.msra.mxu0 %v1848
  %1869 = vmatprep.subr.mxu0 0.0
  %1870 = vmatpush1.msra.mxu0 %v1847
  %1871 = vmatprep.subr.mxu0 0.0
  %1872 = vmatpush1.msra.mxu0 %v1846
  %1873 = vmatprep.subr.mxu0 0.0
  %1874 = vmatpush1.msra.mxu0 %v1845
  %1875 = vmatprep.subr.mxu0 0.0
  %1876 = vmatpush1.msra.mxu0 %v1844
  %1877 = vmatprep.subr.mxu0 0.0
  %1878 = vmatpush1.msra.mxu0 %v1843
  %1879 = vmatprep.subr.mxu0 0.0
  %1880 = vmatpush1.msra.mxu0 %v1842
  %1881 = vmatprep.subr.mxu0 0.0
  %1882 = vmatpush1.msra.mxu0 %v1841
  %1883 = vmatprep.subr.mxu0 0.0
  %1884 = vmatpush1.msra.mxu0 %v1840
  %1885 = vmatprep.subr.mxu0 0.0
  %1886 = vmatpush1.msra.mxu0 %v1839
  %1887 = vmatprep.subr.mxu0 0.0
  %1888 = vmatpush2.msra.mxu0 0.0
  %1889 = vmatprep.subr.mxu0 0.0
  %1890 = vmatpush2.msra.mxu0 0.0
  %1891 = vmatprep.subr.mxu0 0.0
  %1892 = vmatpush2.msra.mxu0 0.0
  %1893 = vmatprep.subr.mxu0 0.0
  %1894 = vmatpush2.msra.mxu0 0.0
  %1895 = vmatprep.subr.mxu0 0.0
  %1896 = vmatpush2.msra.mxu0 0.0
  %1897 = vmatprep.subr.mxu0 0.0
  %1898 = vmatpush2.msra.mxu0 0.0
  %1899 = vmatprep.subr.mxu0 0.0
  %1900 = vmatpush2.msra.mxu0 0.0
  %1901 = vmatprep.subr.mxu0 0.0
  %1902 = vmatpush2.msra.mxu0 0.0
  %1903 = vmatprep.subr.mxu0 0.0
  %1904 = vmatpush2.msra.mxu0 0.0
  %1905 = vmatprep.subr.mxu0 0.0
  %1906 = vmatpush2.msra.mxu0 0.0
  %1907 = vmatprep.subr.mxu0 0.0
  %1908 = vmatpush2.msra.mxu0 0.0
  %1909 = vmatprep.subr.mxu0 0.0
  %1910 = vmatpush2.msra.mxu0 0.0
  %1911 = vmatprep.subr.mxu0 0.0
  %1912 = vmatpush2.msra.mxu0 0.0
  %1913 = vmatprep.subr.mxu0 0.0
  %1914 = vmatpush2.msra.mxu0 0.0
  %1915 = vmatprep.subr.mxu0 0.0
  %1916 = vmatpush2.msra.mxu0 0.0
  %1917 = vmatprep.subr.mxu0 0.0
  %1918 = vmatpush2.msra.mxu0 0.0
  %1919 = vmatprep.mubr.f32.mxu0 0.0
  %1920 = vmatmul.mubr.f32.gmra.mxu0 %v946
  %v1921 = vpop.f32.mrf.mxu0
  %v1922 = vadd.f32 0.0, %v1921
  %v1923 = vpop.f32.mrf.mxu0
  %1924 = vdwg.mxu0
  %v1925 = vadd.f32 %v1837, %v1922
  %s1926 = scalar_lea.vmem %s3, 1408
  %v1927 = vld [vmem:[%s1926] sm:$0xff]
  %v1928 = vld [vmem:[%s1926 + $0x8] sm:$0xff]
  %v1929 = vld [vmem:[%s1926 + $0x10] sm:$0xff]
  %v1930 = vld [vmem:[%s1926 + $0x18] sm:$0xff]
  %v1931 = vld [vmem:[%s1926 + $0x20] sm:$0xff]
  %v1932 = vld [vmem:[%s1926 + $0x28] sm:$0xff]
  %v1933 = vld [vmem:[%s1926 + $0x30] sm:$0xff]
  %v1934 = vld [vmem:[%s1926 + $0x38] sm:$0xff]
  %v1935 = vld [vmem:[%s1926 + $0x40] sm:$0xff]
  %v1936 = vld [vmem:[%s1926 + $0x48] sm:$0xff]
  %v1937 = vld [vmem:[%s1926 + $0x50] sm:$0xff]
  %v1938 = vld [vmem:[%s1926 + $0x58] sm:$0xff]
  %v1939 = vld [vmem:[%s1926 + $0x60] sm:$0xff]
  %v1940 = vld [vmem:[%s1926 + $0x68] sm:$0xff]
  %v1941 = vld [vmem:[%s1926 + $0x70] sm:$0xff]
  %v1942 = vld [vmem:[%s1926 + $0x78] sm:$0xff]
  %1943 = vmatprep.subr.mxu0 0.0
  %1944 = vmatpush1.msra.mxu0 %v1942
  %1945 = vmatprep.subr.mxu0 0.0
  %1946 = vmatpush1.msra.mxu0 %v1941
  %1947 = vmatprep.subr.mxu0 0.0
  %1948 = vmatpush1.msra.mxu0 %v1940
  %1949 = vmatprep.subr.mxu0 0.0
  %1950 = vmatpush1.msra.mxu0 %v1939
  %1951 = vmatprep.subr.mxu0 0.0
  %1952 = vmatpush1.msra.mxu0 %v1938
  %1953 = vmatprep.subr.mxu0 0.0
  %1954 = vmatpush1.msra.mxu0 %v1937
  %1955 = vmatprep.subr.mxu0 0.0
  %1956 = vmatpush1.msra.mxu0 %v1936
  %1957 = vmatprep.subr.mxu0 0.0
  %1958 = vmatpush1.msra.mxu0 %v1935
  %1959 = vmatprep.subr.mxu0 0.0
  %1960 = vmatpush1.msra.mxu0 %v1934
  %1961 = vmatprep.subr.mxu0 0.0
  %1962 = vmatpush1.msra.mxu0 %v1933
  %1963 = vmatprep.subr.mxu0 0.0
  %1964 = vmatpush1.msra.mxu0 %v1932
  %1965 = vmatprep.subr.mxu0 0.0
  %1966 = vmatpush1.msra.mxu0 %v1931
  %1967 = vmatprep.subr.mxu0 0.0
  %1968 = vmatpush1.msra.mxu0 %v1930
  %1969 = vmatprep.subr.mxu0 0.0
  %1970 = vmatpush1.msra.mxu0 %v1929
  %1971 = vmatprep.subr.mxu0 0.0
  %1972 = vmatpush1.msra.mxu0 %v1928
  %1973 = vmatprep.subr.mxu0 0.0
  %1974 = vmatpush1.msra.mxu0 %v1927
  %1975 = vmatprep.subr.mxu0 0.0
  %1976 = vmatpush2.msra.mxu0 0.0
  %1977 = vmatprep.subr.mxu0 0.0
  %1978 = vmatpush2.msra.mxu0 0.0
  %1979 = vmatprep.subr.mxu0 0.0
  %1980 = vmatpush2.msra.mxu0 0.0
  %1981 = vmatprep.subr.mxu0 0.0
  %1982 = vmatpush2.msra.mxu0 0.0
  %1983 = vmatprep.subr.mxu0 0.0
  %1984 = vmatpush2.msra.mxu0 0.0
  %1985 = vmatprep.subr.mxu0 0.0
  %1986 = vmatpush2.msra.mxu0 0.0
  %1987 = vmatprep.subr.mxu0 0.0
  %1988 = vmatpush2.msra.mxu0 0.0
  %1989 = vmatprep.subr.mxu0 0.0
  %1990 = vmatpush2.msra.mxu0 0.0
  %1991 = vmatprep.subr.mxu0 0.0
  %1992 = vmatpush2.msra.mxu0 0.0
  %1993 = vmatprep.subr.mxu0 0.0
  %1994 = vmatpush2.msra.mxu0 0.0
  %1995 = vmatprep.subr.mxu0 0.0
  %1996 = vmatpush2.msra.mxu0 0.0
  %1997 = vmatprep.subr.mxu0 0.0
  %1998 = vmatpush2.msra.mxu0 0.0
  %1999 = vmatprep.subr.mxu0 0.0
  %2000 = vmatpush2.msra.mxu0 0.0
  %2001 = vmatprep.subr.mxu0 0.0
  %2002 = vmatpush2.msra.mxu0 0.0
  %2003 = vmatprep.subr.mxu0 0.0
  %2004 = vmatpush2.msra.mxu0 0.0
  %2005 = vmatprep.subr.mxu0 0.0
  %2006 = vmatpush2.msra.mxu0 0.0
  %2007 = vmatprep.mubr.f32.mxu0 0.0
  %2008 = vmatmul.mubr.f32.gmra.mxu0 %v947
  %v2009 = vpop.f32.mrf.mxu0
  %v2010 = vadd.f32 0.0, %v2009
  %v2011 = vpop.f32.mrf.mxu0
  %2012 = vdwg.mxu0
  %v2013 = vadd.f32 %v1925, %v2010
  %s2014 = scalar_lea.vmem %s3, 1536
  %v2015 = vld [vmem:[%s2014] sm:$0xff]
  %v2016 = vld [vmem:[%s2014 + $0x8] sm:$0xff]
  %v2017 = vld [vmem:[%s2014 + $0x10] sm:$0xff]
  %v2018 = vld [vmem:[%s2014 + $0x18] sm:$0xff]
  %v2019 = vld [vmem:[%s2014 + $0x20] sm:$0xff]
  %v2020 = vld [vmem:[%s2014 + $0x28] sm:$0xff]
  %v2021 = vld [vmem:[%s2014 + $0x30] sm:$0xff]
  %v2022 = vld [vmem:[%s2014 + $0x38] sm:$0xff]
  %v2023 = vld [vmem:[%s2014 + $0x40] sm:$0xff]
  %v2024 = vld [vmem:[%s2014 + $0x48] sm:$0xff]
  %v2025 = vld [vmem:[%s2014 + $0x50] sm:$0xff]
  %v2026 = vld [vmem:[%s2014 + $0x58] sm:$0xff]
  %v2027 = vld [vmem:[%s2014 + $0x60] sm:$0xff]
  %v2028 = vld [vmem:[%s2014 + $0x68] sm:$0xff]
  %v2029 = vld [vmem:[%s2014 + $0x70] sm:$0xff]
  %v2030 = vld [vmem:[%s2014 + $0x78] sm:$0xff]
  %2031 = vmatprep.subr.mxu0 0.0
  %2032 = vmatpush1.msra.mxu0 %v2030
  %2033 = vmatprep.subr.mxu0 0.0
  %2034 = vmatpush1.msra.mxu0 %v2029
  %2035 = vmatprep.subr.mxu0 0.0
  %2036 = vmatpush1.msra.mxu0 %v2028
  %2037 = vmatprep.subr.mxu0 0.0
  %2038 = vmatpush1.msra.mxu0 %v2027
  %2039 = vmatprep.subr.mxu0 0.0
  %2040 = vmatpush1.msra.mxu0 %v2026
  %2041 = vmatprep.subr.mxu0 0.0
  %2042 = vmatpush1.msra.mxu0 %v2025
  %2043 = vmatprep.subr.mxu0 0.0
  %2044 = vmatpush1.msra.mxu0 %v2024
  %2045 = vmatprep.subr.mxu0 0.0
  %2046 = vmatpush1.msra.mxu0 %v2023
  %2047 = vmatprep.subr.mxu0 0.0
  %2048 = vmatpush1.msra.mxu0 %v2022
  %2049 = vmatprep.subr.mxu0 0.0
  %2050 = vmatpush1.msra.mxu0 %v2021
  %2051 = vmatprep.subr.mxu0 0.0
  %2052 = vmatpush1.msra.mxu0 %v2020
  %2053 = vmatprep.subr.mxu0 0.0
  %2054 = vmatpush1.msra.mxu0 %v2019
  %2055 = vmatprep.subr.mxu0 0.0
  %2056 = vmatpush1.msra.mxu0 %v2018
  %2057 = vmatprep.subr.mxu0 0.0
  %2058 = vmatpush1.msra.mxu0 %v2017
  %2059 = vmatprep.subr.mxu0 0.0
  %2060 = vmatpush1.msra.mxu0 %v2016
  %2061 = vmatprep.subr.mxu0 0.0
  %2062 = vmatpush1.msra.mxu0 %v2015
  %2063 = vmatprep.subr.mxu0 0.0
  %2064 = vmatpush2.msra.mxu0 0.0
  %2065 = vmatprep.subr.mxu0 0.0
  %2066 = vmatpush2.msra.mxu0 0.0
  %2067 = vmatprep.subr.mxu0 0.0
  %2068 = vmatpush2.msra.mxu0 0.0
  %2069 = vmatprep.subr.mxu0 0.0
  %2070 = vmatpush2.msra.mxu0 0.0
  %2071 = vmatprep.subr.mxu0 0.0
  %2072 = vmatpush2.msra.mxu0 0.0
  %2073 = vmatprep.subr.mxu0 0.0
  %2074 = vmatpush2.msra.mxu0 0.0
  %2075 = vmatprep.subr.mxu0 0.0
  %2076 = vmatpush2.msra.mxu0 0.0
  %2077 = vmatprep.subr.mxu0 0.0
  %2078 = vmatpush2.msra.mxu0 0.0
  %2079 = vmatprep.subr.mxu0 0.0
  %2080 = vmatpush2.msra.mxu0 0.0
  %2081 = vmatprep.subr.mxu0 0.0
  %2082 = vmatpush2.msra.mxu0 0.0
  %2083 = vmatprep.subr.mxu0 0.0
  %2084 = vmatpush2.msra.mxu0 0.0
  %2085 = vmatprep.subr.mxu0 0.0
  %2086 = vmatpush2.msra.mxu0 0.0
  %2087 = vmatprep.subr.mxu0 0.0
  %2088 = vmatpush2.msra.mxu0 0.0
  %2089 = vmatprep.subr.mxu0 0.0
  %2090 = vmatpush2.msra.mxu0 0.0
  %2091 = vmatprep.subr.mxu0 0.0
  %2092 = vmatpush2.msra.mxu0 0.0
  %2093 = vmatprep.subr.mxu0 0.0
  %2094 = vmatpush2.msra.mxu0 0.0
  %2095 = vmatprep.mubr.f32.mxu0 0.0
  %2096 = vmatmul.mubr.f32.gmra.mxu0 %v948
  %v2097 = vpop.f32.mrf.mxu0
  %v2098 = vadd.f32 0.0, %v2097
  %v2099 = vpop.f32.mrf.mxu0
  %2100 = vdwg.mxu0
  %v2101 = vadd.f32 %v2013, %v2098
  %s2102 = scalar_lea.vmem %s3, 1664
  %v2103 = vld [vmem:[%s2102] sm:$0xff]
  %v2104 = vld [vmem:[%s2102 + $0x8] sm:$0xff]
  %v2105 = vld [vmem:[%s2102 + $0x10] sm:$0xff]
  %v2106 = vld [vmem:[%s2102 + $0x18] sm:$0xff]
  %v2107 = vld [vmem:[%s2102 + $0x20] sm:$0xff]
  %v2108 = vld [vmem:[%s2102 + $0x28] sm:$0xff]
  %v2109 = vld [vmem:[%s2102 + $0x30] sm:$0xff]
  %v2110 = vld [vmem:[%s2102 + $0x38] sm:$0xff]
  %v2111 = vld [vmem:[%s2102 + $0x40] sm:$0xff]
  %v2112 = vld [vmem:[%s2102 + $0x48] sm:$0xff]
  %v2113 = vld [vmem:[%s2102 + $0x50] sm:$0xff]
  %v2114 = vld [vmem:[%s2102 + $0x58] sm:$0xff]
  %v2115 = vld [vmem:[%s2102 + $0x60] sm:$0xff]
  %v2116 = vld [vmem:[%s2102 + $0x68] sm:$0xff]
  %v2117 = vld [vmem:[%s2102 + $0x70] sm:$0xff]
  %v2118 = vld [vmem:[%s2102 + $0x78] sm:$0xff]
  %2119 = vmatprep.subr.mxu0 0.0
  %2120 = vmatpush1.msra.mxu0 %v2118
  %2121 = vmatprep.subr.mxu0 0.0
  %2122 = vmatpush1.msra.mxu0 %v2117
  %2123 = vmatprep.subr.mxu0 0.0
  %2124 = vmatpush1.msra.mxu0 %v2116
  %2125 = vmatprep.subr.mxu0 0.0
  %2126 = vmatpush1.msra.mxu0 %v2115
  %2127 = vmatprep.subr.mxu0 0.0
  %2128 = vmatpush1.msra.mxu0 %v2114
  %2129 = vmatprep.subr.mxu0 0.0
  %2130 = vmatpush1.msra.mxu0 %v2113
  %2131 = vmatprep.subr.mxu0 0.0
  %2132 = vmatpush1.msra.mxu0 %v2112
  %2133 = vmatprep.subr.mxu0 0.0
  %2134 = vmatpush1.msra.mxu0 %v2111
  %2135 = vmatprep.subr.mxu0 0.0
  %2136 = vmatpush1.msra.mxu0 %v2110
  %2137 = vmatprep.subr.mxu0 0.0
  %2138 = vmatpush1.msra.mxu0 %v2109
  %2139 = vmatprep.subr.mxu0 0.0
  %2140 = vmatpush1.msra.mxu0 %v2108
  %2141 = vmatprep.subr.mxu0 0.0
  %2142 = vmatpush1.msra.mxu0 %v2107
  %2143 = vmatprep.subr.mxu0 0.0
  %2144 = vmatpush1.msra.mxu0 %v2106
  %2145 = vmatprep.subr.mxu0 0.0
  %2146 = vmatpush1.msra.mxu0 %v2105
  %2147 = vmatprep.subr.mxu0 0.0
  %2148 = vmatpush1.msra.mxu0 %v2104
  %2149 = vmatprep.subr.mxu0 0.0
  %2150 = vmatpush1.msra.mxu0 %v2103
  %2151 = vmatprep.subr.mxu0 0.0
  %2152 = vmatpush2.msra.mxu0 0.0
  %2153 = vmatprep.subr.mxu0 0.0
  %2154 = vmatpush2.msra.mxu0 0.0
  %2155 = vmatprep.subr.mxu0 0.0
  %2156 = vmatpush2.msra.mxu0 0.0
  %2157 = vmatprep.subr.mxu0 0.0
  %2158 = vmatpush2.msra.mxu0 0.0
  %2159 = vmatprep.subr.mxu0 0.0
  %2160 = vmatpush2.msra.mxu0 0.0
  %2161 = vmatprep.subr.mxu0 0.0
  %2162 = vmatpush2.msra.mxu0 0.0
  %2163 = vmatprep.subr.mxu0 0.0
  %2164 = vmatpush2.msra.mxu0 0.0
  %2165 = vmatprep.subr.mxu0 0.0
  %2166 = vmatpush2.msra.mxu0 0.0
  %2167 = vmatprep.subr.mxu0 0.0
  %2168 = vmatpush2.msra.mxu0 0.0
  %2169 = vmatprep.subr.mxu0 0.0
  %2170 = vmatpush2.msra.mxu0 0.0
  %2171 = vmatprep.subr.mxu0 0.0
  %2172 = vmatpush2.msra.mxu0 0.0
  %2173 = vmatprep.subr.mxu0 0.0
  %2174 = vmatpush2.msra.mxu0 0.0
  %2175 = vmatprep.subr.mxu0 0.0
  %2176 = vmatpush2.msra.mxu0 0.0
  %2177 = vmatprep.subr.mxu0 0.0
  %2178 = vmatpush2.msra.mxu0 0.0
  %2179 = vmatprep.subr.mxu0 0.0
  %2180 = vmatpush2.msra.mxu0 0.0
  %2181 = vmatprep.subr.mxu0 0.0
  %2182 = vmatpush2.msra.mxu0 0.0
  %2183 = vmatprep.mubr.f32.mxu0 0.0
  %2184 = vmatmul.mubr.f32.gmra.mxu0 %v949
  %v2185 = vpop.f32.mrf.mxu0
  %v2186 = vadd.f32 0.0, %v2185
  %v2187 = vpop.f32.mrf.mxu0
  %2188 = vdwg.mxu0
  %v2189 = vadd.f32 %v2101, %v2186
  %s2190 = scalar_lea.vmem %s3, 1792
  %v2191 = vld [vmem:[%s2190] sm:$0xff]
  %v2192 = vld [vmem:[%s2190 + $0x8] sm:$0xff]
  %v2193 = vld [vmem:[%s2190 + $0x10] sm:$0xff]
  %v2194 = vld [vmem:[%s2190 + $0x18] sm:$0xff]
  %v2195 = vld [vmem:[%s2190 + $0x20] sm:$0xff]
  %v2196 = vld [vmem:[%s2190 + $0x28] sm:$0xff]
  %v2197 = vld [vmem:[%s2190 + $0x30] sm:$0xff]
  %v2198 = vld [vmem:[%s2190 + $0x38] sm:$0xff]
  %v2199 = vld [vmem:[%s2190 + $0x40] sm:$0xff]
  %v2200 = vld [vmem:[%s2190 + $0x48] sm:$0xff]
  %v2201 = vld [vmem:[%s2190 + $0x50] sm:$0xff]
  %v2202 = vld [vmem:[%s2190 + $0x58] sm:$0xff]
  %v2203 = vld [vmem:[%s2190 + $0x60] sm:$0xff]
  %v2204 = vld [vmem:[%s2190 + $0x68] sm:$0xff]
  %v2205 = vld [vmem:[%s2190 + $0x70] sm:$0xff]
  %v2206 = vld [vmem:[%s2190 + $0x78] sm:$0xff]
  %2207 = vmatprep.subr.mxu0 0.0
  %2208 = vmatpush1.msra.mxu0 %v2206
  %2209 = vmatprep.subr.mxu0 0.0
  %2210 = vmatpush1.msra.mxu0 %v2205
  %2211 = vmatprep.subr.mxu0 0.0
  %2212 = vmatpush1.msra.mxu0 %v2204
  %2213 = vmatprep.subr.mxu0 0.0
  %2214 = vmatpush1.msra.mxu0 %v2203
  %2215 = vmatprep.subr.mxu0 0.0
  %2216 = vmatpush1.msra.mxu0 %v2202
  %2217 = vmatprep.subr.mxu0 0.0
  %2218 = vmatpush1.msra.mxu0 %v2201
  %2219 = vmatprep.subr.mxu0 0.0
  %2220 = vmatpush1.msra.mxu0 %v2200
  %2221 = vmatprep.subr.mxu0 0.0
  %2222 = vmatpush1.msra.mxu0 %v2199
  %2223 = vmatprep.subr.mxu0 0.0
  %2224 = vmatpush1.msra.mxu0 %v2198
  %2225 = vmatprep.subr.mxu0 0.0
  %2226 = vmatpush1.msra.mxu0 %v2197
  %2227 = vmatprep.subr.mxu0 0.0
  %2228 = vmatpush1.msra.mxu0 %v2196
  %2229 = vmatprep.subr.mxu0 0.0
  %2230 = vmatpush1.msra.mxu0 %v2195
  %2231 = vmatprep.subr.mxu0 0.0
  %2232 = vmatpush1.msra.mxu0 %v2194
  %2233 = vmatprep.subr.mxu0 0.0
  %2234 = vmatpush1.msra.mxu0 %v2193
  %2235 = vmatprep.subr.mxu0 0.0
  %2236 = vmatpush1.msra.mxu0 %v2192
  %2237 = vmatprep.subr.mxu0 0.0
  %2238 = vmatpush1.msra.mxu0 %v2191
  %2239 = vmatprep.subr.mxu0 0.0
  %2240 = vmatpush2.msra.mxu0 0.0
  %2241 = vmatprep.subr.mxu0 0.0
  %2242 = vmatpush2.msra.mxu0 0.0
  %2243 = vmatprep.subr.mxu0 0.0
  %2244 = vmatpush2.msra.mxu0 0.0
  %2245 = vmatprep.subr.mxu0 0.0
  %2246 = vmatpush2.msra.mxu0 0.0
  %2247 = vmatprep.subr.mxu0 0.0
  %2248 = vmatpush2.msra.mxu0 0.0
  %2249 = vmatprep.subr.mxu0 0.0
  %2250 = vmatpush2.msra.mxu0 0.0
  %2251 = vmatprep.subr.mxu0 0.0
  %2252 = vmatpush2.msra.mxu0 0.0
  %2253 = vmatprep.subr.mxu0 0.0
  %2254 = vmatpush2.msra.mxu0 0.0
  %2255 = vmatprep.subr.mxu0 0.0
  %2256 = vmatpush2.msra.mxu0 0.0
  %2257 = vmatprep.subr.mxu0 0.0
  %2258 = vmatpush2.msra.mxu0 0.0
  %2259 = vmatprep.subr.mxu0 0.0
  %2260 = vmatpush2.msra.mxu0 0.0
  %2261 = vmatprep.subr.mxu0 0.0
  %2262 = vmatpush2.msra.mxu0 0.0
  %2263 = vmatprep.subr.mxu0 0.0
  %2264 = vmatpush2.msra.mxu0 0.0
  %2265 = vmatprep.subr.mxu0 0.0
  %2266 = vmatpush2.msra.mxu0 0.0
  %2267 = vmatprep.subr.mxu0 0.0
  %2268 = vmatpush2.msra.mxu0 0.0
  %2269 = vmatprep.subr.mxu0 0.0
  %2270 = vmatpush2.msra.mxu0 0.0
  %2271 = vmatprep.mubr.f32.mxu0 0.0
  %2272 = vmatmul.mubr.f32.gmra.mxu0 %v950
  %v2273 = vpop.f32.mrf.mxu0
  %v2274 = vadd.f32 0.0, %v2273
  %v2275 = vpop.f32.mrf.mxu0
  %2276 = vdwg.mxu0
  %v2277 = vadd.f32 %v2189, %v2274
  %s2278 = scalar_lea.vmem %s3, 1920
  %v2279 = vld [vmem:[%s2278] sm:$0xff]
  %v2280 = vld [vmem:[%s2278 + $0x8] sm:$0xff]
  %v2281 = vld [vmem:[%s2278 + $0x10] sm:$0xff]
  %v2282 = vld [vmem:[%s2278 + $0x18] sm:$0xff]
  %v2283 = vld [vmem:[%s2278 + $0x20] sm:$0xff]
  %v2284 = vld [vmem:[%s2278 + $0x28] sm:$0xff]
  %v2285 = vld [vmem:[%s2278 + $0x30] sm:$0xff]
  %v2286 = vld [vmem:[%s2278 + $0x38] sm:$0xff]
  %v2287 = vld [vmem:[%s2278 + $0x40] sm:$0xff]
  %v2288 = vld [vmem:[%s2278 + $0x48] sm:$0xff]
  %v2289 = vld [vmem:[%s2278 + $0x50] sm:$0xff]
  %v2290 = vld [vmem:[%s2278 + $0x58] sm:$0xff]
  %v2291 = vld [vmem:[%s2278 + $0x60] sm:$0xff]
  %v2292 = vld [vmem:[%s2278 + $0x68] sm:$0xff]
  %v2293 = vld [vmem:[%s2278 + $0x70] sm:$0xff]
  %v2294 = vld [vmem:[%s2278 + $0x78] sm:$0xff]
  %2295 = vmatprep.subr.mxu0 0.0
  %2296 = vmatpush1.msra.mxu0 %v2294
  %2297 = vmatprep.subr.mxu0 0.0
  %2298 = vmatpush1.msra.mxu0 %v2293
  %2299 = vmatprep.subr.mxu0 0.0
  %2300 = vmatpush1.msra.mxu0 %v2292
  %2301 = vmatprep.subr.mxu0 0.0
  %2302 = vmatpush1.msra.mxu0 %v2291
  %2303 = vmatprep.subr.mxu0 0.0
  %2304 = vmatpush1.msra.mxu0 %v2290
  %2305 = vmatprep.subr.mxu0 0.0
  %2306 = vmatpush1.msra.mxu0 %v2289
  %2307 = vmatprep.subr.mxu0 0.0
  %2308 = vmatpush1.msra.mxu0 %v2288
  %2309 = vmatprep.subr.mxu0 0.0
  %2310 = vmatpush1.msra.mxu0 %v2287
  %2311 = vmatprep.subr.mxu0 0.0
  %2312 = vmatpush1.msra.mxu0 %v2286
  %2313 = vmatprep.subr.mxu0 0.0
  %2314 = vmatpush1.msra.mxu0 %v2285
  %2315 = vmatprep.subr.mxu0 0.0
  %2316 = vmatpush1.msra.mxu0 %v2284
  %2317 = vmatprep.subr.mxu0 0.0
  %2318 = vmatpush1.msra.mxu0 %v2283
  %2319 = vmatprep.subr.mxu0 0.0
  %2320 = vmatpush1.msra.mxu0 %v2282
  %2321 = vmatprep.subr.mxu0 0.0
  %2322 = vmatpush1.msra.mxu0 %v2281
  %2323 = vmatprep.subr.mxu0 0.0
  %2324 = vmatpush1.msra.mxu0 %v2280
  %2325 = vmatprep.subr.mxu0 0.0
  %2326 = vmatpush1.msra.mxu0 %v2279
  %2327 = vmatprep.subr.mxu0 0.0
  %2328 = vmatpush2.msra.mxu0 0.0
  %2329 = vmatprep.subr.mxu0 0.0
  %2330 = vmatpush2.msra.mxu0 0.0
  %2331 = vmatprep.subr.mxu0 0.0
  %2332 = vmatpush2.msra.mxu0 0.0
  %2333 = vmatprep.subr.mxu0 0.0
  %2334 = vmatpush2.msra.mxu0 0.0
  %2335 = vmatprep.subr.mxu0 0.0
  %2336 = vmatpush2.msra.mxu0 0.0
  %2337 = vmatprep.subr.mxu0 0.0
  %2338 = vmatpush2.msra.mxu0 0.0
  %2339 = vmatprep.subr.mxu0 0.0
  %2340 = vmatpush2.msra.mxu0 0.0
  %2341 = vmatprep.subr.mxu0 0.0
  %2342 = vmatpush2.msra.mxu0 0.0
  %2343 = vmatprep.subr.mxu0 0.0
  %2344 = vmatpush2.msra.mxu0 0.0
  %2345 = vmatprep.subr.mxu0 0.0
  %2346 = vmatpush2.msra.mxu0 0.0
  %2347 = vmatprep.subr.mxu0 0.0
  %2348 = vmatpush2.msra.mxu0 0.0
  %2349 = vmatprep.subr.mxu0 0.0
  %2350 = vmatpush2.msra.mxu0 0.0
  %2351 = vmatprep.subr.mxu0 0.0
  %2352 = vmatpush2.msra.mxu0 0.0
  %2353 = vmatprep.subr.mxu0 0.0
  %2354 = vmatpush2.msra.mxu0 0.0
  %2355 = vmatprep.subr.mxu0 0.0
  %2356 = vmatpush2.msra.mxu0 0.0
  %2357 = vmatprep.subr.mxu0 0.0
  %2358 = vmatpush2.msra.mxu0 0.0
  %2359 = vmatprep.mubr.f32.mxu0 0.0
  %2360 = vmatmul.mubr.f32.gmra.mxu0 %v951
  %v2361 = vpop.f32.mrf.mxu0
  %v2362 = vadd.f32 0.0, %v2361
  %v2363 = vpop.f32.mrf.mxu0
  %2364 = vdwg.mxu0
  %v2365 = vadd.f32 %v2277, %v2362
  %s2366 = scalar_lea.vmem %s3, 2048
  %v2367 = vld [vmem:[%s2366] sm:$0xff]
  %v2368 = vld [vmem:[%s2366 + $0x8] sm:$0xff]
  %v2369 = vld [vmem:[%s2366 + $0x10] sm:$0xff]
  %v2370 = vld [vmem:[%s2366 + $0x18] sm:$0xff]
  %v2371 = vld [vmem:[%s2366 + $0x20] sm:$0xff]
  %v2372 = vld [vmem:[%s2366 + $0x28] sm:$0xff]
  %v2373 = vld [vmem:[%s2366 + $0x30] sm:$0xff]
  %v2374 = vld [vmem:[%s2366 + $0x38] sm:$0xff]
  %v2375 = vld [vmem:[%s2366 + $0x40] sm:$0xff]
  %v2376 = vld [vmem:[%s2366 + $0x48] sm:$0xff]
  %v2377 = vld [vmem:[%s2366 + $0x50] sm:$0xff]
  %v2378 = vld [vmem:[%s2366 + $0x58] sm:$0xff]
  %v2379 = vld [vmem:[%s2366 + $0x60] sm:$0xff]
  %v2380 = vld [vmem:[%s2366 + $0x68] sm:$0xff]
  %v2381 = vld [vmem:[%s2366 + $0x70] sm:$0xff]
  %v2382 = vld [vmem:[%s2366 + $0x78] sm:$0xff]
  %2383 = vmatprep.subr.mxu0 0.0
  %2384 = vmatpush1.msra.mxu0 %v2382
  %2385 = vmatprep.subr.mxu0 0.0
  %2386 = vmatpush1.msra.mxu0 %v2381
  %2387 = vmatprep.subr.mxu0 0.0
  %2388 = vmatpush1.msra.mxu0 %v2380
  %2389 = vmatprep.subr.mxu0 0.0
  %2390 = vmatpush1.msra.mxu0 %v2379
  %2391 = vmatprep.subr.mxu0 0.0
  %2392 = vmatpush1.msra.mxu0 %v2378
  %2393 = vmatprep.subr.mxu0 0.0
  %2394 = vmatpush1.msra.mxu0 %v2377
  %2395 = vmatprep.subr.mxu0 0.0
  %2396 = vmatpush1.msra.mxu0 %v2376
  %2397 = vmatprep.subr.mxu0 0.0
  %2398 = vmatpush1.msra.mxu0 %v2375
  %2399 = vmatprep.subr.mxu0 0.0
  %2400 = vmatpush1.msra.mxu0 %v2374
  %2401 = vmatprep.subr.mxu0 0.0
  %2402 = vmatpush1.msra.mxu0 %v2373
  %2403 = vmatprep.subr.mxu0 0.0
  %2404 = vmatpush1.msra.mxu0 %v2372
  %2405 = vmatprep.subr.mxu0 0.0
  %2406 = vmatpush1.msra.mxu0 %v2371
  %2407 = vmatprep.subr.mxu0 0.0
  %2408 = vmatpush1.msra.mxu0 %v2370
  %2409 = vmatprep.subr.mxu0 0.0
  %2410 = vmatpush1.msra.mxu0 %v2369
  %2411 = vmatprep.subr.mxu0 0.0
  %2412 = vmatpush1.msra.mxu0 %v2368
  %2413 = vmatprep.subr.mxu0 0.0
  %2414 = vmatpush1.msra.mxu0 %v2367
  %2415 = vmatprep.subr.mxu0 0.0
  %2416 = vmatpush2.msra.mxu0 0.0
  %2417 = vmatprep.subr.mxu0 0.0
  %2418 = vmatpush2.msra.mxu0 0.0
  %2419 = vmatprep.subr.mxu0 0.0
  %2420 = vmatpush2.msra.mxu0 0.0
  %2421 = vmatprep.subr.mxu0 0.0
  %2422 = vmatpush2.msra.mxu0 0.0
  %2423 = vmatprep.subr.mxu0 0.0
  %2424 = vmatpush2.msra.mxu0 0.0
  %2425 = vmatprep.subr.mxu0 0.0
  %2426 = vmatpush2.msra.mxu0 0.0
  %2427 = vmatprep.subr.mxu0 0.0
  %2428 = vmatpush2.msra.mxu0 0.0
  %2429 = vmatprep.subr.mxu0 0.0
  %2430 = vmatpush2.msra.mxu0 0.0
  %2431 = vmatprep.subr.mxu0 0.0
  %2432 = vmatpush2.msra.mxu0 0.0
  %2433 = vmatprep.subr.mxu0 0.0
  %2434 = vmatpush2.msra.mxu0 0.0
  %2435 = vmatprep.subr.mxu0 0.0
  %2436 = vmatpush2.msra.mxu0 0.0
  %2437 = vmatprep.subr.mxu0 0.0
  %2438 = vmatpush2.msra.mxu0 0.0
  %2439 = vmatprep.subr.mxu0 0.0
  %2440 = vmatpush2.msra.mxu0 0.0
  %2441 = vmatprep.subr.mxu0 0.0
  %2442 = vmatpush2.msra.mxu0 0.0
  %2443 = vmatprep.subr.mxu0 0.0
  %2444 = vmatpush2.msra.mxu0 0.0
  %2445 = vmatprep.subr.mxu0 0.0
  %2446 = vmatpush2.msra.mxu0 0.0
  %2447 = vmatprep.mubr.f32.mxu0 0.0
  %2448 = vmatmul.mubr.f32.gmra.mxu0 %v952
  %v2449 = vpop.f32.mrf.mxu0
  %v2450 = vadd.f32 0.0, %v2449
  %v2451 = vpop.f32.mrf.mxu0
  %2452 = vdwg.mxu0
  %v2453 = vadd.f32 %v2365, %v2450
  %s2454 = scalar_lea.vmem %s3, 2176
  %v2455 = vld [vmem:[%s2454] sm:$0xff]
  %v2456 = vld [vmem:[%s2454 + $0x8] sm:$0xff]
  %v2457 = vld [vmem:[%s2454 + $0x10] sm:$0xff]
  %v2458 = vld [vmem:[%s2454 + $0x18] sm:$0xff]
  %v2459 = vld [vmem:[%s2454 + $0x20] sm:$0xff]
  %v2460 = vld [vmem:[%s2454 + $0x28] sm:$0xff]
  %v2461 = vld [vmem:[%s2454 + $0x30] sm:$0xff]
  %v2462 = vld [vmem:[%s2454 + $0x38] sm:$0xff]
  %v2463 = vld [vmem:[%s2454 + $0x40] sm:$0xff]
  %v2464 = vld [vmem:[%s2454 + $0x48] sm:$0xff]
  %v2465 = vld [vmem:[%s2454 + $0x50] sm:$0xff]
  %v2466 = vld [vmem:[%s2454 + $0x58] sm:$0xff]
  %v2467 = vld [vmem:[%s2454 + $0x60] sm:$0xff]
  %v2468 = vld [vmem:[%s2454 + $0x68] sm:$0xff]
  %v2469 = vld [vmem:[%s2454 + $0x70] sm:$0xff]
  %v2470 = vld [vmem:[%s2454 + $0x78] sm:$0xff]
  %2471 = vmatprep.subr.mxu0 0.0
  %2472 = vmatpush1.msra.mxu0 %v2470
  %2473 = vmatprep.subr.mxu0 0.0
  %2474 = vmatpush1.msra.mxu0 %v2469
  %2475 = vmatprep.subr.mxu0 0.0
  %2476 = vmatpush1.msra.mxu0 %v2468
  %2477 = vmatprep.subr.mxu0 0.0
  %2478 = vmatpush1.msra.mxu0 %v2467
  %2479 = vmatprep.subr.mxu0 0.0
  %2480 = vmatpush1.msra.mxu0 %v2466
  %2481 = vmatprep.subr.mxu0 0.0
  %2482 = vmatpush1.msra.mxu0 %v2465
  %2483 = vmatprep.subr.mxu0 0.0
  %2484 = vmatpush1.msra.mxu0 %v2464
  %2485 = vmatprep.subr.mxu0 0.0
  %2486 = vmatpush1.msra.mxu0 %v2463
  %2487 = vmatprep.subr.mxu0 0.0
  %2488 = vmatpush1.msra.mxu0 %v2462
  %2489 = vmatprep.subr.mxu0 0.0
  %2490 = vmatpush1.msra.mxu0 %v2461
  %2491 = vmatprep.subr.mxu0 0.0
  %2492 = vmatpush1.msra.mxu0 %v2460
  %2493 = vmatprep.subr.mxu0 0.0
  %2494 = vmatpush1.msra.mxu0 %v2459
  %2495 = vmatprep.subr.mxu0 0.0
  %2496 = vmatpush1.msra.mxu0 %v2458
  %2497 = vmatprep.subr.mxu0 0.0
  %2498 = vmatpush1.msra.mxu0 %v2457
  %2499 = vmatprep.subr.mxu0 0.0
  %2500 = vmatpush1.msra.mxu0 %v2456
  %2501 = vmatprep.subr.mxu0 0.0
  %2502 = vmatpush1.msra.mxu0 %v2455
  %2503 = vmatprep.subr.mxu0 0.0
  %2504 = vmatpush2.msra.mxu0 0.0
  %2505 = vmatprep.subr.mxu0 0.0
  %2506 = vmatpush2.msra.mxu0 0.0
  %2507 = vmatprep.subr.mxu0 0.0
  %2508 = vmatpush2.msra.mxu0 0.0
  %2509 = vmatprep.subr.mxu0 0.0
  %2510 = vmatpush2.msra.mxu0 0.0
  %2511 = vmatprep.subr.mxu0 0.0
  %2512 = vmatpush2.msra.mxu0 0.0
  %2513 = vmatprep.subr.mxu0 0.0
  %2514 = vmatpush2.msra.mxu0 0.0
  %2515 = vmatprep.subr.mxu0 0.0
  %2516 = vmatpush2.msra.mxu0 0.0
  %2517 = vmatprep.subr.mxu0 0.0
  %2518 = vmatpush2.msra.mxu0 0.0
  %2519 = vmatprep.subr.mxu0 0.0
  %2520 = vmatpush2.msra.mxu0 0.0
  %2521 = vmatprep.subr.mxu0 0.0
  %2522 = vmatpush2.msra.mxu0 0.0
  %2523 = vmatprep.subr.mxu0 0.0
  %2524 = vmatpush2.msra.mxu0 0.0
  %2525 = vmatprep.subr.mxu0 0.0
  %2526 = vmatpush2.msra.mxu0 0.0
  %2527 = vmatprep.subr.mxu0 0.0
  %2528 = vmatpush2.msra.mxu0 0.0
  %2529 = vmatprep.subr.mxu0 0.0
  %2530 = vmatpush2.msra.mxu0 0.0
  %2531 = vmatprep.subr.mxu0 0.0
  %2532 = vmatpush2.msra.mxu0 0.0
  %2533 = vmatprep.subr.mxu0 0.0
  %2534 = vmatpush2.msra.mxu0 0.0
  %2535 = vmatprep.mubr.f32.mxu0 0.0
  %2536 = vmatmul.mubr.f32.gmra.mxu0 %v953
  %v2537 = vpop.f32.mrf.mxu0
  %v2538 = vadd.f32 0.0, %v2537
  %v2539 = vpop.f32.mrf.mxu0
  %2540 = vdwg.mxu0
  %v2541 = vadd.f32 %v2453, %v2538
  %s2542 = scalar_lea.vmem %s3, 2304
  %v2543 = vld [vmem:[%s2542] sm:$0xff]
  %v2544 = vld [vmem:[%s2542 + $0x8] sm:$0xff]
  %v2545 = vld [vmem:[%s2542 + $0x10] sm:$0xff]
  %v2546 = vld [vmem:[%s2542 + $0x18] sm:$0xff]
  %v2547 = vld [vmem:[%s2542 + $0x20] sm:$0xff]
  %v2548 = vld [vmem:[%s2542 + $0x28] sm:$0xff]
  %v2549 = vld [vmem:[%s2542 + $0x30] sm:$0xff]
  %v2550 = vld [vmem:[%s2542 + $0x38] sm:$0xff]
  %v2551 = vld [vmem:[%s2542 + $0x40] sm:$0xff]
  %v2552 = vld [vmem:[%s2542 + $0x48] sm:$0xff]
  %v2553 = vld [vmem:[%s2542 + $0x50] sm:$0xff]
  %v2554 = vld [vmem:[%s2542 + $0x58] sm:$0xff]
  %v2555 = vld [vmem:[%s2542 + $0x60] sm:$0xff]
  %v2556 = vld [vmem:[%s2542 + $0x68] sm:$0xff]
  %v2557 = vld [vmem:[%s2542 + $0x70] sm:$0xff]
  %v2558 = vld [vmem:[%s2542 + $0x78] sm:$0xff]
  %2559 = vmatprep.subr.mxu0 0.0
  %2560 = vmatpush1.msra.mxu0 %v2558
  %2561 = vmatprep.subr.mxu0 0.0
  %2562 = vmatpush1.msra.mxu0 %v2557
  %2563 = vmatprep.subr.mxu0 0.0
  %2564 = vmatpush1.msra.mxu0 %v2556
  %2565 = vmatprep.subr.mxu0 0.0
  %2566 = vmatpush1.msra.mxu0 %v2555
  %2567 = vmatprep.subr.mxu0 0.0
  %2568 = vmatpush1.msra.mxu0 %v2554
  %2569 = vmatprep.subr.mxu0 0.0
  %2570 = vmatpush1.msra.mxu0 %v2553
  %2571 = vmatprep.subr.mxu0 0.0
  %2572 = vmatpush1.msra.mxu0 %v2552
  %2573 = vmatprep.subr.mxu0 0.0
  %2574 = vmatpush1.msra.mxu0 %v2551
  %2575 = vmatprep.subr.mxu0 0.0
  %2576 = vmatpush1.msra.mxu0 %v2550
  %2577 = vmatprep.subr.mxu0 0.0
  %2578 = vmatpush1.msra.mxu0 %v2549
  %2579 = vmatprep.subr.mxu0 0.0
  %2580 = vmatpush1.msra.mxu0 %v2548
  %2581 = vmatprep.subr.mxu0 0.0
  %2582 = vmatpush1.msra.mxu0 %v2547
  %2583 = vmatprep.subr.mxu0 0.0
  %2584 = vmatpush1.msra.mxu0 %v2546
  %2585 = vmatprep.subr.mxu0 0.0
  %2586 = vmatpush1.msra.mxu0 %v2545
  %2587 = vmatprep.subr.mxu0 0.0
  %2588 = vmatpush1.msra.mxu0 %v2544
  %2589 = vmatprep.subr.mxu0 0.0
  %2590 = vmatpush1.msra.mxu0 %v2543
  %2591 = vmatprep.subr.mxu0 0.0
  %2592 = vmatpush2.msra.mxu0 0.0
  %2593 = vmatprep.subr.mxu0 0.0
  %2594 = vmatpush2.msra.mxu0 0.0
  %2595 = vmatprep.subr.mxu0 0.0
  %2596 = vmatpush2.msra.mxu0 0.0
  %2597 = vmatprep.subr.mxu0 0.0
  %2598 = vmatpush2.msra.mxu0 0.0
  %2599 = vmatprep.subr.mxu0 0.0
  %2600 = vmatpush2.msra.mxu0 0.0
  %2601 = vmatprep.subr.mxu0 0.0
  %2602 = vmatpush2.msra.mxu0 0.0
  %2603 = vmatprep.subr.mxu0 0.0
  %2604 = vmatpush2.msra.mxu0 0.0
  %2605 = vmatprep.subr.mxu0 0.0
  %2606 = vmatpush2.msra.mxu0 0.0
  %2607 = vmatprep.subr.mxu0 0.0
  %2608 = vmatpush2.msra.mxu0 0.0
  %2609 = vmatprep.subr.mxu0 0.0
  %2610 = vmatpush2.msra.mxu0 0.0
  %2611 = vmatprep.subr.mxu0 0.0
  %2612 = vmatpush2.msra.mxu0 0.0
  %2613 = vmatprep.subr.mxu0 0.0
  %2614 = vmatpush2.msra.mxu0 0.0
  %2615 = vmatprep.subr.mxu0 0.0
  %2616 = vmatpush2.msra.mxu0 0.0
  %2617 = vmatprep.subr.mxu0 0.0
  %2618 = vmatpush2.msra.mxu0 0.0
  %2619 = vmatprep.subr.mxu0 0.0
  %2620 = vmatpush2.msra.mxu0 0.0
  %2621 = vmatprep.subr.mxu0 0.0
  %2622 = vmatpush2.msra.mxu0 0.0
  %2623 = vmatprep.mubr.f32.mxu0 0.0
  %2624 = vmatmul.mubr.f32.gmra.mxu0 %v954
  %v2625 = vpop.f32.mrf.mxu0
  %v2626 = vadd.f32 0.0, %v2625
  %v2627 = vpop.f32.mrf.mxu0
  %2628 = vdwg.mxu0
  %v2629 = vadd.f32 %v2541, %v2626
  %s2630 = scalar_lea.vmem %s3, 2432
  %v2631 = vld [vmem:[%s2630] sm:$0xff]
  %v2632 = vld [vmem:[%s2630 + $0x8] sm:$0xff]
  %v2633 = vld [vmem:[%s2630 + $0x10] sm:$0xff]
  %v2634 = vld [vmem:[%s2630 + $0x18] sm:$0xff]
  %v2635 = vld [vmem:[%s2630 + $0x20] sm:$0xff]
  %v2636 = vld [vmem:[%s2630 + $0x28] sm:$0xff]
  %v2637 = vld [vmem:[%s2630 + $0x30] sm:$0xff]
  %v2638 = vld [vmem:[%s2630 + $0x38] sm:$0xff]
  %v2639 = vld [vmem:[%s2630 + $0x40] sm:$0xff]
  %v2640 = vld [vmem:[%s2630 + $0x48] sm:$0xff]
  %v2641 = vld [vmem:[%s2630 + $0x50] sm:$0xff]
  %v2642 = vld [vmem:[%s2630 + $0x58] sm:$0xff]
  %v2643 = vld [vmem:[%s2630 + $0x60] sm:$0xff]
  %v2644 = vld [vmem:[%s2630 + $0x68] sm:$0xff]
  %v2645 = vld [vmem:[%s2630 + $0x70] sm:$0xff]
  %v2646 = vld [vmem:[%s2630 + $0x78] sm:$0xff]
  %2647 = vmatprep.subr.mxu0 0.0
  %2648 = vmatpush1.msra.mxu0 %v2646
  %2649 = vmatprep.subr.mxu0 0.0
  %2650 = vmatpush1.msra.mxu0 %v2645
  %2651 = vmatprep.subr.mxu0 0.0
  %2652 = vmatpush1.msra.mxu0 %v2644
  %2653 = vmatprep.subr.mxu0 0.0
  %2654 = vmatpush1.msra.mxu0 %v2643
  %2655 = vmatprep.subr.mxu0 0.0
  %2656 = vmatpush1.msra.mxu0 %v2642
  %2657 = vmatprep.subr.mxu0 0.0
  %2658 = vmatpush1.msra.mxu0 %v2641
  %2659 = vmatprep.subr.mxu0 0.0
  %2660 = vmatpush1.msra.mxu0 %v2640
  %2661 = vmatprep.subr.mxu0 0.0
  %2662 = vmatpush1.msra.mxu0 %v2639
  %2663 = vmatprep.subr.mxu0 0.0
  %2664 = vmatpush1.msra.mxu0 %v2638
  %2665 = vmatprep.subr.mxu0 0.0
  %2666 = vmatpush1.msra.mxu0 %v2637
  %2667 = vmatprep.subr.mxu0 0.0
  %2668 = vmatpush1.msra.mxu0 %v2636
  %2669 = vmatprep.subr.mxu0 0.0
  %2670 = vmatpush1.msra.mxu0 %v2635
  %2671 = vmatprep.subr.mxu0 0.0
  %2672 = vmatpush1.msra.mxu0 %v2634
  %2673 = vmatprep.subr.mxu0 0.0
  %2674 = vmatpush1.msra.mxu0 %v2633
  %2675 = vmatprep.subr.mxu0 0.0
  %2676 = vmatpush1.msra.mxu0 %v2632
  %2677 = vmatprep.subr.mxu0 0.0
  %2678 = vmatpush1.msra.mxu0 %v2631
  %2679 = vmatprep.subr.mxu0 0.0
  %2680 = vmatpush2.msra.mxu0 0.0
  %2681 = vmatprep.subr.mxu0 0.0
  %2682 = vmatpush2.msra.mxu0 0.0
  %2683 = vmatprep.subr.mxu0 0.0
  %2684 = vmatpush2.msra.mxu0 0.0
  %2685 = vmatprep.subr.mxu0 0.0
  %2686 = vmatpush2.msra.mxu0 0.0
  %2687 = vmatprep.subr.mxu0 0.0
  %2688 = vmatpush2.msra.mxu0 0.0
  %2689 = vmatprep.subr.mxu0 0.0
  %2690 = vmatpush2.msra.mxu0 0.0
  %2691 = vmatprep.subr.mxu0 0.0
  %2692 = vmatpush2.msra.mxu0 0.0
  %2693 = vmatprep.subr.mxu0 0.0
  %2694 = vmatpush2.msra.mxu0 0.0
  %2695 = vmatprep.subr.mxu0 0.0
  %2696 = vmatpush2.msra.mxu0 0.0
  %2697 = vmatprep.subr.mxu0 0.0
  %2698 = vmatpush2.msra.mxu0 0.0
  %2699 = vmatprep.subr.mxu0 0.0
  %2700 = vmatpush2.msra.mxu0 0.0
  %2701 = vmatprep.subr.mxu0 0.0
  %2702 = vmatpush2.msra.mxu0 0.0
  %2703 = vmatprep.subr.mxu0 0.0
  %2704 = vmatpush2.msra.mxu0 0.0
  %2705 = vmatprep.subr.mxu0 0.0
  %2706 = vmatpush2.msra.mxu0 0.0
  %2707 = vmatprep.subr.mxu0 0.0
  %2708 = vmatpush2.msra.mxu0 0.0
  %2709 = vmatprep.subr.mxu0 0.0
  %2710 = vmatpush2.msra.mxu0 0.0
  %2711 = vmatprep.mubr.f32.mxu0 0.0
  %2712 = vmatmul.mubr.f32.gmra.mxu0 %v955
  %v2713 = vpop.f32.mrf.mxu0
  %v2714 = vadd.f32 0.0, %v2713
  %v2715 = vpop.f32.mrf.mxu0
  %2716 = vdwg.mxu0
  %v2717 = vadd.f32 %v2629, %v2714
  %s2718 = scalar_lea.vmem %s3, 2560
  %v2719 = vld [vmem:[%s2718] sm:$0xff]
  %v2720 = vld [vmem:[%s2718 + $0x8] sm:$0xff]
  %v2721 = vld [vmem:[%s2718 + $0x10] sm:$0xff]
  %v2722 = vld [vmem:[%s2718 + $0x18] sm:$0xff]
  %v2723 = vld [vmem:[%s2718 + $0x20] sm:$0xff]
  %v2724 = vld [vmem:[%s2718 + $0x28] sm:$0xff]
  %v2725 = vld [vmem:[%s2718 + $0x30] sm:$0xff]
  %v2726 = vld [vmem:[%s2718 + $0x38] sm:$0xff]
  %v2727 = vld [vmem:[%s2718 + $0x40] sm:$0xff]
  %v2728 = vld [vmem:[%s2718 + $0x48] sm:$0xff]
  %v2729 = vld [vmem:[%s2718 + $0x50] sm:$0xff]
  %v2730 = vld [vmem:[%s2718 + $0x58] sm:$0xff]
  %v2731 = vld [vmem:[%s2718 + $0x60] sm:$0xff]
  %v2732 = vld [vmem:[%s2718 + $0x68] sm:$0xff]
  %v2733 = vld [vmem:[%s2718 + $0x70] sm:$0xff]
  %v2734 = vld [vmem:[%s2718 + $0x78] sm:$0xff]
  %2735 = vmatprep.subr.mxu0 0.0
  %2736 = vmatpush1.msra.mxu0 %v2734
  %2737 = vmatprep.subr.mxu0 0.0
  %2738 = vmatpush1.msra.mxu0 %v2733
  %2739 = vmatprep.subr.mxu0 0.0
  %2740 = vmatpush1.msra.mxu0 %v2732
  %2741 = vmatprep.subr.mxu0 0.0
  %2742 = vmatpush1.msra.mxu0 %v2731
  %2743 = vmatprep.subr.mxu0 0.0
  %2744 = vmatpush1.msra.mxu0 %v2730
  %2745 = vmatprep.subr.mxu0 0.0
  %2746 = vmatpush1.msra.mxu0 %v2729
  %2747 = vmatprep.subr.mxu0 0.0
  %2748 = vmatpush1.msra.mxu0 %v2728
  %2749 = vmatprep.subr.mxu0 0.0
  %2750 = vmatpush1.msra.mxu0 %v2727
  %2751 = vmatprep.subr.mxu0 0.0
  %2752 = vmatpush1.msra.mxu0 %v2726
  %2753 = vmatprep.subr.mxu0 0.0
  %2754 = vmatpush1.msra.mxu0 %v2725
  %2755 = vmatprep.subr.mxu0 0.0
  %2756 = vmatpush1.msra.mxu0 %v2724
  %2757 = vmatprep.subr.mxu0 0.0
  %2758 = vmatpush1.msra.mxu0 %v2723
  %2759 = vmatprep.subr.mxu0 0.0
  %2760 = vmatpush1.msra.mxu0 %v2722
  %2761 = vmatprep.subr.mxu0 0.0
  %2762 = vmatpush1.msra.mxu0 %v2721
  %2763 = vmatprep.subr.mxu0 0.0
  %2764 = vmatpush1.msra.mxu0 %v2720
  %2765 = vmatprep.subr.mxu0 0.0
  %2766 = vmatpush1.msra.mxu0 %v2719
  %2767 = vmatprep.subr.mxu0 0.0
  %2768 = vmatpush2.msra.mxu0 0.0
  %2769 = vmatprep.subr.mxu0 0.0
  %2770 = vmatpush2.msra.mxu0 0.0
  %2771 = vmatprep.subr.mxu0 0.0
  %2772 = vmatpush2.msra.mxu0 0.0
  %2773 = vmatprep.subr.mxu0 0.0
  %2774 = vmatpush2.msra.mxu0 0.0
  %2775 = vmatprep.subr.mxu0 0.0
  %2776 = vmatpush2.msra.mxu0 0.0
  %2777 = vmatprep.subr.mxu0 0.0
  %2778 = vmatpush2.msra.mxu0 0.0
  %2779 = vmatprep.subr.mxu0 0.0
  %2780 = vmatpush2.msra.mxu0 0.0
  %2781 = vmatprep.subr.mxu0 0.0
  %2782 = vmatpush2.msra.mxu0 0.0
  %2783 = vmatprep.subr.mxu0 0.0
  %2784 = vmatpush2.msra.mxu0 0.0
  %2785 = vmatprep.subr.mxu0 0.0
  %2786 = vmatpush2.msra.mxu0 0.0
  %2787 = vmatprep.subr.mxu0 0.0
  %2788 = vmatpush2.msra.mxu0 0.0
  %2789 = vmatprep.subr.mxu0 0.0
  %2790 = vmatpush2.msra.mxu0 0.0
  %2791 = vmatprep.subr.mxu0 0.0
  %2792 = vmatpush2.msra.mxu0 0.0
  %2793 = vmatprep.subr.mxu0 0.0
  %2794 = vmatpush2.msra.mxu0 0.0
  %2795 = vmatprep.subr.mxu0 0.0
  %2796 = vmatpush2.msra.mxu0 0.0
  %2797 = vmatprep.subr.mxu0 0.0
  %2798 = vmatpush2.msra.mxu0 0.0
  %2799 = vmatprep.mubr.f32.mxu0 0.0
  %2800 = vmatmul.mubr.f32.gmra.mxu0 %v956
  %v2801 = vpop.f32.mrf.mxu0
  %v2802 = vadd.f32 0.0, %v2801
  %v2803 = vpop.f32.mrf.mxu0
  %2804 = vdwg.mxu0
  %v2805 = vadd.f32 %v2717, %v2802
  %s2806 = scalar_lea.vmem %s3, 2688
  %v2807 = vld [vmem:[%s2806] sm:$0xff]
  %v2808 = vld [vmem:[%s2806 + $0x8] sm:$0xff]
  %v2809 = vld [vmem:[%s2806 + $0x10] sm:$0xff]
  %v2810 = vld [vmem:[%s2806 + $0x18] sm:$0xff]
  %v2811 = vld [vmem:[%s2806 + $0x20] sm:$0xff]
  %v2812 = vld [vmem:[%s2806 + $0x28] sm:$0xff]
  %v2813 = vld [vmem:[%s2806 + $0x30] sm:$0xff]
  %v2814 = vld [vmem:[%s2806 + $0x38] sm:$0xff]
  %v2815 = vld [vmem:[%s2806 + $0x40] sm:$0xff]
  %v2816 = vld [vmem:[%s2806 + $0x48] sm:$0xff]
  %v2817 = vld [vmem:[%s2806 + $0x50] sm:$0xff]
  %v2818 = vld [vmem:[%s2806 + $0x58] sm:$0xff]
  %v2819 = vld [vmem:[%s2806 + $0x60] sm:$0xff]
  %v2820 = vld [vmem:[%s2806 + $0x68] sm:$0xff]
  %v2821 = vld [vmem:[%s2806 + $0x70] sm:$0xff]
  %v2822 = vld [vmem:[%s2806 + $0x78] sm:$0xff]
  %2823 = vmatprep.subr.mxu0 0.0
  %2824 = vmatpush1.msra.mxu0 %v2822
  %2825 = vmatprep.subr.mxu0 0.0
  %2826 = vmatpush1.msra.mxu0 %v2821
  %2827 = vmatprep.subr.mxu0 0.0
  %2828 = vmatpush1.msra.mxu0 %v2820
  %2829 = vmatprep.subr.mxu0 0.0
  %2830 = vmatpush1.msra.mxu0 %v2819
  %2831 = vmatprep.subr.mxu0 0.0
  %2832 = vmatpush1.msra.mxu0 %v2818
  %2833 = vmatprep.subr.mxu0 0.0
  %2834 = vmatpush1.msra.mxu0 %v2817
  %2835 = vmatprep.subr.mxu0 0.0
  %2836 = vmatpush1.msra.mxu0 %v2816
  %2837 = vmatprep.subr.mxu0 0.0
  %2838 = vmatpush1.msra.mxu0 %v2815
  %2839 = vmatprep.subr.mxu0 0.0
  %2840 = vmatpush1.msra.mxu0 %v2814
  %2841 = vmatprep.subr.mxu0 0.0
  %2842 = vmatpush1.msra.mxu0 %v2813
  %2843 = vmatprep.subr.mxu0 0.0
  %2844 = vmatpush1.msra.mxu0 %v2812
  %2845 = vmatprep.subr.mxu0 0.0
  %2846 = vmatpush1.msra.mxu0 %v2811
  %2847 = vmatprep.subr.mxu0 0.0
  %2848 = vmatpush1.msra.mxu0 %v2810
  %2849 = vmatprep.subr.mxu0 0.0
  %2850 = vmatpush1.msra.mxu0 %v2809
  %2851 = vmatprep.subr.mxu0 0.0
  %2852 = vmatpush1.msra.mxu0 %v2808
  %2853 = vmatprep.subr.mxu0 0.0
  %2854 = vmatpush1.msra.mxu0 %v2807
  %2855 = vmatprep.subr.mxu0 0.0
  %2856 = vmatpush2.msra.mxu0 0.0
  %2857 = vmatprep.subr.mxu0 0.0
  %2858 = vmatpush2.msra.mxu0 0.0
  %2859 = vmatprep.subr.mxu0 0.0
  %2860 = vmatpush2.msra.mxu0 0.0
  %2861 = vmatprep.subr.mxu0 0.0
  %2862 = vmatpush2.msra.mxu0 0.0
  %2863 = vmatprep.subr.mxu0 0.0
  %2864 = vmatpush2.msra.mxu0 0.0
  %2865 = vmatprep.subr.mxu0 0.0
  %2866 = vmatpush2.msra.mxu0 0.0
  %2867 = vmatprep.subr.mxu0 0.0
  %2868 = vmatpush2.msra.mxu0 0.0
  %2869 = vmatprep.subr.mxu0 0.0
  %2870 = vmatpush2.msra.mxu0 0.0
  %2871 = vmatprep.subr.mxu0 0.0
  %2872 = vmatpush2.msra.mxu0 0.0
  %2873 = vmatprep.subr.mxu0 0.0
  %2874 = vmatpush2.msra.mxu0 0.0
  %2875 = vmatprep.subr.mxu0 0.0
  %2876 = vmatpush2.msra.mxu0 0.0
  %2877 = vmatprep.subr.mxu0 0.0
  %2878 = vmatpush2.msra.mxu0 0.0
  %2879 = vmatprep.subr.mxu0 0.0
  %2880 = vmatpush2.msra.mxu0 0.0
  %2881 = vmatprep.subr.mxu0 0.0
  %2882 = vmatpush2.msra.mxu0 0.0
  %2883 = vmatprep.subr.mxu0 0.0
  %2884 = vmatpush2.msra.mxu0 0.0
  %2885 = vmatprep.subr.mxu0 0.0
  %2886 = vmatpush2.msra.mxu0 0.0
  %2887 = vmatprep.mubr.f32.mxu0 0.0
  %2888 = vmatmul.mubr.f32.gmra.mxu0 %v957
  %v2889 = vpop.f32.mrf.mxu0
  %v2890 = vadd.f32 0.0, %v2889
  %v2891 = vpop.f32.mrf.mxu0
  %2892 = vdwg.mxu0
  %v2893 = vadd.f32 %v2805, %v2890
  %s2894 = scalar_lea.vmem %s3, 2816
  %v2895 = vld [vmem:[%s2894] sm:$0xff]
  %v2896 = vld [vmem:[%s2894 + $0x8] sm:$0xff]
  %v2897 = vld [vmem:[%s2894 + $0x10] sm:$0xff]
  %v2898 = vld [vmem:[%s2894 + $0x18] sm:$0xff]
  %v2899 = vld [vmem:[%s2894 + $0x20] sm:$0xff]
  %v2900 = vld [vmem:[%s2894 + $0x28] sm:$0xff]
  %v2901 = vld [vmem:[%s2894 + $0x30] sm:$0xff]
  %v2902 = vld [vmem:[%s2894 + $0x38] sm:$0xff]
  %v2903 = vld [vmem:[%s2894 + $0x40] sm:$0xff]
  %v2904 = vld [vmem:[%s2894 + $0x48] sm:$0xff]
  %v2905 = vld [vmem:[%s2894 + $0x50] sm:$0xff]
  %v2906 = vld [vmem:[%s2894 + $0x58] sm:$0xff]
  %v2907 = vld [vmem:[%s2894 + $0x60] sm:$0xff]
  %v2908 = vld [vmem:[%s2894 + $0x68] sm:$0xff]
  %v2909 = vld [vmem:[%s2894 + $0x70] sm:$0xff]
  %v2910 = vld [vmem:[%s2894 + $0x78] sm:$0xff]
  %2911 = vmatprep.subr.mxu0 0.0
  %2912 = vmatpush1.msra.mxu0 %v2910
  %2913 = vmatprep.subr.mxu0 0.0
  %2914 = vmatpush1.msra.mxu0 %v2909
  %2915 = vmatprep.subr.mxu0 0.0
  %2916 = vmatpush1.msra.mxu0 %v2908
  %2917 = vmatprep.subr.mxu0 0.0
  %2918 = vmatpush1.msra.mxu0 %v2907
  %2919 = vmatprep.subr.mxu0 0.0
  %2920 = vmatpush1.msra.mxu0 %v2906
  %2921 = vmatprep.subr.mxu0 0.0
  %2922 = vmatpush1.msra.mxu0 %v2905
  %2923 = vmatprep.subr.mxu0 0.0
  %2924 = vmatpush1.msra.mxu0 %v2904
  %2925 = vmatprep.subr.mxu0 0.0
  %2926 = vmatpush1.msra.mxu0 %v2903
  %2927 = vmatprep.subr.mxu0 0.0
  %2928 = vmatpush1.msra.mxu0 %v2902
  %2929 = vmatprep.subr.mxu0 0.0
  %2930 = vmatpush1.msra.mxu0 %v2901
  %2931 = vmatprep.subr.mxu0 0.0
  %2932 = vmatpush1.msra.mxu0 %v2900
  %2933 = vmatprep.subr.mxu0 0.0
  %2934 = vmatpush1.msra.mxu0 %v2899
  %2935 = vmatprep.subr.mxu0 0.0
  %2936 = vmatpush1.msra.mxu0 %v2898
  %2937 = vmatprep.subr.mxu0 0.0
  %2938 = vmatpush1.msra.mxu0 %v2897
  %2939 = vmatprep.subr.mxu0 0.0
  %2940 = vmatpush1.msra.mxu0 %v2896
  %2941 = vmatprep.subr.mxu0 0.0
  %2942 = vmatpush1.msra.mxu0 %v2895
  %2943 = vmatprep.subr.mxu0 0.0
  %2944 = vmatpush2.msra.mxu0 0.0
  %2945 = vmatprep.subr.mxu0 0.0
  %2946 = vmatpush2.msra.mxu0 0.0
  %2947 = vmatprep.subr.mxu0 0.0
  %2948 = vmatpush2.msra.mxu0 0.0
  %2949 = vmatprep.subr.mxu0 0.0
  %2950 = vmatpush2.msra.mxu0 0.0
  %2951 = vmatprep.subr.mxu0 0.0
  %2952 = vmatpush2.msra.mxu0 0.0
  %2953 = vmatprep.subr.mxu0 0.0
  %2954 = vmatpush2.msra.mxu0 0.0
  %2955 = vmatprep.subr.mxu0 0.0
  %2956 = vmatpush2.msra.mxu0 0.0
  %2957 = vmatprep.subr.mxu0 0.0
  %2958 = vmatpush2.msra.mxu0 0.0
  %2959 = vmatprep.subr.mxu0 0.0
  %2960 = vmatpush2.msra.mxu0 0.0
  %2961 = vmatprep.subr.mxu0 0.0
  %2962 = vmatpush2.msra.mxu0 0.0
  %2963 = vmatprep.subr.mxu0 0.0
  %2964 = vmatpush2.msra.mxu0 0.0
  %2965 = vmatprep.subr.mxu0 0.0
  %2966 = vmatpush2.msra.mxu0 0.0
  %2967 = vmatprep.subr.mxu0 0.0
  %2968 = vmatpush2.msra.mxu0 0.0
  %2969 = vmatprep.subr.mxu0 0.0
  %2970 = vmatpush2.msra.mxu0 0.0
  %2971 = vmatprep.subr.mxu0 0.0
  %2972 = vmatpush2.msra.mxu0 0.0
  %2973 = vmatprep.subr.mxu0 0.0
  %2974 = vmatpush2.msra.mxu0 0.0
  %2975 = vmatprep.mubr.f32.mxu0 0.0
  %2976 = vmatmul.mubr.f32.gmra.mxu0 %v958
  %v2977 = vpop.f32.mrf.mxu0
  %v2978 = vadd.f32 0.0, %v2977
  %v2979 = vpop.f32.mrf.mxu0
  %2980 = vdwg.mxu0
  %v2981 = vadd.f32 %v2893, %v2978
  %s2982 = scalar_lea.vmem %s3, 2944
  %v2983 = vld [vmem:[%s2982] sm:$0xff]
  %v2984 = vld [vmem:[%s2982 + $0x8] sm:$0xff]
  %v2985 = vld [vmem:[%s2982 + $0x10] sm:$0xff]
  %v2986 = vld [vmem:[%s2982 + $0x18] sm:$0xff]
  %v2987 = vld [vmem:[%s2982 + $0x20] sm:$0xff]
  %v2988 = vld [vmem:[%s2982 + $0x28] sm:$0xff]
  %v2989 = vld [vmem:[%s2982 + $0x30] sm:$0xff]
  %v2990 = vld [vmem:[%s2982 + $0x38] sm:$0xff]
  %v2991 = vld [vmem:[%s2982 + $0x40] sm:$0xff]
  %v2992 = vld [vmem:[%s2982 + $0x48] sm:$0xff]
  %v2993 = vld [vmem:[%s2982 + $0x50] sm:$0xff]
  %v2994 = vld [vmem:[%s2982 + $0x58] sm:$0xff]
  %v2995 = vld [vmem:[%s2982 + $0x60] sm:$0xff]
  %v2996 = vld [vmem:[%s2982 + $0x68] sm:$0xff]
  %v2997 = vld [vmem:[%s2982 + $0x70] sm:$0xff]
  %v2998 = vld [vmem:[%s2982 + $0x78] sm:$0xff]
  %2999 = vmatprep.subr.mxu0 0.0
  %3000 = vmatpush1.msra.mxu0 %v2998
  %3001 = vmatprep.subr.mxu0 0.0
  %3002 = vmatpush1.msra.mxu0 %v2997
  %3003 = vmatprep.subr.mxu0 0.0
  %3004 = vmatpush1.msra.mxu0 %v2996
  %3005 = vmatprep.subr.mxu0 0.0
  %3006 = vmatpush1.msra.mxu0 %v2995
  %3007 = vmatprep.subr.mxu0 0.0
  %3008 = vmatpush1.msra.mxu0 %v2994
  %3009 = vmatprep.subr.mxu0 0.0
  %3010 = vmatpush1.msra.mxu0 %v2993
  %3011 = vmatprep.subr.mxu0 0.0
  %3012 = vmatpush1.msra.mxu0 %v2992
  %3013 = vmatprep.subr.mxu0 0.0
  %3014 = vmatpush1.msra.mxu0 %v2991
  %3015 = vmatprep.subr.mxu0 0.0
  %3016 = vmatpush1.msra.mxu0 %v2990
  %3017 = vmatprep.subr.mxu0 0.0
  %3018 = vmatpush1.msra.mxu0 %v2989
  %3019 = vmatprep.subr.mxu0 0.0
  %3020 = vmatpush1.msra.mxu0 %v2988
  %3021 = vmatprep.subr.mxu0 0.0
  %3022 = vmatpush1.msra.mxu0 %v2987
  %3023 = vmatprep.subr.mxu0 0.0
  %3024 = vmatpush1.msra.mxu0 %v2986
  %3025 = vmatprep.subr.mxu0 0.0
  %3026 = vmatpush1.msra.mxu0 %v2985
  %3027 = vmatprep.subr.mxu0 0.0
  %3028 = vmatpush1.msra.mxu0 %v2984
  %3029 = vmatprep.subr.mxu0 0.0
  %3030 = vmatpush1.msra.mxu0 %v2983
  %3031 = vmatprep.subr.mxu0 0.0
  %3032 = vmatpush2.msra.mxu0 0.0
  %3033 = vmatprep.subr.mxu0 0.0
  %3034 = vmatpush2.msra.mxu0 0.0
  %3035 = vmatprep.subr.mxu0 0.0
  %3036 = vmatpush2.msra.mxu0 0.0
  %3037 = vmatprep.subr.mxu0 0.0
  %3038 = vmatpush2.msra.mxu0 0.0
  %3039 = vmatprep.subr.mxu0 0.0
  %3040 = vmatpush2.msra.mxu0 0.0
  %3041 = vmatprep.subr.mxu0 0.0
  %3042 = vmatpush2.msra.mxu0 0.0
  %3043 = vmatprep.subr.mxu0 0.0
  %3044 = vmatpush2.msra.mxu0 0.0
  %3045 = vmatprep.subr.mxu0 0.0
  %3046 = vmatpush2.msra.mxu0 0.0
  %3047 = vmatprep.subr.mxu0 0.0
  %3048 = vmatpush2.msra.mxu0 0.0
  %3049 = vmatprep.subr.mxu0 0.0
  %3050 = vmatpush2.msra.mxu0 0.0
  %3051 = vmatprep.subr.mxu0 0.0
  %3052 = vmatpush2.msra.mxu0 0.0
  %3053 = vmatprep.subr.mxu0 0.0
  %3054 = vmatpush2.msra.mxu0 0.0
  %3055 = vmatprep.subr.mxu0 0.0
  %3056 = vmatpush2.msra.mxu0 0.0
  %3057 = vmatprep.subr.mxu0 0.0
  %3058 = vmatpush2.msra.mxu0 0.0
  %3059 = vmatprep.subr.mxu0 0.0
  %3060 = vmatpush2.msra.mxu0 0.0
  %3061 = vmatprep.subr.mxu0 0.0
  %3062 = vmatpush2.msra.mxu0 0.0
  %3063 = vmatprep.mubr.f32.mxu0 0.0
  %3064 = vmatmul.mubr.f32.gmra.mxu0 %v959
  %v3065 = vpop.f32.mrf.mxu0
  %v3066 = vadd.f32 0.0, %v3065
  %v3067 = vpop.f32.mrf.mxu0
  %3068 = vdwg.mxu0
  %v3069 = vadd.f32 %v2981, %v3066
  %s3070 = scalar_lea.vmem %s3, 3072
  %v3071 = vld [vmem:[%s3070] sm:$0xff]
  %v3072 = vld [vmem:[%s3070 + $0x8] sm:$0xff]
  %v3073 = vld [vmem:[%s3070 + $0x10] sm:$0xff]
  %v3074 = vld [vmem:[%s3070 + $0x18] sm:$0xff]
  %v3075 = vld [vmem:[%s3070 + $0x20] sm:$0xff]
  %v3076 = vld [vmem:[%s3070 + $0x28] sm:$0xff]
  %v3077 = vld [vmem:[%s3070 + $0x30] sm:$0xff]
  %v3078 = vld [vmem:[%s3070 + $0x38] sm:$0xff]
  %v3079 = vld [vmem:[%s3070 + $0x40] sm:$0xff]
  %v3080 = vld [vmem:[%s3070 + $0x48] sm:$0xff]
  %v3081 = vld [vmem:[%s3070 + $0x50] sm:$0xff]
  %v3082 = vld [vmem:[%s3070 + $0x58] sm:$0xff]
  %v3083 = vld [vmem:[%s3070 + $0x60] sm:$0xff]
  %v3084 = vld [vmem:[%s3070 + $0x68] sm:$0xff]
  %v3085 = vld [vmem:[%s3070 + $0x70] sm:$0xff]
  %v3086 = vld [vmem:[%s3070 + $0x78] sm:$0xff]
  %3087 = vmatprep.subr.mxu0 0.0
  %3088 = vmatpush1.msra.mxu0 %v3086
  %3089 = vmatprep.subr.mxu0 0.0
  %3090 = vmatpush1.msra.mxu0 %v3085
  %3091 = vmatprep.subr.mxu0 0.0
  %3092 = vmatpush1.msra.mxu0 %v3084
  %3093 = vmatprep.subr.mxu0 0.0
  %3094 = vmatpush1.msra.mxu0 %v3083
  %3095 = vmatprep.subr.mxu0 0.0
  %3096 = vmatpush1.msra.mxu0 %v3082
  %3097 = vmatprep.subr.mxu0 0.0
  %3098 = vmatpush1.msra.mxu0 %v3081
  %3099 = vmatprep.subr.mxu0 0.0
  %3100 = vmatpush1.msra.mxu0 %v3080
  %3101 = vmatprep.subr.mxu0 0.0
  %3102 = vmatpush1.msra.mxu0 %v3079
  %3103 = vmatprep.subr.mxu0 0.0
  %3104 = vmatpush1.msra.mxu0 %v3078
  %3105 = vmatprep.subr.mxu0 0.0
  %3106 = vmatpush1.msra.mxu0 %v3077
  %3107 = vmatprep.subr.mxu0 0.0
  %3108 = vmatpush1.msra.mxu0 %v3076
  %3109 = vmatprep.subr.mxu0 0.0
  %3110 = vmatpush1.msra.mxu0 %v3075
  %3111 = vmatprep.subr.mxu0 0.0
  %3112 = vmatpush1.msra.mxu0 %v3074
  %3113 = vmatprep.subr.mxu0 0.0
  %3114 = vmatpush1.msra.mxu0 %v3073
  %3115 = vmatprep.subr.mxu0 0.0
  %3116 = vmatpush1.msra.mxu0 %v3072
  %3117 = vmatprep.subr.mxu0 0.0
  %3118 = vmatpush1.msra.mxu0 %v3071
  %3119 = vmatprep.subr.mxu0 0.0
  %3120 = vmatpush2.msra.mxu0 0.0
  %3121 = vmatprep.subr.mxu0 0.0
  %3122 = vmatpush2.msra.mxu0 0.0
  %3123 = vmatprep.subr.mxu0 0.0
  %3124 = vmatpush2.msra.mxu0 0.0
  %3125 = vmatprep.subr.mxu0 0.0
  %3126 = vmatpush2.msra.mxu0 0.0
  %3127 = vmatprep.subr.mxu0 0.0
  %3128 = vmatpush2.msra.mxu0 0.0
  %3129 = vmatprep.subr.mxu0 0.0
  %3130 = vmatpush2.msra.mxu0 0.0
  %3131 = vmatprep.subr.mxu0 0.0
  %3132 = vmatpush2.msra.mxu0 0.0
  %3133 = vmatprep.subr.mxu0 0.0
  %3134 = vmatpush2.msra.mxu0 0.0
  %3135 = vmatprep.subr.mxu0 0.0
  %3136 = vmatpush2.msra.mxu0 0.0
  %3137 = vmatprep.subr.mxu0 0.0
  %3138 = vmatpush2.msra.mxu0 0.0
  %3139 = vmatprep.subr.mxu0 0.0
  %3140 = vmatpush2.msra.mxu0 0.0
  %3141 = vmatprep.subr.mxu0 0.0
  %3142 = vmatpush2.msra.mxu0 0.0
  %3143 = vmatprep.subr.mxu0 0.0
  %3144 = vmatpush2.msra.mxu0 0.0
  %3145 = vmatprep.subr.mxu0 0.0
  %3146 = vmatpush2.msra.mxu0 0.0
  %3147 = vmatprep.subr.mxu0 0.0
  %3148 = vmatpush2.msra.mxu0 0.0
  %3149 = vmatprep.subr.mxu0 0.0
  %3150 = vmatpush2.msra.mxu0 0.0
  %3151 = vmatprep.mubr.f32.mxu0 0.0
  %3152 = vmatmul.mubr.f32.gmra.mxu0 %v960
  %v3153 = vpop.f32.mrf.mxu0
  %v3154 = vadd.f32 0.0, %v3153
  %v3155 = vpop.f32.mrf.mxu0
  %3156 = vdwg.mxu0
  %v3157 = vadd.f32 %v3069, %v3154
  %v3158 = vld [vmem:[%s4] sm:$0x1]
  %v3160 = vlaneseq
  %v3161 = vshrl.u32 %v3160, 7
  %v3162 = vsub.s32 0, %v3161
  %v3163 = vrot.slane %v3158, %v3162
  %v3165 = vadd.f32 %v3157, %v3163
  %v3166 = vmax.f32 %v3165, 0.0
  %v3167 = vld [vmem:[%s5] sm:$0xff]
  %v3168 = vld [vmem:[%s5 + $0x8] sm:$0xff]
  %v3169 = vld [vmem:[%s5 + $0x10] sm:$0xff]
  %v3170 = vld [vmem:[%s5 + $0x18] sm:$0xff]
  %v3171 = vld [vmem:[%s5 + $0x20] sm:$0xff]
  %v3172 = vld [vmem:[%s5 + $0x28] sm:$0xff]
  %v3173 = vld [vmem:[%s5 + $0x30] sm:$0xff]
  %v3174 = vld [vmem:[%s5 + $0x38] sm:$0xff]
  %v3175 = vld [vmem:[%s5 + $0x40] sm:$0xff]
  %v3176 = vld [vmem:[%s5 + $0x48] sm:$0xff]
  %v3177 = vld [vmem:[%s5 + $0x50] sm:$0xff]
  %v3178 = vld [vmem:[%s5 + $0x58] sm:$0xff]
  %v3179 = vld [vmem:[%s5 + $0x60] sm:$0xff]
  %v3180 = vld [vmem:[%s5 + $0x68] sm:$0xff]
  %v3181 = vld [vmem:[%s5 + $0x70] sm:$0xff]
  %v3182 = vld [vmem:[%s5 + $0x78] sm:$0xff]
  %v3183 = vld [vmem:[%s6] sm:$0x1]
  %v3185 = vlaneseq
  %v3186 = vshrl.u32 %v3185, 7
  %v3187 = vsub.s32 0, %v3186
  %v3188 = vrot.slane %v3183, %v3187
  %3190 = vmatprep.subr.mxu0 0.0
  %3191 = vmatpush1.msra.mxu0 %v3182
  %3192 = vmatprep.subr.mxu0 0.0
  %3193 = vmatpush1.msra.mxu0 %v3181
  %3194 = vmatprep.subr.mxu0 0.0
  %3195 = vmatpush1.msra.mxu0 %v3180
  %3196 = vmatprep.subr.mxu0 0.0
  %3197 = vmatpush1.msra.mxu0 %v3179
  %3198 = vmatprep.subr.mxu0 0.0
  %3199 = vmatpush1.msra.mxu0 %v3178
  %3200 = vmatprep.subr.mxu0 0.0
  %3201 = vmatpush1.msra.mxu0 %v3177
  %3202 = vmatprep.subr.mxu0 0.0
  %3203 = vmatpush1.msra.mxu0 %v3176
  %3204 = vmatprep.subr.mxu0 0.0
  %3205 = vmatpush1.msra.mxu0 %v3175
  %3206 = vmatprep.subr.mxu0 0.0
  %3207 = vmatpush1.msra.mxu0 %v3174
  %3208 = vmatprep.subr.mxu0 0.0
  %3209 = vmatpush1.msra.mxu0 %v3173
  %3210 = vmatprep.subr.mxu0 0.0
  %3211 = vmatpush1.msra.mxu0 %v3172
  %3212 = vmatprep.subr.mxu0 0.0
  %3213 = vmatpush1.msra.mxu0 %v3171
  %3214 = vmatprep.subr.mxu0 0.0
  %3215 = vmatpush1.msra.mxu0 %v3170
  %3216 = vmatprep.subr.mxu0 0.0
  %3217 = vmatpush1.msra.mxu0 %v3169
  %3218 = vmatprep.subr.mxu0 0.0
  %3219 = vmatpush1.msra.mxu0 %v3168
  %3220 = vmatprep.subr.mxu0 0.0
  %3221 = vmatpush1.msra.mxu0 %v3167
  %3222 = vmatprep.subr.mxu0 0.0
  %3223 = vmatpush2.msra.mxu0 0.0
  %3224 = vmatprep.subr.mxu0 0.0
  %3225 = vmatpush2.msra.mxu0 0.0
  %3226 = vmatprep.subr.mxu0 0.0
  %3227 = vmatpush2.msra.mxu0 0.0
  %3228 = vmatprep.subr.mxu0 0.0
  %3229 = vmatpush2.msra.mxu0 0.0
  %3230 = vmatprep.subr.mxu0 0.0
  %3231 = vmatpush2.msra.mxu0 0.0
  %3232 = vmatprep.subr.mxu0 0.0
  %3233 = vmatpush2.msra.mxu0 0.0
  %3234 = vmatprep.subr.mxu0 0.0
  %3235 = vmatpush2.msra.mxu0 0.0
  %3236 = vmatprep.subr.mxu0 0.0
  %3237 = vmatpush2.msra.mxu0 0.0
  %3238 = vmatprep.subr.mxu0 0.0
  %3239 = vmatpush2.msra.mxu0 0.0
  %3240 = vmatprep.subr.mxu0 0.0
  %3241 = vmatpush2.msra.mxu0 0.0
  %3242 = vmatprep.subr.mxu0 0.0
  %3243 = vmatpush2.msra.mxu0 0.0
  %3244 = vmatprep.subr.mxu0 0.0
  %3245 = vmatpush2.msra.mxu0 0.0
  %3246 = vmatprep.subr.mxu0 0.0
  %3247 = vmatpush2.msra.mxu0 0.0
  %3248 = vmatprep.subr.mxu0 0.0
  %3249 = vmatpush2.msra.mxu0 0.0
  %3250 = vmatprep.subr.mxu0 0.0
  %3251 = vmatpush2.msra.mxu0 0.0
  %3252 = vmatprep.subr.mxu0 0.0
  %3253 = vmatpush2.msra.mxu0 0.0
  %3254 = vmatprep.mubr.f32.mxu0 0.0
  %3255 = vmatmul.mubr.f32.gmra.mxu0 %v3166
  %v3256 = vpop.f32.mrf.mxu0
  %v3257 = vadd.f32 %v3188, %v3256
  %v3258 = vpop.f32.mrf.mxu0
  %3259 = vdwg.mxu0
  %v3260 = vmax.f32 %v3257, 0.0
  %v3261 = vld [vmem:[%s7] sm:$0xff]
  %v3262 = vld [vmem:[%s7 + $0x8] sm:$0xff]
  %v3263 = vld [vmem:[%s7 + $0x10] sm:$0xff]
  %v3264 = vld [vmem:[%s7 + $0x18] sm:$0xff]
  %v3265 = vld [vmem:[%s7 + $0x20] sm:$0xff]
  %v3266 = vld [vmem:[%s7 + $0x28] sm:$0xff]
  %v3267 = vld [vmem:[%s7 + $0x30] sm:$0xff]
  %v3268 = vld [vmem:[%s7 + $0x38] sm:$0xff]
  %v3269 = vld [vmem:[%s7 + $0x40] sm:$0xff]
  %v3270 = vld [vmem:[%s7 + $0x48] sm:$0xff]
  %v3271 = vld [vmem:[%s7 + $0x50] sm:$0xff]
  %v3272 = vld [vmem:[%s7 + $0x58] sm:$0xff]
  %v3273 = vld [vmem:[%s7 + $0x60] sm:$0xff]
  %v3274 = vld [vmem:[%s7 + $0x68] sm:$0xff]
  %v3275 = vld [vmem:[%s7 + $0x70] sm:$0xff]
  %v3276 = vld [vmem:[%s7 + $0x78] sm:$0xff]
  %v3277 = vld [vmem:[%s8] sm:$0x1]
  %v3279 = vlaneseq
  %v3280 = vshrl.u32 %v3279, 7
  %v3281 = vsub.s32 0, %v3280
  %v3282 = vrot.slane %v3277, %v3281
  %3284 = vmatprep.subr.mxu0 0.0
  %3285 = vmatpush1.msra.mxu0 %v3276
  %3286 = vmatprep.subr.mxu0 0.0
  %3287 = vmatpush1.msra.mxu0 %v3275
  %3288 = vmatprep.subr.mxu0 0.0
  %3289 = vmatpush1.msra.mxu0 %v3274
  %3290 = vmatprep.subr.mxu0 0.0
  %3291 = vmatpush1.msra.mxu0 %v3273
  %3292 = vmatprep.subr.mxu0 0.0
  %3293 = vmatpush1.msra.mxu0 %v3272
  %3294 = vmatprep.subr.mxu0 0.0
  %3295 = vmatpush1.msra.mxu0 %v3271
  %3296 = vmatprep.subr.mxu0 0.0
  %3297 = vmatpush1.msra.mxu0 %v3270
  %3298 = vmatprep.subr.mxu0 0.0
  %3299 = vmatpush1.msra.mxu0 %v3269
  %3300 = vmatprep.subr.mxu0 0.0
  %3301 = vmatpush1.msra.mxu0 %v3268
  %3302 = vmatprep.subr.mxu0 0.0
  %3303 = vmatpush1.msra.mxu0 %v3267
  %3304 = vmatprep.subr.mxu0 0.0
  %3305 = vmatpush1.msra.mxu0 %v3266
  %3306 = vmatprep.subr.mxu0 0.0
  %3307 = vmatpush1.msra.mxu0 %v3265
  %3308 = vmatprep.subr.mxu0 0.0
  %3309 = vmatpush1.msra.mxu0 %v3264
  %3310 = vmatprep.subr.mxu0 0.0
  %3311 = vmatpush1.msra.mxu0 %v3263
  %3312 = vmatprep.subr.mxu0 0.0
  %3313 = vmatpush1.msra.mxu0 %v3262
  %3314 = vmatprep.subr.mxu0 0.0
  %3315 = vmatpush1.msra.mxu0 %v3261
  %3316 = vmatprep.subr.mxu0 0.0
  %3317 = vmatpush2.msra.mxu0 0.0
  %3318 = vmatprep.subr.mxu0 0.0
  %3319 = vmatpush2.msra.mxu0 0.0
  %3320 = vmatprep.subr.mxu0 0.0
  %3321 = vmatpush2.msra.mxu0 0.0
  %3322 = vmatprep.subr.mxu0 0.0
  %3323 = vmatpush2.msra.mxu0 0.0
  %3324 = vmatprep.subr.mxu0 0.0
  %3325 = vmatpush2.msra.mxu0 0.0
  %3326 = vmatprep.subr.mxu0 0.0
  %3327 = vmatpush2.msra.mxu0 0.0
  %3328 = vmatprep.subr.mxu0 0.0
  %3329 = vmatpush2.msra.mxu0 0.0
  %3330 = vmatprep.subr.mxu0 0.0
  %3331 = vmatpush2.msra.mxu0 0.0
  %3332 = vmatprep.subr.mxu0 0.0
  %3333 = vmatpush2.msra.mxu0 0.0
  %3334 = vmatprep.subr.mxu0 0.0
  %3335 = vmatpush2.msra.mxu0 0.0
  %3336 = vmatprep.subr.mxu0 0.0
  %3337 = vmatpush2.msra.mxu0 0.0
  %3338 = vmatprep.subr.mxu0 0.0
  %3339 = vmatpush2.msra.mxu0 0.0
  %3340 = vmatprep.subr.mxu0 0.0
  %3341 = vmatpush2.msra.mxu0 0.0
  %3342 = vmatprep.subr.mxu0 0.0
  %3343 = vmatpush2.msra.mxu0 0.0
  %3344 = vmatprep.subr.mxu0 0.0
  %3345 = vmatpush2.msra.mxu0 0.0
  %3346 = vmatprep.subr.mxu0 0.0
  %3347 = vmatpush2.msra.mxu0 0.0
  %3348 = vmatprep.mubr.f32.mxu0 0.0
  %3349 = vmatmul.mubr.f32.gmra.mxu0 %v3260
  %v3350 = vpop.f32.mrf.mxu0
  %v3351 = vadd.f32 %v3282, %v3350
  %v3352 = vpop.f32.mrf.mxu0
  %3353 = vdwg.mxu0
  %3354 = vst [vmem:[%s9] sm:$0xff] %v3351
  // Predicated region
  $region38: #{lenet_forward.3} parent=0 // pred_check
    _
  $region39: #{lenet_forward.3} parent=0 // pred_check_branch
    %3356 = sbr.rel (0) target = $region41
  $region40: #{lenet_forward.3} parent=0 // pred_region
    _
  $region41: #{lenet_forward.3} parent=0 // pred_fallthru
    _
  // Predicated region
  $region42: #{lenet_forward.3} parent=0 // pred_check
    _
  $region43: #{lenet_forward.3} parent=0 // pred_check_branch
    %3358 = sbr.rel (0) target = $region45
  $region44: #{lenet_forward.3} parent=0 // pred_region
    _
  $region45: #{lenet_forward.3} parent=0 // pred_fallthru
    _

</llo_original>
